<compile_context>
chip_gen: v7x
topology: tpu7x:2x2x1
jax: 0.10.0
libtpu: 0.0.40
codegen_flags: <defaults>
</compile_context>

<pallas_src>
import math

import jax
import jax.numpy as jnp
from jax import lax
from jax.experimental import pallas as pl
from jax.experimental.pallas import tpu as pltpu


# --------------------------------------------------------------------------
# Pallas kernel: fused bidirectional LSTM recurrence over a chunk of Tc steps
# --------------------------------------------------------------------------
def _bilstm_recurrent_kernel(gf_ref, gb_ref, w_hbm, of_ref, ob_ref,
                             h_scr, c_scr, w_vmem, dma_sem):
    """gf_ref : (Tc, Bp, 4Hp) forward pre-gates (x@W_ih^T + b), natural order.
    gb_ref : (Tc, Bp, 4Hp) backward pre-gates, natural order (consumed
             back-to-front; blocks arrive reversed via the index_map).
    w_hbm  : (2Hp, 4Hp) row-stacked [W_hh_fwd^T ; W_hh_bwd^T] in HBM.
    of_ref / ob_ref : (Tc, Bp, Hp) hidden outputs (natural order).
    h_scr  : (2Bp, 2Hp) block-diagonal hidden state (compute dtype):
             rows [:Bp] hold h_fwd in cols [:Hp]; rows [Bp:] hold h_bwd in
             cols [Hp:]; off-diagonal blocks stay zero, so ONE matmul yields
             both directions' recurrent gate contributions.
    c_scr  : (2Bp, Hp) cell state, f32.
    w_vmem : resident single-buffered copy of the stacked weights.
    """
    Tc, Bp, G = gf_ref.shape
    Hp = G // 4

    @pl.when(pl.program_id(0) == 0)
    def _init():
        cp = pltpu.make_async_copy(w_hbm, w_vmem, dma_sem.at[0])
        cp.start()
        h_scr[...] = jnp.zeros_like(h_scr)
        c_scr[...] = jnp.zeros_like(c_scr)
        cp.wait()

    def body(j, carry):
        jr = Tc - 1 - j
        # One fused MXU call per timestep for BOTH directions.
        dot = jnp.dot(h_scr[...], w_vmem[...],
                      preferred_element_type=jnp.float32)        # (2Bp, 4Hp)
        pre = jnp.concatenate([gf_ref[j], gb_ref[jr]], axis=0)   # (2Bp, 4Hp)
        gates = pre.astype(jnp.float32) + dot
        # Gate order is (i, f, o, g): three sigmoid gates are contiguous.
        sig = jax.nn.sigmoid(gates[:, :3 * Hp])
        g = jnp.tanh(gates[:, 3 * Hp:])
        i = sig[:, :Hp]
        f = sig[:, Hp:2 * Hp]
        o = sig[:, 2 * Hp:]
        c_new = f * c_scr[...] + i * g
        h_new = o * jnp.tanh(c_new)
        c_scr[...] = c_new
        h_c = h_new.astype(of_ref.dtype)
        # Write only the diagonal blocks of the state (off-diag stays zero).
        h_scr[:Bp, :Hp] = h_c[:Bp]
        h_scr[Bp:, Hp:] = h_c[Bp:]
        of_ref[j] = h_c[:Bp]
        ob_ref[jr] = h_c[Bp:]
        return carry

    lax.fori_loop(0, Tc, body, 0, unroll=True)


# --------------------------------------------------------------------------
# Layer wrapper
# --------------------------------------------------------------------------
def _choose_time_chunk(T, Bp, Hp, stream_bytes, out_bytes,
                       budget_bytes=40 << 20, tc_cap=32):
    """Largest Tc (<= tc_cap) whose double-buffered streams fit the budget."""
    fixed = (2 * Hp) * (4 * Hp) * stream_bytes          # resident W_hh
    fixed += (2 * Bp) * (2 * Hp) * stream_bytes         # h state
    fixed += (2 * Bp) * Hp * 4                          # c state (f32)
    per_step = 2 * 2 * Bp * (4 * Hp) * stream_bytes     # 2 gate streams, 2 bufs
    per_step += 2 * 2 * Bp * Hp * out_bytes             # 2 output streams, 2 bufs
    tc = min(tc_cap, T, max(1, (budget_bytes - fixed) // max(per_step, 1)))
    tc = int(max(1, tc))
    return tc, int(fixed + tc * per_step)


def _bilstm_layer(gx_f, gx_b, whh_stacked, compute_dtype):
    """gx_f / gx_b : (T, Bp, 4Hp) pre-gate streams; whh_stacked : (2Hp, 4Hp).
    Returns (h_fwd, h_bwd), each (T, Bp, Hp), natural time order."""
    T, Bp, G = gx_f.shape
    Hp = G // 4
    sb = jnp.dtype(compute_dtype).itemsize
    Tc, vmem_need = _choose_time_chunk(T, Bp, Hp, sb, sb)
    nc = -(-T // Tc)
    Tp = nc * Tc
    pad = Tp - T
    if pad:
        # Forward stream: pad at the END (junk steps run after all real ones).
        gx_f = jnp.pad(gx_f, ((0, pad), (0, 0), (0, 0)))
        # Backward stream: pad at the FRONT (processed back-to-front, so junk
        # steps also run after all real ones -> state is never corrupted).
        gx_b = jnp.pad(gx_b, ((pad, 0), (0, 0), (0, 0)))

    flops = 2 * Tp * (2 * Bp) * (2 * Hp) * (4 * Hp)
    transcendentals = Tp * (2 * Bp) * (5 * Hp)
    bytes_accessed = (2 * Tp * Bp * G + 2 * Tp * Bp * Hp + (2 * Hp) * G) * sb

    of, ob = pl.pallas_call(
        _bilstm_recurrent_kernel,
        out_shape=(jax.ShapeDtypeStruct((Tp, Bp, Hp), compute_dtype),
                   jax.ShapeDtypeStruct((Tp, Bp, Hp), compute_dtype)),
        grid=(nc,),
        in_specs=[
            pl.BlockSpec((Tc, Bp, G), lambda s: (s, 0, 0)),           # fwd gates
            pl.BlockSpec((Tc, Bp, G), lambda s: (nc - 1 - s, 0, 0)),  # bwd gates
            pl.BlockSpec(memory_space=pl.ANY),   # stacked W_hh (HBM, manual DMA)
        ],
        out_specs=(
            pl.BlockSpec((Tc, Bp, Hp), lambda s: (s, 0, 0)),          # fwd h
            pl.BlockSpec((Tc, Bp, Hp), lambda s: (nc - 1 - s, 0, 0)),  # bwd h
        ),
        scratch_shapes=[
            pltpu.VMEM((2 * Bp, 2 * Hp), compute_dtype),  # h state (block-diag)
            pltpu.VMEM((2 * Bp, Hp), jnp.float32),        # c state
            pltpu.VMEM((2 * Hp, G), compute_dtype),       # resident W_hh stack
            pltpu.SemaphoreType.DMA((1,)),
        ],
        compiler_params=pltpu.CompilerParams(
            dimension_semantics=("arbitrary",),           # state carried
            vmem_limit_bytes=int(min(max(vmem_need + (8 << 20), 32 << 20),
                                     64 << 20))),
        cost_estimate=pl.CostEstimate(flops=int(flops),
                                      transcendentals=int(transcendentals),
                                      bytes_accessed=int(bytes_accessed)),
    )(gx_f, gx_b, whh_stacked)
    return of[:T], ob[pad:]


# --------------------------------------------------------------------------
# Parameter preparation (done ONCE, outside the forward pass)
# --------------------------------------------------------------------------
def _reorder_ifog(m):
    """Gate blocks (last axis) from PyTorch (i, f, g, o) to (i, f, o, g)."""
    i, f, g, o = jnp.split(m, 4, axis=-1)
    return jnp.concatenate([i, f, o, g], axis=-1)


def _pad_gate_cols(m, H, Hp):
    """Zero-pad each of the 4 gate blocks (last axis) from H to Hp lanes."""
    if Hp == H:
        return m
    pad = [(0, 0)] * (m.ndim - 1) + [(0, Hp - H)]
    return jnp.concatenate([jnp.pad(b, pad) for b in jnp.split(m, 4, axis=-1)],
                           axis=-1)


def _pad_rows(m, rows_to):
    return jnp.pad(m, ((0, rows_to - m.shape[0]),) + ((0, 0),) * (m.ndim - 1))


def prepare_bilstm_params(params, hidden, compute_dtype=jnp.bfloat16, lane=128):
    """PyTorch-layout params -> kernel layout: transposed, bias-combined,
    gate-reordered to (i,f,o,g), H padded to a multiple of 128, W_hh of both
    directions row-stacked, weights cast to compute_dtype."""
    H = hidden
    Hp = ((H + lane - 1) // lane) * lane
    layers = []
    for li, layer_params in enumerate(params):
        entry = {}
        whh_stack = []
        for d, (w_ih, w_hh, b_ih, b_hh) in enumerate(layer_params):
            tag = "f" if d == 0 else "b"
            wih = _pad_gate_cols(
                _reorder_ifog(jnp.transpose(w_ih.astype(jnp.float32))), H, Hp)
            if li > 0:
                # rows = [h_fwd_prev (H) ; h_bwd_prev (H)] -> pad each half to Hp
                wih = jnp.concatenate([_pad_rows(wih[:H], Hp),
                                       _pad_rows(wih[H:], Hp)], axis=0)
            whh = _pad_rows(_pad_gate_cols(
                _reorder_ifog(jnp.transpose(w_hh.astype(jnp.float32))), H, Hp), Hp)
            b = _pad_gate_cols(
                _reorder_ifog((b_ih + b_hh).astype(jnp.float32)), H, Hp)
            entry["wih_" + tag] = wih.astype(compute_dtype)
            entry["b_" + tag] = b                       # bias kept f32
            whh_stack.append(whh)
        entry["whh"] = jnp.concatenate(whh_stack, axis=0).astype(compute_dtype)
        layers.append(entry)
    return layers


# --------------------------------------------------------------------------
# Forward pass
# --------------------------------------------------------------------------
def bilstm_forward(x_btc, layers, hidden_size, compute_dtype):
    """x_btc: (B, T, C) -> (B, T, 2*hidden_size) float32 (eval semantics)."""
    B, T, _ = x_btc.shape
    Bp = max(8, ((B + 7) // 8) * 8)
    Hp = layers[0]["whh"].shape[0] // 2

    x = jnp.transpose(x_btc, (1, 0, 2))                     # (T, B, C)
    if Bp != B:
        x = jnp.pad(x, ((0, 0), (0, Bp - B), (0, 0)))
    x = x.astype(compute_dtype)

    h_f = h_b = None
    for li, lp in enumerate(layers):
        if li == 0:
            gx_f = jnp.einsum("tbc,cg->tbg", x, lp["wih_f"],
                              preferred_element_type=jnp.float32) + lp["b_f"]
            gx_b = jnp.einsum("tbc,cg->tbg", x, lp["wih_b"],
                              preferred_element_type=jnp.float32) + lp["b_b"]
        else:
            # Consume previous layer's fwd/bwd halves directly (no (T,B,2H)
            # concat is ever materialised between layers).
            gx_f = (jnp.einsum("tbh,hg->tbg", h_f, lp["wih_f"][:Hp],
                               preferred_element_type=jnp.float32)
                    + jnp.einsum("tbh,hg->tbg", h_b, lp["wih_f"][Hp:],
                                 preferred_element_type=jnp.float32)
                    + lp["b_f"])
            gx_b = (jnp.einsum("tbh,hg->tbg", h_f, lp["wih_b"][:Hp],
                               preferred_element_type=jnp.float32)
                    + jnp.einsum("tbh,hg->tbg", h_b, lp["wih_b"][Hp:],
                                 preferred_element_type=jnp.float32)
                    + lp["b_b"])
        gx_f = gx_f.astype(compute_dtype)
        gx_b = gx_b.astype(compute_dtype)
        h_f, h_b = _bilstm_layer(gx_f, gx_b, lp["whh"], compute_dtype)

    H = hidden_size
    out = jnp.concatenate([h_f[..., :H], h_b[..., :H]], axis=-1)   # (T, Bp, 2H)
    out = jnp.transpose(out, (1, 0, 2))[:B]                        # (B, T, 2H)
    return out.astype(jnp.float32)


# --------------------------------------------------------------------------
# Synthetic params (PyTorch nn.LSTM shapes / init range)
# --------------------------------------------------------------------------
def init_bilstm_params(key, in_channels, hidden_channels, num_layers):
    H = hidden_channels
    k = 1.0 / math.sqrt(H)
    params = []
    for layer in range(num_layers):
        d_in = in_channels if layer == 0 else 2 * H
        layer_params = []
        for _direction in range(2):
            key, k1, k2, k3, k4 = jax.random.split(key, 5)
            w_ih = jax.random.uniform(k1, (4 * H, d_in), jnp.float32, -k, k)
            w_hh = jax.random.uniform(k2, (4 * H, H), jnp.float32, -k, k)
            b_ih = jax.random.uniform(k3, (4 * H,), jnp.float32, -k, k)
            b_hh = jax.random.uniform(k4, (4 * H,), jnp.float32, -k, k)
            layer_params.append((w_ih, w_hh, b_ih, b_hh))
        params.append(layer_params)
    return params


# --------------------------------------------------------------------------
# Pure-JAX reference (PyTorch gate order i, f, g, o)
# --------------------------------------------------------------------------
def _ref_lstm_dir(x_tbd, w_ih, w_hh, b_ih, b_hh, reverse):
    T, B, _ = x_tbd.shape
    H = w_hh.shape[1]
    xs = x_tbd[::-1] if reverse else x_tbd

    def step(carry, x_t):
        h, c = carry
        gates = x_t @ w_ih.T + h @ w_hh.T + b_ih + b_hh
        i = jax.nn.sigmoid(gates[:, 0 * H:1 * H])
        f = jax.nn.sigmoid(gates[:, 1 * H:2 * H])
        g = jnp.tanh(gates[:, 2 * H:3 * H])
        o = jax.nn.sigmoid(gates[:, 3 * H:4 * H])
        c = f * c + i * g
        h = o * jnp.tanh(c)
        return (h, c), h

    init = (jnp.zeros((B, H), jnp.float32), jnp.zeros((B, H), jnp.float32))
    _, hs = jax.lax.scan(step, init, xs)
    return hs[::-1] if reverse else hs


def bilstm_reference(x_btc, params):
    x = jnp.transpose(x_btc, (1, 0, 2)).astype(jnp.float32)
    for layer_params in params:
        outs = [
            _ref_lstm_dir(x, w_ih, w_hh, b_ih, b_hh, reverse=(d == 1))
            for d, (w_ih, w_hh, b_ih, b_hh) in enumerate(layer_params)
        ]
        x = jnp.concatenate(outs, axis=-1)
    return jnp.transpose(x, (1, 0, 2))


if __name__ == "__main__":
    B, T = 2, 8
    in_channels = 4
    hidden_channels = 32
    num_layers = 2
    # dropout = 0.0 (eval semantics)

    key = jax.random.PRNGKey(0)
    kx, kp = jax.random.split(key)
    x = jax.random.normal(kx, (B, T, in_channels), jnp.float32)
    params = init_bilstm_params(kp, in_channels, hidden_channels, num_layers)

    ref = jax.block_until_ready(bilstm_reference(x, params))

    fwd = jax.jit(bilstm_forward, static_argnums=(2, 3))

    # 1) f32 path: exactness check against the f32 reference.
    prepped_f32 = prepare_bilstm_params(params, hidden_channels, jnp.float32)
    out_f32 = jax.block_until_ready(
        fwd(x, prepped_f32, hidden_channels, jnp.float32))
    assert out_f32.shape == (B, T, 2 * hidden_channels), out_f32.shape
    assert jnp.allclose(out_f32, ref, atol=1e-5, rtol=1e-5), (
        float(jnp.max(jnp.abs(out_f32 - ref))))

    # 2) bf16 compute path (default performance configuration).
    prepped_bf16 = prepare_bilstm_params(params, hidden_channels, jnp.bfloat16)
    out_bf16 = jax.block_until_ready(
        fwd(x, prepped_bf16, hidden_channels, jnp.bfloat16))
    assert out_bf16.shape == (B, T, 2 * hidden_channels), out_bf16.shape
    assert jnp.allclose(out_bf16, ref, atol=5e-2, rtol=5e-2), (
        float(jnp.max(jnp.abs(out_bf16 - ref))))

    print("KERNEL_OK")
</pallas_src>

<mosaic_0001>
module attributes {stable_mosaic.version = 11 : i64} {
  func.func @_bilstm_recurrent_kernel(%arg0: i32, %arg1: memref<8x8x512xf32, #tpu.memory_space<vmem>>, %arg2: memref<8x8x512xf32, #tpu.memory_space<vmem>>, %arg3: memref<256x512xf32, #tpu.memory_space<any>>, %arg4: memref<8x8x128xf32, #tpu.memory_space<vmem>>, %arg5: memref<8x8x128xf32, #tpu.memory_space<vmem>>, %arg6: memref<16x256xf32, #tpu.memory_space<vmem>>, %arg7: memref<16x128xf32, #tpu.memory_space<vmem>>, %arg8: memref<256x512xf32, #tpu.memory_space<vmem>>, %arg9: memref<1x!tpu.dma_semaphore, #tpu.memory_space<semaphore_mem>>) attributes {dimension_semantics = [#tpu.dimension_semantics<arbitrary>], iteration_bounds = array<i64: 1>, scalar_prefetch = 0 : i64, scratch_operands = 4 : i64, tpu.core_type = #tpu.core_type<tc>, window_params = [{transform_indices = @transform_0, window_bounds = array<i64: 8, 8, 512>}, {transform_indices = @transform_1, window_bounds = array<i64: 8, 8, 512>}, {}, {transform_indices = @transform_3, window_bounds = array<i64: 8, 8, 128>}, {transform_indices = @transform_4, window_bounds = array<i64: 8, 8, 128>}]} {
    %c0_i32 = arith.constant 0 : i32
    %0 = arith.cmpi eq, %arg0, %c0_i32 : i32
    %1 = arith.extui %0 : i1 to i32
    %c0_i32_0 = arith.constant 0 : i32
    %2 = arith.cmpi ne, %1, %c0_i32_0 : i32
    scf.if %2 {
      %c0_i32_182 = arith.constant 0 : i32
      %355 = tpu.memref_slice %arg9[%c0_i32_182] : memref<1x!tpu.dma_semaphore, #tpu.memory_space<semaphore_mem>> -> memref<1x!tpu.dma_semaphore, #tpu.memory_space<semaphore_mem>>
      %356 = tpu.memref_squeeze %355 : memref<1x!tpu.dma_semaphore, #tpu.memory_space<semaphore_mem>> -> memref<!tpu.dma_semaphore, #tpu.memory_space<semaphore_mem>>
      tpu.enqueue_dma source(%arg3 : memref<256x512xf32, #tpu.memory_space<any>>) target(%arg8 : memref<256x512xf32, #tpu.memory_space<vmem>>) target_semaphore(%356 : memref<!tpu.dma_semaphore, #tpu.memory_space<semaphore_mem>>)
      %cst_183 = arith.constant 0.000000e+00 : f32
      %357 = vector.broadcast %cst_183 : f32 to vector<16x256xf32>
      %c0_184 = arith.constant 0 : index
      %c0_185 = arith.constant 0 : index
      %358 = vector.load %arg6[%c0_184, %c0_185] : memref<16x256xf32, #tpu.memory_space<vmem>>, vector<16x256xf32>
      tpu.vector_store %arg6[%c0_184, %c0_185], %357 {strides = array<i32>} : memref<16x256xf32, #tpu.memory_space<vmem>>, vector<16x256xf32>,
      %cst_186 = arith.constant 0.000000e+00 : f32
      %359 = vector.broadcast %cst_186 : f32 to vector<16x128xf32>
      %c0_187 = arith.constant 0 : index
      %c0_188 = arith.constant 0 : index
      %360 = vector.load %arg7[%c0_187, %c0_188] : memref<16x128xf32, #tpu.memory_space<vmem>>, vector<16x128xf32>
      tpu.vector_store %arg7[%c0_187, %c0_188], %359 {strides = array<i32>} : memref<16x128xf32, #tpu.memory_space<vmem>>, vector<16x128xf32>,
      %c0_i32_189 = arith.constant 0 : i32
      %361 = tpu.memref_slice %arg9[%c0_i32_189] : memref<1x!tpu.dma_semaphore, #tpu.memory_space<semaphore_mem>> -> memref<1x!tpu.dma_semaphore, #tpu.memory_space<semaphore_mem>>
      %362 = tpu.memref_squeeze %361 : memref<1x!tpu.dma_semaphore, #tpu.memory_space<semaphore_mem>> -> memref<!tpu.dma_semaphore, #tpu.memory_space<semaphore_mem>>
      tpu.wait_dma2 semaphore(%362 : memref<!tpu.dma_semaphore, #tpu.memory_space<semaphore_mem>>) src(%arg3 : memref<256x512xf32, #tpu.memory_space<any>>) dst(%arg8 : memref<256x512xf32, #tpu.memory_space<vmem>>)
    } else {
    }
    %c0_i32_1 = arith.constant 0 : i32
    %c7_i32 = arith.constant 7 : i32
    %3 = arith.subi %c7_i32, %c0_i32_1 : i32
    %c0 = arith.constant 0 : index
    %c0_2 = arith.constant 0 : index
    %4 = vector.load %arg6[%c0, %c0_2] : memref<16x256xf32, #tpu.memory_space<vmem>>, vector<16x256xf32>
    %c0_3 = arith.constant 0 : index
    %c0_4 = arith.constant 0 : index
    %5 = vector.load %arg8[%c0_3, %c0_4] : memref<256x512xf32, #tpu.memory_space<vmem>>, vector<256x512xf32>
    %cst = arith.constant dense<0.000000e+00> : vector<16x512xf32>
    %6 = tpu.matmul %4, %5, %cst {dimension_numbers = #tpu.dot_dimension_numbers<[1], [0], [0], [1], [0, 0, 1, 1], [], []>} : vector<16x256xf32>, vector<256x512xf32>, vector<16x512xf32> -> vector<16x512xf32>
    %7 = arith.index_cast %c0_i32_1 : i32 to index
    %c0_5 = arith.constant 0 : index
    %c0_6 = arith.constant 0 : index
    %8 = vector.load %arg1[%7, %c0_5, %c0_6] : memref<8x8x512xf32, #tpu.memory_space<vmem>>, vector<1x8x512xf32>
    %9 = vector.shape_cast %8 : vector<1x8x512xf32> to vector<8x512xf32>
    %10 = arith.index_cast %3 : i32 to index
    %c0_7 = arith.constant 0 : index
    %c0_8 = arith.constant 0 : index
    %11 = vector.load %arg2[%10, %c0_7, %c0_8] : memref<8x8x512xf32, #tpu.memory_space<vmem>>, vector<1x8x512xf32>
    %12 = vector.shape_cast %11 : vector<1x8x512xf32> to vector<8x512xf32>
    %13 = tpu.concatenate %9, %12 in 0 : vector<8x512xf32>, vector<8x512xf32> -> vector<16x512xf32>
    %14 = arith.addf %13, %6 : vector<16x512xf32>
    %15 = vector.extract_strided_slice %14 {offsets = [0, 0], sizes = [16, 384], strides = [1, 1]} : vector<16x512xf32> to vector<16x384xf32>
    %16 = arith.negf %15 : vector<16x384xf32>
    %17 = math.exp %16 : vector<16x384xf32>
    %cst_9 = arith.constant 1.000000e+00 : f32
    %18 = vector.broadcast %cst_9 : f32 to vector<16x384xf32>
    %19 = arith.addf %18, %17 : vector<16x384xf32>
    %20 = arith.divf %18, %19 : vector<16x384xf32>
    %21 = vector.extract_strided_slice %14 {offsets = [0, 384], sizes = [16, 128], strides = [1, 1]} : vector<16x512xf32> to vector<16x128xf32>
    %22 = math.tanh %21 : vector<16x128xf32>
    %23 = vector.extract_strided_slice %20 {offsets = [0, 0], sizes = [16, 128], strides = [1, 1]} : vector<16x384xf32> to vector<16x128xf32>
    %24 = vector.extract_strided_slice %20 {offsets = [0, 128], sizes = [16, 128], strides = [1, 1]} : vector<16x384xf32> to vector<16x128xf32>
    %25 = vector.extract_strided_slice %20 {offsets = [0, 256], sizes = [16, 128], strides = [1, 1]} : vector<16x384xf32> to vector<16x128xf32>
    %c0_10 = arith.constant 0 : index
    %c0_11 = arith.constant 0 : index
    %26 = vector.load %arg7[%c0_10, %c0_11] : memref<16x128xf32, #tpu.memory_space<vmem>>, vector<16x128xf32>
    %27 = arith.mulf %24, %26 : vector<16x128xf32>
    %28 = arith.mulf %23, %22 : vector<16x128xf32>
    %29 = arith.addf %27, %28 : vector<16x128xf32>
    %30 = math.tanh %29 : vector<16x128xf32>
    %31 = arith.mulf %25, %30 : vector<16x128xf32>
    %c0_12 = arith.constant 0 : index
    %c0_13 = arith.constant 0 : index
    %32 = vector.load %arg7[%c0_12, %c0_13] : memref<16x128xf32, #tpu.memory_space<vmem>>, vector<16x128xf32>
    tpu.vector_store %arg7[%c0_12, %c0_13], %29 {strides = array<i32>} : memref<16x128xf32, #tpu.memory_space<vmem>>, vector<16x128xf32>,
    %33 = vector.extract_strided_slice %31 {offsets = [0, 0], sizes = [8, 128], strides = [1, 1]} : vector<16x128xf32> to vector<8x128xf32>
    %c0_14 = arith.constant 0 : index
    %c0_15 = arith.constant 0 : index
    %34 = vector.load %arg6[%c0_14, %c0_15] : memref<16x256xf32, #tpu.memory_space<vmem>>, vector<8x128xf32>
    tpu.vector_store %arg6[%c0_14, %c0_15], %33 {strides = array<i32>} : memref<16x256xf32, #tpu.memory_space<vmem>>, vector<8x128xf32>,
    %35 = vector.extract_strided_slice %31 {offsets = [8, 0], sizes = [8, 128], strides = [1, 1]} : vector<16x128xf32> to vector<8x128xf32>
    %c8 = arith.constant 8 : index
    %c128 = arith.constant 128 : index
    %36 = vector.load %arg6[%c8, %c128] : memref<16x256xf32, #tpu.memory_space<vmem>>, vector<8x128xf32>
    tpu.vector_store %arg6[%c8, %c128], %35 {strides = array<i32>} : memref<16x256xf32, #tpu.memory_space<vmem>>, vector<8x128xf32>,
    %37 = vector.extract_strided_slice %31 {offsets = [0, 0], sizes = [8, 128], strides = [1, 1]} : vector<16x128xf32> to vector<8x128xf32>
    %38 = arith.index_cast %c0_i32_1 : i32 to index
    %c0_16 = arith.constant 0 : index
    %c0_17 = arith.constant 0 : index
    %39 = vector.load %arg4[%38, %c0_16, %c0_17] : memref<8x8x128xf32, #tpu.memory_space<vmem>>, vector<1x8x128xf32>
    %40 = vector.shape_cast %39 : vector<1x8x128xf32> to vector<8x128xf32>
    %41 = vector.shape_cast %37 : vector<8x128xf32> to vector<1x8x128xf32>
    tpu.vector_store %arg4[%38, %c0_16, %c0_17], %41 {strides = array<i32>} : memref<8x8x128xf32, #tpu.memory_space<vmem>>, vector<1x8x128xf32>,
    %42 = vector.extract_strided_slice %31 {offsets = [8, 0], sizes = [8, 128], strides = [1, 1]} : vector<16x128xf32> to vector<8x128xf32>
    %43 = arith.index_cast %3 : i32 to index
    %c0_18 = arith.constant 0 : index
    %c0_19 = arith.constant 0 : index
    %44 = vector.load %arg5[%43, %c0_18, %c0_19] : memref<8x8x128xf32, #tpu.memory_space<vmem>>, vector<1x8x128xf32>
    %45 = vector.shape_cast %44 : vector<1x8x128xf32> to vector<8x128xf32>
    %46 = vector.shape_cast %42 : vector<8x128xf32> to vector<1x8x128xf32>
    tpu.vector_store %arg5[%43, %c0_18, %c0_19], %46 {strides = array<i32>} : memref<8x8x128xf32, #tpu.memory_space<vmem>>, vector<1x8x128xf32>,
    %c1_i32 = arith.constant 1 : i32
    %c7_i32_20 = arith.constant 7 : i32
    %47 = arith.subi %c7_i32_20, %c1_i32 : i32
    %c0_21 = arith.constant 0 : index
    %c0_22 = arith.constant 0 : index
    %48 = vector.load %arg6[%c0_21, %c0_22] : memref<16x256xf32, #tpu.memory_space<vmem>>, vector<16x256xf32>
    %c0_23 = arith.constant 0 : index
    %c0_24 = arith.constant 0 : index
    %49 = vector.load %arg8[%c0_23, %c0_24] : memref<256x512xf32, #tpu.memory_space<vmem>>, vector<256x512xf32>
    %cst_25 = arith.constant dense<0.000000e+00> : vector<16x512xf32>
    %50 = tpu.matmul %48, %49, %cst_25 {dimension_numbers = #tpu.dot_dimension_numbers<[1], [0], [0], [1], [0, 0, 1, 1], [], []>} : vector<16x256xf32>, vector<256x512xf32>, vector<16x512xf32> -> vector<16x512xf32>
    %51 = arith.index_cast %c1_i32 : i32 to index
    %c0_26 = arith.constant 0 : index
    %c0_27 = arith.constant 0 : index
    %52 = vector.load %arg1[%51, %c0_26, %c0_27] : memref<8x8x512xf32, #tpu.memory_space<vmem>>, vector<1x8x512xf32>
    %53 = vector.shape_cast %52 : vector<1x8x512xf32> to vector<8x512xf32>
    %54 = arith.index_cast %47 : i32 to index
    %c0_28 = arith.constant 0 : index
    %c0_29 = arith.constant 0 : index
    %55 = vector.load %arg2[%54, %c0_28, %c0_29] : memref<8x8x512xf32, #tpu.memory_space<vmem>>, vector<1x8x512xf32>
    %56 = vector.shape_cast %55 : vector<1x8x512xf32> to vector<8x512xf32>
    %57 = tpu.concatenate %53, %56 in 0 : vector<8x512xf32>, vector<8x512xf32> -> vector<16x512xf32>
    %58 = arith.addf %57, %50 : vector<16x512xf32>
    %59 = vector.extract_strided_slice %58 {offsets = [0, 0], sizes = [16, 384], strides = [1, 1]} : vector<16x512xf32> to vector<16x384xf32>
    %60 = arith.negf %59 : vector<16x384xf32>
    %61 = math.exp %60 : vector<16x384xf32>
    %cst_30 = arith.constant 1.000000e+00 : f32
    %62 = vector.broadcast %cst_30 : f32 to vector<16x384xf32>
    %63 = arith.addf %62, %61 : vector<16x384xf32>
    %64 = arith.divf %62, %63 : vector<16x384xf32>
    %65 = vector.extract_strided_slice %58 {offsets = [0, 384], sizes = [16, 128], strides = [1, 1]} : vector<16x512xf32> to vector<16x128xf32>
    %66 = math.tanh %65 : vector<16x128xf32>
    %67 = vector.extract_strided_slice %64 {offsets = [0, 0], sizes = [16, 128], strides = [1, 1]} : vector<16x384xf32> to vector<16x128xf32>
    %68 = vector.extract_strided_slice %64 {offsets = [0, 128], sizes = [16, 128], strides = [1, 1]} : vector<16x384xf32> to vector<16x128xf32>
    %69 = vector.extract_strided_slice %64 {offsets = [0, 256], sizes = [16, 128], strides = [1, 1]} : vector<16x384xf32> to vector<16x128xf32>
    %c0_31 = arith.constant 0 : index
    %c0_32 = arith.constant 0 : index
    %70 = vector.load %arg7[%c0_31, %c0_32] : memref<16x128xf32, #tpu.memory_space<vmem>>, vector<16x128xf32>
    %71 = arith.mulf %68, %70 : vector<16x128xf32>
    %72 = arith.mulf %67, %66 : vector<16x128xf32>
    %73 = arith.addf %71, %72 : vector<16x128xf32>
    %74 = math.tanh %73 : vector<16x128xf32>
    %75 = arith.mulf %69, %74 : vector<16x128xf32>
    %c0_33 = arith.constant 0 : index
    %c0_34 = arith.constant 0 : index
    %76 = vector.load %arg7[%c0_33, %c0_34] : memref<16x128xf32, #tpu.memory_space<vmem>>, vector<16x128xf32>
    tpu.vector_store %arg7[%c0_33, %c0_34], %73 {strides = array<i32>} : memref<16x128xf32, #tpu.memory_space<vmem>>, vector<16x128xf32>,
    %77 = vector.extract_strided_slice %75 {offsets = [0, 0], sizes = [8, 128], strides = [1, 1]} : vector<16x128xf32> to vector<8x128xf32>
    %c0_35 = arith.constant 0 : index
    %c0_36 = arith.constant 0 : index
    %78 = vector.load %arg6[%c0_35, %c0_36] : memref<16x256xf32, #tpu.memory_space<vmem>>, vector<8x128xf32>
    tpu.vector_store %arg6[%c0_35, %c0_36], %77 {strides = array<i32>} : memref<16x256xf32, #tpu.memory_space<vmem>>, vector<8x128xf32>,
    %79 = vector.extract_strided_slice %75 {offsets = [8, 0], sizes = [8, 128], strides = [1, 1]} : vector<16x128xf32> to vector<8x128xf32>
    %c8_37 = arith.constant 8 : index
    %c128_38 = arith.constant 128 : index
    %80 = vector.load %arg6[%c8_37, %c128_38] : memref<16x256xf32, #tpu.memory_space<vmem>>, vector<8x128xf32>
    tpu.vector_store %arg6[%c8_37, %c128_38], %79 {strides = array<i32>} : memref<16x256xf32, #tpu.memory_space<vmem>>, vector<8x128xf32>,
    %81 = vector.extract_strided_slice %75 {offsets = [0, 0], sizes = [8, 128], strides = [1, 1]} : vector<16x128xf32> to vector<8x128xf32>
    %82 = arith.index_cast %c1_i32 : i32 to index
    %c0_39 = arith.constant 0 : index
    %c0_40 = arith.constant 0 : index
    %83 = vector.load %arg4[%82, %c0_39, %c0_40] : memref<8x8x128xf32, #tpu.memory_space<vmem>>, vector<1x8x128xf32>
    %84 = vector.shape_cast %83 : vector<1x8x128xf32> to vector<8x128xf32>
    %85 = vector.shape_cast %81 : vector<8x128xf32> to vector<1x8x128xf32>
    tpu.vector_store %arg4[%82, %c0_39, %c0_40], %85 {strides = array<i32>} : memref<8x8x128xf32, #tpu.memory_space<vmem>>, vector<1x8x128xf32>,
    %86 = vector.extract_strided_slice %75 {offsets = [8, 0], sizes = [8, 128], strides = [1, 1]} : vector<16x128xf32> to vector<8x128xf32>
    %87 = arith.index_cast %47 : i32 to index
    %c0_41 = arith.constant 0 : index
    %c0_42 = arith.constant 0 : index
    %88 = vector.load %arg5[%87, %c0_41, %c0_42] : memref<8x8x128xf32, #tpu.memory_space<vmem>>, vector<1x8x128xf32>
    %89 = vector.shape_cast %88 : vector<1x8x128xf32> to vector<8x128xf32>
    %90 = vector.shape_cast %86 : vector<8x128xf32> to vector<1x8x128xf32>
    tpu.vector_store %arg5[%87, %c0_41, %c0_42], %90 {strides = array<i32>} : memref<8x8x128xf32, #tpu.memory_space<vmem>>, vector<1x8x128xf32>,
    %c2_i32 = arith.constant 2 : i32
    %c7_i32_43 = arith.constant 7 : i32
    %91 = arith.subi %c7_i32_43, %c2_i32 : i32
    %c0_44 = arith.constant 0 : index
    %c0_45 = arith.constant 0 : index
    %92 = vector.load %arg6[%c0_44, %c0_45] : memref<16x256xf32, #tpu.memory_space<vmem>>, vector<16x256xf32>
    %c0_46 = arith.constant 0 : index
    %c0_47 = arith.constant 0 : index
    %93 = vector.load %arg8[%c0_46, %c0_47] : memref<256x512xf32, #tpu.memory_space<vmem>>, vector<256x512xf32>
    %cst_48 = arith.constant dense<0.000000e+00> : vector<16x512xf32>
    %94 = tpu.matmul %92, %93, %cst_48 {dimension_numbers = #tpu.dot_dimension_numbers<[1], [0], [0], [1], [0, 0, 1, 1], [], []>} : vector<16x256xf32>, vector<256x512xf32>, vector<16x512xf32> -> vector<16x512xf32>
    %95 = arith.index_cast %c2_i32 : i32 to index
    %c0_49 = arith.constant 0 : index
    %c0_50 = arith.constant 0 : index
    %96 = vector.load %arg1[%95, %c0_49, %c0_50] : memref<8x8x512xf32, #tpu.memory_space<vmem>>, vector<1x8x512xf32>
    %97 = vector.shape_cast %96 : vector<1x8x512xf32> to vector<8x512xf32>
    %98 = arith.index_cast %91 : i32 to index
    %c0_51 = arith.constant 0 : index
    %c0_52 = arith.constant 0 : index
    %99 = vector.load %arg2[%98, %c0_51, %c0_52] : memref<8x8x512xf32, #tpu.memory_space<vmem>>, vector<1x8x512xf32>
    %100 = vector.shape_cast %99 : vector<1x8x512xf32> to vector<8x512xf32>
    %101 = tpu.concatenate %97, %100 in 0 : vector<8x512xf32>, vector<8x512xf32> -> vector<16x512xf32>
    %102 = arith.addf %101, %94 : vector<16x512xf32>
    %103 = vector.extract_strided_slice %102 {offsets = [0, 0], sizes = [16, 384], strides = [1, 1]} : vector<16x512xf32> to vector<16x384xf32>
    %104 = arith.negf %103 : vector<16x384xf32>
    %105 = math.exp %104 : vector<16x384xf32>
    %cst_53 = arith.constant 1.000000e+00 : f32
    %106 = vector.broadcast %cst_53 : f32 to vector<16x384xf32>
    %107 = arith.addf %106, %105 : vector<16x384xf32>
    %108 = arith.divf %106, %107 : vector<16x384xf32>
    %109 = vector.extract_strided_slice %102 {offsets = [0, 384], sizes = [16, 128], strides = [1, 1]} : vector<16x512xf32> to vector<16x128xf32>
    %110 = math.tanh %109 : vector<16x128xf32>
    %111 = vector.extract_strided_slice %108 {offsets = [0, 0], sizes = [16, 128], strides = [1, 1]} : vector<16x384xf32> to vector<16x128xf32>
    %112 = vector.extract_strided_slice %108 {offsets = [0, 128], sizes = [16, 128], strides = [1, 1]} : vector<16x384xf32> to vector<16x128xf32>
    %113 = vector.extract_strided_slice %108 {offsets = [0, 256], sizes = [16, 128], strides = [1, 1]} : vector<16x384xf32> to vector<16x128xf32>
    %c0_54 = arith.constant 0 : index
    %c0_55 = arith.constant 0 : index
    %114 = vector.load %arg7[%c0_54, %c0_55] : memref<16x128xf32, #tpu.memory_space<vmem>>, vector<16x128xf32>
    %115 = arith.mulf %112, %114 : vector<16x128xf32>
    %116 = arith.mulf %111, %110 : vector<16x128xf32>
    %117 = arith.addf %115, %116 : vector<16x128xf32>
    %118 = math.tanh %117 : vector<16x128xf32>
    %119 = arith.mulf %113, %118 : vector<16x128xf32>
    %c0_56 = arith.constant 0 : index
    %c0_57 = arith.constant 0 : index
    %120 = vector.load %arg7[%c0_56, %c0_57] : memref<16x128xf32, #tpu.memory_space<vmem>>, vector<16x128xf32>
    tpu.vector_store %arg7[%c0_56, %c0_57], %117 {strides = array<i32>} : memref<16x128xf32, #tpu.memory_space<vmem>>, vector<16x128xf32>,
    %121 = vector.extract_strided_slice %119 {offsets = [0, 0], sizes = [8, 128], strides = [1, 1]} : vector<16x128xf32> to vector<8x128xf32>
    %c0_58 = arith.constant 0 : index
    %c0_59 = arith.constant 0 : index
    %122 = vector.load %arg6[%c0_58, %c0_59] : memref<16x256xf32, #tpu.memory_space<vmem>>, vector<8x128xf32>
    tpu.vector_store %arg6[%c0_58, %c0_59], %121 {strides = array<i32>} : memref<16x256xf32, #tpu.memory_space<vmem>>, vector<8x128xf32>,
    %123 = vector.extract_strided_slice %119 {offsets = [8, 0], sizes = [8, 128], strides = [1, 1]} : vector<16x128xf32> to vector<8x128xf32>
    %c8_60 = arith.constant 8 : index
    %c128_61 = arith.constant 128 : index
    %124 = vector.load %arg6[%c8_60, %c128_61] : memref<16x256xf32, #tpu.memory_space<vmem>>, vector<8x128xf32>
    tpu.vector_store %arg6[%c8_60, %c128_61], %123 {strides = array<i32>} : memref<16x256xf32, #tpu.memory_space<vmem>>, vector<8x128xf32>,
    %125 = vector.extract_strided_slice %119 {offsets = [0, 0], sizes = [8, 128], strides = [1, 1]} : vector<16x128xf32> to vector<8x128xf32>
    %126 = arith.index_cast %c2_i32 : i32 to index
    %c0_62 = arith.constant 0 : index
    %c0_63 = arith.constant 0 : index
    %127 = vector.load %arg4[%126, %c0_62, %c0_63] : memref<8x8x128xf32, #tpu.memory_space<vmem>>, vector<1x8x128xf32>
    %128 = vector.shape_cast %127 : vector<1x8x128xf32> to vector<8x128xf32>
    %129 = vector.shape_cast %125 : vector<8x128xf32> to vector<1x8x128xf32>
    tpu.vector_store %arg4[%126, %c0_62, %c0_63], %129 {strides = array<i32>} : memref<8x8x128xf32, #tpu.memory_space<vmem>>, vector<1x8x128xf32>,
    %130 = vector.extract_strided_slice %119 {offsets = [8, 0], sizes = [8, 128], strides = [1, 1]} : vector<16x128xf32> to vector<8x128xf32>
    %131 = arith.index_cast %91 : i32 to index
    %c0_64 = arith.constant 0 : index
    %c0_65 = arith.constant 0 : index
    %132 = vector.load %arg5[%131, %c0_64, %c0_65] : memref<8x8x128xf32, #tpu.memory_space<vmem>>, vector<1x8x128xf32>
    %133 = vector.shape_cast %132 : vector<1x8x128xf32> to vector<8x128xf32>
    %134 = vector.shape_cast %130 : vector<8x128xf32> to vector<1x8x128xf32>
    tpu.vector_store %arg5[%131, %c0_64, %c0_65], %134 {strides = array<i32>} : memref<8x8x128xf32, #tpu.memory_space<vmem>>, vector<1x8x128xf32>,
    %c3_i32 = arith.constant 3 : i32
    %c7_i32_66 = arith.constant 7 : i32
    %135 = arith.subi %c7_i32_66, %c3_i32 : i32
    %c0_67 = arith.constant 0 : index
    %c0_68 = arith.constant 0 : index
    %136 = vector.load %arg6[%c0_67, %c0_68] : memref<16x256xf32, #tpu.memory_space<vmem>>, vector<16x256xf32>
    %c0_69 = arith.constant 0 : index
    %c0_70 = arith.constant 0 : index
    %137 = vector.load %arg8[%c0_69, %c0_70] : memref<256x512xf32, #tpu.memory_space<vmem>>, vector<256x512xf32>
    %cst_71 = arith.constant dense<0.000000e+00> : vector<16x512xf32>
    %138 = tpu.matmul %136, %137, %cst_71 {dimension_numbers = #tpu.dot_dimension_numbers<[1], [0], [0], [1], [0, 0, 1, 1], [], []>} : vector<16x256xf32>, vector<256x512xf32>, vector<16x512xf32> -> vector<16x512xf32>
    %139 = arith.index_cast %c3_i32 : i32 to index
    %c0_72 = arith.constant 0 : index
    %c0_73 = arith.constant 0 : index
    %140 = vector.load %arg1[%139, %c0_72, %c0_73] : memref<8x8x512xf32, #tpu.memory_space<vmem>>, vector<1x8x512xf32>
    %141 = vector.shape_cast %140 : vector<1x8x512xf32> to vector<8x512xf32>
    %142 = arith.index_cast %135 : i32 to index
    %c0_74 = arith.constant 0 : index
    %c0_75 = arith.constant 0 : index
    %143 = vector.load %arg2[%142, %c0_74, %c0_75] : memref<8x8x512xf32, #tpu.memory_space<vmem>>, vector<1x8x512xf32>
    %144 = vector.shape_cast %143 : vector<1x8x512xf32> to vector<8x512xf32>
    %145 = tpu.concatenate %141, %144 in 0 : vector<8x512xf32>, vector<8x512xf32> -> vector<16x512xf32>
    %146 = arith.addf %145, %138 : vector<16x512xf32>
    %147 = vector.extract_strided_slice %146 {offsets = [0, 0], sizes = [16, 384], strides = [1, 1]} : vector<16x512xf32> to vector<16x384xf32>
    %148 = arith.negf %147 : vector<16x384xf32>
    %149 = math.exp %148 : vector<16x384xf32>
    %cst_76 = arith.constant 1.000000e+00 : f32
    %150 = vector.broadcast %cst_76 : f32 to vector<16x384xf32>
    %151 = arith.addf %150, %149 : vector<16x384xf32>
    %152 = arith.divf %150, %151 : vector<16x384xf32>
    %153 = vector.extract_strided_slice %146 {offsets = [0, 384], sizes = [16, 128], strides = [1, 1]} : vector<16x512xf32> to vector<16x128xf32>
    %154 = math.tanh %153 : vector<16x128xf32>
    %155 = vector.extract_strided_slice %152 {offsets = [0, 0], sizes = [16, 128], strides = [1, 1]} : vector<16x384xf32> to vector<16x128xf32>
    %156 = vector.extract_strided_slice %152 {offsets = [0, 128], sizes = [16, 128], strides = [1, 1]} : vector<16x384xf32> to vector<16x128xf32>
    %157 = vector.extract_strided_slice %152 {offsets = [0, 256], sizes = [16, 128], strides = [1, 1]} : vector<16x384xf32> to vector<16x128xf32>
    %c0_77 = arith.constant 0 : index
    %c0_78 = arith.constant 0 : index
    %158 = vector.load %arg7[%c0_77, %c0_78] : memref<16x128xf32, #tpu.memory_space<vmem>>, vector<16x128xf32>
    %159 = arith.mulf %156, %158 : vector<16x128xf32>
    %160 = arith.mulf %155, %154 : vector<16x128xf32>
    %161 = arith.addf %159, %160 : vector<16x128xf32>
    %162 = math.tanh %161 : vector<16x128xf32>
    %163 = arith.mulf %157, %162 : vector<16x128xf32>
    %c0_79 = arith.constant 0 : index
    %c0_80 = arith.constant 0 : index
    %164 = vector.load %arg7[%c0_79, %c0_80] : memref<16x128xf32, #tpu.memory_space<vmem>>, vector<16x128xf32>
    tpu.vector_store %arg7[%c0_79, %c0_80], %161 {strides = array<i32>} : memref<16x128xf32, #tpu.memory_space<vmem>>, vector<16x128xf32>,
    %165 = vector.extract_strided_slice %163 {offsets = [0, 0], sizes = [8, 128], strides = [1, 1]} : vector<16x128xf32> to vector<8x128xf32>
    %c0_81 = arith.constant 0 : index
    %c0_82 = arith.constant 0 : index
    %166 = vector.load %arg6[%c0_81, %c0_82] : memref<16x256xf32, #tpu.memory_space<vmem>>, vector<8x128xf32>
    tpu.vector_store %arg6[%c0_81, %c0_82], %165 {strides = array<i32>} : memref<16x256xf32, #tpu.memory_space<vmem>>, vector<8x128xf32>,
    %167 = vector.extract_strided_slice %163 {offsets = [8, 0], sizes = [8, 128], strides = [1, 1]} : vector<16x128xf32> to vector<8x128xf32>
    %c8_83 = arith.constant 8 : index
    %c128_84 = arith.constant 128 : index
    %168 = vector.load %arg6[%c8_83, %c128_84] : memref<16x256xf32, #tpu.memory_space<vmem>>, vector<8x128xf32>
    tpu.vector_store %arg6[%c8_83, %c128_84], %167 {strides = array<i32>} : memref<16x256xf32, #tpu.memory_space<vmem>>, vector<8x128xf32>,
    %169 = vector.extract_strided_slice %163 {offsets = [0, 0], sizes = [8, 128], strides = [1, 1]} : vector<16x128xf32> to vector<8x128xf32>
    %170 = arith.index_cast %c3_i32 : i32 to index
    %c0_85 = arith.constant 0 : index
    %c0_86 = arith.constant 0 : index
    %171 = vector.load %arg4[%170, %c0_85, %c0_86] : memref<8x8x128xf32, #tpu.memory_space<vmem>>, vector<1x8x128xf32>
    %172 = vector.shape_cast %171 : vector<1x8x128xf32> to vector<8x128xf32>
    %173 = vector.shape_cast %169 : vector<8x128xf32> to vector<1x8x128xf32>
    tpu.vector_store %arg4[%170, %c0_85, %c0_86], %173 {strides = array<i32>} : memref<8x8x128xf32, #tpu.memory_space<vmem>>, vector<1x8x128xf32>,
    %174 = vector.extract_strided_slice %163 {offsets = [8, 0], sizes = [8, 128], strides = [1, 1]} : vector<16x128xf32> to vector<8x128xf32>
    %175 = arith.index_cast %135 : i32 to index
    %c0_87 = arith.constant 0 : index
    %c0_88 = arith.constant 0 : index
    %176 = vector.load %arg5[%175, %c0_87, %c0_88] : memref<8x8x128xf32, #tpu.memory_space<vmem>>, vector<1x8x128xf32>
    %177 = vector.shape_cast %176 : vector<1x8x128xf32> to vector<8x128xf32>
    %178 = vector.shape_cast %174 : vector<8x128xf32> to vector<1x8x128xf32>
    tpu.vector_store %arg5[%175, %c0_87, %c0_88], %178 {strides = array<i32>} : memref<8x8x128xf32, #tpu.memory_space<vmem>>, vector<1x8x128xf32>,
    %c4_i32 = arith.constant 4 : i32
    %c7_i32_89 = arith.constant 7 : i32
    %179 = arith.subi %c7_i32_89, %c4_i32 : i32
    %c0_90 = arith.constant 0 : index
    %c0_91 = arith.constant 0 : index
    %180 = vector.load %arg6[%c0_90, %c0_91] : memref<16x256xf32, #tpu.memory_space<vmem>>, vector<16x256xf32>
    %c0_92 = arith.constant 0 : index
    %c0_93 = arith.constant 0 : index
    %181 = vector.load %arg8[%c0_92, %c0_93] : memref<256x512xf32, #tpu.memory_space<vmem>>, vector<256x512xf32>
    %cst_94 = arith.constant dense<0.000000e+00> : vector<16x512xf32>
    %182 = tpu.matmul %180, %181, %cst_94 {dimension_numbers = #tpu.dot_dimension_numbers<[1], [0], [0], [1], [0, 0, 1, 1], [], []>} : vector<16x256xf32>, vector<256x512xf32>, vector<16x512xf32> -> vector<16x512xf32>
    %183 = arith.index_cast %c4_i32 : i32 to index
    %c0_95 = arith.constant 0 : index
    %c0_96 = arith.constant 0 : index
    %184 = vector.load %arg1[%183, %c0_95, %c0_96] : memref<8x8x512xf32, #tpu.memory_space<vmem>>, vector<1x8x512xf32>
    %185 = vector.shape_cast %184 : vector<1x8x512xf32> to vector<8x512xf32>
    %186 = arith.index_cast %179 : i32 to index
    %c0_97 = arith.constant 0 : index
    %c0_98 = arith.constant 0 : index
    %187 = vector.load %arg2[%186, %c0_97, %c0_98] : memref<8x8x512xf32, #tpu.memory_space<vmem>>, vector<1x8x512xf32>
    %188 = vector.shape_cast %187 : vector<1x8x512xf32> to vector<8x512xf32>
    %189 = tpu.concatenate %185, %188 in 0 : vector<8x512xf32>, vector<8x512xf32> -> vector<16x512xf32>
    %190 = arith.addf %189, %182 : vector<16x512xf32>
    %191 = vector.extract_strided_slice %190 {offsets = [0, 0], sizes = [16, 384], strides = [1, 1]} : vector<16x512xf32> to vector<16x384xf32>
    %192 = arith.negf %191 : vector<16x384xf32>
    %193 = math.exp %192 : vector<16x384xf32>
    %cst_99 = arith.constant 1.000000e+00 : f32
    %194 = vector.broadcast %cst_99 : f32 to vector<16x384xf32>
    %195 = arith.addf %194, %193 : vector<16x384xf32>
    %196 = arith.divf %194, %195 : vector<16x384xf32>
    %197 = vector.extract_strided_slice %190 {offsets = [0, 384], sizes = [16, 128], strides = [1, 1]} : vector<16x512xf32> to vector<16x128xf32>
    %198 = math.tanh %197 : vector<16x128xf32>
    %199 = vector.extract_strided_slice %196 {offsets = [0, 0], sizes = [16, 128], strides = [1, 1]} : vector<16x384xf32> to vector<16x128xf32>
    %200 = vector.extract_strided_slice %196 {offsets = [0, 128], sizes = [16, 128], strides = [1, 1]} : vector<16x384xf32> to vector<16x128xf32>
    %201 = vector.extract_strided_slice %196 {offsets = [0, 256], sizes = [16, 128], strides = [1, 1]} : vector<16x384xf32> to vector<16x128xf32>
    %c0_100 = arith.constant 0 : index
    %c0_101 = arith.constant 0 : index
    %202 = vector.load %arg7[%c0_100, %c0_101] : memref<16x128xf32, #tpu.memory_space<vmem>>, vector<16x128xf32>
    %203 = arith.mulf %200, %202 : vector<16x128xf32>
    %204 = arith.mulf %199, %198 : vector<16x128xf32>
    %205 = arith.addf %203, %204 : vector<16x128xf32>
    %206 = math.tanh %205 : vector<16x128xf32>
    %207 = arith.mulf %201, %206 : vector<16x128xf32>
    %c0_102 = arith.constant 0 : index
    %c0_103 = arith.constant 0 : index
    %208 = vector.load %arg7[%c0_102, %c0_103] : memref<16x128xf32, #tpu.memory_space<vmem>>, vector<16x128xf32>
    tpu.vector_store %arg7[%c0_102, %c0_103], %205 {strides = array<i32>} : memref<16x128xf32, #tpu.memory_space<vmem>>, vector<16x128xf32>,
    %209 = vector.extract_strided_slice %207 {offsets = [0, 0], sizes = [8, 128], strides = [1, 1]} : vector<16x128xf32> to vector<8x128xf32>
    %c0_104 = arith.constant 0 : index
    %c0_105 = arith.constant 0 : index
    %210 = vector.load %arg6[%c0_104, %c0_105] : memref<16x256xf32, #tpu.memory_space<vmem>>, vector<8x128xf32>
    tpu.vector_store %arg6[%c0_104, %c0_105], %209 {strides = array<i32>} : memref<16x256xf32, #tpu.memory_space<vmem>>, vector<8x128xf32>,
    %211 = vector.extract_strided_slice %207 {offsets = [8, 0], sizes = [8, 128], strides = [1, 1]} : vector<16x128xf32> to vector<8x128xf32>
    %c8_106 = arith.constant 8 : index
    %c128_107 = arith.constant 128 : index
    %212 = vector.load %arg6[%c8_106, %c128_107] : memref<16x256xf32, #tpu.memory_space<vmem>>, vector<8x128xf32>
    tpu.vector_store %arg6[%c8_106, %c128_107], %211 {strides = array<i32>} : memref<16x256xf32, #tpu.memory_space<vmem>>, vector<8x128xf32>,
    %213 = vector.extract_strided_slice %207 {offsets = [0, 0], sizes = [8, 128], strides = [1, 1]} : vector<16x128xf32> to vector<8x128xf32>
    %214 = arith.index_cast %c4_i32 : i32 to index
    %c0_108 = arith.constant 0 : index
    %c0_109 = arith.constant 0 : index
    %215 = vector.load %arg4[%214, %c0_108, %c0_109] : memref<8x8x128xf32, #tpu.memory_space<vmem>>, vector<1x8x128xf32>
    %216 = vector.shape_cast %215 : vector<1x8x128xf32> to vector<8x128xf32>
    %217 = vector.shape_cast %213 : vector<8x128xf32> to vector<1x8x128xf32>
    tpu.vector_store %arg4[%214, %c0_108, %c0_109], %217 {strides = array<i32>} : memref<8x8x128xf32, #tpu.memory_space<vmem>>, vector<1x8x128xf32>,
    %218 = vector.extract_strided_slice %207 {offsets = [8, 0], sizes = [8, 128], strides = [1, 1]} : vector<16x128xf32> to vector<8x128xf32>
    %219 = arith.index_cast %179 : i32 to index
    %c0_110 = arith.constant 0 : index
    %c0_111 = arith.constant 0 : index
    %220 = vector.load %arg5[%219, %c0_110, %c0_111] : memref<8x8x128xf32, #tpu.memory_space<vmem>>, vector<1x8x128xf32>
    %221 = vector.shape_cast %220 : vector<1x8x128xf32> to vector<8x128xf32>
    %222 = vector.shape_cast %218 : vector<8x128xf32> to vector<1x8x128xf32>
    tpu.vector_store %arg5[%219, %c0_110, %c0_111], %222 {strides = array<i32>} : memref<8x8x128xf32, #tpu.memory_space<vmem>>, vector<1x8x128xf32>,
    %c5_i32 = arith.constant 5 : i32
    %c7_i32_112 = arith.constant 7 : i32
    %223 = arith.subi %c7_i32_112, %c5_i32 : i32
    %c0_113 = arith.constant 0 : index
    %c0_114 = arith.constant 0 : index
    %224 = vector.load %arg6[%c0_113, %c0_114] : memref<16x256xf32, #tpu.memory_space<vmem>>, vector<16x256xf32>
    %c0_115 = arith.constant 0 : index
    %c0_116 = arith.constant 0 : index
    %225 = vector.load %arg8[%c0_115, %c0_116] : memref<256x512xf32, #tpu.memory_space<vmem>>, vector<256x512xf32>
    %cst_117 = arith.constant dense<0.000000e+00> : vector<16x512xf32>
    %226 = tpu.matmul %224, %225, %cst_117 {dimension_numbers = #tpu.dot_dimension_numbers<[1], [0], [0], [1], [0, 0, 1, 1], [], []>} : vector<16x256xf32>, vector<256x512xf32>, vector<16x512xf32> -> vector<16x512xf32>
    %227 = arith.index_cast %c5_i32 : i32 to index
    %c0_118 = arith.constant 0 : index
    %c0_119 = arith.constant 0 : index
    %228 = vector.load %arg1[%227, %c0_118, %c0_119] : memref<8x8x512xf32, #tpu.memory_space<vmem>>, vector<1x8x512xf32>
    %229 = vector.shape_cast %228 : vector<1x8x512xf32> to vector<8x512xf32>
    %230 = arith.index_cast %223 : i32 to index
    %c0_120 = arith.constant 0 : index
    %c0_121 = arith.constant 0 : index
    %231 = vector.load %arg2[%230, %c0_120, %c0_121] : memref<8x8x512xf32, #tpu.memory_space<vmem>>, vector<1x8x512xf32>
    %232 = vector.shape_cast %231 : vector<1x8x512xf32> to vector<8x512xf32>
    %233 = tpu.concatenate %229, %232 in 0 : vector<8x512xf32>, vector<8x512xf32> -> vector<16x512xf32>
    %234 = arith.addf %233, %226 : vector<16x512xf32>
    %235 = vector.extract_strided_slice %234 {offsets = [0, 0], sizes = [16, 384], strides = [1, 1]} : vector<16x512xf32> to vector<16x384xf32>
    %236 = arith.negf %235 : vector<16x384xf32>
    %237 = math.exp %236 : vector<16x384xf32>
    %cst_122 = arith.constant 1.000000e+00 : f32
    %238 = vector.broadcast %cst_122 : f32 to vector<16x384xf32>
    %239 = arith.addf %238, %237 : vector<16x384xf32>
    %240 = arith.divf %238, %239 : vector<16x384xf32>
    %241 = vector.extract_strided_slice %234 {offsets = [0, 384], sizes = [16, 128], strides = [1, 1]} : vector<16x512xf32> to vector<16x128xf32>
    %242 = math.tanh %241 : vector<16x128xf32>
    %243 = vector.extract_strided_slice %240 {offsets = [0, 0], sizes = [16, 128], strides = [1, 1]} : vector<16x384xf32> to vector<16x128xf32>
    %244 = vector.extract_strided_slice %240 {offsets = [0, 128], sizes = [16, 128], strides = [1, 1]} : vector<16x384xf32> to vector<16x128xf32>
    %245 = vector.extract_strided_slice %240 {offsets = [0, 256], sizes = [16, 128], strides = [1, 1]} : vector<16x384xf32> to vector<16x128xf32>
    %c0_123 = arith.constant 0 : index
    %c0_124 = arith.constant 0 : index
    %246 = vector.load %arg7[%c0_123, %c0_124] : memref<16x128xf32, #tpu.memory_space<vmem>>, vector<16x128xf32>
    %247 = arith.mulf %244, %246 : vector<16x128xf32>
    %248 = arith.mulf %243, %242 : vector<16x128xf32>
    %249 = arith.addf %247, %248 : vector<16x128xf32>
    %250 = math.tanh %249 : vector<16x128xf32>
    %251 = arith.mulf %245, %250 : vector<16x128xf32>
    %c0_125 = arith.constant 0 : index
    %c0_126 = arith.constant 0 : index
    %252 = vector.load %arg7[%c0_125, %c0_126] : memref<16x128xf32, #tpu.memory_space<vmem>>, vector<16x128xf32>
    tpu.vector_store %arg7[%c0_125, %c0_126], %249 {strides = array<i32>} : memref<16x128xf32, #tpu.memory_space<vmem>>, vector<16x128xf32>,
    %253 = vector.extract_strided_slice %251 {offsets = [0, 0], sizes = [8, 128], strides = [1, 1]} : vector<16x128xf32> to vector<8x128xf32>
    %c0_127 = arith.constant 0 : index
    %c0_128 = arith.constant 0 : index
    %254 = vector.load %arg6[%c0_127, %c0_128] : memref<16x256xf32, #tpu.memory_space<vmem>>, vector<8x128xf32>
    tpu.vector_store %arg6[%c0_127, %c0_128], %253 {strides = array<i32>} : memref<16x256xf32, #tpu.memory_space<vmem>>, vector<8x128xf32>,
    %255 = vector.extract_strided_slice %251 {offsets = [8, 0], sizes = [8, 128], strides = [1, 1]} : vector<16x128xf32> to vector<8x128xf32>
    %c8_129 = arith.constant 8 : index
    %c128_130 = arith.constant 128 : index
    %256 = vector.load %arg6[%c8_129, %c128_130] : memref<16x256xf32, #tpu.memory_space<vmem>>, vector<8x128xf32>
    tpu.vector_store %arg6[%c8_129, %c128_130], %255 {strides = array<i32>} : memref<16x256xf32, #tpu.memory_space<vmem>>, vector<8x128xf32>,
    %257 = vector.extract_strided_slice %251 {offsets = [0, 0], sizes = [8, 128], strides = [1, 1]} : vector<16x128xf32> to vector<8x128xf32>
    %258 = arith.index_cast %c5_i32 : i32 to index
    %c0_131 = arith.constant 0 : index
    %c0_132 = arith.constant 0 : index
    %259 = vector.load %arg4[%258, %c0_131, %c0_132] : memref<8x8x128xf32, #tpu.memory_space<vmem>>, vector<1x8x128xf32>
    %260 = vector.shape_cast %259 : vector<1x8x128xf32> to vector<8x128xf32>
    %261 = vector.shape_cast %257 : vector<8x128xf32> to vector<1x8x128xf32>
    tpu.vector_store %arg4[%258, %c0_131, %c0_132], %261 {strides = array<i32>} : memref<8x8x128xf32, #tpu.memory_space<vmem>>, vector<1x8x128xf32>,
    %262 = vector.extract_strided_slice %251 {offsets = [8, 0], sizes = [8, 128], strides = [1, 1]} : vector<16x128xf32> to vector<8x128xf32>
    %263 = arith.index_cast %223 : i32 to index
    %c0_133 = arith.constant 0 : index
    %c0_134 = arith.constant 0 : index
    %264 = vector.load %arg5[%263, %c0_133, %c0_134] : memref<8x8x128xf32, #tpu.memory_space<vmem>>, vector<1x8x128xf32>
    %265 = vector.shape_cast %264 : vector<1x8x128xf32> to vector<8x128xf32>
    %266 = vector.shape_cast %262 : vector<8x128xf32> to vector<1x8x128xf32>
    tpu.vector_store %arg5[%263, %c0_133, %c0_134], %266 {strides = array<i32>} : memref<8x8x128xf32, #tpu.memory_space<vmem>>, vector<1x8x128xf32>,
    %c6_i32 = arith.constant 6 : i32
    %c7_i32_135 = arith.constant 7 : i32
    %267 = arith.subi %c7_i32_135, %c6_i32 : i32
    %c0_136 = arith.constant 0 : index
    %c0_137 = arith.constant 0 : index
    %268 = vector.load %arg6[%c0_136, %c0_137] : memref<16x256xf32, #tpu.memory_space<vmem>>, vector<16x256xf32>
    %c0_138 = arith.constant 0 : index
    %c0_139 = arith.constant 0 : index
    %269 = vector.load %arg8[%c0_138, %c0_139] : memref<256x512xf32, #tpu.memory_space<vmem>>, vector<256x512xf32>
    %cst_140 = arith.constant dense<0.000000e+00> : vector<16x512xf32>
    %270 = tpu.matmul %268, %269, %cst_140 {dimension_numbers = #tpu.dot_dimension_numbers<[1], [0], [0], [1], [0, 0, 1, 1], [], []>} : vector<16x256xf32>, vector<256x512xf32>, vector<16x512xf32> -> vector<16x512xf32>
    %271 = arith.index_cast %c6_i32 : i32 to index
    %c0_141 = arith.constant 0 : index
    %c0_142 = arith.constant 0 : index
    %272 = vector.load %arg1[%271, %c0_141, %c0_142] : memref<8x8x512xf32, #tpu.memory_space<vmem>>, vector<1x8x512xf32>
    %273 = vector.shape_cast %272 : vector<1x8x512xf32> to vector<8x512xf32>
    %274 = arith.index_cast %267 : i32 to index
    %c0_143 = arith.constant 0 : index
    %c0_144 = arith.constant 0 : index
    %275 = vector.load %arg2[%274, %c0_143, %c0_144] : memref<8x8x512xf32, #tpu.memory_space<vmem>>, vector<1x8x512xf32>
    %276 = vector.shape_cast %275 : vector<1x8x512xf32> to vector<8x512xf32>
    %277 = tpu.concatenate %273, %276 in 0 : vector<8x512xf32>, vector<8x512xf32> -> vector<16x512xf32>
    %278 = arith.addf %277, %270 : vector<16x512xf32>
    %279 = vector.extract_strided_slice %278 {offsets = [0, 0], sizes = [16, 384], strides = [1, 1]} : vector<16x512xf32> to vector<16x384xf32>
    %280 = arith.negf %279 : vector<16x384xf32>
    %281 = math.exp %280 : vector<16x384xf32>
    %cst_145 = arith.constant 1.000000e+00 : f32
    %282 = vector.broadcast %cst_145 : f32 to vector<16x384xf32>
    %283 = arith.addf %282, %281 : vector<16x384xf32>
    %284 = arith.divf %282, %283 : vector<16x384xf32>
    %285 = vector.extract_strided_slice %278 {offsets = [0, 384], sizes = [16, 128], strides = [1, 1]} : vector<16x512xf32> to vector<16x128xf32>
    %286 = math.tanh %285 : vector<16x128xf32>
    %287 = vector.extract_strided_slice %284 {offsets = [0, 0], sizes = [16, 128], strides = [1, 1]} : vector<16x384xf32> to vector<16x128xf32>
    %288 = vector.extract_strided_slice %284 {offsets = [0, 128], sizes = [16, 128], strides = [1, 1]} : vector<16x384xf32> to vector<16x128xf32>
    %289 = vector.extract_strided_slice %284 {offsets = [0, 256], sizes = [16, 128], strides = [1, 1]} : vector<16x384xf32> to vector<16x128xf32>
    %c0_146 = arith.constant 0 : index
    %c0_147 = arith.constant 0 : index
    %290 = vector.load %arg7[%c0_146, %c0_147] : memref<16x128xf32, #tpu.memory_space<vmem>>, vector<16x128xf32>
    %291 = arith.mulf %288, %290 : vector<16x128xf32>
    %292 = arith.mulf %287, %286 : vector<16x128xf32>
    %293 = arith.addf %291, %292 : vector<16x128xf32>
    %294 = math.tanh %293 : vector<16x128xf32>
    %295 = arith.mulf %289, %294 : vector<16x128xf32>
    %c0_148 = arith.constant 0 : index
    %c0_149 = arith.constant 0 : index
    %296 = vector.load %arg7[%c0_148, %c0_149] : memref<16x128xf32, #tpu.memory_space<vmem>>, vector<16x128xf32>
    tpu.vector_store %arg7[%c0_148, %c0_149], %293 {strides = array<i32>} : memref<16x128xf32, #tpu.memory_space<vmem>>, vector<16x128xf32>,
    %297 = vector.extract_strided_slice %295 {offsets = [0, 0], sizes = [8, 128], strides = [1, 1]} : vector<16x128xf32> to vector<8x128xf32>
    %c0_150 = arith.constant 0 : index
    %c0_151 = arith.constant 0 : index
    %298 = vector.load %arg6[%c0_150, %c0_151] : memref<16x256xf32, #tpu.memory_space<vmem>>, vector<8x128xf32>
    tpu.vector_store %arg6[%c0_150, %c0_151], %297 {strides = array<i32>} : memref<16x256xf32, #tpu.memory_space<vmem>>, vector<8x128xf32>,
    %299 = vector.extract_strided_slice %295 {offsets = [8, 0], sizes = [8, 128], strides = [1, 1]} : vector<16x128xf32> to vector<8x128xf32>
    %c8_152 = arith.constant 8 : index
    %c128_153 = arith.constant 128 : index
    %300 = vector.load %arg6[%c8_152, %c128_153] : memref<16x256xf32, #tpu.memory_space<vmem>>, vector<8x128xf32>
    tpu.vector_store %arg6[%c8_152, %c128_153], %299 {strides = array<i32>} : memref<16x256xf32, #tpu.memory_space<vmem>>, vector<8x128xf32>,
    %301 = vector.extract_strided_slice %295 {offsets = [0, 0], sizes = [8, 128], strides = [1, 1]} : vector<16x128xf32> to vector<8x128xf32>
    %302 = arith.index_cast %c6_i32 : i32 to index
    %c0_154 = arith.constant 0 : index
    %c0_155 = arith.constant 0 : index
    %303 = vector.load %arg4[%302, %c0_154, %c0_155] : memref<8x8x128xf32, #tpu.memory_space<vmem>>, vector<1x8x128xf32>
    %304 = vector.shape_cast %303 : vector<1x8x128xf32> to vector<8x128xf32>
    %305 = vector.shape_cast %301 : vector<8x128xf32> to vector<1x8x128xf32>
    tpu.vector_store %arg4[%302, %c0_154, %c0_155], %305 {strides = array<i32>} : memref<8x8x128xf32, #tpu.memory_space<vmem>>, vector<1x8x128xf32>,
    %306 = vector.extract_strided_slice %295 {offsets = [8, 0], sizes = [8, 128], strides = [1, 1]} : vector<16x128xf32> to vector<8x128xf32>
    %307 = arith.index_cast %267 : i32 to index
    %c0_156 = arith.constant 0 : index
    %c0_157 = arith.constant 0 : index
    %308 = vector.load %arg5[%307, %c0_156, %c0_157] : memref<8x8x128xf32, #tpu.memory_space<vmem>>, vector<1x8x128xf32>
    %309 = vector.shape_cast %308 : vector<1x8x128xf32> to vector<8x128xf32>
    %310 = vector.shape_cast %306 : vector<8x128xf32> to vector<1x8x128xf32>
    tpu.vector_store %arg5[%307, %c0_156, %c0_157], %310 {strides = array<i32>} : memref<8x8x128xf32, #tpu.memory_space<vmem>>, vector<1x8x128xf32>,
    %c7_i32_158 = arith.constant 7 : i32
    %c7_i32_159 = arith.constant 7 : i32
    %311 = arith.subi %c7_i32_159, %c7_i32_158 : i32
    %c0_160 = arith.constant 0 : index
    %c0_161 = arith.constant 0 : index
    %312 = vector.load %arg6[%c0_160, %c0_161] : memref<16x256xf32, #tpu.memory_space<vmem>>, vector<16x256xf32>
    %c0_162 = arith.constant 0 : index
    %c0_163 = arith.constant 0 : index
    %313 = vector.load %arg8[%c0_162, %c0_163] : memref<256x512xf32, #tpu.memory_space<vmem>>, vector<256x512xf32>
    %cst_164 = arith.constant dense<0.000000e+00> : vector<16x512xf32>
    %314 = tpu.matmul %312, %313, %cst_164 {dimension_numbers = #tpu.dot_dimension_numbers<[1], [0], [0], [1], [0, 0, 1, 1], [], []>} : vector<16x256xf32>, vector<256x512xf32>, vector<16x512xf32> -> vector<16x512xf32>
    %315 = arith.index_cast %c7_i32_158 : i32 to index
    %c0_165 = arith.constant 0 : index
    %c0_166 = arith.constant 0 : index
    %316 = vector.load %arg1[%315, %c0_165, %c0_166] : memref<8x8x512xf32, #tpu.memory_space<vmem>>, vector<1x8x512xf32>
    %317 = vector.shape_cast %316 : vector<1x8x512xf32> to vector<8x512xf32>
    %318 = arith.index_cast %311 : i32 to index
    %c0_167 = arith.constant 0 : index
    %c0_168 = arith.constant 0 : index
    %319 = vector.load %arg2[%318, %c0_167, %c0_168] : memref<8x8x512xf32, #tpu.memory_space<vmem>>, vector<1x8x512xf32>
    %320 = vector.shape_cast %319 : vector<1x8x512xf32> to vector<8x512xf32>
    %321 = tpu.concatenate %317, %320 in 0 : vector<8x512xf32>, vector<8x512xf32> -> vector<16x512xf32>
    %322 = arith.addf %321, %314 : vector<16x512xf32>
    %323 = vector.extract_strided_slice %322 {offsets = [0, 0], sizes = [16, 384], strides = [1, 1]} : vector<16x512xf32> to vector<16x384xf32>
    %324 = arith.negf %323 : vector<16x384xf32>
    %325 = math.exp %324 : vector<16x384xf32>
    %cst_169 = arith.constant 1.000000e+00 : f32
    %326 = vector.broadcast %cst_169 : f32 to vector<16x384xf32>
    %327 = arith.addf %326, %325 : vector<16x384xf32>
    %328 = arith.divf %326, %327 : vector<16x384xf32>
    %329 = vector.extract_strided_slice %322 {offsets = [0, 384], sizes = [16, 128], strides = [1, 1]} : vector<16x512xf32> to vector<16x128xf32>
    %330 = math.tanh %329 : vector<16x128xf32>
    %331 = vector.extract_strided_slice %328 {offsets = [0, 0], sizes = [16, 128], strides = [1, 1]} : vector<16x384xf32> to vector<16x128xf32>
    %332 = vector.extract_strided_slice %328 {offsets = [0, 128], sizes = [16, 128], strides = [1, 1]} : vector<16x384xf32> to vector<16x128xf32>
    %333 = vector.extract_strided_slice %328 {offsets = [0, 256], sizes = [16, 128], strides = [1, 1]} : vector<16x384xf32> to vector<16x128xf32>
    %c0_170 = arith.constant 0 : index
    %c0_171 = arith.constant 0 : index
    %334 = vector.load %arg7[%c0_170, %c0_171] : memref<16x128xf32, #tpu.memory_space<vmem>>, vector<16x128xf32>
    %335 = arith.mulf %332, %334 : vector<16x128xf32>
    %336 = arith.mulf %331, %330 : vector<16x128xf32>
    %337 = arith.addf %335, %336 : vector<16x128xf32>
    %338 = math.tanh %337 : vector<16x128xf32>
    %339 = arith.mulf %333, %338 : vector<16x128xf32>
    %c0_172 = arith.constant 0 : index
    %c0_173 = arith.constant 0 : index
    %340 = vector.load %arg7[%c0_172, %c0_173] : memref<16x128xf32, #tpu.memory_space<vmem>>, vector<16x128xf32>
    tpu.vector_store %arg7[%c0_172, %c0_173], %337 {strides = array<i32>} : memref<16x128xf32, #tpu.memory_space<vmem>>, vector<16x128xf32>,
    %341 = vector.extract_strided_slice %339 {offsets = [0, 0], sizes = [8, 128], strides = [1, 1]} : vector<16x128xf32> to vector<8x128xf32>
    %c0_174 = arith.constant 0 : index
    %c0_175 = arith.constant 0 : index
    %342 = vector.load %arg6[%c0_174, %c0_175] : memref<16x256xf32, #tpu.memory_space<vmem>>, vector<8x128xf32>
    tpu.vector_store %arg6[%c0_174, %c0_175], %341 {strides = array<i32>} : memref<16x256xf32, #tpu.memory_space<vmem>>, vector<8x128xf32>,
    %343 = vector.extract_strided_slice %339 {offsets = [8, 0], sizes = [8, 128], strides = [1, 1]} : vector<16x128xf32> to vector<8x128xf32>
    %c8_176 = arith.constant 8 : index
    %c128_177 = arith.constant 128 : index
    %344 = vector.load %arg6[%c8_176, %c128_177] : memref<16x256xf32, #tpu.memory_space<vmem>>, vector<8x128xf32>
    tpu.vector_store %arg6[%c8_176, %c128_177], %343 {strides = array<i32>} : memref<16x256xf32, #tpu.memory_space<vmem>>, vector<8x128xf32>,
    %345 = vector.extract_strided_slice %339 {offsets = [0, 0], sizes = [8, 128], strides = [1, 1]} : vector<16x128xf32> to vector<8x128xf32>
    %346 = arith.index_cast %c7_i32_158 : i32 to index
    %c0_178 = arith.constant 0 : index
    %c0_179 = arith.constant 0 : index
    %347 = vector.load %arg4[%346, %c0_178, %c0_179] : memref<8x8x128xf32, #tpu.memory_space<vmem>>, vector<1x8x128xf32>
    %348 = vector.shape_cast %347 : vector<1x8x128xf32> to vector<8x128xf32>
    %349 = vector.shape_cast %345 : vector<8x128xf32> to vector<1x8x128xf32>
    tpu.vector_store %arg4[%346, %c0_178, %c0_179], %349 {strides = array<i32>} : memref<8x8x128xf32, #tpu.memory_space<vmem>>, vector<1x8x128xf32>,
    %350 = vector.extract_strided_slice %339 {offsets = [8, 0], sizes = [8, 128], strides = [1, 1]} : vector<16x128xf32> to vector<8x128xf32>
    %351 = arith.index_cast %311 : i32 to index
    %c0_180 = arith.constant 0 : index
    %c0_181 = arith.constant 0 : index
    %352 = vector.load %arg5[%351, %c0_180, %c0_181] : memref<8x8x128xf32, #tpu.memory_space<vmem>>, vector<1x8x128xf32>
    %353 = vector.shape_cast %352 : vector<1x8x128xf32> to vector<8x128xf32>
    %354 = vector.shape_cast %350 : vector<8x128xf32> to vector<1x8x128xf32>
    tpu.vector_store %arg5[%351, %c0_180, %c0_181], %354 {strides = array<i32>} : memref<8x8x128xf32, #tpu.memory_space<vmem>>, vector<1x8x128xf32>,
    %c8_i32 = arith.constant 8 : i32
    return
  }
  func.func @transform_0(%arg0: i32) -> (i32, i32, i32) {
    %c0_i32 = arith.constant 0 : i32
    %c0_i32_0 = arith.constant 0 : i32
    %c0_i32_1 = arith.constant 0 : i32
    return %arg0, %c0_i32, %c0_i32_0 : i32, i32, i32
  }
  func.func @transform_1(%arg0: i32) -> (i32, i32, i32) {
    %c0_i32 = arith.constant 0 : i32
    %0 = arith.subi %c0_i32, %arg0 : i32
    %c0_i32_0 = arith.constant 0 : i32
    %c0_i32_1 = arith.constant 0 : i32
    %c0_i32_2 = arith.constant 0 : i32
    return %0, %c0_i32_0, %c0_i32_1 : i32, i32, i32
  }
  func.func @transform_3(%arg0: i32) -> (i32, i32, i32) {
    %c0_i32 = arith.constant 0 : i32
    %c0_i32_0 = arith.constant 0 : i32
    %c0_i32_1 = arith.constant 0 : i32
    return %arg0, %c0_i32, %c0_i32_0 : i32, i32, i32
  }
  func.func @transform_4(%arg0: i32) -> (i32, i32, i32) {
    %c0_i32 = arith.constant 0 : i32
    %0 = arith.subi %c0_i32, %arg0 : i32
    %c0_i32_0 = arith.constant 0 : i32
    %c0_i32_1 = arith.constant 0 : i32
    %c0_i32_2 = arith.constant 0 : i32
    return %0, %c0_i32_0, %c0_i32_1 : i32, i32, i32
  }
}

module attributes {stable_mosaic.version = 11 : i64} {
  func.func @_bilstm_recurrent_kernel(%arg0: i32, %arg1: memref<8x8x512xf32, #tpu.memory_space<vmem>>, %arg2: memref<8x8x512xf32, #tpu.memory_space<vmem>>, %arg3: memref<256x512xf32, #tpu.memory_space<any>>, %arg4: memref<8x8x128xf32, #tpu.memory_space<vmem>>, %arg5: memref<8x8x128xf32, #tpu.memory_space<vmem>>, %arg6: memref<16x256xf32, #tpu.memory_space<vmem>>, %arg7: memref<16x128xf32, #tpu.memory_space<vmem>>, %arg8: memref<256x512xf32, #tpu.memory_space<vmem>>, %arg9: memref<1x!tpu.dma_semaphore, #tpu.memory_space<semaphore_mem>>) attributes {dimension_semantics = [#tpu.dimension_semantics<arbitrary>], iteration_bounds = array<i64: 1>, scalar_prefetch = 0 : i64, scratch_operands = 4 : i64, tpu.core_type = #tpu.core_type<tc>, window_params = [{transform_indices = @transform_0, window_bounds = array<i64: 8, 8, 512>}, {transform_indices = @transform_1, window_bounds = array<i64: 8, 8, 512>}, {}, {transform_indices = @transform_3, window_bounds = array<i64: 8, 8, 128>}, {transform_indices = @transform_4, window_bounds = array<i64: 8, 8, 128>}]} {
    %c0_i32 = arith.constant 0 : i32
    %0 = arith.cmpi eq, %arg0, %c0_i32 : i32
    %1 = arith.extui %0 : i1 to i32
    %c0_i32_0 = arith.constant 0 : i32
    %2 = arith.cmpi ne, %1, %c0_i32_0 : i32
    scf.if %2 {
      %c0_i32_182 = arith.constant 0 : i32
      %355 = tpu.memref_slice %arg9[%c0_i32_182] : memref<1x!tpu.dma_semaphore, #tpu.memory_space<semaphore_mem>> -> memref<1x!tpu.dma_semaphore, #tpu.memory_space<semaphore_mem>>
      %356 = tpu.memref_squeeze %355 : memref<1x!tpu.dma_semaphore, #tpu.memory_space<semaphore_mem>> -> memref<!tpu.dma_semaphore, #tpu.memory_space<semaphore_mem>>
      tpu.enqueue_dma source(%arg3 : memref<256x512xf32, #tpu.memory_space<any>>) target(%arg8 : memref<256x512xf32, #tpu.memory_space<vmem>>) target_semaphore(%356 : memref<!tpu.dma_semaphore, #tpu.memory_space<semaphore_mem>>)
      %cst_183 = arith.constant 0.000000e+00 : f32
      %357 = vector.broadcast %cst_183 : f32 to vector<16x256xf32>
      %c0_184 = arith.constant 0 : index
      %c0_185 = arith.constant 0 : index
      %358 = vector.load %arg6[%c0_184, %c0_185] : memref<16x256xf32, #tpu.memory_space<vmem>>, vector<16x256xf32>
      tpu.vector_store %arg6[%c0_184, %c0_185], %357 {strides = array<i32>} : memref<16x256xf32, #tpu.memory_space<vmem>>, vector<16x256xf32>,
      %cst_186 = arith.constant 0.000000e+00 : f32
      %359 = vector.broadcast %cst_186 : f32 to vector<16x128xf32>
      %c0_187 = arith.constant 0 : index
      %c0_188 = arith.constant 0 : index
      %360 = vector.load %arg7[%c0_187, %c0_188] : memref<16x128xf32, #tpu.memory_space<vmem>>, vector<16x128xf32>
      tpu.vector_store %arg7[%c0_187, %c0_188], %359 {strides = array<i32>} : memref<16x128xf32, #tpu.memory_space<vmem>>, vector<16x128xf32>,
      %c0_i32_189 = arith.constant 0 : i32
      %361 = tpu.memref_slice %arg9[%c0_i32_189] : memref<1x!tpu.dma_semaphore, #tpu.memory_space<semaphore_mem>> -> memref<1x!tpu.dma_semaphore, #tpu.memory_space<semaphore_mem>>
      %362 = tpu.memref_squeeze %361 : memref<1x!tpu.dma_semaphore, #tpu.memory_space<semaphore_mem>> -> memref<!tpu.dma_semaphore, #tpu.memory_space<semaphore_mem>>
      tpu.wait_dma2 semaphore(%362 : memref<!tpu.dma_semaphore, #tpu.memory_space<semaphore_mem>>) src(%arg3 : memref<256x512xf32, #tpu.memory_space<any>>) dst(%arg8 : memref<256x512xf32, #tpu.memory_space<vmem>>)
    } else {
    }
    %c0_i32_1 = arith.constant 0 : i32
    %c7_i32 = arith.constant 7 : i32
    %3 = arith.subi %c7_i32, %c0_i32_1 : i32
    %c0 = arith.constant 0 : index
    %c0_2 = arith.constant 0 : index
    %4 = vector.load %arg6[%c0, %c0_2] : memref<16x256xf32, #tpu.memory_space<vmem>>, vector<16x256xf32>
    %c0_3 = arith.constant 0 : index
    %c0_4 = arith.constant 0 : index
    %5 = vector.load %arg8[%c0_3, %c0_4] : memref<256x512xf32, #tpu.memory_space<vmem>>, vector<256x512xf32>
    %cst = arith.constant dense<0.000000e+00> : vector<16x512xf32>
    %6 = tpu.matmul %4, %5, %cst {dimension_numbers = #tpu.dot_dimension_numbers<[1], [0], [0], [1], [0, 0, 1, 1], [], []>} : vector<16x256xf32>, vector<256x512xf32>, vector<16x512xf32> -> vector<16x512xf32>
    %7 = arith.index_cast %c0_i32_1 : i32 to index
    %c0_5 = arith.constant 0 : index
    %c0_6 = arith.constant 0 : index
    %8 = vector.load %arg1[%7, %c0_5, %c0_6] : memref<8x8x512xf32, #tpu.memory_space<vmem>>, vector<1x8x512xf32>
    %9 = vector.shape_cast %8 : vector<1x8x512xf32> to vector<8x512xf32>
    %10 = arith.index_cast %3 : i32 to index
    %c0_7 = arith.constant 0 : index
    %c0_8 = arith.constant 0 : index
    %11 = vector.load %arg2[%10, %c0_7, %c0_8] : memref<8x8x512xf32, #tpu.memory_space<vmem>>, vector<1x8x512xf32>
    %12 = vector.shape_cast %11 : vector<1x8x512xf32> to vector<8x512xf32>
    %13 = tpu.concatenate %9, %12 in 0 : vector<8x512xf32>, vector<8x512xf32> -> vector<16x512xf32>
    %14 = arith.addf %13, %6 : vector<16x512xf32>
    %15 = vector.extract_strided_slice %14 {offsets = [0, 0], sizes = [16, 384], strides = [1, 1]} : vector<16x512xf32> to vector<16x384xf32>
    %16 = arith.negf %15 : vector<16x384xf32>
    %17 = math.exp %16 : vector<16x384xf32>
    %cst_9 = arith.constant 1.000000e+00 : f32
    %18 = vector.broadcast %cst_9 : f32 to vector<16x384xf32>
    %19 = arith.addf %18, %17 : vector<16x384xf32>
    %20 = arith.divf %18, %19 : vector<16x384xf32>
    %21 = vector.extract_strided_slice %14 {offsets = [0, 384], sizes = [16, 128], strides = [1, 1]} : vector<16x512xf32> to vector<16x128xf32>
    %22 = math.tanh %21 : vector<16x128xf32>
    %23 = vector.extract_strided_slice %20 {offsets = [0, 0], sizes = [16, 128], strides = [1, 1]} : vector<16x384xf32> to vector<16x128xf32>
    %24 = vector.extract_strided_slice %20 {offsets = [0, 128], sizes = [16, 128], strides = [1, 1]} : vector<16x384xf32> to vector<16x128xf32>
    %25 = vector.extract_strided_slice %20 {offsets = [0, 256], sizes = [16, 128], strides = [1, 1]} : vector<16x384xf32> to vector<16x128xf32>
    %c0_10 = arith.constant 0 : index
    %c0_11 = arith.constant 0 : index
    %26 = vector.load %arg7[%c0_10, %c0_11] : memref<16x128xf32, #tpu.memory_space<vmem>>, vector<16x128xf32>
    %27 = arith.mulf %24, %26 : vector<16x128xf32>
    %28 = arith.mulf %23, %22 : vector<16x128xf32>
    %29 = arith.addf %27, %28 : vector<16x128xf32>
    %30 = math.tanh %29 : vector<16x128xf32>
    %31 = arith.mulf %25, %30 : vector<16x128xf32>
    %c0_12 = arith.constant 0 : index
    %c0_13 = arith.constant 0 : index
    %32 = vector.load %arg7[%c0_12, %c0_13] : memref<16x128xf32, #tpu.memory_space<vmem>>, vector<16x128xf32>
    tpu.vector_store %arg7[%c0_12, %c0_13], %29 {strides = array<i32>} : memref<16x128xf32, #tpu.memory_space<vmem>>, vector<16x128xf32>,
    %33 = vector.extract_strided_slice %31 {offsets = [0, 0], sizes = [8, 128], strides = [1, 1]} : vector<16x128xf32> to vector<8x128xf32>
    %c0_14 = arith.constant 0 : index
    %c0_15 = arith.constant 0 : index
    %34 = vector.load %arg6[%c0_14, %c0_15] : memref<16x256xf32, #tpu.memory_space<vmem>>, vector<8x128xf32>
    tpu.vector_store %arg6[%c0_14, %c0_15], %33 {strides = array<i32>} : memref<16x256xf32, #tpu.memory_space<vmem>>, vector<8x128xf32>,
    %35 = vector.extract_strided_slice %31 {offsets = [8, 0], sizes = [8, 128], strides = [1, 1]} : vector<16x128xf32> to vector<8x128xf32>
    %c8 = arith.constant 8 : index
    %c128 = arith.constant 128 : index
    %36 = vector.load %arg6[%c8, %c128] : memref<16x256xf32, #tpu.memory_space<vmem>>, vector<8x128xf32>
    tpu.vector_store %arg6[%c8, %c128], %35 {strides = array<i32>} : memref<16x256xf32, #tpu.memory_space<vmem>>, vector<8x128xf32>,
    %37 = vector.extract_strided_slice %31 {offsets = [0, 0], sizes = [8, 128], strides = [1, 1]} : vector<16x128xf32> to vector<8x128xf32>
    %38 = arith.index_cast %c0_i32_1 : i32 to index
    %c0_16 = arith.constant 0 : index
    %c0_17 = arith.constant 0 : index
    %39 = vector.load %arg4[%38, %c0_16, %c0_17] : memref<8x8x128xf32, #tpu.memory_space<vmem>>, vector<1x8x128xf32>
    %40 = vector.shape_cast %39 : vector<1x8x128xf32> to vector<8x128xf32>
    %41 = vector.shape_cast %37 : vector<8x128xf32> to vector<1x8x128xf32>
    tpu.vector_store %arg4[%38, %c0_16, %c0_17], %41 {strides = array<i32>} : memref<8x8x128xf32, #tpu.memory_space<vmem>>, vector<1x8x128xf32>,
    %42 = vector.extract_strided_slice %31 {offsets = [8, 0], sizes = [8, 128], strides = [1, 1]} : vector<16x128xf32> to vector<8x128xf32>
    %43 = arith.index_cast %3 : i32 to index
    %c0_18 = arith.constant 0 : index
    %c0_19 = arith.constant 0 : index
    %44 = vector.load %arg5[%43, %c0_18, %c0_19] : memref<8x8x128xf32, #tpu.memory_space<vmem>>, vector<1x8x128xf32>
    %45 = vector.shape_cast %44 : vector<1x8x128xf32> to vector<8x128xf32>
    %46 = vector.shape_cast %42 : vector<8x128xf32> to vector<1x8x128xf32>
    tpu.vector_store %arg5[%43, %c0_18, %c0_19], %46 {strides = array<i32>} : memref<8x8x128xf32, #tpu.memory_space<vmem>>, vector<1x8x128xf32>,
    %c1_i32 = arith.constant 1 : i32
    %c7_i32_20 = arith.constant 7 : i32
    %47 = arith.subi %c7_i32_20, %c1_i32 : i32
    %c0_21 = arith.constant 0 : index
    %c0_22 = arith.constant 0 : index
    %48 = vector.load %arg6[%c0_21, %c0_22] : memref<16x256xf32, #tpu.memory_space<vmem>>, vector<16x256xf32>
    %c0_23 = arith.constant 0 : index
    %c0_24 = arith.constant 0 : index
    %49 = vector.load %arg8[%c0_23, %c0_24] : memref<256x512xf32, #tpu.memory_space<vmem>>, vector<256x512xf32>
    %cst_25 = arith.constant dense<0.000000e+00> : vector<16x512xf32>
    %50 = tpu.matmul %48, %49, %cst_25 {dimension_numbers = #tpu.dot_dimension_numbers<[1], [0], [0], [1], [0, 0, 1, 1], [], []>} : vector<16x256xf32>, vector<256x512xf32>, vector<16x512xf32> -> vector<16x512xf32>
    %51 = arith.index_cast %c1_i32 : i32 to index
    %c0_26 = arith.constant 0 : index
    %c0_27 = arith.constant 0 : index
    %52 = vector.load %arg1[%51, %c0_26, %c0_27] : memref<8x8x512xf32, #tpu.memory_space<vmem>>, vector<1x8x512xf32>
    %53 = vector.shape_cast %52 : vector<1x8x512xf32> to vector<8x512xf32>
    %54 = arith.index_cast %47 : i32 to index
    %c0_28 = arith.constant 0 : index
    %c0_29 = arith.constant 0 : index
    %55 = vector.load %arg2[%54, %c0_28, %c0_29] : memref<8x8x512xf32, #tpu.memory_space<vmem>>, vector<1x8x512xf32>
    %56 = vector.shape_cast %55 : vector<1x8x512xf32> to vector<8x512xf32>
    %57 = tpu.concatenate %53, %56 in 0 : vector<8x512xf32>, vector<8x512xf32> -> vector<16x512xf32>
    %58 = arith.addf %57, %50 : vector<16x512xf32>
    %59 = vector.extract_strided_slice %58 {offsets = [0, 0], sizes = [16, 384], strides = [1, 1]} : vector<16x512xf32> to vector<16x384xf32>
    %60 = arith.negf %59 : vector<16x384xf32>
    %61 = math.exp %60 : vector<16x384xf32>
    %cst_30 = arith.constant 1.000000e+00 : f32
    %62 = vector.broadcast %cst_30 : f32 to vector<16x384xf32>
    %63 = arith.addf %62, %61 : vector<16x384xf32>
    %64 = arith.divf %62, %63 : vector<16x384xf32>
    %65 = vector.extract_strided_slice %58 {offsets = [0, 384], sizes = [16, 128], strides = [1, 1]} : vector<16x512xf32> to vector<16x128xf32>
    %66 = math.tanh %65 : vector<16x128xf32>
    %67 = vector.extract_strided_slice %64 {offsets = [0, 0], sizes = [16, 128], strides = [1, 1]} : vector<16x384xf32> to vector<16x128xf32>
    %68 = vector.extract_strided_slice %64 {offsets = [0, 128], sizes = [16, 128], strides = [1, 1]} : vector<16x384xf32> to vector<16x128xf32>
    %69 = vector.extract_strided_slice %64 {offsets = [0, 256], sizes = [16, 128], strides = [1, 1]} : vector<16x384xf32> to vector<16x128xf32>
    %c0_31 = arith.constant 0 : index
    %c0_32 = arith.constant 0 : index
    %70 = vector.load %arg7[%c0_31, %c0_32] : memref<16x128xf32, #tpu.memory_space<vmem>>, vector<16x128xf32>
    %71 = arith.mulf %68, %70 : vector<16x128xf32>
    %72 = arith.mulf %67, %66 : vector<16x128xf32>
    %73 = arith.addf %71, %72 : vector<16x128xf32>
    %74 = math.tanh %73 : vector<16x128xf32>
    %75 = arith.mulf %69, %74 : vector<16x128xf32>
    %c0_33 = arith.constant 0 : index
    %c0_34 = arith.constant 0 : index
    %76 = vector.load %arg7[%c0_33, %c0_34] : memref<16x128xf32, #tpu.memory_space<vmem>>, vector<16x128xf32>
    tpu.vector_store %arg7[%c0_33, %c0_34], %73 {strides = array<i32>} : memref<16x128xf32, #tpu.memory_space<vmem>>, vector<16x128xf32>,
    %77 = vector.extract_strided_slice %75 {offsets = [0, 0], sizes = [8, 128], strides = [1, 1]} : vector<16x128xf32> to vector<8x128xf32>
    %c0_35 = arith.constant 0 : index
    %c0_36 = arith.constant 0 : index
    %78 = vector.load %arg6[%c0_35, %c0_36] : memref<16x256xf32, #tpu.memory_space<vmem>>, vector<8x128xf32>
    tpu.vector_store %arg6[%c0_35, %c0_36], %77 {strides = array<i32>} : memref<16x256xf32, #tpu.memory_space<vmem>>, vector<8x128xf32>,
    %79 = vector.extract_strided_slice %75 {offsets = [8, 0], sizes = [8, 128], strides = [1, 1]} : vector<16x128xf32> to vector<8x128xf32>
    %c8_37 = arith.constant 8 : index
    %c128_38 = arith.constant 128 : index
    %80 = vector.load %arg6[%c8_37, %c128_38] : memref<16x256xf32, #tpu.memory_space<vmem>>, vector<8x128xf32>
    tpu.vector_store %arg6[%c8_37, %c128_38], %79 {strides = array<i32>} : memref<16x256xf32, #tpu.memory_space<vmem>>, vector<8x128xf32>,
    %81 = vector.extract_strided_slice %75 {offsets = [0, 0], sizes = [8, 128], strides = [1, 1]} : vector<16x128xf32> to vector<8x128xf32>
    %82 = arith.index_cast %c1_i32 : i32 to index
    %c0_39 = arith.constant 0 : index
    %c0_40 = arith.constant 0 : index
    %83 = vector.load %arg4[%82, %c0_39, %c0_40] : memref<8x8x128xf32, #tpu.memory_space<vmem>>, vector<1x8x128xf32>
    %84 = vector.shape_cast %83 : vector<1x8x128xf32> to vector<8x128xf32>
    %85 = vector.shape_cast %81 : vector<8x128xf32> to vector<1x8x128xf32>
    tpu.vector_store %arg4[%82, %c0_39, %c0_40], %85 {strides = array<i32>} : memref<8x8x128xf32, #tpu.memory_space<vmem>>, vector<1x8x128xf32>,
    %86 = vector.extract_strided_slice %75 {offsets = [8, 0], sizes = [8, 128], strides = [1, 1]} : vector<16x128xf32> to vector<8x128xf32>
    %87 = arith.index_cast %47 : i32 to index
    %c0_41 = arith.constant 0 : index
    %c0_42 = arith.constant 0 : index
    %88 = vector.load %arg5[%87, %c0_41, %c0_42] : memref<8x8x128xf32, #tpu.memory_space<vmem>>, vector<1x8x128xf32>
    %89 = vector.shape_cast %88 : vector<1x8x128xf32> to vector<8x128xf32>
    %90 = vector.shape_cast %86 : vector<8x128xf32> to vector<1x8x128xf32>
    tpu.vector_store %arg5[%87, %c0_41, %c0_42], %90 {strides = array<i32>} : memref<8x8x128xf32, #tpu.memory_space<vmem>>, vector<1x8x128xf32>,
    %c2_i32 = arith.constant 2 : i32
    %c7_i32_43 = arith.constant 7 : i32
    %91 = arith.subi %c7_i32_43, %c2_i32 : i32
    %c0_44 = arith.constant 0 : index
    %c0_45 = arith.constant 0 : index
    %92 = vector.load %arg6[%c0_44, %c0_45] : memref<16x256xf32, #tpu.memory_space<vmem>>, vector<16x256xf32>
    %c0_46 = arith.constant 0 : index
    %c0_47 = arith.constant 0 : index
    %93 = vector.load %arg8[%c0_46, %c0_47] : memref<256x512xf32, #tpu.memory_space<vmem>>, vector<256x512xf32>
    %cst_48 = arith.constant dense<0.000000e+00> : vector<16x512xf32>
    %94 = tpu.matmul %92, %93, %cst_48 {dimension_numbers = #tpu.dot_dimension_numbers<[1], [0], [0], [1], [0, 0, 1, 1], [], []>} : vector<16x256xf32>, vector<256x512xf32>, vector<16x512xf32> -> vector<16x512xf32>
    %95 = arith.index_cast %c2_i32 : i32 to index
    %c0_49 = arith.constant 0 : index
    %c0_50 = arith.constant 0 : index
    %96 = vector.load %arg1[%95, %c0_49, %c0_50] : memref<8x8x512xf32, #tpu.memory_space<vmem>>, vector<1x8x512xf32>
    %97 = vector.shape_cast %96 : vector<1x8x512xf32> to vector<8x512xf32>
    %98 = arith.index_cast %91 : i32 to index
    %c0_51 = arith.constant 0 : index
    %c0_52 = arith.constant 0 : index
    %99 = vector.load %arg2[%98, %c0_51, %c0_52] : memref<8x8x512xf32, #tpu.memory_space<vmem>>, vector<1x8x512xf32>
    %100 = vector.shape_cast %99 : vector<1x8x512xf32> to vector<8x512xf32>
    %101 = tpu.concatenate %97, %100 in 0 : vector<8x512xf32>, vector<8x512xf32> -> vector<16x512xf32>
    %102 = arith.addf %101, %94 : vector<16x512xf32>
    %103 = vector.extract_strided_slice %102 {offsets = [0, 0], sizes = [16, 384], strides = [1, 1]} : vector<16x512xf32> to vector<16x384xf32>
    %104 = arith.negf %103 : vector<16x384xf32>
    %105 = math.exp %104 : vector<16x384xf32>
    %cst_53 = arith.constant 1.000000e+00 : f32
    %106 = vector.broadcast %cst_53 : f32 to vector<16x384xf32>
    %107 = arith.addf %106, %105 : vector<16x384xf32>
    %108 = arith.divf %106, %107 : vector<16x384xf32>
    %109 = vector.extract_strided_slice %102 {offsets = [0, 384], sizes = [16, 128], strides = [1, 1]} : vector<16x512xf32> to vector<16x128xf32>
    %110 = math.tanh %109 : vector<16x128xf32>
    %111 = vector.extract_strided_slice %108 {offsets = [0, 0], sizes = [16, 128], strides = [1, 1]} : vector<16x384xf32> to vector<16x128xf32>
    %112 = vector.extract_strided_slice %108 {offsets = [0, 128], sizes = [16, 128], strides = [1, 1]} : vector<16x384xf32> to vector<16x128xf32>
    %113 = vector.extract_strided_slice %108 {offsets = [0, 256], sizes = [16, 128], strides = [1, 1]} : vector<16x384xf32> to vector<16x128xf32>
    %c0_54 = arith.constant 0 : index
    %c0_55 = arith.constant 0 : index
    %114 = vector.load %arg7[%c0_54, %c0_55] : memref<16x128xf32, #tpu.memory_space<vmem>>, vector<16x128xf32>
    %115 = arith.mulf %112, %114 : vector<16x128xf32>
    %116 = arith.mulf %111, %110 : vector<16x128xf32>
    %117 = arith.addf %115, %116 : vector<16x128xf32>
    %118 = math.tanh %117 : vector<16x128xf32>
    %119 = arith.mulf %113, %118 : vector<16x128xf32>
    %c0_56 = arith.constant 0 : index
    %c0_57 = arith.constant 0 : index
    %120 = vector.load %arg7[%c0_56, %c0_57] : memref<16x128xf32, #tpu.memory_space<vmem>>, vector<16x128xf32>
    tpu.vector_store %arg7[%c0_56, %c0_57], %117 {strides = array<i32>} : memref<16x128xf32, #tpu.memory_space<vmem>>, vector<16x128xf32>,
    %121 = vector.extract_strided_slice %119 {offsets = [0, 0], sizes = [8, 128], strides = [1, 1]} : vector<16x128xf32> to vector<8x128xf32>
    %c0_58 = arith.constant 0 : index
    %c0_59 = arith.constant 0 : index
    %122 = vector.load %arg6[%c0_58, %c0_59] : memref<16x256xf32, #tpu.memory_space<vmem>>, vector<8x128xf32>
    tpu.vector_store %arg6[%c0_58, %c0_59], %121 {strides = array<i32>} : memref<16x256xf32, #tpu.memory_space<vmem>>, vector<8x128xf32>,
    %123 = vector.extract_strided_slice %119 {offsets = [8, 0], sizes = [8, 128], strides = [1, 1]} : vector<16x128xf32> to vector<8x128xf32>
    %c8_60 = arith.constant 8 : index
    %c128_61 = arith.constant 128 : index
    %124 = vector.load %arg6[%c8_60, %c128_61] : memref<16x256xf32, #tpu.memory_space<vmem>>, vector<8x128xf32>
    tpu.vector_store %arg6[%c8_60, %c128_61], %123 {strides = array<i32>} : memref<16x256xf32, #tpu.memory_space<vmem>>, vector<8x128xf32>,
    %125 = vector.extract_strided_slice %119 {offsets = [0, 0], sizes = [8, 128], strides = [1, 1]} : vector<16x128xf32> to vector<8x128xf32>
    %126 = arith.index_cast %c2_i32 : i32 to index
    %c0_62 = arith.constant 0 : index
    %c0_63 = arith.constant 0 : index
    %127 = vector.load %arg4[%126, %c0_62, %c0_63] : memref<8x8x128xf32, #tpu.memory_space<vmem>>, vector<1x8x128xf32>
    %128 = vector.shape_cast %127 : vector<1x8x128xf32> to vector<8x128xf32>
    %129 = vector.shape_cast %125 : vector<8x128xf32> to vector<1x8x128xf32>
    tpu.vector_store %arg4[%126, %c0_62, %c0_63], %129 {strides = array<i32>} : memref<8x8x128xf32, #tpu.memory_space<vmem>>, vector<1x8x128xf32>,
    %130 = vector.extract_strided_slice %119 {offsets = [8, 0], sizes = [8, 128], strides = [1, 1]} : vector<16x128xf32> to vector<8x128xf32>
    %131 = arith.index_cast %91 : i32 to index
    %c0_64 = arith.constant 0 : index
    %c0_65 = arith.constant 0 : index
    %132 = vector.load %arg5[%131, %c0_64, %c0_65] : memref<8x8x128xf32, #tpu.memory_space<vmem>>, vector<1x8x128xf32>
    %133 = vector.shape_cast %132 : vector<1x8x128xf32> to vector<8x128xf32>
    %134 = vector.shape_cast %130 : vector<8x128xf32> to vector<1x8x128xf32>
    tpu.vector_store %arg5[%131, %c0_64, %c0_65], %134 {strides = array<i32>} : memref<8x8x128xf32, #tpu.memory_space<vmem>>, vector<1x8x128xf32>,
    %c3_i32 = arith.constant 3 : i32
    %c7_i32_66 = arith.constant 7 : i32
    %135 = arith.subi %c7_i32_66, %c3_i32 : i32
    %c0_67 = arith.constant 0 : index
    %c0_68 = arith.constant 0 : index
    %136 = vector.load %arg6[%c0_67, %c0_68] : memref<16x256xf32, #tpu.memory_space<vmem>>, vector<16x256xf32>
    %c0_69 = arith.constant 0 : index
    %c0_70 = arith.constant 0 : index
    %137 = vector.load %arg8[%c0_69, %c0_70] : memref<256x512xf32, #tpu.memory_space<vmem>>, vector<256x512xf32>
    %cst_71 = arith.constant dense<0.000000e+00> : vector<16x512xf32>
    %138 = tpu.matmul %136, %137, %cst_71 {dimension_numbers = #tpu.dot_dimension_numbers<[1], [0], [0], [1], [0, 0, 1, 1], [], []>} : vector<16x256xf32>, vector<256x512xf32>, vector<16x512xf32> -> vector<16x512xf32>
    %139 = arith.index_cast %c3_i32 : i32 to index
    %c0_72 = arith.constant 0 : index
    %c0_73 = arith.constant 0 : index
    %140 = vector.load %arg1[%139, %c0_72, %c0_73] : memref<8x8x512xf32, #tpu.memory_space<vmem>>, vector<1x8x512xf32>
    %141 = vector.shape_cast %140 : vector<1x8x512xf32> to vector<8x512xf32>
    %142 = arith.index_cast %135 : i32 to index
    %c0_74 = arith.constant 0 : index
    %c0_75 = arith.constant 0 : index
    %143 = vector.load %arg2[%142, %c0_74, %c0_75] : memref<8x8x512xf32, #tpu.memory_space<vmem>>, vector<1x8x512xf32>
    %144 = vector.shape_cast %143 : vector<1x8x512xf32> to vector<8x512xf32>
    %145 = tpu.concatenate %141, %144 in 0 : vector<8x512xf32>, vector<8x512xf32> -> vector<16x512xf32>
    %146 = arith.addf %145, %138 : vector<16x512xf32>
    %147 = vector.extract_strided_slice %146 {offsets = [0, 0], sizes = [16, 384], strides = [1, 1]} : vector<16x512xf32> to vector<16x384xf32>
    %148 = arith.negf %147 : vector<16x384xf32>
    %149 = math.exp %148 : vector<16x384xf32>
    %cst_76 = arith.constant 1.000000e+00 : f32
    %150 = vector.broadcast %cst_76 : f32 to vector<16x384xf32>
    %151 = arith.addf %150, %149 : vector<16x384xf32>
    %152 = arith.divf %150, %151 : vector<16x384xf32>
    %153 = vector.extract_strided_slice %146 {offsets = [0, 384], sizes = [16, 128], strides = [1, 1]} : vector<16x512xf32> to vector<16x128xf32>
    %154 = math.tanh %153 : vector<16x128xf32>
    %155 = vector.extract_strided_slice %152 {offsets = [0, 0], sizes = [16, 128], strides = [1, 1]} : vector<16x384xf32> to vector<16x128xf32>
    %156 = vector.extract_strided_slice %152 {offsets = [0, 128], sizes = [16, 128], strides = [1, 1]} : vector<16x384xf32> to vector<16x128xf32>
    %157 = vector.extract_strided_slice %152 {offsets = [0, 256], sizes = [16, 128], strides = [1, 1]} : vector<16x384xf32> to vector<16x128xf32>
    %c0_77 = arith.constant 0 : index
    %c0_78 = arith.constant 0 : index
    %158 = vector.load %arg7[%c0_77, %c0_78] : memref<16x128xf32, #tpu.memory_space<vmem>>, vector<16x128xf32>
    %159 = arith.mulf %156, %158 : vector<16x128xf32>
    %160 = arith.mulf %155, %154 : vector<16x128xf32>
    %161 = arith.addf %159, %160 : vector<16x128xf32>
    %162 = math.tanh %161 : vector<16x128xf32>
    %163 = arith.mulf %157, %162 : vector<16x128xf32>
    %c0_79 = arith.constant 0 : index
    %c0_80 = arith.constant 0 : index
    %164 = vector.load %arg7[%c0_79, %c0_80] : memref<16x128xf32, #tpu.memory_space<vmem>>, vector<16x128xf32>
    tpu.vector_store %arg7[%c0_79, %c0_80], %161 {strides = array<i32>} : memref<16x128xf32, #tpu.memory_space<vmem>>, vector<16x128xf32>,
    %165 = vector.extract_strided_slice %163 {offsets = [0, 0], sizes = [8, 128], strides = [1, 1]} : vector<16x128xf32> to vector<8x128xf32>
    %c0_81 = arith.constant 0 : index
    %c0_82 = arith.constant 0 : index
    %166 = vector.load %arg6[%c0_81, %c0_82] : memref<16x256xf32, #tpu.memory_space<vmem>>, vector<8x128xf32>
    tpu.vector_store %arg6[%c0_81, %c0_82], %165 {strides = array<i32>} : memref<16x256xf32, #tpu.memory_space<vmem>>, vector<8x128xf32>,
    %167 = vector.extract_strided_slice %163 {offsets = [8, 0], sizes = [8, 128], strides = [1, 1]} : vector<16x128xf32> to vector<8x128xf32>
    %c8_83 = arith.constant 8 : index
    %c128_84 = arith.constant 128 : index
    %168 = vector.load %arg6[%c8_83, %c128_84] : memref<16x256xf32, #tpu.memory_space<vmem>>, vector<8x128xf32>
    tpu.vector_store %arg6[%c8_83, %c128_84], %167 {strides = array<i32>} : memref<16x256xf32, #tpu.memory_space<vmem>>, vector<8x128xf32>,
    %169 = vector.extract_strided_slice %163 {offsets = [0, 0], sizes = [8, 128], strides = [1, 1]} : vector<16x128xf32> to vector<8x128xf32>
    %170 = arith.index_cast %c3_i32 : i32 to index
    %c0_85 = arith.constant 0 : index
    %c0_86 = arith.constant 0 : index
    %171 = vector.load %arg4[%170, %c0_85, %c0_86] : memref<8x8x128xf32, #tpu.memory_space<vmem>>, vector<1x8x128xf32>
    %172 = vector.shape_cast %171 : vector<1x8x128xf32> to vector<8x128xf32>
    %173 = vector.shape_cast %169 : vector<8x128xf32> to vector<1x8x128xf32>
    tpu.vector_store %arg4[%170, %c0_85, %c0_86], %173 {strides = array<i32>} : memref<8x8x128xf32, #tpu.memory_space<vmem>>, vector<1x8x128xf32>,
    %174 = vector.extract_strided_slice %163 {offsets = [8, 0], sizes = [8, 128], strides = [1, 1]} : vector<16x128xf32> to vector<8x128xf32>
    %175 = arith.index_cast %135 : i32 to index
    %c0_87 = arith.constant 0 : index
    %c0_88 = arith.constant 0 : index
    %176 = vector.load %arg5[%175, %c0_87, %c0_88] : memref<8x8x128xf32, #tpu.memory_space<vmem>>, vector<1x8x128xf32>
    %177 = vector.shape_cast %176 : vector<1x8x128xf32> to vector<8x128xf32>
    %178 = vector.shape_cast %174 : vector<8x128xf32> to vector<1x8x128xf32>
    tpu.vector_store %arg5[%175, %c0_87, %c0_88], %178 {strides = array<i32>} : memref<8x8x128xf32, #tpu.memory_space<vmem>>, vector<1x8x128xf32>,
    %c4_i32 = arith.constant 4 : i32
    %c7_i32_89 = arith.constant 7 : i32
    %179 = arith.subi %c7_i32_89, %c4_i32 : i32
    %c0_90 = arith.constant 0 : index
    %c0_91 = arith.constant 0 : index
    %180 = vector.load %arg6[%c0_90, %c0_91] : memref<16x256xf32, #tpu.memory_space<vmem>>, vector<16x256xf32>
    %c0_92 = arith.constant 0 : index
    %c0_93 = arith.constant 0 : index
    %181 = vector.load %arg8[%c0_92, %c0_93] : memref<256x512xf32, #tpu.memory_space<vmem>>, vector<256x512xf32>
    %cst_94 = arith.constant dense<0.000000e+00> : vector<16x512xf32>
    %182 = tpu.matmul %180, %181, %cst_94 {dimension_numbers = #tpu.dot_dimension_numbers<[1], [0], [0], [1], [0, 0, 1, 1], [], []>} : vector<16x256xf32>, vector<256x512xf32>, vector<16x512xf32> -> vector<16x512xf32>
    %183 = arith.index_cast %c4_i32 : i32 to index
    %c0_95 = arith.constant 0 : index
    %c0_96 = arith.constant 0 : index
    %184 = vector.load %arg1[%183, %c0_95, %c0_96] : memref<8x8x512xf32, #tpu.memory_space<vmem>>, vector<1x8x512xf32>
    %185 = vector.shape_cast %184 : vector<1x8x512xf32> to vector<8x512xf32>
    %186 = arith.index_cast %179 : i32 to index
    %c0_97 = arith.constant 0 : index
    %c0_98 = arith.constant 0 : index
    %187 = vector.load %arg2[%186, %c0_97, %c0_98] : memref<8x8x512xf32, #tpu.memory_space<vmem>>, vector<1x8x512xf32>
    %188 = vector.shape_cast %187 : vector<1x8x512xf32> to vector<8x512xf32>
    %189 = tpu.concatenate %185, %188 in 0 : vector<8x512xf32>, vector<8x512xf32> -> vector<16x512xf32>
    %190 = arith.addf %189, %182 : vector<16x512xf32>
    %191 = vector.extract_strided_slice %190 {offsets = [0, 0], sizes = [16, 384], strides = [1, 1]} : vector<16x512xf32> to vector<16x384xf32>
    %192 = arith.negf %191 : vector<16x384xf32>
    %193 = math.exp %192 : vector<16x384xf32>
    %cst_99 = arith.constant 1.000000e+00 : f32
    %194 = vector.broadcast %cst_99 : f32 to vector<16x384xf32>
    %195 = arith.addf %194, %193 : vector<16x384xf32>
    %196 = arith.divf %194, %195 : vector<16x384xf32>
    %197 = vector.extract_strided_slice %190 {offsets = [0, 384], sizes = [16, 128], strides = [1, 1]} : vector<16x512xf32> to vector<16x128xf32>
    %198 = math.tanh %197 : vector<16x128xf32>
    %199 = vector.extract_strided_slice %196 {offsets = [0, 0], sizes = [16, 128], strides = [1, 1]} : vector<16x384xf32> to vector<16x128xf32>
    %200 = vector.extract_strided_slice %196 {offsets = [0, 128], sizes = [16, 128], strides = [1, 1]} : vector<16x384xf32> to vector<16x128xf32>
    %201 = vector.extract_strided_slice %196 {offsets = [0, 256], sizes = [16, 128], strides = [1, 1]} : vector<16x384xf32> to vector<16x128xf32>
    %c0_100 = arith.constant 0 : index
    %c0_101 = arith.constant 0 : index
    %202 = vector.load %arg7[%c0_100, %c0_101] : memref<16x128xf32, #tpu.memory_space<vmem>>, vector<16x128xf32>
    %203 = arith.mulf %200, %202 : vector<16x128xf32>
    %204 = arith.mulf %199, %198 : vector<16x128xf32>
    %205 = arith.addf %203, %204 : vector<16x128xf32>
    %206 = math.tanh %205 : vector<16x128xf32>
    %207 = arith.mulf %201, %206 : vector<16x128xf32>
    %c0_102 = arith.constant 0 : index
    %c0_103 = arith.constant 0 : index
    %208 = vector.load %arg7[%c0_102, %c0_103] : memref<16x128xf32, #tpu.memory_space<vmem>>, vector<16x128xf32>
    tpu.vector_store %arg7[%c0_102, %c0_103], %205 {strides = array<i32>} : memref<16x128xf32, #tpu.memory_space<vmem>>, vector<16x128xf32>,
    %209 = vector.extract_strided_slice %207 {offsets = [0, 0], sizes = [8, 128], strides = [1, 1]} : vector<16x128xf32> to vector<8x128xf32>
    %c0_104 = arith.constant 0 : index
    %c0_105 = arith.constant 0 : index
    %210 = vector.load %arg6[%c0_104, %c0_105] : memref<16x256xf32, #tpu.memory_space<vmem>>, vector<8x128xf32>
    tpu.vector_store %arg6[%c0_104, %c0_105], %209 {strides = array<i32>} : memref<16x256xf32, #tpu.memory_space<vmem>>, vector<8x128xf32>,
    %211 = vector.extract_strided_slice %207 {offsets = [8, 0], sizes = [8, 128], strides = [1, 1]} : vector<16x128xf32> to vector<8x128xf32>
    %c8_106 = arith.constant 8 : index
    %c128_107 = arith.constant 128 : index
    %212 = vector.load %arg6[%c8_106, %c128_107] : memref<16x256xf32, #tpu.memory_space<vmem>>, vector<8x128xf32>
    tpu.vector_store %arg6[%c8_106, %c128_107], %211 {strides = array<i32>} : memref<16x256xf32, #tpu.memory_space<vmem>>, vector<8x128xf32>,
    %213 = vector.extract_strided_slice %207 {offsets = [0, 0], sizes = [8, 128], strides = [1, 1]} : vector<16x128xf32> to vector<8x128xf32>
    %214 = arith.index_cast %c4_i32 : i32 to index
    %c0_108 = arith.constant 0 : index
    %c0_109 = arith.constant 0 : index
    %215 = vector.load %arg4[%214, %c0_108, %c0_109] : memref<8x8x128xf32, #tpu.memory_space<vmem>>, vector<1x8x128xf32>
    %216 = vector.shape_cast %215 : vector<1x8x128xf32> to vector<8x128xf32>
    %217 = vector.shape_cast %213 : vector<8x128xf32> to vector<1x8x128xf32>
    tpu.vector_store %arg4[%214, %c0_108, %c0_109], %217 {strides = array<i32>} : memref<8x8x128xf32, #tpu.memory_space<vmem>>, vector<1x8x128xf32>,
    %218 = vector.extract_strided_slice %207 {offsets = [8, 0], sizes = [8, 128], strides = [1, 1]} : vector<16x128xf32> to vector<8x128xf32>
    %219 = arith.index_cast %179 : i32 to index
    %c0_110 = arith.constant 0 : index
    %c0_111 = arith.constant 0 : index
    %220 = vector.load %arg5[%219, %c0_110, %c0_111] : memref<8x8x128xf32, #tpu.memory_space<vmem>>, vector<1x8x128xf32>
    %221 = vector.shape_cast %220 : vector<1x8x128xf32> to vector<8x128xf32>
    %222 = vector.shape_cast %218 : vector<8x128xf32> to vector<1x8x128xf32>
    tpu.vector_store %arg5[%219, %c0_110, %c0_111], %222 {strides = array<i32>} : memref<8x8x128xf32, #tpu.memory_space<vmem>>, vector<1x8x128xf32>,
    %c5_i32 = arith.constant 5 : i32
    %c7_i32_112 = arith.constant 7 : i32
    %223 = arith.subi %c7_i32_112, %c5_i32 : i32
    %c0_113 = arith.constant 0 : index
    %c0_114 = arith.constant 0 : index
    %224 = vector.load %arg6[%c0_113, %c0_114] : memref<16x256xf32, #tpu.memory_space<vmem>>, vector<16x256xf32>
    %c0_115 = arith.constant 0 : index
    %c0_116 = arith.constant 0 : index
    %225 = vector.load %arg8[%c0_115, %c0_116] : memref<256x512xf32, #tpu.memory_space<vmem>>, vector<256x512xf32>
    %cst_117 = arith.constant dense<0.000000e+00> : vector<16x512xf32>
    %226 = tpu.matmul %224, %225, %cst_117 {dimension_numbers = #tpu.dot_dimension_numbers<[1], [0], [0], [1], [0, 0, 1, 1], [], []>} : vector<16x256xf32>, vector<256x512xf32>, vector<16x512xf32> -> vector<16x512xf32>
    %227 = arith.index_cast %c5_i32 : i32 to index
    %c0_118 = arith.constant 0 : index
    %c0_119 = arith.constant 0 : index
    %228 = vector.load %arg1[%227, %c0_118, %c0_119] : memref<8x8x512xf32, #tpu.memory_space<vmem>>, vector<1x8x512xf32>
    %229 = vector.shape_cast %228 : vector<1x8x512xf32> to vector<8x512xf32>
    %230 = arith.index_cast %223 : i32 to index
    %c0_120 = arith.constant 0 : index
    %c0_121 = arith.constant 0 : index
    %231 = vector.load %arg2[%230, %c0_120, %c0_121] : memref<8x8x512xf32, #tpu.memory_space<vmem>>, vector<1x8x512xf32>
    %232 = vector.shape_cast %231 : vector<1x8x512xf32> to vector<8x512xf32>
    %233 = tpu.concatenate %229, %232 in 0 : vector<8x512xf32>, vector<8x512xf32> -> vector<16x512xf32>
    %234 = arith.addf %233, %226 : vector<16x512xf32>
    %235 = vector.extract_strided_slice %234 {offsets = [0, 0], sizes = [16, 384], strides = [1, 1]} : vector<16x512xf32> to vector<16x384xf32>
    %236 = arith.negf %235 : vector<16x384xf32>
    %237 = math.exp %236 : vector<16x384xf32>
    %cst_122 = arith.constant 1.000000e+00 : f32
    %238 = vector.broadcast %cst_122 : f32 to vector<16x384xf32>
    %239 = arith.addf %238, %237 : vector<16x384xf32>
    %240 = arith.divf %238, %239 : vector<16x384xf32>
    %241 = vector.extract_strided_slice %234 {offsets = [0, 384], sizes = [16, 128], strides = [1, 1]} : vector<16x512xf32> to vector<16x128xf32>
    %242 = math.tanh %241 : vector<16x128xf32>
    %243 = vector.extract_strided_slice %240 {offsets = [0, 0], sizes = [16, 128], strides = [1, 1]} : vector<16x384xf32> to vector<16x128xf32>
    %244 = vector.extract_strided_slice %240 {offsets = [0, 128], sizes = [16, 128], strides = [1, 1]} : vector<16x384xf32> to vector<16x128xf32>
    %245 = vector.extract_strided_slice %240 {offsets = [0, 256], sizes = [16, 128], strides = [1, 1]} : vector<16x384xf32> to vector<16x128xf32>
    %c0_123 = arith.constant 0 : index
    %c0_124 = arith.constant 0 : index
    %246 = vector.load %arg7[%c0_123, %c0_124] : memref<16x128xf32, #tpu.memory_space<vmem>>, vector<16x128xf32>
    %247 = arith.mulf %244, %246 : vector<16x128xf32>
    %248 = arith.mulf %243, %242 : vector<16x128xf32>
    %249 = arith.addf %247, %248 : vector<16x128xf32>
    %250 = math.tanh %249 : vector<16x128xf32>
    %251 = arith.mulf %245, %250 : vector<16x128xf32>
    %c0_125 = arith.constant 0 : index
    %c0_126 = arith.constant 0 : index
    %252 = vector.load %arg7[%c0_125, %c0_126] : memref<16x128xf32, #tpu.memory_space<vmem>>, vector<16x128xf32>
    tpu.vector_store %arg7[%c0_125, %c0_126], %249 {strides = array<i32>} : memref<16x128xf32, #tpu.memory_space<vmem>>, vector<16x128xf32>,
    %253 = vector.extract_strided_slice %251 {offsets = [0, 0], sizes = [8, 128], strides = [1, 1]} : vector<16x128xf32> to vector<8x128xf32>
    %c0_127 = arith.constant 0 : index
    %c0_128 = arith.constant 0 : index
    %254 = vector.load %arg6[%c0_127, %c0_128] : memref<16x256xf32, #tpu.memory_space<vmem>>, vector<8x128xf32>
    tpu.vector_store %arg6[%c0_127, %c0_128], %253 {strides = array<i32>} : memref<16x256xf32, #tpu.memory_space<vmem>>, vector<8x128xf32>,
    %255 = vector.extract_strided_slice %251 {offsets = [8, 0], sizes = [8, 128], strides = [1, 1]} : vector<16x128xf32> to vector<8x128xf32>
    %c8_129 = arith.constant 8 : index
    %c128_130 = arith.constant 128 : index
    %256 = vector.load %arg6[%c8_129, %c128_130] : memref<16x256xf32, #tpu.memory_space<vmem>>, vector<8x128xf32>
    tpu.vector_store %arg6[%c8_129, %c128_130], %255 {strides = array<i32>} : memref<16x256xf32, #tpu.memory_space<vmem>>, vector<8x128xf32>,
    %257 = vector.extract_strided_slice %251 {offsets = [0, 0], sizes = [8, 128], strides = [1, 1]} : vector<16x128xf32> to vector<8x128xf32>
    %258 = arith.index_cast %c5_i32 : i32 to index
    %c0_131 = arith.constant 0 : index
    %c0_132 = arith.constant 0 : index
    %259 = vector.load %arg4[%258, %c0_131, %c0_132] : memref<8x8x128xf32, #tpu.memory_space<vmem>>, vector<1x8x128xf32>
    %260 = vector.shape_cast %259 : vector<1x8x128xf32> to vector<8x128xf32>
    %261 = vector.shape_cast %257 : vector<8x128xf32> to vector<1x8x128xf32>
    tpu.vector_store %arg4[%258, %c0_131, %c0_132], %261 {strides = array<i32>} : memref<8x8x128xf32, #tpu.memory_space<vmem>>, vector<1x8x128xf32>,
    %262 = vector.extract_strided_slice %251 {offsets = [8, 0], sizes = [8, 128], strides = [1, 1]} : vector<16x128xf32> to vector<8x128xf32>
    %263 = arith.index_cast %223 : i32 to index
    %c0_133 = arith.constant 0 : index
    %c0_134 = arith.constant 0 : index
    %264 = vector.load %arg5[%263, %c0_133, %c0_134] : memref<8x8x128xf32, #tpu.memory_space<vmem>>, vector<1x8x128xf32>
    %265 = vector.shape_cast %264 : vector<1x8x128xf32> to vector<8x128xf32>
    %266 = vector.shape_cast %262 : vector<8x128xf32> to vector<1x8x128xf32>
    tpu.vector_store %arg5[%263, %c0_133, %c0_134], %266 {strides = array<i32>} : memref<8x8x128xf32, #tpu.memory_space<vmem>>, vector<1x8x128xf32>,
    %c6_i32 = arith.constant 6 : i32
    %c7_i32_135 = arith.constant 7 : i32
    %267 = arith.subi %c7_i32_135, %c6_i32 : i32
    %c0_136 = arith.constant 0 : index
    %c0_137 = arith.constant 0 : index
    %268 = vector.load %arg6[%c0_136, %c0_137] : memref<16x256xf32, #tpu.memory_space<vmem>>, vector<16x256xf32>
    %c0_138 = arith.constant 0 : index
    %c0_139 = arith.constant 0 : index
    %269 = vector.load %arg8[%c0_138, %c0_139] : memref<256x512xf32, #tpu.memory_space<vmem>>, vector<256x512xf32>
    %cst_140 = arith.constant dense<0.000000e+00> : vector<16x512xf32>
    %270 = tpu.matmul %268, %269, %cst_140 {dimension_numbers = #tpu.dot_dimension_numbers<[1], [0], [0], [1], [0, 0, 1, 1], [], []>} : vector<16x256xf32>, vector<256x512xf32>, vector<16x512xf32> -> vector<16x512xf32>
    %271 = arith.index_cast %c6_i32 : i32 to index
    %c0_141 = arith.constant 0 : index
    %c0_142 = arith.constant 0 : index
    %272 = vector.load %arg1[%271, %c0_141, %c0_142] : memref<8x8x512xf32, #tpu.memory_space<vmem>>, vector<1x8x512xf32>
    %273 = vector.shape_cast %272 : vector<1x8x512xf32> to vector<8x512xf32>
    %274 = arith.index_cast %267 : i32 to index
    %c0_143 = arith.constant 0 : index
    %c0_144 = arith.constant 0 : index
    %275 = vector.load %arg2[%274, %c0_143, %c0_144] : memref<8x8x512xf32, #tpu.memory_space<vmem>>, vector<1x8x512xf32>
    %276 = vector.shape_cast %275 : vector<1x8x512xf32> to vector<8x512xf32>
    %277 = tpu.concatenate %273, %276 in 0 : vector<8x512xf32>, vector<8x512xf32> -> vector<16x512xf32>
    %278 = arith.addf %277, %270 : vector<16x512xf32>
    %279 = vector.extract_strided_slice %278 {offsets = [0, 0], sizes = [16, 384], strides = [1, 1]} : vector<16x512xf32> to vector<16x384xf32>
    %280 = arith.negf %279 : vector<16x384xf32>
    %281 = math.exp %280 : vector<16x384xf32>
    %cst_145 = arith.constant 1.000000e+00 : f32
    %282 = vector.broadcast %cst_145 : f32 to vector<16x384xf32>
    %283 = arith.addf %282, %281 : vector<16x384xf32>
    %284 = arith.divf %282, %283 : vector<16x384xf32>
    %285 = vector.extract_strided_slice %278 {offsets = [0, 384], sizes = [16, 128], strides = [1, 1]} : vector<16x512xf32> to vector<16x128xf32>
    %286 = math.tanh %285 : vector<16x128xf32>
    %287 = vector.extract_strided_slice %284 {offsets = [0, 0], sizes = [16, 128], strides = [1, 1]} : vector<16x384xf32> to vector<16x128xf32>
    %288 = vector.extract_strided_slice %284 {offsets = [0, 128], sizes = [16, 128], strides = [1, 1]} : vector<16x384xf32> to vector<16x128xf32>
    %289 = vector.extract_strided_slice %284 {offsets = [0, 256], sizes = [16, 128], strides = [1, 1]} : vector<16x384xf32> to vector<16x128xf32>
    %c0_146 = arith.constant 0 : index
    %c0_147 = arith.constant 0 : index
    %290 = vector.load %arg7[%c0_146, %c0_147] : memref<16x128xf32, #tpu.memory_space<vmem>>, vector<16x128xf32>
    %291 = arith.mulf %288, %290 : vector<16x128xf32>
    %292 = arith.mulf %287, %286 : vector<16x128xf32>
    %293 = arith.addf %291, %292 : vector<16x128xf32>
    %294 = math.tanh %293 : vector<16x128xf32>
    %295 = arith.mulf %289, %294 : vector<16x128xf32>
    %c0_148 = arith.constant 0 : index
    %c0_149 = arith.constant 0 : index
    %296 = vector.load %arg7[%c0_148, %c0_149] : memref<16x128xf32, #tpu.memory_space<vmem>>, vector<16x128xf32>
    tpu.vector_store %arg7[%c0_148, %c0_149], %293 {strides = array<i32>} : memref<16x128xf32, #tpu.memory_space<vmem>>, vector<16x128xf32>,
    %297 = vector.extract_strided_slice %295 {offsets = [0, 0], sizes = [8, 128], strides = [1, 1]} : vector<16x128xf32> to vector<8x128xf32>
    %c0_150 = arith.constant 0 : index
    %c0_151 = arith.constant 0 : index
    %298 = vector.load %arg6[%c0_150, %c0_151] : memref<16x256xf32, #tpu.memory_space<vmem>>, vector<8x128xf32>
    tpu.vector_store %arg6[%c0_150, %c0_151], %297 {strides = array<i32>} : memref<16x256xf32, #tpu.memory_space<vmem>>, vector<8x128xf32>,
    %299 = vector.extract_strided_slice %295 {offsets = [8, 0], sizes = [8, 128], strides = [1, 1]} : vector<16x128xf32> to vector<8x128xf32>
    %c8_152 = arith.constant 8 : index
    %c128_153 = arith.constant 128 : index
    %300 = vector.load %arg6[%c8_152, %c128_153] : memref<16x256xf32, #tpu.memory_space<vmem>>, vector<8x128xf32>
    tpu.vector_store %arg6[%c8_152, %c128_153], %299 {strides = array<i32>} : memref<16x256xf32, #tpu.memory_space<vmem>>, vector<8x128xf32>,
    %301 = vector.extract_strided_slice %295 {offsets = [0, 0], sizes = [8, 128], strides = [1, 1]} : vector<16x128xf32> to vector<8x128xf32>
    %302 = arith.index_cast %c6_i32 : i32 to index
    %c0_154 = arith.constant 0 : index
    %c0_155 = arith.constant 0 : index
    %303 = vector.load %arg4[%302, %c0_154, %c0_155] : memref<8x8x128xf32, #tpu.memory_space<vmem>>, vector<1x8x128xf32>
    %304 = vector.shape_cast %303 : vector<1x8x128xf32> to vector<8x128xf32>
    %305 = vector.shape_cast %301 : vector<8x128xf32> to vector<1x8x128xf32>
    tpu.vector_store %arg4[%302, %c0_154, %c0_155], %305 {strides = array<i32>} : memref<8x8x128xf32, #tpu.memory_space<vmem>>, vector<1x8x128xf32>,
    %306 = vector.extract_strided_slice %295 {offsets = [8, 0], sizes = [8, 128], strides = [1, 1]} : vector<16x128xf32> to vector<8x128xf32>
    %307 = arith.index_cast %267 : i32 to index
    %c0_156 = arith.constant 0 : index
    %c0_157 = arith.constant 0 : index
    %308 = vector.load %arg5[%307, %c0_156, %c0_157] : memref<8x8x128xf32, #tpu.memory_space<vmem>>, vector<1x8x128xf32>
    %309 = vector.shape_cast %308 : vector<1x8x128xf32> to vector<8x128xf32>
    %310 = vector.shape_cast %306 : vector<8x128xf32> to vector<1x8x128xf32>
    tpu.vector_store %arg5[%307, %c0_156, %c0_157], %310 {strides = array<i32>} : memref<8x8x128xf32, #tpu.memory_space<vmem>>, vector<1x8x128xf32>,
    %c7_i32_158 = arith.constant 7 : i32
    %c7_i32_159 = arith.constant 7 : i32
    %311 = arith.subi %c7_i32_159, %c7_i32_158 : i32
    %c0_160 = arith.constant 0 : index
    %c0_161 = arith.constant 0 : index
    %312 = vector.load %arg6[%c0_160, %c0_161] : memref<16x256xf32, #tpu.memory_space<vmem>>, vector<16x256xf32>
    %c0_162 = arith.constant 0 : index
    %c0_163 = arith.constant 0 : index
    %313 = vector.load %arg8[%c0_162, %c0_163] : memref<256x512xf32, #tpu.memory_space<vmem>>, vector<256x512xf32>
    %cst_164 = arith.constant dense<0.000000e+00> : vector<16x512xf32>
    %314 = tpu.matmul %312, %313, %cst_164 {dimension_numbers = #tpu.dot_dimension_numbers<[1], [0], [0], [1], [0, 0, 1, 1], [], []>} : vector<16x256xf32>, vector<256x512xf32>, vector<16x512xf32> -> vector<16x512xf32>
    %315 = arith.index_cast %c7_i32_158 : i32 to index
    %c0_165 = arith.constant 0 : index
    %c0_166 = arith.constant 0 : index
    %316 = vector.load %arg1[%315, %c0_165, %c0_166] : memref<8x8x512xf32, #tpu.memory_space<vmem>>, vector<1x8x512xf32>
    %317 = vector.shape_cast %316 : vector<1x8x512xf32> to vector<8x512xf32>
    %318 = arith.index_cast %311 : i32 to index
    %c0_167 = arith.constant 0 : index
    %c0_168 = arith.constant 0 : index
    %319 = vector.load %arg2[%318, %c0_167, %c0_168] : memref<8x8x512xf32, #tpu.memory_space<vmem>>, vector<1x8x512xf32>
    %320 = vector.shape_cast %319 : vector<1x8x512xf32> to vector<8x512xf32>
    %321 = tpu.concatenate %317, %320 in 0 : vector<8x512xf32>, vector<8x512xf32> -> vector<16x512xf32>
    %322 = arith.addf %321, %314 : vector<16x512xf32>
    %323 = vector.extract_strided_slice %322 {offsets = [0, 0], sizes = [16, 384], strides = [1, 1]} : vector<16x512xf32> to vector<16x384xf32>
    %324 = arith.negf %323 : vector<16x384xf32>
    %325 = math.exp %324 : vector<16x384xf32>
    %cst_169 = arith.constant 1.000000e+00 : f32
    %326 = vector.broadcast %cst_169 : f32 to vector<16x384xf32>
    %327 = arith.addf %326, %325 : vector<16x384xf32>
    %328 = arith.divf %326, %327 : vector<16x384xf32>
    %329 = vector.extract_strided_slice %322 {offsets = [0, 384], sizes = [16, 128], strides = [1, 1]} : vector<16x512xf32> to vector<16x128xf32>
    %330 = math.tanh %329 : vector<16x128xf32>
    %331 = vector.extract_strided_slice %328 {offsets = [0, 0], sizes = [16, 128], strides = [1, 1]} : vector<16x384xf32> to vector<16x128xf32>
    %332 = vector.extract_strided_slice %328 {offsets = [0, 128], sizes = [16, 128], strides = [1, 1]} : vector<16x384xf32> to vector<16x128xf32>
    %333 = vector.extract_strided_slice %328 {offsets = [0, 256], sizes = [16, 128], strides = [1, 1]} : vector<16x384xf32> to vector<16x128xf32>
    %c0_170 = arith.constant 0 : index
    %c0_171 = arith.constant 0 : index
    %334 = vector.load %arg7[%c0_170, %c0_171] : memref<16x128xf32, #tpu.memory_space<vmem>>, vector<16x128xf32>
    %335 = arith.mulf %332, %334 : vector<16x128xf32>
    %336 = arith.mulf %331, %330 : vector<16x128xf32>
    %337 = arith.addf %335, %336 : vector<16x128xf32>
    %338 = math.tanh %337 : vector<16x128xf32>
    %339 = arith.mulf %333, %338 : vector<16x128xf32>
    %c0_172 = arith.constant 0 : index
    %c0_173 = arith.constant 0 : index
    %340 = vector.load %arg7[%c0_172, %c0_173] : memref<16x128xf32, #tpu.memory_space<vmem>>, vector<16x128xf32>
    tpu.vector_store %arg7[%c0_172, %c0_173], %337 {strides = array<i32>} : memref<16x128xf32, #tpu.memory_space<vmem>>, vector<16x128xf32>,
    %341 = vector.extract_strided_slice %339 {offsets = [0, 0], sizes = [8, 128], strides = [1, 1]} : vector<16x128xf32> to vector<8x128xf32>
    %c0_174 = arith.constant 0 : index
    %c0_175 = arith.constant 0 : index
    %342 = vector.load %arg6[%c0_174, %c0_175] : memref<16x256xf32, #tpu.memory_space<vmem>>, vector<8x128xf32>
    tpu.vector_store %arg6[%c0_174, %c0_175], %341 {strides = array<i32>} : memref<16x256xf32, #tpu.memory_space<vmem>>, vector<8x128xf32>,
    %343 = vector.extract_strided_slice %339 {offsets = [8, 0], sizes = [8, 128], strides = [1, 1]} : vector<16x128xf32> to vector<8x128xf32>
    %c8_176 = arith.constant 8 : index
    %c128_177 = arith.constant 128 : index
    %344 = vector.load %arg6[%c8_176, %c128_177] : memref<16x256xf32, #tpu.memory_space<vmem>>, vector<8x128xf32>
    tpu.vector_store %arg6[%c8_176, %c128_177], %343 {strides = array<i32>} : memref<16x256xf32, #tpu.memory_space<vmem>>, vector<8x128xf32>,
    %345 = vector.extract_strided_slice %339 {offsets = [0, 0], sizes = [8, 128], strides = [1, 1]} : vector<16x128xf32> to vector<8x128xf32>
    %346 = arith.index_cast %c7_i32_158 : i32 to index
    %c0_178 = arith.constant 0 : index
    %c0_179 = arith.constant 0 : index
    %347 = vector.load %arg4[%346, %c0_178, %c0_179] : memref<8x8x128xf32, #tpu.memory_space<vmem>>, vector<1x8x128xf32>
    %348 = vector.shape_cast %347 : vector<1x8x128xf32> to vector<8x128xf32>
    %349 = vector.shape_cast %345 : vector<8x128xf32> to vector<1x8x128xf32>
    tpu.vector_store %arg4[%346, %c0_178, %c0_179], %349 {strides = array<i32>} : memref<8x8x128xf32, #tpu.memory_space<vmem>>, vector<1x8x128xf32>,
    %350 = vector.extract_strided_slice %339 {offsets = [8, 0], sizes = [8, 128], strides = [1, 1]} : vector<16x128xf32> to vector<8x128xf32>
    %351 = arith.index_cast %311 : i32 to index
    %c0_180 = arith.constant 0 : index
    %c0_181 = arith.constant 0 : index
    %352 = vector.load %arg5[%351, %c0_180, %c0_181] : memref<8x8x128xf32, #tpu.memory_space<vmem>>, vector<1x8x128xf32>
    %353 = vector.shape_cast %352 : vector<1x8x128xf32> to vector<8x128xf32>
    %354 = vector.shape_cast %350 : vector<8x128xf32> to vector<1x8x128xf32>
    tpu.vector_store %arg5[%351, %c0_180, %c0_181], %354 {strides = array<i32>} : memref<8x8x128xf32, #tpu.memory_space<vmem>>, vector<1x8x128xf32>,
    %c8_i32 = arith.constant 8 : i32
    return
  }
  func.func @transform_0(%arg0: i32) -> (i32, i32, i32) {
    %c0_i32 = arith.constant 0 : i32
    %c0_i32_0 = arith.constant 0 : i32
    %c0_i32_1 = arith.constant 0 : i32
    return %arg0, %c0_i32, %c0_i32_0 : i32, i32, i32
  }
  func.func @transform_1(%arg0: i32) -> (i32, i32, i32) {
    %c0_i32 = arith.constant 0 : i32
    %0 = arith.subi %c0_i32, %arg0 : i32
    %c0_i32_0 = arith.constant 0 : i32
    %c0_i32_1 = arith.constant 0 : i32
    %c0_i32_2 = arith.constant 0 : i32
    return %0, %c0_i32_0, %c0_i32_1 : i32, i32, i32
  }
  func.func @transform_3(%arg0: i32) -> (i32, i32, i32) {
    %c0_i32 = arith.constant 0 : i32
    %c0_i32_0 = arith.constant 0 : i32
    %c0_i32_1 = arith.constant 0 : i32
    return %arg0, %c0_i32, %c0_i32_0 : i32, i32, i32
  }
  func.func @transform_4(%arg0: i32) -> (i32, i32, i32) {
    %c0_i32 = arith.constant 0 : i32
    %0 = arith.subi %c0_i32, %arg0 : i32
    %c0_i32_0 = arith.constant 0 : i32
    %c0_i32_1 = arith.constant 0 : i32
    %c0_i32_2 = arith.constant 0 : i32
    return %0, %c0_i32_0, %c0_i32_1 : i32, i32, i32
  }
}

</mosaic_0001>

<llo_original>
// kernel: bilstm_forward.2
$region0: #{bilstm_forward.2}
  #allocation0 [shape = 'u32[]', space=smem, size = 0x4, offset = 0x4, fixed_abs, tag = 'smem constant byte address 0x4 - core index']
  #allocation1 [shape = 'u32[144,128]{1,0:T(1,128)}', space=vmem, size = 0x12000, scoped, tag = 'internal scratch']
  #allocation2 [shape = 'f32[16,256]{1,0:T(8,128)}', space=vmem, size = 0x4000, scoped, tag = 'scratch operand']
  #allocation3 [shape = 'f32[16,128]{1,0:T(8,128)}', space=vmem, size = 0x2000, scoped, tag = 'scratch operand']
  #allocation4 [shape = 'f32[256,512]{1,0:T(8,128)}', space=vmem, size = 0x80000, scoped, tag = 'scratch operand']
  #allocation5 [shape = 's32[1]{0}', space=sflag, size = 0x4, scoped, tag = 'scratch operand']
  #allocation6 [shape = 's32[]', space=sflag, size = 0x4, offset = 0, fixed_abs, tag = 'sflag constant byte address 0x0 - dummy sync flag']
  #allocation7 [shape = 's32[]', space=sflag, size = 0x4, offset = 0, fixed_abs, tag = 'sflag constant byte address 0x0 - dummy sync flag']
  #allocation8 [shape = 'u32[]', space=smem, size = 0x4, offset = 0x44, fixed_abs, tag = 'smem constant byte address 0x44 - assertion arg 0']
  #allocation9 [shape = 'u32[]', space=smem, size = 0x4, offset = 0x48, fixed_abs, tag = 'smem constant byte address 0x48 - assertion arg 1']
  %s0 = inlined_call_operand.vmem [shape: f32[8,8,512], index: 0, kind: input, shape index: {}]
  %s1 = inlined_call_operand.vmem [shape: f32[8,8,512], index: 1, kind: input, shape index: {}]
  %s2 = inlined_call_operand.hbm [shape: f32[256,512], index: 2, kind: input, shape index: {}]
  %s3 = inlined_call_operand.vmem [shape: f32[8,8,128], index: 3, kind: output, shape index: {0}]
  %s4 = inlined_call_operand.vmem [shape: f32[8,8,128], index: 4, kind: output, shape index: {1}]
  %5 = xla_tuple %s3, %s4
  %s6 = sld [smem:[#allocation0]]
  $region34: #{bilstm_forward.2} parent=0
    _
  %s8 = ssub.s32 1, %s6
  %s9 = scalar_select 0, %s8, %s6
  // Predicated region
  $region2: #{bilstm_forward.2} parent=0 // pred_check
    _
  $region3: #{bilstm_forward.2} parent=0 // pred_check_branch
    %11 = sbr.rel (0) target = $region5
  $region4: #{bilstm_forward.2} parent=0 // pred_region
    _
  $region5: #{bilstm_forward.2} parent=0 // pred_fallthru
    _
  // Predicated region
  $region6: #{bilstm_forward.2} parent=0 // pred_check
    _
  $region7: #{bilstm_forward.2} parent=0 // pred_check_branch
    %13 = sbr.rel (0) target = $region9
  $region8: #{bilstm_forward.2} parent=0 // pred_region
    %s14 = ssub.s32 0, 0
    %s15 = smul.u32 8, %s14
    %p16 = scmp.lt.s32.totalorder %s15, 7
    %s17 = scalar_select %p16, %s15, 7
    %s18 = smul.addr %s17, 4
    %s19 = smul.addr %s18, 8
    %s20 = scalar_lea.vmem %s1, %s19
    %s21 = ssub.s32 0, 0
    %s22 = smul.u32 8, %s21
  $region9: #{bilstm_forward.2} parent=0 // pred_fallthru
    _
  %s23 = ssub.s32 0, 0
  %s24 = smul.u32 8, %s23
  %p25 = scmp.lt.s32.totalorder %s24, 7
  %s26 = scalar_select %p25, %s24, 7
  %s27 = smul.addr %s26, 4
  %s28 = smul.addr %s27, 8
  %s29 = scalar_lea.vmem %s1, %s28
  %s30 = ssub.s32 0, 0
  %s31 = smul.u32 8, %s30
  %p32 = scmp.lt.s32.totalorder %s31, 7
  %s33 = scalar_select %p32, %s31, 7
  %s34 = smul.addr %s33, 8
  %s35 = scalar_lea.vmem %s4, %s34
  %s36 = ssub.s32 0, 0
  %s37 = smul.u32 8, %s36
  %p38 = scmp.lt.s32.totalorder %s37, 7
  %s39 = scalar_select %p38, %s37, 7
  %s40 = smul.addr %s39, 4
  %s41 = smul.addr %s40, 8
  %s42 = scalar_lea.vmem %s1, %s41
  %s43 = ssub.s32 0, 0
  %s44 = smul.u32 8, %s43
  %s45 = ssub.s32 0, 0
  %s46 = smul.u32 8, %s45
  %p47 = scmp.lt.s32.totalorder %s46, 7
  %s48 = scalar_select %p47, %s46, 7
  %s49 = smul.addr %s48, 8
  %s50 = scalar_lea.vmem %s4, %s49
  %s51 = ssub.s32 0, 0
  %s52 = smul.u32 8, %s51
  %p53 = scmp.eq.s32.totalorder 0, 0
  // Predicated region
  $region10: #{bilstm_forward.2} parent=0 // pred_check
    %p54 = pneg %p53
  $region11: #{bilstm_forward.2} parent=0 // pred_check_branch
    %56 = sbr.rel (%p54) target = $region13
  $region12: #{bilstm_forward.2} parent=0 // pred_region
    // Predicated region
    $region14: #{bilstm_forward.2} parent=12 // pred_check
      _
    $region15: #{bilstm_forward.2} parent=12 // pred_check_branch
      %58 = sbr.rel target = $region17
    $region16: #{bilstm_forward.2} parent=12 // pred_region
      %59 = sst [smem:[#allocation8]] [#allocation7]
      %60 = sst [smem:[#allocation9]] [#allocation6]
    $region17: #{bilstm_forward.2} parent=12 // pred_fallthru
      _
    %62 = shalt.err (0)
    %s64 = sshll.u32 [#allocation4], 4
    %s65 = int_to_ptr.vmem [resolvable:$true] %s64
    %67 = dma.hbm_to_vmem [thread:$0]  %s2, 16384, %s65, [#allocation5]
    %68 = vst [vmem:[#allocation2] sm:$0xff] 0.0
    %69 = vst [vmem:[#allocation2 + $0x8] sm:$0xff] 0.0
    %70 = vst [vmem:[#allocation2 + $0x10] sm:$0xff] 0.0
    %71 = vst [vmem:[#allocation2 + $0x18] sm:$0xff] 0.0
    %72 = vst [vmem:[#allocation3] sm:$0xff] 0.0
    %73 = vst [vmem:[#allocation3 + $0x8] sm:$0xff] 0.0
    %s74 = smul.u32 8, 32
    %s75 = smul.u32 %s74, 4
    %s76 = sshll.u32 %s75, 4
    %77 = dma.done [#allocation5], %s76
  $region13: #{bilstm_forward.2} parent=0 // pred_fallthru
    _
  %v78 = vld [vmem:[#allocation2] sm:$0xff]
  %v79 = vld [vmem:[#allocation2 + $0x8] sm:$0xff]
  %v80 = vld [vmem:[#allocation2 + $0x10] sm:$0xff]
  %v81 = vld [vmem:[#allocation2 + $0x18] sm:$0xff]
  %v82 = vld [vmem:[#allocation4] sm:$0xff]
  %v83 = vld [vmem:[#allocation4 + $0x8] sm:$0xff]
  %v84 = vld [vmem:[#allocation4 + $0x10] sm:$0xff]
  %v85 = vld [vmem:[#allocation4 + $0x18] sm:$0xff]
  %v86 = vld [vmem:[#allocation4 + $0x20] sm:$0xff]
  %v87 = vld [vmem:[#allocation4 + $0x28] sm:$0xff]
  %v88 = vld [vmem:[#allocation4 + $0x30] sm:$0xff]
  %v89 = vld [vmem:[#allocation4 + $0x38] sm:$0xff]
  %v90 = vld [vmem:[#allocation4 + $0x40] sm:$0xff]
  %v91 = vld [vmem:[#allocation4 + $0x48] sm:$0xff]
  %v92 = vld [vmem:[#allocation4 + $0x50] sm:$0xff]
  %v93 = vld [vmem:[#allocation4 + $0x58] sm:$0xff]
  %v94 = vld [vmem:[#allocation4 + $0x60] sm:$0xff]
  %v95 = vld [vmem:[#allocation4 + $0x68] sm:$0xff]
  %v96 = vld [vmem:[#allocation4 + $0x70] sm:$0xff]
  %v97 = vld [vmem:[#allocation4 + $0x78] sm:$0xff]
  %v98 = vld [vmem:[#allocation4 + $0x80] sm:$0xff]
  %v99 = vld [vmem:[#allocation4 + $0x88] sm:$0xff]
  %v100 = vld [vmem:[#allocation4 + $0x90] sm:$0xff]
  %v101 = vld [vmem:[#allocation4 + $0x98] sm:$0xff]
  %v102 = vld [vmem:[#allocation4 + $0xa0] sm:$0xff]
  %v103 = vld [vmem:[#allocation4 + $0xa8] sm:$0xff]
  %v104 = vld [vmem:[#allocation4 + $0xb0] sm:$0xff]
  %v105 = vld [vmem:[#allocation4 + $0xb8] sm:$0xff]
  %v106 = vld [vmem:[#allocation4 + $0xc0] sm:$0xff]
  %v107 = vld [vmem:[#allocation4 + $0xc8] sm:$0xff]
  %v108 = vld [vmem:[#allocation4 + $0xd0] sm:$0xff]
  %v109 = vld [vmem:[#allocation4 + $0xd8] sm:$0xff]
  %v110 = vld [vmem:[#allocation4 + $0xe0] sm:$0xff]
  %v111 = vld [vmem:[#allocation4 + $0xe8] sm:$0xff]
  %v112 = vld [vmem:[#allocation4 + $0xf0] sm:$0xff]
  %v113 = vld [vmem:[#allocation4 + $0xf8] sm:$0xff]
  %v114 = vld [vmem:[#allocation4 + $0x100] sm:$0xff]
  %v115 = vld [vmem:[#allocation4 + $0x108] sm:$0xff]
  %v116 = vld [vmem:[#allocation4 + $0x110] sm:$0xff]
  %v117 = vld [vmem:[#allocation4 + $0x118] sm:$0xff]
  %v118 = vld [vmem:[#allocation4 + $0x120] sm:$0xff]
  %v119 = vld [vmem:[#allocation4 + $0x128] sm:$0xff]
  %v120 = vld [vmem:[#allocation4 + $0x130] sm:$0xff]
  %v121 = vld [vmem:[#allocation4 + $0x138] sm:$0xff]
  %v122 = vld [vmem:[#allocation4 + $0x140] sm:$0xff]
  %v123 = vld [vmem:[#allocation4 + $0x148] sm:$0xff]
  %v124 = vld [vmem:[#allocation4 + $0x150] sm:$0xff]
  %v125 = vld [vmem:[#allocation4 + $0x158] sm:$0xff]
  %v126 = vld [vmem:[#allocation4 + $0x160] sm:$0xff]
  %v127 = vld [vmem:[#allocation4 + $0x168] sm:$0xff]
  %v128 = vld [vmem:[#allocation4 + $0x170] sm:$0xff]
  %v129 = vld [vmem:[#allocation4 + $0x178] sm:$0xff]
  %v130 = vld [vmem:[#allocation4 + $0x180] sm:$0xff]
  %v131 = vld [vmem:[#allocation4 + $0x188] sm:$0xff]
  %v132 = vld [vmem:[#allocation4 + $0x190] sm:$0xff]
  %v133 = vld [vmem:[#allocation4 + $0x198] sm:$0xff]
  %v134 = vld [vmem:[#allocation4 + $0x1a0] sm:$0xff]
  %v135 = vld [vmem:[#allocation4 + $0x1a8] sm:$0xff]
  %v136 = vld [vmem:[#allocation4 + $0x1b0] sm:$0xff]
  %v137 = vld [vmem:[#allocation4 + $0x1b8] sm:$0xff]
  %v138 = vld [vmem:[#allocation4 + $0x1c0] sm:$0xff]
  %v139 = vld [vmem:[#allocation4 + $0x1c8] sm:$0xff]
  %v140 = vld [vmem:[#allocation4 + $0x1d0] sm:$0xff]
  %v141 = vld [vmem:[#allocation4 + $0x1d8] sm:$0xff]
  %v142 = vld [vmem:[#allocation4 + $0x1e0] sm:$0xff]
  %v143 = vld [vmem:[#allocation4 + $0x1e8] sm:$0xff]
  %v144 = vld [vmem:[#allocation4 + $0x1f0] sm:$0xff]
  %v145 = vld [vmem:[#allocation4 + $0x1f8] sm:$0xff]
  %v146 = vld [vmem:[#allocation4 + $0x200] sm:$0xff]
  %v147 = vld [vmem:[#allocation4 + $0x208] sm:$0xff]
  %v148 = vld [vmem:[#allocation4 + $0x210] sm:$0xff]
  %v149 = vld [vmem:[#allocation4 + $0x218] sm:$0xff]
  %v150 = vld [vmem:[#allocation4 + $0x220] sm:$0xff]
  %v151 = vld [vmem:[#allocation4 + $0x228] sm:$0xff]
  %v152 = vld [vmem:[#allocation4 + $0x230] sm:$0xff]
  %v153 = vld [vmem:[#allocation4 + $0x238] sm:$0xff]
  %v154 = vld [vmem:[#allocation4 + $0x240] sm:$0xff]
  %v155 = vld [vmem:[#allocation4 + $0x248] sm:$0xff]
  %v156 = vld [vmem:[#allocation4 + $0x250] sm:$0xff]
  %v157 = vld [vmem:[#allocation4 + $0x258] sm:$0xff]
  %v158 = vld [vmem:[#allocation4 + $0x260] sm:$0xff]
  %v159 = vld [vmem:[#allocation4 + $0x268] sm:$0xff]
  %v160 = vld [vmem:[#allocation4 + $0x270] sm:$0xff]
  %v161 = vld [vmem:[#allocation4 + $0x278] sm:$0xff]
  %v162 = vld [vmem:[#allocation4 + $0x280] sm:$0xff]
  %v163 = vld [vmem:[#allocation4 + $0x288] sm:$0xff]
  %v164 = vld [vmem:[#allocation4 + $0x290] sm:$0xff]
  %v165 = vld [vmem:[#allocation4 + $0x298] sm:$0xff]
  %v166 = vld [vmem:[#allocation4 + $0x2a0] sm:$0xff]
  %v167 = vld [vmem:[#allocation4 + $0x2a8] sm:$0xff]
  %v168 = vld [vmem:[#allocation4 + $0x2b0] sm:$0xff]
  %v169 = vld [vmem:[#allocation4 + $0x2b8] sm:$0xff]
  %v170 = vld [vmem:[#allocation4 + $0x2c0] sm:$0xff]
  %v171 = vld [vmem:[#allocation4 + $0x2c8] sm:$0xff]
  %v172 = vld [vmem:[#allocation4 + $0x2d0] sm:$0xff]
  %v173 = vld [vmem:[#allocation4 + $0x2d8] sm:$0xff]
  %v174 = vld [vmem:[#allocation4 + $0x2e0] sm:$0xff]
  %v175 = vld [vmem:[#allocation4 + $0x2e8] sm:$0xff]
  %v176 = vld [vmem:[#allocation4 + $0x2f0] sm:$0xff]
  %v177 = vld [vmem:[#allocation4 + $0x2f8] sm:$0xff]
  %v178 = vld [vmem:[#allocation4 + $0x300] sm:$0xff]
  %v179 = vld [vmem:[#allocation4 + $0x308] sm:$0xff]
  %v180 = vld [vmem:[#allocation4 + $0x310] sm:$0xff]
  %v181 = vld [vmem:[#allocation4 + $0x318] sm:$0xff]
  %v182 = vld [vmem:[#allocation4 + $0x320] sm:$0xff]
  %v183 = vld [vmem:[#allocation4 + $0x328] sm:$0xff]
  %v184 = vld [vmem:[#allocation4 + $0x330] sm:$0xff]
  %v185 = vld [vmem:[#allocation4 + $0x338] sm:$0xff]
  %v186 = vld [vmem:[#allocation4 + $0x340] sm:$0xff]
  %v187 = vld [vmem:[#allocation4 + $0x348] sm:$0xff]
  %v188 = vld [vmem:[#allocation4 + $0x350] sm:$0xff]
  %v189 = vld [vmem:[#allocation4 + $0x358] sm:$0xff]
  %v190 = vld [vmem:[#allocation4 + $0x360] sm:$0xff]
  %v191 = vld [vmem:[#allocation4 + $0x368] sm:$0xff]
  %v192 = vld [vmem:[#allocation4 + $0x370] sm:$0xff]
  %v193 = vld [vmem:[#allocation4 + $0x378] sm:$0xff]
  %v194 = vld [vmem:[#allocation4 + $0x380] sm:$0xff]
  %v195 = vld [vmem:[#allocation4 + $0x388] sm:$0xff]
  %v196 = vld [vmem:[#allocation4 + $0x390] sm:$0xff]
  %v197 = vld [vmem:[#allocation4 + $0x398] sm:$0xff]
  %v198 = vld [vmem:[#allocation4 + $0x3a0] sm:$0xff]
  %v199 = vld [vmem:[#allocation4 + $0x3a8] sm:$0xff]
  %v200 = vld [vmem:[#allocation4 + $0x3b0] sm:$0xff]
  %v201 = vld [vmem:[#allocation4 + $0x3b8] sm:$0xff]
  %v202 = vld [vmem:[#allocation4 + $0x3c0] sm:$0xff]
  %v203 = vld [vmem:[#allocation4 + $0x3c8] sm:$0xff]
  %v204 = vld [vmem:[#allocation4 + $0x3d0] sm:$0xff]
  %v205 = vld [vmem:[#allocation4 + $0x3d8] sm:$0xff]
  %v206 = vld [vmem:[#allocation4 + $0x3e0] sm:$0xff]
  %v207 = vld [vmem:[#allocation4 + $0x3e8] sm:$0xff]
  %v208 = vld [vmem:[#allocation4 + $0x3f0] sm:$0xff]
  %v209 = vld [vmem:[#allocation4 + $0x3f8] sm:$0xff]
  %210 = vmatprep.subr.mxu0 %v83
  %211 = vmatpush1.msra.mxu0 %v82
  %212 = vmatprep.subr.mxu0 %v87
  %213 = vmatpush1.msra.mxu0 %v86
  %214 = vmatprep.subr.mxu0 %v91
  %215 = vmatpush1.msra.mxu0 %v90
  %216 = vmatprep.subr.mxu0 %v95
  %217 = vmatpush1.msra.mxu0 %v94
  %218 = vmatprep.subr.mxu0 %v99
  %219 = vmatpush1.msra.mxu0 %v98
  %220 = vmatprep.subr.mxu0 %v103
  %221 = vmatpush1.msra.mxu0 %v102
  %222 = vmatprep.subr.mxu0 %v107
  %223 = vmatpush1.msra.mxu0 %v106
  %224 = vmatprep.subr.mxu0 %v111
  %225 = vmatpush1.msra.mxu0 %v110
  %226 = vmatprep.subr.mxu0 %v115
  %227 = vmatpush1.msra.mxu0 %v114
  %228 = vmatprep.subr.mxu0 %v119
  %229 = vmatpush1.msra.mxu0 %v118
  %230 = vmatprep.subr.mxu0 %v123
  %231 = vmatpush1.msra.mxu0 %v122
  %232 = vmatprep.subr.mxu0 %v127
  %233 = vmatpush1.msra.mxu0 %v126
  %234 = vmatprep.subr.mxu0 %v131
  %235 = vmatpush1.msra.mxu0 %v130
  %236 = vmatprep.subr.mxu0 %v135
  %237 = vmatpush1.msra.mxu0 %v134
  %238 = vmatprep.subr.mxu0 %v139
  %239 = vmatpush1.msra.mxu0 %v138
  %240 = vmatprep.subr.mxu0 %v143
  %241 = vmatpush1.msra.mxu0 %v142
  %242 = vmatprep.subr.mxu0 %v147
  %243 = vmatpush1.msra.mxu0 %v146
  %244 = vmatprep.subr.mxu0 %v151
  %245 = vmatpush1.msra.mxu0 %v150
  %246 = vmatprep.subr.mxu0 %v155
  %247 = vmatpush1.msra.mxu0 %v154
  %248 = vmatprep.subr.mxu0 %v159
  %249 = vmatpush1.msra.mxu0 %v158
  %250 = vmatprep.subr.mxu0 %v163
  %251 = vmatpush1.msra.mxu0 %v162
  %252 = vmatprep.subr.mxu0 %v167
  %253 = vmatpush1.msra.mxu0 %v166
  %254 = vmatprep.subr.mxu0 %v171
  %255 = vmatpush1.msra.mxu0 %v170
  %256 = vmatprep.subr.mxu0 %v175
  %257 = vmatpush1.msra.mxu0 %v174
  %258 = vmatprep.subr.mxu0 %v179
  %259 = vmatpush1.msra.mxu0 %v178
  %260 = vmatprep.subr.mxu0 %v183
  %261 = vmatpush1.msra.mxu0 %v182
  %262 = vmatprep.subr.mxu0 %v187
  %263 = vmatpush1.msra.mxu0 %v186
  %264 = vmatprep.subr.mxu0 %v191
  %265 = vmatpush1.msra.mxu0 %v190
  %266 = vmatprep.subr.mxu0 %v195
  %267 = vmatpush1.msra.mxu0 %v194
  %268 = vmatprep.subr.mxu0 %v199
  %269 = vmatpush1.msra.mxu0 %v198
  %270 = vmatprep.subr.mxu0 %v203
  %271 = vmatpush1.msra.mxu0 %v202
  %272 = vmatprep.subr.mxu0 %v207
  %273 = vmatpush1.msra.mxu0 %v206
  %274 = vmatprep.mubr.f32.mxu0 %v79
  %275 = vmatmul.mubr.f32.gmra.mrb[0].mxu0 %v78
  %v276 = vpop.f32.mrb[0].mxu0
  %v277 = vadd.f32 0.0, %v276
  %v278 = vpop.f32.mrb[0].mxu0
  %v279 = vadd.f32 0.0, %v278
  %280 = vmatprep.mubr.f32.mxu0 %v81
  %281 = vmatmul.mubr.f32.gmra.mrb[0].mxu0 %v80
  %v282 = vpop.f32.mrb[0].mxu0
  %v283 = vadd.f32 0.0, %v282
  %v284 = vpop.f32.mrb[0].mxu0
  %v285 = vadd.f32 0.0, %v284
  %286 = vdwg.mxu0
  %287 = vmatprep.subr.mxu0 %v85
  %288 = vmatpush1.msra.mxu0 %v84
  %289 = vmatprep.subr.mxu0 %v89
  %290 = vmatpush1.msra.mxu0 %v88
  %291 = vmatprep.subr.mxu0 %v93
  %292 = vmatpush1.msra.mxu0 %v92
  %293 = vmatprep.subr.mxu0 %v97
  %294 = vmatpush1.msra.mxu0 %v96
  %295 = vmatprep.subr.mxu0 %v101
  %296 = vmatpush1.msra.mxu0 %v100
  %297 = vmatprep.subr.mxu0 %v105
  %298 = vmatpush1.msra.mxu0 %v104
  %299 = vmatprep.subr.mxu0 %v109
  %300 = vmatpush1.msra.mxu0 %v108
  %301 = vmatprep.subr.mxu0 %v113
  %302 = vmatpush1.msra.mxu0 %v112
  %303 = vmatprep.subr.mxu0 %v117
  %304 = vmatpush1.msra.mxu0 %v116
  %305 = vmatprep.subr.mxu0 %v121
  %306 = vmatpush1.msra.mxu0 %v120
  %307 = vmatprep.subr.mxu0 %v125
  %308 = vmatpush1.msra.mxu0 %v124
  %309 = vmatprep.subr.mxu0 %v129
  %310 = vmatpush1.msra.mxu0 %v128
  %311 = vmatprep.subr.mxu0 %v133
  %312 = vmatpush1.msra.mxu0 %v132
  %313 = vmatprep.subr.mxu0 %v137
  %314 = vmatpush1.msra.mxu0 %v136
  %315 = vmatprep.subr.mxu0 %v141
  %316 = vmatpush1.msra.mxu0 %v140
  %317 = vmatprep.subr.mxu0 %v145
  %318 = vmatpush1.msra.mxu0 %v144
  %319 = vmatprep.subr.mxu0 %v149
  %320 = vmatpush1.msra.mxu0 %v148
  %321 = vmatprep.subr.mxu0 %v153
  %322 = vmatpush1.msra.mxu0 %v152
  %323 = vmatprep.subr.mxu0 %v157
  %324 = vmatpush1.msra.mxu0 %v156
  %325 = vmatprep.subr.mxu0 %v161
  %326 = vmatpush1.msra.mxu0 %v160
  %327 = vmatprep.subr.mxu0 %v165
  %328 = vmatpush1.msra.mxu0 %v164
  %329 = vmatprep.subr.mxu0 %v169
  %330 = vmatpush1.msra.mxu0 %v168
  %331 = vmatprep.subr.mxu0 %v173
  %332 = vmatpush1.msra.mxu0 %v172
  %333 = vmatprep.subr.mxu0 %v177
  %334 = vmatpush1.msra.mxu0 %v176
  %335 = vmatprep.subr.mxu0 %v181
  %336 = vmatpush1.msra.mxu0 %v180
  %337 = vmatprep.subr.mxu0 %v185
  %338 = vmatpush1.msra.mxu0 %v184
  %339 = vmatprep.subr.mxu0 %v189
  %340 = vmatpush1.msra.mxu0 %v188
  %341 = vmatprep.subr.mxu0 %v193
  %342 = vmatpush1.msra.mxu0 %v192
  %343 = vmatprep.subr.mxu0 %v197
  %344 = vmatpush1.msra.mxu0 %v196
  %345 = vmatprep.subr.mxu0 %v201
  %346 = vmatpush1.msra.mxu0 %v200
  %347 = vmatprep.subr.mxu0 %v205
  %348 = vmatpush1.msra.mxu0 %v204
  %349 = vmatprep.subr.mxu0 %v209
  %350 = vmatpush1.msra.mxu0 %v208
  %351 = vmatprep.mubr.f32.mxu0 %v79
  %352 = vmatmul.mubr.f32.gmra.mrb[0].mxu0 %v78
  %v353 = vpop.f32.mrb[0].mxu0
  %v354 = vadd.f32 0.0, %v353
  %v355 = vpop.f32.mrb[0].mxu0
  %v356 = vadd.f32 0.0, %v355
  %357 = vmatprep.mubr.f32.mxu0 %v81
  %358 = vmatmul.mubr.f32.gmra.mrb[0].mxu0 %v80
  %v359 = vpop.f32.mrb[0].mxu0
  %v360 = vadd.f32 0.0, %v359
  %v361 = vpop.f32.mrb[0].mxu0
  %v362 = vadd.f32 0.0, %v361
  %363 = vdwg.mxu0
  %v364 = vld [vmem:[%s0] sm:$0xff]
  %v365 = vld [vmem:[%s0 + $0x8] sm:$0xff]
  %v366 = vld [vmem:[%s0 + $0x10] sm:$0xff]
  %v367 = vld [vmem:[%s0 + $0x18] sm:$0xff]
  %s368 = scalar_lea.vmem %s42, 224
  %v369 = vld [vmem:[%s368] sm:$0xff]
  %v370 = vld [vmem:[%s368 + $0x8] sm:$0xff]
  %v371 = vld [vmem:[%s368 + $0x10] sm:$0xff]
  %v372 = vld [vmem:[%s368 + $0x18] sm:$0xff]
  %v373 = vadd.f32 %v364, %v277
  %v374 = vadd.f32 %v365, %v279
  %v375 = vadd.f32 %v366, %v354
  %v376 = vadd.f32 %v367, %v356
  %v377 = vadd.f32 %v369, %v283
  %v378 = vadd.f32 %v370, %v285
  %v379 = vadd.f32 %v371, %v360
  %v380 = vadd.f32 %v372, %v362
  %v381 = vxor.u32 %v373, 2147483648
  %v382 = vxor.u32 %v374, 2147483648
  %v383 = vxor.u32 %v375, 2147483648
  %v384 = vxor.u32 %v377, 2147483648
  %v385 = vxor.u32 %v378, 2147483648
  %v386 = vxor.u32 %v379, 2147483648
  %v387 = vmul.f32 %v381, 1.442695
  %v388 = vpow.pop %v387
  %v389 = vmul.f32 %v382, 1.442695
  %v390 = vpow.pop %v389
  %v391 = vmul.f32 %v383, 1.442695
  %v392 = vpow.pop %v391
  %v393 = vmul.f32 %v384, 1.442695
  %v394 = vpow.pop %v393
  %v395 = vmul.f32 %v385, 1.442695
  %v396 = vpow.pop %v395
  %v397 = vmul.f32 %v386, 1.442695
  %v398 = vpow.pop %v397
  %v399 = vadd.f32 %v388, 1.0
  %v400 = vadd.f32 %v390, 1.0
  %v401 = vadd.f32 %v392, 1.0
  %v402 = vadd.f32 %v394, 1.0
  %v403 = vadd.f32 %v396, 1.0
  %v404 = vadd.f32 %v398, 1.0
  %v405 = vrcp.pop %v399
  %v406 = vmul.f32 1.0, %v405
  %v407 = vrcp.pop %v400
  %v408 = vmul.f32 1.0, %v407
  %v409 = vrcp.pop %v401
  %v410 = vmul.f32 1.0, %v409
  %v411 = vrcp.pop %v402
  %v412 = vmul.f32 1.0, %v411
  %v413 = vrcp.pop %v403
  %v414 = vmul.f32 1.0, %v413
  %v415 = vrcp.pop %v404
  %v416 = vmul.f32 1.0, %v415
  %v417 = vtanh.pop %v376
  %v418 = vtanh.pop %v380
  %v419 = vld [vmem:[#allocation3] sm:$0xff]
  %v420 = vld [vmem:[#allocation3 + $0x8] sm:$0xff]
  %v421 = vmul.f32 %v408, %v419
  %v422 = vmul.f32 %v414, %v420
  %v423 = vmul.f32 %v406, %v417
  %v424 = vmul.f32 %v412, %v418
  %v425 = vadd.f32 %v421, %v423
  %v426 = vadd.f32 %v422, %v424
  %v427 = vtanh.pop %v425
  %v428 = vtanh.pop %v426
  %v429 = vmul.f32 %v410, %v427
  %v430 = vmul.f32 %v416, %v428
  %431 = vst [vmem:[#allocation3] sm:$0xff] %v425
  %432 = vst [vmem:[#allocation3 + $0x8] sm:$0xff] %v426
  %433 = vst [vmem:[#allocation2] sm:$0xff] %v429
  %434 = vst [vmem:[#allocation2 + $0x18] sm:$0xff] %v430
  %435 = vst [vmem:[%s3] sm:$0xff] %v429
  %s436 = scalar_lea.vmem %s50, 56
  %437 = vst [vmem:[%s436] sm:$0xff] %v430
  %v438 = vld [vmem:[#allocation2] sm:$0xff]
  %v439 = vld [vmem:[#allocation2 + $0x8] sm:$0xff]
  %v440 = vld [vmem:[#allocation2 + $0x10] sm:$0xff]
  %v441 = vld [vmem:[#allocation2 + $0x18] sm:$0xff]
  %v442 = vld [vmem:[#allocation4] sm:$0xff]
  %v443 = vld [vmem:[#allocation4 + $0x8] sm:$0xff]
  %v444 = vld [vmem:[#allocation4 + $0x10] sm:$0xff]
  %v445 = vld [vmem:[#allocation4 + $0x18] sm:$0xff]
  %v446 = vld [vmem:[#allocation4 + $0x20] sm:$0xff]
  %v447 = vld [vmem:[#allocation4 + $0x28] sm:$0xff]
  %v448 = vld [vmem:[#allocation4 + $0x30] sm:$0xff]
  %v449 = vld [vmem:[#allocation4 + $0x38] sm:$0xff]
  %v450 = vld [vmem:[#allocation4 + $0x40] sm:$0xff]
  %v451 = vld [vmem:[#allocation4 + $0x48] sm:$0xff]
  %v452 = vld [vmem:[#allocation4 + $0x50] sm:$0xff]
  %v453 = vld [vmem:[#allocation4 + $0x58] sm:$0xff]
  %v454 = vld [vmem:[#allocation4 + $0x60] sm:$0xff]
  %v455 = vld [vmem:[#allocation4 + $0x68] sm:$0xff]
  %v456 = vld [vmem:[#allocation4 + $0x70] sm:$0xff]
  %v457 = vld [vmem:[#allocation4 + $0x78] sm:$0xff]
  %v458 = vld [vmem:[#allocation4 + $0x80] sm:$0xff]
  %v459 = vld [vmem:[#allocation4 + $0x88] sm:$0xff]
  %v460 = vld [vmem:[#allocation4 + $0x90] sm:$0xff]
  %v461 = vld [vmem:[#allocation4 + $0x98] sm:$0xff]
  %v462 = vld [vmem:[#allocation4 + $0xa0] sm:$0xff]
  %v463 = vld [vmem:[#allocation4 + $0xa8] sm:$0xff]
  %v464 = vld [vmem:[#allocation4 + $0xb0] sm:$0xff]
  %v465 = vld [vmem:[#allocation4 + $0xb8] sm:$0xff]
  %v466 = vld [vmem:[#allocation4 + $0xc0] sm:$0xff]
  %v467 = vld [vmem:[#allocation4 + $0xc8] sm:$0xff]
  %v468 = vld [vmem:[#allocation4 + $0xd0] sm:$0xff]
  %v469 = vld [vmem:[#allocation4 + $0xd8] sm:$0xff]
  %v470 = vld [vmem:[#allocation4 + $0xe0] sm:$0xff]
  %v471 = vld [vmem:[#allocation4 + $0xe8] sm:$0xff]
  %v472 = vld [vmem:[#allocation4 + $0xf0] sm:$0xff]
  %v473 = vld [vmem:[#allocation4 + $0xf8] sm:$0xff]
  %v474 = vld [vmem:[#allocation4 + $0x100] sm:$0xff]
  %v475 = vld [vmem:[#allocation4 + $0x108] sm:$0xff]
  %v476 = vld [vmem:[#allocation4 + $0x110] sm:$0xff]
  %v477 = vld [vmem:[#allocation4 + $0x118] sm:$0xff]
  %v478 = vld [vmem:[#allocation4 + $0x120] sm:$0xff]
  %v479 = vld [vmem:[#allocation4 + $0x128] sm:$0xff]
  %v480 = vld [vmem:[#allocation4 + $0x130] sm:$0xff]
  %v481 = vld [vmem:[#allocation4 + $0x138] sm:$0xff]
  %v482 = vld [vmem:[#allocation4 + $0x140] sm:$0xff]
  %v483 = vld [vmem:[#allocation4 + $0x148] sm:$0xff]
  %v484 = vld [vmem:[#allocation4 + $0x150] sm:$0xff]
  %v485 = vld [vmem:[#allocation4 + $0x158] sm:$0xff]
  %v486 = vld [vmem:[#allocation4 + $0x160] sm:$0xff]
  %v487 = vld [vmem:[#allocation4 + $0x168] sm:$0xff]
  %v488 = vld [vmem:[#allocation4 + $0x170] sm:$0xff]
  %v489 = vld [vmem:[#allocation4 + $0x178] sm:$0xff]
  %v490 = vld [vmem:[#allocation4 + $0x180] sm:$0xff]
  %v491 = vld [vmem:[#allocation4 + $0x188] sm:$0xff]
  %v492 = vld [vmem:[#allocation4 + $0x190] sm:$0xff]
  %v493 = vld [vmem:[#allocation4 + $0x198] sm:$0xff]
  %v494 = vld [vmem:[#allocation4 + $0x1a0] sm:$0xff]
  %v495 = vld [vmem:[#allocation4 + $0x1a8] sm:$0xff]
  %v496 = vld [vmem:[#allocation4 + $0x1b0] sm:$0xff]
  %v497 = vld [vmem:[#allocation4 + $0x1b8] sm:$0xff]
  %v498 = vld [vmem:[#allocation4 + $0x1c0] sm:$0xff]
  %v499 = vld [vmem:[#allocation4 + $0x1c8] sm:$0xff]
  %v500 = vld [vmem:[#allocation4 + $0x1d0] sm:$0xff]
  %v501 = vld [vmem:[#allocation4 + $0x1d8] sm:$0xff]
  %v502 = vld [vmem:[#allocation4 + $0x1e0] sm:$0xff]
  %v503 = vld [vmem:[#allocation4 + $0x1e8] sm:$0xff]
  %v504 = vld [vmem:[#allocation4 + $0x1f0] sm:$0xff]
  %v505 = vld [vmem:[#allocation4 + $0x1f8] sm:$0xff]
  %v506 = vld [vmem:[#allocation4 + $0x200] sm:$0xff]
  %v507 = vld [vmem:[#allocation4 + $0x208] sm:$0xff]
  %v508 = vld [vmem:[#allocation4 + $0x210] sm:$0xff]
  %v509 = vld [vmem:[#allocation4 + $0x218] sm:$0xff]
  %v510 = vld [vmem:[#allocation4 + $0x220] sm:$0xff]
  %v511 = vld [vmem:[#allocation4 + $0x228] sm:$0xff]
  %v512 = vld [vmem:[#allocation4 + $0x230] sm:$0xff]
  %v513 = vld [vmem:[#allocation4 + $0x238] sm:$0xff]
  %v514 = vld [vmem:[#allocation4 + $0x240] sm:$0xff]
  %v515 = vld [vmem:[#allocation4 + $0x248] sm:$0xff]
  %v516 = vld [vmem:[#allocation4 + $0x250] sm:$0xff]
  %v517 = vld [vmem:[#allocation4 + $0x258] sm:$0xff]
  %v518 = vld [vmem:[#allocation4 + $0x260] sm:$0xff]
  %v519 = vld [vmem:[#allocation4 + $0x268] sm:$0xff]
  %v520 = vld [vmem:[#allocation4 + $0x270] sm:$0xff]
  %v521 = vld [vmem:[#allocation4 + $0x278] sm:$0xff]
  %v522 = vld [vmem:[#allocation4 + $0x280] sm:$0xff]
  %v523 = vld [vmem:[#allocation4 + $0x288] sm:$0xff]
  %v524 = vld [vmem:[#allocation4 + $0x290] sm:$0xff]
  %v525 = vld [vmem:[#allocation4 + $0x298] sm:$0xff]
  %v526 = vld [vmem:[#allocation4 + $0x2a0] sm:$0xff]
  %v527 = vld [vmem:[#allocation4 + $0x2a8] sm:$0xff]
  %v528 = vld [vmem:[#allocation4 + $0x2b0] sm:$0xff]
  %v529 = vld [vmem:[#allocation4 + $0x2b8] sm:$0xff]
  %v530 = vld [vmem:[#allocation4 + $0x2c0] sm:$0xff]
  %v531 = vld [vmem:[#allocation4 + $0x2c8] sm:$0xff]
  %v532 = vld [vmem:[#allocation4 + $0x2d0] sm:$0xff]
  %v533 = vld [vmem:[#allocation4 + $0x2d8] sm:$0xff]
  %v534 = vld [vmem:[#allocation4 + $0x2e0] sm:$0xff]
  %v535 = vld [vmem:[#allocation4 + $0x2e8] sm:$0xff]
  %v536 = vld [vmem:[#allocation4 + $0x2f0] sm:$0xff]
  %v537 = vld [vmem:[#allocation4 + $0x2f8] sm:$0xff]
  %v538 = vld [vmem:[#allocation4 + $0x300] sm:$0xff]
  %v539 = vld [vmem:[#allocation4 + $0x308] sm:$0xff]
  %v540 = vld [vmem:[#allocation4 + $0x310] sm:$0xff]
  %v541 = vld [vmem:[#allocation4 + $0x318] sm:$0xff]
  %v542 = vld [vmem:[#allocation4 + $0x320] sm:$0xff]
  %v543 = vld [vmem:[#allocation4 + $0x328] sm:$0xff]
  %v544 = vld [vmem:[#allocation4 + $0x330] sm:$0xff]
  %v545 = vld [vmem:[#allocation4 + $0x338] sm:$0xff]
  %v546 = vld [vmem:[#allocation4 + $0x340] sm:$0xff]
  %v547 = vld [vmem:[#allocation4 + $0x348] sm:$0xff]
  %v548 = vld [vmem:[#allocation4 + $0x350] sm:$0xff]
  %v549 = vld [vmem:[#allocation4 + $0x358] sm:$0xff]
  %v550 = vld [vmem:[#allocation4 + $0x360] sm:$0xff]
  %v551 = vld [vmem:[#allocation4 + $0x368] sm:$0xff]
  %v552 = vld [vmem:[#allocation4 + $0x370] sm:$0xff]
  %v553 = vld [vmem:[#allocation4 + $0x378] sm:$0xff]
  %v554 = vld [vmem:[#allocation4 + $0x380] sm:$0xff]
  %v555 = vld [vmem:[#allocation4 + $0x388] sm:$0xff]
  %v556 = vld [vmem:[#allocation4 + $0x390] sm:$0xff]
  %v557 = vld [vmem:[#allocation4 + $0x398] sm:$0xff]
  %v558 = vld [vmem:[#allocation4 + $0x3a0] sm:$0xff]
  %v559 = vld [vmem:[#allocation4 + $0x3a8] sm:$0xff]
  %v560 = vld [vmem:[#allocation4 + $0x3b0] sm:$0xff]
  %v561 = vld [vmem:[#allocation4 + $0x3b8] sm:$0xff]
  %v562 = vld [vmem:[#allocation4 + $0x3c0] sm:$0xff]
  %v563 = vld [vmem:[#allocation4 + $0x3c8] sm:$0xff]
  %v564 = vld [vmem:[#allocation4 + $0x3d0] sm:$0xff]
  %v565 = vld [vmem:[#allocation4 + $0x3d8] sm:$0xff]
  %v566 = vld [vmem:[#allocation4 + $0x3e0] sm:$0xff]
  %v567 = vld [vmem:[#allocation4 + $0x3e8] sm:$0xff]
  %v568 = vld [vmem:[#allocation4 + $0x3f0] sm:$0xff]
  %v569 = vld [vmem:[#allocation4 + $0x3f8] sm:$0xff]
  %570 = vmatprep.subr.mxu0 %v443
  %571 = vmatpush1.msra.mxu0 %v442
  %572 = vmatprep.subr.mxu0 %v447
  %573 = vmatpush1.msra.mxu0 %v446
  %574 = vmatprep.subr.mxu0 %v451
  %575 = vmatpush1.msra.mxu0 %v450
  %576 = vmatprep.subr.mxu0 %v455
  %577 = vmatpush1.msra.mxu0 %v454
  %578 = vmatprep.subr.mxu0 %v459
  %579 = vmatpush1.msra.mxu0 %v458
  %580 = vmatprep.subr.mxu0 %v463
  %581 = vmatpush1.msra.mxu0 %v462
  %582 = vmatprep.subr.mxu0 %v467
  %583 = vmatpush1.msra.mxu0 %v466
  %584 = vmatprep.subr.mxu0 %v471
  %585 = vmatpush1.msra.mxu0 %v470
  %586 = vmatprep.subr.mxu0 %v475
  %587 = vmatpush1.msra.mxu0 %v474
  %588 = vmatprep.subr.mxu0 %v479
  %589 = vmatpush1.msra.mxu0 %v478
  %590 = vmatprep.subr.mxu0 %v483
  %591 = vmatpush1.msra.mxu0 %v482
  %592 = vmatprep.subr.mxu0 %v487
  %593 = vmatpush1.msra.mxu0 %v486
  %594 = vmatprep.subr.mxu0 %v491
  %595 = vmatpush1.msra.mxu0 %v490
  %596 = vmatprep.subr.mxu0 %v495
  %597 = vmatpush1.msra.mxu0 %v494
  %598 = vmatprep.subr.mxu0 %v499
  %599 = vmatpush1.msra.mxu0 %v498
  %600 = vmatprep.subr.mxu0 %v503
  %601 = vmatpush1.msra.mxu0 %v502
  %602 = vmatprep.subr.mxu0 %v507
  %603 = vmatpush1.msra.mxu0 %v506
  %604 = vmatprep.subr.mxu0 %v511
  %605 = vmatpush1.msra.mxu0 %v510
  %606 = vmatprep.subr.mxu0 %v515
  %607 = vmatpush1.msra.mxu0 %v514
  %608 = vmatprep.subr.mxu0 %v519
  %609 = vmatpush1.msra.mxu0 %v518
  %610 = vmatprep.subr.mxu0 %v523
  %611 = vmatpush1.msra.mxu0 %v522
  %612 = vmatprep.subr.mxu0 %v527
  %613 = vmatpush1.msra.mxu0 %v526
  %614 = vmatprep.subr.mxu0 %v531
  %615 = vmatpush1.msra.mxu0 %v530
  %616 = vmatprep.subr.mxu0 %v535
  %617 = vmatpush1.msra.mxu0 %v534
  %618 = vmatprep.subr.mxu0 %v539
  %619 = vmatpush1.msra.mxu0 %v538
  %620 = vmatprep.subr.mxu0 %v543
  %621 = vmatpush1.msra.mxu0 %v542
  %622 = vmatprep.subr.mxu0 %v547
  %623 = vmatpush1.msra.mxu0 %v546
  %624 = vmatprep.subr.mxu0 %v551
  %625 = vmatpush1.msra.mxu0 %v550
  %626 = vmatprep.subr.mxu0 %v555
  %627 = vmatpush1.msra.mxu0 %v554
  %628 = vmatprep.subr.mxu0 %v559
  %629 = vmatpush1.msra.mxu0 %v558
  %630 = vmatprep.subr.mxu0 %v563
  %631 = vmatpush1.msra.mxu0 %v562
  %632 = vmatprep.subr.mxu0 %v567
  %633 = vmatpush1.msra.mxu0 %v566
  %634 = vmatprep.mubr.f32.mxu0 %v439
  %635 = vmatmul.mubr.f32.gmra.mrb[0].mxu0 %v438
  %v636 = vpop.f32.mrb[0].mxu0
  %v637 = vadd.f32 0.0, %v636
  %v638 = vpop.f32.mrb[0].mxu0
  %v639 = vadd.f32 0.0, %v638
  %640 = vmatprep.mubr.f32.mxu0 %v441
  %641 = vmatmul.mubr.f32.gmra.mrb[0].mxu0 %v440
  %v642 = vpop.f32.mrb[0].mxu0
  %v643 = vadd.f32 0.0, %v642
  %v644 = vpop.f32.mrb[0].mxu0
  %v645 = vadd.f32 0.0, %v644
  %646 = vdwg.mxu0
  %647 = vmatprep.subr.mxu0 %v445
  %648 = vmatpush1.msra.mxu0 %v444
  %649 = vmatprep.subr.mxu0 %v449
  %650 = vmatpush1.msra.mxu0 %v448
  %651 = vmatprep.subr.mxu0 %v453
  %652 = vmatpush1.msra.mxu0 %v452
  %653 = vmatprep.subr.mxu0 %v457
  %654 = vmatpush1.msra.mxu0 %v456
  %655 = vmatprep.subr.mxu0 %v461
  %656 = vmatpush1.msra.mxu0 %v460
  %657 = vmatprep.subr.mxu0 %v465
  %658 = vmatpush1.msra.mxu0 %v464
  %659 = vmatprep.subr.mxu0 %v469
  %660 = vmatpush1.msra.mxu0 %v468
  %661 = vmatprep.subr.mxu0 %v473
  %662 = vmatpush1.msra.mxu0 %v472
  %663 = vmatprep.subr.mxu0 %v477
  %664 = vmatpush1.msra.mxu0 %v476
  %665 = vmatprep.subr.mxu0 %v481
  %666 = vmatpush1.msra.mxu0 %v480
  %667 = vmatprep.subr.mxu0 %v485
  %668 = vmatpush1.msra.mxu0 %v484
  %669 = vmatprep.subr.mxu0 %v489
  %670 = vmatpush1.msra.mxu0 %v488
  %671 = vmatprep.subr.mxu0 %v493
  %672 = vmatpush1.msra.mxu0 %v492
  %673 = vmatprep.subr.mxu0 %v497
  %674 = vmatpush1.msra.mxu0 %v496
  %675 = vmatprep.subr.mxu0 %v501
  %676 = vmatpush1.msra.mxu0 %v500
  %677 = vmatprep.subr.mxu0 %v505
  %678 = vmatpush1.msra.mxu0 %v504
  %679 = vmatprep.subr.mxu0 %v509
  %680 = vmatpush1.msra.mxu0 %v508
  %681 = vmatprep.subr.mxu0 %v513
  %682 = vmatpush1.msra.mxu0 %v512
  %683 = vmatprep.subr.mxu0 %v517
  %684 = vmatpush1.msra.mxu0 %v516
  %685 = vmatprep.subr.mxu0 %v521
  %686 = vmatpush1.msra.mxu0 %v520
  %687 = vmatprep.subr.mxu0 %v525
  %688 = vmatpush1.msra.mxu0 %v524
  %689 = vmatprep.subr.mxu0 %v529
  %690 = vmatpush1.msra.mxu0 %v528
  %691 = vmatprep.subr.mxu0 %v533
  %692 = vmatpush1.msra.mxu0 %v532
  %693 = vmatprep.subr.mxu0 %v537
  %694 = vmatpush1.msra.mxu0 %v536
  %695 = vmatprep.subr.mxu0 %v541
  %696 = vmatpush1.msra.mxu0 %v540
  %697 = vmatprep.subr.mxu0 %v545
  %698 = vmatpush1.msra.mxu0 %v544
  %699 = vmatprep.subr.mxu0 %v549
  %700 = vmatpush1.msra.mxu0 %v548
  %701 = vmatprep.subr.mxu0 %v553
  %702 = vmatpush1.msra.mxu0 %v552
  %703 = vmatprep.subr.mxu0 %v557
  %704 = vmatpush1.msra.mxu0 %v556
  %705 = vmatprep.subr.mxu0 %v561
  %706 = vmatpush1.msra.mxu0 %v560
  %707 = vmatprep.subr.mxu0 %v565
  %708 = vmatpush1.msra.mxu0 %v564
  %709 = vmatprep.subr.mxu0 %v569
  %710 = vmatpush1.msra.mxu0 %v568
  %711 = vmatprep.mubr.f32.mxu0 %v439
  %712 = vmatmul.mubr.f32.gmra.mrb[0].mxu0 %v438
  %v713 = vpop.f32.mrb[0].mxu0
  %v714 = vadd.f32 0.0, %v713
  %v715 = vpop.f32.mrb[0].mxu0
  %v716 = vadd.f32 0.0, %v715
  %717 = vmatprep.mubr.f32.mxu0 %v441
  %718 = vmatmul.mubr.f32.gmra.mrb[0].mxu0 %v440
  %v719 = vpop.f32.mrb[0].mxu0
  %v720 = vadd.f32 0.0, %v719
  %v721 = vpop.f32.mrb[0].mxu0
  %v722 = vadd.f32 0.0, %v721
  %723 = vdwg.mxu0
  %s724 = scalar_lea.vmem %s0, 32
  %v725 = vld [vmem:[%s724] sm:$0xff]
  %v726 = vld [vmem:[%s724 + $0x8] sm:$0xff]
  %v727 = vld [vmem:[%s724 + $0x10] sm:$0xff]
  %v728 = vld [vmem:[%s724 + $0x18] sm:$0xff]
  %s729 = scalar_lea.vmem %s42, 192
  %v730 = vld [vmem:[%s729] sm:$0xff]
  %v731 = vld [vmem:[%s729 + $0x8] sm:$0xff]
  %v732 = vld [vmem:[%s729 + $0x10] sm:$0xff]
  %v733 = vld [vmem:[%s729 + $0x18] sm:$0xff]
  %v734 = vadd.f32 %v725, %v637
  %v735 = vadd.f32 %v726, %v639
  %v736 = vadd.f32 %v727, %v714
  %v737 = vadd.f32 %v728, %v716
  %v738 = vadd.f32 %v730, %v643
  %v739 = vadd.f32 %v731, %v645
  %v740 = vadd.f32 %v732, %v720
  %v741 = vadd.f32 %v733, %v722
  %v742 = vxor.u32 %v734, 2147483648
  %v743 = vxor.u32 %v735, 2147483648
  %v744 = vxor.u32 %v736, 2147483648
  %v745 = vxor.u32 %v738, 2147483648
  %v746 = vxor.u32 %v739, 2147483648
  %v747 = vxor.u32 %v740, 2147483648
  %v748 = vmul.f32 %v742, 1.442695
  %v749 = vpow.pop %v748
  %v750 = vmul.f32 %v743, 1.442695
  %v751 = vpow.pop %v750
  %v752 = vmul.f32 %v744, 1.442695
  %v753 = vpow.pop %v752
  %v754 = vmul.f32 %v745, 1.442695
  %v755 = vpow.pop %v754
  %v756 = vmul.f32 %v746, 1.442695
  %v757 = vpow.pop %v756
  %v758 = vmul.f32 %v747, 1.442695
  %v759 = vpow.pop %v758
  %v760 = vadd.f32 %v749, 1.0
  %v761 = vadd.f32 %v751, 1.0
  %v762 = vadd.f32 %v753, 1.0
  %v763 = vadd.f32 %v755, 1.0
  %v764 = vadd.f32 %v757, 1.0
  %v765 = vadd.f32 %v759, 1.0
  %v766 = vrcp.pop %v760
  %v767 = vmul.f32 1.0, %v766
  %v768 = vrcp.pop %v761
  %v769 = vmul.f32 1.0, %v768
  %v770 = vrcp.pop %v762
  %v771 = vmul.f32 1.0, %v770
  %v772 = vrcp.pop %v763
  %v773 = vmul.f32 1.0, %v772
  %v774 = vrcp.pop %v764
  %v775 = vmul.f32 1.0, %v774
  %v776 = vrcp.pop %v765
  %v777 = vmul.f32 1.0, %v776
  %v778 = vtanh.pop %v737
  %v779 = vtanh.pop %v741
  %v780 = vld [vmem:[#allocation3] sm:$0xff]
  %v781 = vld [vmem:[#allocation3 + $0x8] sm:$0xff]
  %v782 = vmul.f32 %v769, %v780
  %v783 = vmul.f32 %v775, %v781
  %v784 = vmul.f32 %v767, %v778
  %v785 = vmul.f32 %v773, %v779
  %v786 = vadd.f32 %v782, %v784
  %v787 = vadd.f32 %v783, %v785
  %v788 = vtanh.pop %v786
  %v789 = vtanh.pop %v787
  %v790 = vmul.f32 %v771, %v788
  %v791 = vmul.f32 %v777, %v789
  %792 = vst [vmem:[#allocation3] sm:$0xff] %v786
  %793 = vst [vmem:[#allocation3 + $0x8] sm:$0xff] %v787
  %794 = vst [vmem:[#allocation2] sm:$0xff] %v790
  %795 = vst [vmem:[#allocation2 + $0x18] sm:$0xff] %v791
  %s796 = scalar_lea.vmem %s3, 8
  %797 = vst [vmem:[%s796] sm:$0xff] %v790
  %s798 = scalar_lea.vmem %s50, 48
  %799 = vst [vmem:[%s798] sm:$0xff] %v791
  %v800 = vld [vmem:[#allocation2] sm:$0xff]
  %v801 = vld [vmem:[#allocation2 + $0x8] sm:$0xff]
  %v802 = vld [vmem:[#allocation2 + $0x10] sm:$0xff]
  %v803 = vld [vmem:[#allocation2 + $0x18] sm:$0xff]
  %v804 = vld [vmem:[#allocation4] sm:$0xff]
  %v805 = vld [vmem:[#allocation4 + $0x8] sm:$0xff]
  %v806 = vld [vmem:[#allocation4 + $0x10] sm:$0xff]
  %v807 = vld [vmem:[#allocation4 + $0x18] sm:$0xff]
  %v808 = vld [vmem:[#allocation4 + $0x20] sm:$0xff]
  %v809 = vld [vmem:[#allocation4 + $0x28] sm:$0xff]
  %v810 = vld [vmem:[#allocation4 + $0x30] sm:$0xff]
  %v811 = vld [vmem:[#allocation4 + $0x38] sm:$0xff]
  %v812 = vld [vmem:[#allocation4 + $0x40] sm:$0xff]
  %v813 = vld [vmem:[#allocation4 + $0x48] sm:$0xff]
  %v814 = vld [vmem:[#allocation4 + $0x50] sm:$0xff]
  %v815 = vld [vmem:[#allocation4 + $0x58] sm:$0xff]
  %v816 = vld [vmem:[#allocation4 + $0x60] sm:$0xff]
  %v817 = vld [vmem:[#allocation4 + $0x68] sm:$0xff]
  %v818 = vld [vmem:[#allocation4 + $0x70] sm:$0xff]
  %v819 = vld [vmem:[#allocation4 + $0x78] sm:$0xff]
  %v820 = vld [vmem:[#allocation4 + $0x80] sm:$0xff]
  %v821 = vld [vmem:[#allocation4 + $0x88] sm:$0xff]
  %v822 = vld [vmem:[#allocation4 + $0x90] sm:$0xff]
  %v823 = vld [vmem:[#allocation4 + $0x98] sm:$0xff]
  %v824 = vld [vmem:[#allocation4 + $0xa0] sm:$0xff]
  %v825 = vld [vmem:[#allocation4 + $0xa8] sm:$0xff]
  %v826 = vld [vmem:[#allocation4 + $0xb0] sm:$0xff]
  %v827 = vld [vmem:[#allocation4 + $0xb8] sm:$0xff]
  %v828 = vld [vmem:[#allocation4 + $0xc0] sm:$0xff]
  %v829 = vld [vmem:[#allocation4 + $0xc8] sm:$0xff]
  %v830 = vld [vmem:[#allocation4 + $0xd0] sm:$0xff]
  %v831 = vld [vmem:[#allocation4 + $0xd8] sm:$0xff]
  %v832 = vld [vmem:[#allocation4 + $0xe0] sm:$0xff]
  %v833 = vld [vmem:[#allocation4 + $0xe8] sm:$0xff]
  %v834 = vld [vmem:[#allocation4 + $0xf0] sm:$0xff]
  %v835 = vld [vmem:[#allocation4 + $0xf8] sm:$0xff]
  %v836 = vld [vmem:[#allocation4 + $0x100] sm:$0xff]
  %v837 = vld [vmem:[#allocation4 + $0x108] sm:$0xff]
  %v838 = vld [vmem:[#allocation4 + $0x110] sm:$0xff]
  %v839 = vld [vmem:[#allocation4 + $0x118] sm:$0xff]
  %v840 = vld [vmem:[#allocation4 + $0x120] sm:$0xff]
  %v841 = vld [vmem:[#allocation4 + $0x128] sm:$0xff]
  %v842 = vld [vmem:[#allocation4 + $0x130] sm:$0xff]
  %v843 = vld [vmem:[#allocation4 + $0x138] sm:$0xff]
  %v844 = vld [vmem:[#allocation4 + $0x140] sm:$0xff]
  %v845 = vld [vmem:[#allocation4 + $0x148] sm:$0xff]
  %v846 = vld [vmem:[#allocation4 + $0x150] sm:$0xff]
  %v847 = vld [vmem:[#allocation4 + $0x158] sm:$0xff]
  %v848 = vld [vmem:[#allocation4 + $0x160] sm:$0xff]
  %v849 = vld [vmem:[#allocation4 + $0x168] sm:$0xff]
  %v850 = vld [vmem:[#allocation4 + $0x170] sm:$0xff]
  %v851 = vld [vmem:[#allocation4 + $0x178] sm:$0xff]
  %v852 = vld [vmem:[#allocation4 + $0x180] sm:$0xff]
  %v853 = vld [vmem:[#allocation4 + $0x188] sm:$0xff]
  %v854 = vld [vmem:[#allocation4 + $0x190] sm:$0xff]
  %v855 = vld [vmem:[#allocation4 + $0x198] sm:$0xff]
  %v856 = vld [vmem:[#allocation4 + $0x1a0] sm:$0xff]
  %v857 = vld [vmem:[#allocation4 + $0x1a8] sm:$0xff]
  %v858 = vld [vmem:[#allocation4 + $0x1b0] sm:$0xff]
  %v859 = vld [vmem:[#allocation4 + $0x1b8] sm:$0xff]
  %v860 = vld [vmem:[#allocation4 + $0x1c0] sm:$0xff]
  %v861 = vld [vmem:[#allocation4 + $0x1c8] sm:$0xff]
  %v862 = vld [vmem:[#allocation4 + $0x1d0] sm:$0xff]
  %v863 = vld [vmem:[#allocation4 + $0x1d8] sm:$0xff]
  %v864 = vld [vmem:[#allocation4 + $0x1e0] sm:$0xff]
  %v865 = vld [vmem:[#allocation4 + $0x1e8] sm:$0xff]
  %v866 = vld [vmem:[#allocation4 + $0x1f0] sm:$0xff]
  %v867 = vld [vmem:[#allocation4 + $0x1f8] sm:$0xff]
  %v868 = vld [vmem:[#allocation4 + $0x200] sm:$0xff]
  %v869 = vld [vmem:[#allocation4 + $0x208] sm:$0xff]
  %v870 = vld [vmem:[#allocation4 + $0x210] sm:$0xff]
  %v871 = vld [vmem:[#allocation4 + $0x218] sm:$0xff]
  %v872 = vld [vmem:[#allocation4 + $0x220] sm:$0xff]
  %v873 = vld [vmem:[#allocation4 + $0x228] sm:$0xff]
  %v874 = vld [vmem:[#allocation4 + $0x230] sm:$0xff]
  %v875 = vld [vmem:[#allocation4 + $0x238] sm:$0xff]
  %v876 = vld [vmem:[#allocation4 + $0x240] sm:$0xff]
  %v877 = vld [vmem:[#allocation4 + $0x248] sm:$0xff]
  %v878 = vld [vmem:[#allocation4 + $0x250] sm:$0xff]
  %v879 = vld [vmem:[#allocation4 + $0x258] sm:$0xff]
  %v880 = vld [vmem:[#allocation4 + $0x260] sm:$0xff]
  %v881 = vld [vmem:[#allocation4 + $0x268] sm:$0xff]
  %v882 = vld [vmem:[#allocation4 + $0x270] sm:$0xff]
  %v883 = vld [vmem:[#allocation4 + $0x278] sm:$0xff]
  %v884 = vld [vmem:[#allocation4 + $0x280] sm:$0xff]
  %v885 = vld [vmem:[#allocation4 + $0x288] sm:$0xff]
  %v886 = vld [vmem:[#allocation4 + $0x290] sm:$0xff]
  %v887 = vld [vmem:[#allocation4 + $0x298] sm:$0xff]
  %v888 = vld [vmem:[#allocation4 + $0x2a0] sm:$0xff]
  %v889 = vld [vmem:[#allocation4 + $0x2a8] sm:$0xff]
  %v890 = vld [vmem:[#allocation4 + $0x2b0] sm:$0xff]
  %v891 = vld [vmem:[#allocation4 + $0x2b8] sm:$0xff]
  %v892 = vld [vmem:[#allocation4 + $0x2c0] sm:$0xff]
  %v893 = vld [vmem:[#allocation4 + $0x2c8] sm:$0xff]
  %v894 = vld [vmem:[#allocation4 + $0x2d0] sm:$0xff]
  %v895 = vld [vmem:[#allocation4 + $0x2d8] sm:$0xff]
  %v896 = vld [vmem:[#allocation4 + $0x2e0] sm:$0xff]
  %v897 = vld [vmem:[#allocation4 + $0x2e8] sm:$0xff]
  %v898 = vld [vmem:[#allocation4 + $0x2f0] sm:$0xff]
  %v899 = vld [vmem:[#allocation4 + $0x2f8] sm:$0xff]
  %v900 = vld [vmem:[#allocation4 + $0x300] sm:$0xff]
  %v901 = vld [vmem:[#allocation4 + $0x308] sm:$0xff]
  %v902 = vld [vmem:[#allocation4 + $0x310] sm:$0xff]
  %v903 = vld [vmem:[#allocation4 + $0x318] sm:$0xff]
  %v904 = vld [vmem:[#allocation4 + $0x320] sm:$0xff]
  %v905 = vld [vmem:[#allocation4 + $0x328] sm:$0xff]
  %v906 = vld [vmem:[#allocation4 + $0x330] sm:$0xff]
  %v907 = vld [vmem:[#allocation4 + $0x338] sm:$0xff]
  %v908 = vld [vmem:[#allocation4 + $0x340] sm:$0xff]
  %v909 = vld [vmem:[#allocation4 + $0x348] sm:$0xff]
  %v910 = vld [vmem:[#allocation4 + $0x350] sm:$0xff]
  %v911 = vld [vmem:[#allocation4 + $0x358] sm:$0xff]
  %v912 = vld [vmem:[#allocation4 + $0x360] sm:$0xff]
  %v913 = vld [vmem:[#allocation4 + $0x368] sm:$0xff]
  %v914 = vld [vmem:[#allocation4 + $0x370] sm:$0xff]
  %v915 = vld [vmem:[#allocation4 + $0x378] sm:$0xff]
  %v916 = vld [vmem:[#allocation4 + $0x380] sm:$0xff]
  %v917 = vld [vmem:[#allocation4 + $0x388] sm:$0xff]
  %v918 = vld [vmem:[#allocation4 + $0x390] sm:$0xff]
  %v919 = vld [vmem:[#allocation4 + $0x398] sm:$0xff]
  %v920 = vld [vmem:[#allocation4 + $0x3a0] sm:$0xff]
  %v921 = vld [vmem:[#allocation4 + $0x3a8] sm:$0xff]
  %v922 = vld [vmem:[#allocation4 + $0x3b0] sm:$0xff]
  %v923 = vld [vmem:[#allocation4 + $0x3b8] sm:$0xff]
  %v924 = vld [vmem:[#allocation4 + $0x3c0] sm:$0xff]
  %v925 = vld [vmem:[#allocation4 + $0x3c8] sm:$0xff]
  %v926 = vld [vmem:[#allocation4 + $0x3d0] sm:$0xff]
  %v927 = vld [vmem:[#allocation4 + $0x3d8] sm:$0xff]
  %v928 = vld [vmem:[#allocation4 + $0x3e0] sm:$0xff]
  %v929 = vld [vmem:[#allocation4 + $0x3e8] sm:$0xff]
  %v930 = vld [vmem:[#allocation4 + $0x3f0] sm:$0xff]
  %v931 = vld [vmem:[#allocation4 + $0x3f8] sm:$0xff]
  %932 = vmatprep.subr.mxu0 %v805
  %933 = vmatpush1.msra.mxu0 %v804
  %934 = vmatprep.subr.mxu0 %v809
  %935 = vmatpush1.msra.mxu0 %v808
  %936 = vmatprep.subr.mxu0 %v813
  %937 = vmatpush1.msra.mxu0 %v812
  %938 = vmatprep.subr.mxu0 %v817
  %939 = vmatpush1.msra.mxu0 %v816
  %940 = vmatprep.subr.mxu0 %v821
  %941 = vmatpush1.msra.mxu0 %v820
  %942 = vmatprep.subr.mxu0 %v825
  %943 = vmatpush1.msra.mxu0 %v824
  %944 = vmatprep.subr.mxu0 %v829
  %945 = vmatpush1.msra.mxu0 %v828
  %946 = vmatprep.subr.mxu0 %v833
  %947 = vmatpush1.msra.mxu0 %v832
  %948 = vmatprep.subr.mxu0 %v837
  %949 = vmatpush1.msra.mxu0 %v836
  %950 = vmatprep.subr.mxu0 %v841
  %951 = vmatpush1.msra.mxu0 %v840
  %952 = vmatprep.subr.mxu0 %v845
  %953 = vmatpush1.msra.mxu0 %v844
  %954 = vmatprep.subr.mxu0 %v849
  %955 = vmatpush1.msra.mxu0 %v848
  %956 = vmatprep.subr.mxu0 %v853
  %957 = vmatpush1.msra.mxu0 %v852
  %958 = vmatprep.subr.mxu0 %v857
  %959 = vmatpush1.msra.mxu0 %v856
  %960 = vmatprep.subr.mxu0 %v861
  %961 = vmatpush1.msra.mxu0 %v860
  %962 = vmatprep.subr.mxu0 %v865
  %963 = vmatpush1.msra.mxu0 %v864
  %964 = vmatprep.subr.mxu0 %v869
  %965 = vmatpush1.msra.mxu0 %v868
  %966 = vmatprep.subr.mxu0 %v873
  %967 = vmatpush1.msra.mxu0 %v872
  %968 = vmatprep.subr.mxu0 %v877
  %969 = vmatpush1.msra.mxu0 %v876
  %970 = vmatprep.subr.mxu0 %v881
  %971 = vmatpush1.msra.mxu0 %v880
  %972 = vmatprep.subr.mxu0 %v885
  %973 = vmatpush1.msra.mxu0 %v884
  %974 = vmatprep.subr.mxu0 %v889
  %975 = vmatpush1.msra.mxu0 %v888
  %976 = vmatprep.subr.mxu0 %v893
  %977 = vmatpush1.msra.mxu0 %v892
  %978 = vmatprep.subr.mxu0 %v897
  %979 = vmatpush1.msra.mxu0 %v896
  %980 = vmatprep.subr.mxu0 %v901
  %981 = vmatpush1.msra.mxu0 %v900
  %982 = vmatprep.subr.mxu0 %v905
  %983 = vmatpush1.msra.mxu0 %v904
  %984 = vmatprep.subr.mxu0 %v909
  %985 = vmatpush1.msra.mxu0 %v908
  %986 = vmatprep.subr.mxu0 %v913
  %987 = vmatpush1.msra.mxu0 %v912
  %988 = vmatprep.subr.mxu0 %v917
  %989 = vmatpush1.msra.mxu0 %v916
  %990 = vmatprep.subr.mxu0 %v921
  %991 = vmatpush1.msra.mxu0 %v920
  %992 = vmatprep.subr.mxu0 %v925
  %993 = vmatpush1.msra.mxu0 %v924
  %994 = vmatprep.subr.mxu0 %v929
  %995 = vmatpush1.msra.mxu0 %v928
  %996 = vmatprep.mubr.f32.mxu0 %v801
  %997 = vmatmul.mubr.f32.gmra.mrb[0].mxu0 %v800
  %v998 = vpop.f32.mrb[0].mxu0
  %v999 = vadd.f32 0.0, %v998
  %v1000 = vpop.f32.mrb[0].mxu0
  %v1001 = vadd.f32 0.0, %v1000
  %1002 = vmatprep.mubr.f32.mxu0 %v803
  %1003 = vmatmul.mubr.f32.gmra.mrb[0].mxu0 %v802
  %v1004 = vpop.f32.mrb[0].mxu0
  %v1005 = vadd.f32 0.0, %v1004
  %v1006 = vpop.f32.mrb[0].mxu0
  %v1007 = vadd.f32 0.0, %v1006
  %1008 = vdwg.mxu0
  %1009 = vmatprep.subr.mxu0 %v807
  %1010 = vmatpush1.msra.mxu0 %v806
  %1011 = vmatprep.subr.mxu0 %v811
  %1012 = vmatpush1.msra.mxu0 %v810
  %1013 = vmatprep.subr.mxu0 %v815
  %1014 = vmatpush1.msra.mxu0 %v814
  %1015 = vmatprep.subr.mxu0 %v819
  %1016 = vmatpush1.msra.mxu0 %v818
  %1017 = vmatprep.subr.mxu0 %v823
  %1018 = vmatpush1.msra.mxu0 %v822
  %1019 = vmatprep.subr.mxu0 %v827
  %1020 = vmatpush1.msra.mxu0 %v826
  %1021 = vmatprep.subr.mxu0 %v831
  %1022 = vmatpush1.msra.mxu0 %v830
  %1023 = vmatprep.subr.mxu0 %v835
  %1024 = vmatpush1.msra.mxu0 %v834
  %1025 = vmatprep.subr.mxu0 %v839
  %1026 = vmatpush1.msra.mxu0 %v838
  %1027 = vmatprep.subr.mxu0 %v843
  %1028 = vmatpush1.msra.mxu0 %v842
  %1029 = vmatprep.subr.mxu0 %v847
  %1030 = vmatpush1.msra.mxu0 %v846
  %1031 = vmatprep.subr.mxu0 %v851
  %1032 = vmatpush1.msra.mxu0 %v850
  %1033 = vmatprep.subr.mxu0 %v855
  %1034 = vmatpush1.msra.mxu0 %v854
  %1035 = vmatprep.subr.mxu0 %v859
  %1036 = vmatpush1.msra.mxu0 %v858
  %1037 = vmatprep.subr.mxu0 %v863
  %1038 = vmatpush1.msra.mxu0 %v862
  %1039 = vmatprep.subr.mxu0 %v867
  %1040 = vmatpush1.msra.mxu0 %v866
  %1041 = vmatprep.subr.mxu0 %v871
  %1042 = vmatpush1.msra.mxu0 %v870
  %1043 = vmatprep.subr.mxu0 %v875
  %1044 = vmatpush1.msra.mxu0 %v874
  %1045 = vmatprep.subr.mxu0 %v879
  %1046 = vmatpush1.msra.mxu0 %v878
  %1047 = vmatprep.subr.mxu0 %v883
  %1048 = vmatpush1.msra.mxu0 %v882
  %1049 = vmatprep.subr.mxu0 %v887
  %1050 = vmatpush1.msra.mxu0 %v886
  %1051 = vmatprep.subr.mxu0 %v891
  %1052 = vmatpush1.msra.mxu0 %v890
  %1053 = vmatprep.subr.mxu0 %v895
  %1054 = vmatpush1.msra.mxu0 %v894
  %1055 = vmatprep.subr.mxu0 %v899
  %1056 = vmatpush1.msra.mxu0 %v898
  %1057 = vmatprep.subr.mxu0 %v903
  %1058 = vmatpush1.msra.mxu0 %v902
  %1059 = vmatprep.subr.mxu0 %v907
  %1060 = vmatpush1.msra.mxu0 %v906
  %1061 = vmatprep.subr.mxu0 %v911
  %1062 = vmatpush1.msra.mxu0 %v910
  %1063 = vmatprep.subr.mxu0 %v915
  %1064 = vmatpush1.msra.mxu0 %v914
  %1065 = vmatprep.subr.mxu0 %v919
  %1066 = vmatpush1.msra.mxu0 %v918
  %1067 = vmatprep.subr.mxu0 %v923
  %1068 = vmatpush1.msra.mxu0 %v922
  %1069 = vmatprep.subr.mxu0 %v927
  %1070 = vmatpush1.msra.mxu0 %v926
  %1071 = vmatprep.subr.mxu0 %v931
  %1072 = vmatpush1.msra.mxu0 %v930
  %1073 = vmatprep.mubr.f32.mxu0 %v801
  %1074 = vmatmul.mubr.f32.gmra.mrb[0].mxu0 %v800
  %v1075 = vpop.f32.mrb[0].mxu0
  %v1076 = vadd.f32 0.0, %v1075
  %v1077 = vpop.f32.mrb[0].mxu0
  %v1078 = vadd.f32 0.0, %v1077
  %1079 = vmatprep.mubr.f32.mxu0 %v803
  %1080 = vmatmul.mubr.f32.gmra.mrb[0].mxu0 %v802
  %v1081 = vpop.f32.mrb[0].mxu0
  %v1082 = vadd.f32 0.0, %v1081
  %v1083 = vpop.f32.mrb[0].mxu0
  %v1084 = vadd.f32 0.0, %v1083
  %1085 = vdwg.mxu0
  %s1086 = scalar_lea.vmem %s0, 64
  %v1087 = vld [vmem:[%s1086] sm:$0xff]
  %v1088 = vld [vmem:[%s1086 + $0x8] sm:$0xff]
  %v1089 = vld [vmem:[%s1086 + $0x10] sm:$0xff]
  %v1090 = vld [vmem:[%s1086 + $0x18] sm:$0xff]
  %s1091 = scalar_lea.vmem %s42, 160
  %v1092 = vld [vmem:[%s1091] sm:$0xff]
  %v1093 = vld [vmem:[%s1091 + $0x8] sm:$0xff]
  %v1094 = vld [vmem:[%s1091 + $0x10] sm:$0xff]
  %v1095 = vld [vmem:[%s1091 + $0x18] sm:$0xff]
  %v1096 = vadd.f32 %v1087, %v999
  %v1097 = vadd.f32 %v1088, %v1001
  %v1098 = vadd.f32 %v1089, %v1076
  %v1099 = vadd.f32 %v1090, %v1078
  %v1100 = vadd.f32 %v1092, %v1005
  %v1101 = vadd.f32 %v1093, %v1007
  %v1102 = vadd.f32 %v1094, %v1082
  %v1103 = vadd.f32 %v1095, %v1084
  %v1104 = vxor.u32 %v1096, 2147483648
  %v1105 = vxor.u32 %v1097, 2147483648
  %v1106 = vxor.u32 %v1098, 2147483648
  %v1107 = vxor.u32 %v1100, 2147483648
  %v1108 = vxor.u32 %v1101, 2147483648
  %v1109 = vxor.u32 %v1102, 2147483648
  %v1110 = vmul.f32 %v1104, 1.442695
  %v1111 = vpow.pop %v1110
  %v1112 = vmul.f32 %v1105, 1.442695
  %v1113 = vpow.pop %v1112
  %v1114 = vmul.f32 %v1106, 1.442695
  %v1115 = vpow.pop %v1114
  %v1116 = vmul.f32 %v1107, 1.442695
  %v1117 = vpow.pop %v1116
  %v1118 = vmul.f32 %v1108, 1.442695
  %v1119 = vpow.pop %v1118
  %v1120 = vmul.f32 %v1109, 1.442695
  %v1121 = vpow.pop %v1120
  %v1122 = vadd.f32 %v1111, 1.0
  %v1123 = vadd.f32 %v1113, 1.0
  %v1124 = vadd.f32 %v1115, 1.0
  %v1125 = vadd.f32 %v1117, 1.0
  %v1126 = vadd.f32 %v1119, 1.0
  %v1127 = vadd.f32 %v1121, 1.0
  %v1128 = vrcp.pop %v1122
  %v1129 = vmul.f32 1.0, %v1128
  %v1130 = vrcp.pop %v1123
  %v1131 = vmul.f32 1.0, %v1130
  %v1132 = vrcp.pop %v1124
  %v1133 = vmul.f32 1.0, %v1132
  %v1134 = vrcp.pop %v1125
  %v1135 = vmul.f32 1.0, %v1134
  %v1136 = vrcp.pop %v1126
  %v1137 = vmul.f32 1.0, %v1136
  %v1138 = vrcp.pop %v1127
  %v1139 = vmul.f32 1.0, %v1138
  %v1140 = vtanh.pop %v1099
  %v1141 = vtanh.pop %v1103
  %v1142 = vld [vmem:[#allocation3] sm:$0xff]
  %v1143 = vld [vmem:[#allocation3 + $0x8] sm:$0xff]
  %v1144 = vmul.f32 %v1131, %v1142
  %v1145 = vmul.f32 %v1137, %v1143
  %v1146 = vmul.f32 %v1129, %v1140
  %v1147 = vmul.f32 %v1135, %v1141
  %v1148 = vadd.f32 %v1144, %v1146
  %v1149 = vadd.f32 %v1145, %v1147
  %v1150 = vtanh.pop %v1148
  %v1151 = vtanh.pop %v1149
  %v1152 = vmul.f32 %v1133, %v1150
  %v1153 = vmul.f32 %v1139, %v1151
  %1154 = vst [vmem:[#allocation3] sm:$0xff] %v1148
  %1155 = vst [vmem:[#allocation3 + $0x8] sm:$0xff] %v1149
  %1156 = vst [vmem:[#allocation2] sm:$0xff] %v1152
  %1157 = vst [vmem:[#allocation2 + $0x18] sm:$0xff] %v1153
  %s1158 = scalar_lea.vmem %s3, 16
  %1159 = vst [vmem:[%s1158] sm:$0xff] %v1152
  %s1160 = scalar_lea.vmem %s50, 40
  %1161 = vst [vmem:[%s1160] sm:$0xff] %v1153
  %v1162 = vld [vmem:[#allocation2] sm:$0xff]
  %v1163 = vld [vmem:[#allocation2 + $0x8] sm:$0xff]
  %v1164 = vld [vmem:[#allocation2 + $0x10] sm:$0xff]
  %v1165 = vld [vmem:[#allocation2 + $0x18] sm:$0xff]
  %v1166 = vld [vmem:[#allocation4] sm:$0xff]
  %v1167 = vld [vmem:[#allocation4 + $0x8] sm:$0xff]
  %v1168 = vld [vmem:[#allocation4 + $0x10] sm:$0xff]
  %v1169 = vld [vmem:[#allocation4 + $0x18] sm:$0xff]
  %v1170 = vld [vmem:[#allocation4 + $0x20] sm:$0xff]
  %v1171 = vld [vmem:[#allocation4 + $0x28] sm:$0xff]
  %v1172 = vld [vmem:[#allocation4 + $0x30] sm:$0xff]
  %v1173 = vld [vmem:[#allocation4 + $0x38] sm:$0xff]
  %v1174 = vld [vmem:[#allocation4 + $0x40] sm:$0xff]
  %v1175 = vld [vmem:[#allocation4 + $0x48] sm:$0xff]
  %v1176 = vld [vmem:[#allocation4 + $0x50] sm:$0xff]
  %v1177 = vld [vmem:[#allocation4 + $0x58] sm:$0xff]
  %v1178 = vld [vmem:[#allocation4 + $0x60] sm:$0xff]
  %v1179 = vld [vmem:[#allocation4 + $0x68] sm:$0xff]
  %v1180 = vld [vmem:[#allocation4 + $0x70] sm:$0xff]
  %v1181 = vld [vmem:[#allocation4 + $0x78] sm:$0xff]
  %v1182 = vld [vmem:[#allocation4 + $0x80] sm:$0xff]
  %v1183 = vld [vmem:[#allocation4 + $0x88] sm:$0xff]
  %v1184 = vld [vmem:[#allocation4 + $0x90] sm:$0xff]
  %v1185 = vld [vmem:[#allocation4 + $0x98] sm:$0xff]
  %v1186 = vld [vmem:[#allocation4 + $0xa0] sm:$0xff]
  %v1187 = vld [vmem:[#allocation4 + $0xa8] sm:$0xff]
  %v1188 = vld [vmem:[#allocation4 + $0xb0] sm:$0xff]
  %v1189 = vld [vmem:[#allocation4 + $0xb8] sm:$0xff]
  %v1190 = vld [vmem:[#allocation4 + $0xc0] sm:$0xff]
  %v1191 = vld [vmem:[#allocation4 + $0xc8] sm:$0xff]
  %v1192 = vld [vmem:[#allocation4 + $0xd0] sm:$0xff]
  %v1193 = vld [vmem:[#allocation4 + $0xd8] sm:$0xff]
  %v1194 = vld [vmem:[#allocation4 + $0xe0] sm:$0xff]
  %v1195 = vld [vmem:[#allocation4 + $0xe8] sm:$0xff]
  %v1196 = vld [vmem:[#allocation4 + $0xf0] sm:$0xff]
  %v1197 = vld [vmem:[#allocation4 + $0xf8] sm:$0xff]
  %v1198 = vld [vmem:[#allocation4 + $0x100] sm:$0xff]
  %v1199 = vld [vmem:[#allocation4 + $0x108] sm:$0xff]
  %v1200 = vld [vmem:[#allocation4 + $0x110] sm:$0xff]
  %v1201 = vld [vmem:[#allocation4 + $0x118] sm:$0xff]
  %v1202 = vld [vmem:[#allocation4 + $0x120] sm:$0xff]
  %v1203 = vld [vmem:[#allocation4 + $0x128] sm:$0xff]
  %v1204 = vld [vmem:[#allocation4 + $0x130] sm:$0xff]
  %v1205 = vld [vmem:[#allocation4 + $0x138] sm:$0xff]
  %v1206 = vld [vmem:[#allocation4 + $0x140] sm:$0xff]
  %v1207 = vld [vmem:[#allocation4 + $0x148] sm:$0xff]
  %v1208 = vld [vmem:[#allocation4 + $0x150] sm:$0xff]
  %v1209 = vld [vmem:[#allocation4 + $0x158] sm:$0xff]
  %v1210 = vld [vmem:[#allocation4 + $0x160] sm:$0xff]
  %v1211 = vld [vmem:[#allocation4 + $0x168] sm:$0xff]
  %v1212 = vld [vmem:[#allocation4 + $0x170] sm:$0xff]
  %v1213 = vld [vmem:[#allocation4 + $0x178] sm:$0xff]
  %v1214 = vld [vmem:[#allocation4 + $0x180] sm:$0xff]
  %v1215 = vld [vmem:[#allocation4 + $0x188] sm:$0xff]
  %v1216 = vld [vmem:[#allocation4 + $0x190] sm:$0xff]
  %v1217 = vld [vmem:[#allocation4 + $0x198] sm:$0xff]
  %v1218 = vld [vmem:[#allocation4 + $0x1a0] sm:$0xff]
  %v1219 = vld [vmem:[#allocation4 + $0x1a8] sm:$0xff]
  %v1220 = vld [vmem:[#allocation4 + $0x1b0] sm:$0xff]
  %v1221 = vld [vmem:[#allocation4 + $0x1b8] sm:$0xff]
  %v1222 = vld [vmem:[#allocation4 + $0x1c0] sm:$0xff]
  %v1223 = vld [vmem:[#allocation4 + $0x1c8] sm:$0xff]
  %v1224 = vld [vmem:[#allocation4 + $0x1d0] sm:$0xff]
  %v1225 = vld [vmem:[#allocation4 + $0x1d8] sm:$0xff]
  %v1226 = vld [vmem:[#allocation4 + $0x1e0] sm:$0xff]
  %v1227 = vld [vmem:[#allocation4 + $0x1e8] sm:$0xff]
  %v1228 = vld [vmem:[#allocation4 + $0x1f0] sm:$0xff]
  %v1229 = vld [vmem:[#allocation4 + $0x1f8] sm:$0xff]
  %v1230 = vld [vmem:[#allocation4 + $0x200] sm:$0xff]
  %v1231 = vld [vmem:[#allocation4 + $0x208] sm:$0xff]
  %v1232 = vld [vmem:[#allocation4 + $0x210] sm:$0xff]
  %v1233 = vld [vmem:[#allocation4 + $0x218] sm:$0xff]
  %v1234 = vld [vmem:[#allocation4 + $0x220] sm:$0xff]
  %v1235 = vld [vmem:[#allocation4 + $0x228] sm:$0xff]
  %v1236 = vld [vmem:[#allocation4 + $0x230] sm:$0xff]
  %v1237 = vld [vmem:[#allocation4 + $0x238] sm:$0xff]
  %v1238 = vld [vmem:[#allocation4 + $0x240] sm:$0xff]
  %v1239 = vld [vmem:[#allocation4 + $0x248] sm:$0xff]
  %v1240 = vld [vmem:[#allocation4 + $0x250] sm:$0xff]
  %v1241 = vld [vmem:[#allocation4 + $0x258] sm:$0xff]
  %v1242 = vld [vmem:[#allocation4 + $0x260] sm:$0xff]
  %v1243 = vld [vmem:[#allocation4 + $0x268] sm:$0xff]
  %v1244 = vld [vmem:[#allocation4 + $0x270] sm:$0xff]
  %v1245 = vld [vmem:[#allocation4 + $0x278] sm:$0xff]
  %v1246 = vld [vmem:[#allocation4 + $0x280] sm:$0xff]
  %v1247 = vld [vmem:[#allocation4 + $0x288] sm:$0xff]
  %v1248 = vld [vmem:[#allocation4 + $0x290] sm:$0xff]
  %v1249 = vld [vmem:[#allocation4 + $0x298] sm:$0xff]
  %v1250 = vld [vmem:[#allocation4 + $0x2a0] sm:$0xff]
  %v1251 = vld [vmem:[#allocation4 + $0x2a8] sm:$0xff]
  %v1252 = vld [vmem:[#allocation4 + $0x2b0] sm:$0xff]
  %v1253 = vld [vmem:[#allocation4 + $0x2b8] sm:$0xff]
  %v1254 = vld [vmem:[#allocation4 + $0x2c0] sm:$0xff]
  %v1255 = vld [vmem:[#allocation4 + $0x2c8] sm:$0xff]
  %v1256 = vld [vmem:[#allocation4 + $0x2d0] sm:$0xff]
  %v1257 = vld [vmem:[#allocation4 + $0x2d8] sm:$0xff]
  %v1258 = vld [vmem:[#allocation4 + $0x2e0] sm:$0xff]
  %v1259 = vld [vmem:[#allocation4 + $0x2e8] sm:$0xff]
  %v1260 = vld [vmem:[#allocation4 + $0x2f0] sm:$0xff]
  %v1261 = vld [vmem:[#allocation4 + $0x2f8] sm:$0xff]
  %v1262 = vld [vmem:[#allocation4 + $0x300] sm:$0xff]
  %v1263 = vld [vmem:[#allocation4 + $0x308] sm:$0xff]
  %v1264 = vld [vmem:[#allocation4 + $0x310] sm:$0xff]
  %v1265 = vld [vmem:[#allocation4 + $0x318] sm:$0xff]
  %v1266 = vld [vmem:[#allocation4 + $0x320] sm:$0xff]
  %v1267 = vld [vmem:[#allocation4 + $0x328] sm:$0xff]
  %v1268 = vld [vmem:[#allocation4 + $0x330] sm:$0xff]
  %v1269 = vld [vmem:[#allocation4 + $0x338] sm:$0xff]
  %v1270 = vld [vmem:[#allocation4 + $0x340] sm:$0xff]
  %v1271 = vld [vmem:[#allocation4 + $0x348] sm:$0xff]
  %v1272 = vld [vmem:[#allocation4 + $0x350] sm:$0xff]
  %v1273 = vld [vmem:[#allocation4 + $0x358] sm:$0xff]
  %v1274 = vld [vmem:[#allocation4 + $0x360] sm:$0xff]
  %v1275 = vld [vmem:[#allocation4 + $0x368] sm:$0xff]
  %v1276 = vld [vmem:[#allocation4 + $0x370] sm:$0xff]
  %v1277 = vld [vmem:[#allocation4 + $0x378] sm:$0xff]
  %v1278 = vld [vmem:[#allocation4 + $0x380] sm:$0xff]
  %v1279 = vld [vmem:[#allocation4 + $0x388] sm:$0xff]
  %v1280 = vld [vmem:[#allocation4 + $0x390] sm:$0xff]
  %v1281 = vld [vmem:[#allocation4 + $0x398] sm:$0xff]
  %v1282 = vld [vmem:[#allocation4 + $0x3a0] sm:$0xff]
  %v1283 = vld [vmem:[#allocation4 + $0x3a8] sm:$0xff]
  %v1284 = vld [vmem:[#allocation4 + $0x3b0] sm:$0xff]
  %v1285 = vld [vmem:[#allocation4 + $0x3b8] sm:$0xff]
  %v1286 = vld [vmem:[#allocation4 + $0x3c0] sm:$0xff]
  %v1287 = vld [vmem:[#allocation4 + $0x3c8] sm:$0xff]
  %v1288 = vld [vmem:[#allocation4 + $0x3d0] sm:$0xff]
  %v1289 = vld [vmem:[#allocation4 + $0x3d8] sm:$0xff]
  %v1290 = vld [vmem:[#allocation4 + $0x3e0] sm:$0xff]
  %v1291 = vld [vmem:[#allocation4 + $0x3e8] sm:$0xff]
  %v1292 = vld [vmem:[#allocation4 + $0x3f0] sm:$0xff]
  %v1293 = vld [vmem:[#allocation4 + $0x3f8] sm:$0xff]
  %1294 = vmatprep.subr.mxu0 %v1167
  %1295 = vmatpush1.msra.mxu0 %v1166
  %1296 = vmatprep.subr.mxu0 %v1171
  %1297 = vmatpush1.msra.mxu0 %v1170
  %1298 = vmatprep.subr.mxu0 %v1175
  %1299 = vmatpush1.msra.mxu0 %v1174
  %1300 = vmatprep.subr.mxu0 %v1179
  %1301 = vmatpush1.msra.mxu0 %v1178
  %1302 = vmatprep.subr.mxu0 %v1183
  %1303 = vmatpush1.msra.mxu0 %v1182
  %1304 = vmatprep.subr.mxu0 %v1187
  %1305 = vmatpush1.msra.mxu0 %v1186
  %1306 = vmatprep.subr.mxu0 %v1191
  %1307 = vmatpush1.msra.mxu0 %v1190
  %1308 = vmatprep.subr.mxu0 %v1195
  %1309 = vmatpush1.msra.mxu0 %v1194
  %1310 = vmatprep.subr.mxu0 %v1199
  %1311 = vmatpush1.msra.mxu0 %v1198
  %1312 = vmatprep.subr.mxu0 %v1203
  %1313 = vmatpush1.msra.mxu0 %v1202
  %1314 = vmatprep.subr.mxu0 %v1207
  %1315 = vmatpush1.msra.mxu0 %v1206
  %1316 = vmatprep.subr.mxu0 %v1211
  %1317 = vmatpush1.msra.mxu0 %v1210
  %1318 = vmatprep.subr.mxu0 %v1215
  %1319 = vmatpush1.msra.mxu0 %v1214
  %1320 = vmatprep.subr.mxu0 %v1219
  %1321 = vmatpush1.msra.mxu0 %v1218
  %1322 = vmatprep.subr.mxu0 %v1223
  %1323 = vmatpush1.msra.mxu0 %v1222
  %1324 = vmatprep.subr.mxu0 %v1227
  %1325 = vmatpush1.msra.mxu0 %v1226
  %1326 = vmatprep.subr.mxu0 %v1231
  %1327 = vmatpush1.msra.mxu0 %v1230
  %1328 = vmatprep.subr.mxu0 %v1235
  %1329 = vmatpush1.msra.mxu0 %v1234
  %1330 = vmatprep.subr.mxu0 %v1239
  %1331 = vmatpush1.msra.mxu0 %v1238
  %1332 = vmatprep.subr.mxu0 %v1243
  %1333 = vmatpush1.msra.mxu0 %v1242
  %1334 = vmatprep.subr.mxu0 %v1247
  %1335 = vmatpush1.msra.mxu0 %v1246
  %1336 = vmatprep.subr.mxu0 %v1251
  %1337 = vmatpush1.msra.mxu0 %v1250
  %1338 = vmatprep.subr.mxu0 %v1255
  %1339 = vmatpush1.msra.mxu0 %v1254
  %1340 = vmatprep.subr.mxu0 %v1259
  %1341 = vmatpush1.msra.mxu0 %v1258
  %1342 = vmatprep.subr.mxu0 %v1263
  %1343 = vmatpush1.msra.mxu0 %v1262
  %1344 = vmatprep.subr.mxu0 %v1267
  %1345 = vmatpush1.msra.mxu0 %v1266
  %1346 = vmatprep.subr.mxu0 %v1271
  %1347 = vmatpush1.msra.mxu0 %v1270
  %1348 = vmatprep.subr.mxu0 %v1275
  %1349 = vmatpush1.msra.mxu0 %v1274
  %1350 = vmatprep.subr.mxu0 %v1279
  %1351 = vmatpush1.msra.mxu0 %v1278
  %1352 = vmatprep.subr.mxu0 %v1283
  %1353 = vmatpush1.msra.mxu0 %v1282
  %1354 = vmatprep.subr.mxu0 %v1287
  %1355 = vmatpush1.msra.mxu0 %v1286
  %1356 = vmatprep.subr.mxu0 %v1291
  %1357 = vmatpush1.msra.mxu0 %v1290
  %1358 = vmatprep.mubr.f32.mxu0 %v1163
  %1359 = vmatmul.mubr.f32.gmra.mrb[0].mxu0 %v1162
  %v1360 = vpop.f32.mrb[0].mxu0
  %v1361 = vadd.f32 0.0, %v1360
  %v1362 = vpop.f32.mrb[0].mxu0
  %v1363 = vadd.f32 0.0, %v1362
  %1364 = vmatprep.mubr.f32.mxu0 %v1165
  %1365 = vmatmul.mubr.f32.gmra.mrb[0].mxu0 %v1164
  %v1366 = vpop.f32.mrb[0].mxu0
  %v1367 = vadd.f32 0.0, %v1366
  %v1368 = vpop.f32.mrb[0].mxu0
  %v1369 = vadd.f32 0.0, %v1368
  %1370 = vdwg.mxu0
  %1371 = vmatprep.subr.mxu0 %v1169
  %1372 = vmatpush1.msra.mxu0 %v1168
  %1373 = vmatprep.subr.mxu0 %v1173
  %1374 = vmatpush1.msra.mxu0 %v1172
  %1375 = vmatprep.subr.mxu0 %v1177
  %1376 = vmatpush1.msra.mxu0 %v1176
  %1377 = vmatprep.subr.mxu0 %v1181
  %1378 = vmatpush1.msra.mxu0 %v1180
  %1379 = vmatprep.subr.mxu0 %v1185
  %1380 = vmatpush1.msra.mxu0 %v1184
  %1381 = vmatprep.subr.mxu0 %v1189
  %1382 = vmatpush1.msra.mxu0 %v1188
  %1383 = vmatprep.subr.mxu0 %v1193
  %1384 = vmatpush1.msra.mxu0 %v1192
  %1385 = vmatprep.subr.mxu0 %v1197
  %1386 = vmatpush1.msra.mxu0 %v1196
  %1387 = vmatprep.subr.mxu0 %v1201
  %1388 = vmatpush1.msra.mxu0 %v1200
  %1389 = vmatprep.subr.mxu0 %v1205
  %1390 = vmatpush1.msra.mxu0 %v1204
  %1391 = vmatprep.subr.mxu0 %v1209
  %1392 = vmatpush1.msra.mxu0 %v1208
  %1393 = vmatprep.subr.mxu0 %v1213
  %1394 = vmatpush1.msra.mxu0 %v1212
  %1395 = vmatprep.subr.mxu0 %v1217
  %1396 = vmatpush1.msra.mxu0 %v1216
  %1397 = vmatprep.subr.mxu0 %v1221
  %1398 = vmatpush1.msra.mxu0 %v1220
  %1399 = vmatprep.subr.mxu0 %v1225
  %1400 = vmatpush1.msra.mxu0 %v1224
  %1401 = vmatprep.subr.mxu0 %v1229
  %1402 = vmatpush1.msra.mxu0 %v1228
  %1403 = vmatprep.subr.mxu0 %v1233
  %1404 = vmatpush1.msra.mxu0 %v1232
  %1405 = vmatprep.subr.mxu0 %v1237
  %1406 = vmatpush1.msra.mxu0 %v1236
  %1407 = vmatprep.subr.mxu0 %v1241
  %1408 = vmatpush1.msra.mxu0 %v1240
  %1409 = vmatprep.subr.mxu0 %v1245
  %1410 = vmatpush1.msra.mxu0 %v1244
  %1411 = vmatprep.subr.mxu0 %v1249
  %1412 = vmatpush1.msra.mxu0 %v1248
  %1413 = vmatprep.subr.mxu0 %v1253
  %1414 = vmatpush1.msra.mxu0 %v1252
  %1415 = vmatprep.subr.mxu0 %v1257
  %1416 = vmatpush1.msra.mxu0 %v1256
  %1417 = vmatprep.subr.mxu0 %v1261
  %1418 = vmatpush1.msra.mxu0 %v1260
  %1419 = vmatprep.subr.mxu0 %v1265
  %1420 = vmatpush1.msra.mxu0 %v1264
  %1421 = vmatprep.subr.mxu0 %v1269
  %1422 = vmatpush1.msra.mxu0 %v1268
  %1423 = vmatprep.subr.mxu0 %v1273
  %1424 = vmatpush1.msra.mxu0 %v1272
  %1425 = vmatprep.subr.mxu0 %v1277
  %1426 = vmatpush1.msra.mxu0 %v1276
  %1427 = vmatprep.subr.mxu0 %v1281
  %1428 = vmatpush1.msra.mxu0 %v1280
  %1429 = vmatprep.subr.mxu0 %v1285
  %1430 = vmatpush1.msra.mxu0 %v1284
  %1431 = vmatprep.subr.mxu0 %v1289
  %1432 = vmatpush1.msra.mxu0 %v1288
  %1433 = vmatprep.subr.mxu0 %v1293
  %1434 = vmatpush1.msra.mxu0 %v1292
  %1435 = vmatprep.mubr.f32.mxu0 %v1163
  %1436 = vmatmul.mubr.f32.gmra.mrb[0].mxu0 %v1162
  %v1437 = vpop.f32.mrb[0].mxu0
  %v1438 = vadd.f32 0.0, %v1437
  %v1439 = vpop.f32.mrb[0].mxu0
  %v1440 = vadd.f32 0.0, %v1439
  %1441 = vmatprep.mubr.f32.mxu0 %v1165
  %1442 = vmatmul.mubr.f32.gmra.mrb[0].mxu0 %v1164
  %v1443 = vpop.f32.mrb[0].mxu0
  %v1444 = vadd.f32 0.0, %v1443
  %v1445 = vpop.f32.mrb[0].mxu0
  %v1446 = vadd.f32 0.0, %v1445
  %1447 = vdwg.mxu0
  %s1448 = scalar_lea.vmem %s0, 96
  %v1449 = vld [vmem:[%s1448] sm:$0xff]
  %v1450 = vld [vmem:[%s1448 + $0x8] sm:$0xff]
  %v1451 = vld [vmem:[%s1448 + $0x10] sm:$0xff]
  %v1452 = vld [vmem:[%s1448 + $0x18] sm:$0xff]
  %s1453 = scalar_lea.vmem %s42, 128
  %v1454 = vld [vmem:[%s1453] sm:$0xff]
  %v1455 = vld [vmem:[%s1453 + $0x8] sm:$0xff]
  %v1456 = vld [vmem:[%s1453 + $0x10] sm:$0xff]
  %v1457 = vld [vmem:[%s1453 + $0x18] sm:$0xff]
  %v1458 = vadd.f32 %v1449, %v1361
  %v1459 = vadd.f32 %v1450, %v1363
  %v1460 = vadd.f32 %v1451, %v1438
  %v1461 = vadd.f32 %v1452, %v1440
  %v1462 = vadd.f32 %v1454, %v1367
  %v1463 = vadd.f32 %v1455, %v1369
  %v1464 = vadd.f32 %v1456, %v1444
  %v1465 = vadd.f32 %v1457, %v1446
  %v1466 = vxor.u32 %v1458, 2147483648
  %v1467 = vxor.u32 %v1459, 2147483648
  %v1468 = vxor.u32 %v1460, 2147483648
  %v1469 = vxor.u32 %v1462, 2147483648
  %v1470 = vxor.u32 %v1463, 2147483648
  %v1471 = vxor.u32 %v1464, 2147483648
  %v1472 = vmul.f32 %v1466, 1.442695
  %v1473 = vpow.pop %v1472
  %v1474 = vmul.f32 %v1467, 1.442695
  %v1475 = vpow.pop %v1474
  %v1476 = vmul.f32 %v1468, 1.442695
  %v1477 = vpow.pop %v1476
  %v1478 = vmul.f32 %v1469, 1.442695
  %v1479 = vpow.pop %v1478
  %v1480 = vmul.f32 %v1470, 1.442695
  %v1481 = vpow.pop %v1480
  %v1482 = vmul.f32 %v1471, 1.442695
  %v1483 = vpow.pop %v1482
  %v1484 = vadd.f32 %v1473, 1.0
  %v1485 = vadd.f32 %v1475, 1.0
  %v1486 = vadd.f32 %v1477, 1.0
  %v1487 = vadd.f32 %v1479, 1.0
  %v1488 = vadd.f32 %v1481, 1.0
  %v1489 = vadd.f32 %v1483, 1.0
  %v1490 = vrcp.pop %v1484
  %v1491 = vmul.f32 1.0, %v1490
  %v1492 = vrcp.pop %v1485
  %v1493 = vmul.f32 1.0, %v1492
  %v1494 = vrcp.pop %v1486
  %v1495 = vmul.f32 1.0, %v1494
  %v1496 = vrcp.pop %v1487
  %v1497 = vmul.f32 1.0, %v1496
  %v1498 = vrcp.pop %v1488
  %v1499 = vmul.f32 1.0, %v1498
  %v1500 = vrcp.pop %v1489
  %v1501 = vmul.f32 1.0, %v1500
  %v1502 = vtanh.pop %v1461
  %v1503 = vtanh.pop %v1465
  %v1504 = vld [vmem:[#allocation3] sm:$0xff]
  %v1505 = vld [vmem:[#allocation3 + $0x8] sm:$0xff]
  %v1506 = vmul.f32 %v1493, %v1504
  %v1507 = vmul.f32 %v1499, %v1505
  %v1508 = vmul.f32 %v1491, %v1502
  %v1509 = vmul.f32 %v1497, %v1503
  %v1510 = vadd.f32 %v1506, %v1508
  %v1511 = vadd.f32 %v1507, %v1509
  %v1512 = vtanh.pop %v1510
  %v1513 = vtanh.pop %v1511
  %v1514 = vmul.f32 %v1495, %v1512
  %v1515 = vmul.f32 %v1501, %v1513
  %1516 = vst [vmem:[#allocation3] sm:$0xff] %v1510
  %1517 = vst [vmem:[#allocation3 + $0x8] sm:$0xff] %v1511
  %1518 = vst [vmem:[#allocation2] sm:$0xff] %v1514
  %1519 = vst [vmem:[#allocation2 + $0x18] sm:$0xff] %v1515
  %s1520 = scalar_lea.vmem %s3, 24
  %1521 = vst [vmem:[%s1520] sm:$0xff] %v1514
  %s1522 = scalar_lea.vmem %s50, 32
  %1523 = vst [vmem:[%s1522] sm:$0xff] %v1515
  %v1524 = vld [vmem:[#allocation2] sm:$0xff]
  %v1525 = vld [vmem:[#allocation2 + $0x8] sm:$0xff]
  %v1526 = vld [vmem:[#allocation2 + $0x10] sm:$0xff]
  %v1527 = vld [vmem:[#allocation2 + $0x18] sm:$0xff]
  %v1528 = vld [vmem:[#allocation4] sm:$0xff]
  %v1529 = vld [vmem:[#allocation4 + $0x8] sm:$0xff]
  %v1530 = vld [vmem:[#allocation4 + $0x10] sm:$0xff]
  %v1531 = vld [vmem:[#allocation4 + $0x18] sm:$0xff]
  %v1532 = vld [vmem:[#allocation4 + $0x20] sm:$0xff]
  %v1533 = vld [vmem:[#allocation4 + $0x28] sm:$0xff]
  %v1534 = vld [vmem:[#allocation4 + $0x30] sm:$0xff]
  %v1535 = vld [vmem:[#allocation4 + $0x38] sm:$0xff]
  %v1536 = vld [vmem:[#allocation4 + $0x40] sm:$0xff]
  %v1537 = vld [vmem:[#allocation4 + $0x48] sm:$0xff]
  %v1538 = vld [vmem:[#allocation4 + $0x50] sm:$0xff]
  %v1539 = vld [vmem:[#allocation4 + $0x58] sm:$0xff]
  %v1540 = vld [vmem:[#allocation4 + $0x60] sm:$0xff]
  %v1541 = vld [vmem:[#allocation4 + $0x68] sm:$0xff]
  %v1542 = vld [vmem:[#allocation4 + $0x70] sm:$0xff]
  %v1543 = vld [vmem:[#allocation4 + $0x78] sm:$0xff]
  %v1544 = vld [vmem:[#allocation4 + $0x80] sm:$0xff]
  %v1545 = vld [vmem:[#allocation4 + $0x88] sm:$0xff]
  %v1546 = vld [vmem:[#allocation4 + $0x90] sm:$0xff]
  %v1547 = vld [vmem:[#allocation4 + $0x98] sm:$0xff]
  %v1548 = vld [vmem:[#allocation4 + $0xa0] sm:$0xff]
  %v1549 = vld [vmem:[#allocation4 + $0xa8] sm:$0xff]
  %v1550 = vld [vmem:[#allocation4 + $0xb0] sm:$0xff]
  %v1551 = vld [vmem:[#allocation4 + $0xb8] sm:$0xff]
  %v1552 = vld [vmem:[#allocation4 + $0xc0] sm:$0xff]
  %v1553 = vld [vmem:[#allocation4 + $0xc8] sm:$0xff]
  %v1554 = vld [vmem:[#allocation4 + $0xd0] sm:$0xff]
  %v1555 = vld [vmem:[#allocation4 + $0xd8] sm:$0xff]
  %v1556 = vld [vmem:[#allocation4 + $0xe0] sm:$0xff]
  %v1557 = vld [vmem:[#allocation4 + $0xe8] sm:$0xff]
  %v1558 = vld [vmem:[#allocation4 + $0xf0] sm:$0xff]
  %v1559 = vld [vmem:[#allocation4 + $0xf8] sm:$0xff]
  %v1560 = vld [vmem:[#allocation4 + $0x100] sm:$0xff]
  %v1561 = vld [vmem:[#allocation4 + $0x108] sm:$0xff]
  %v1562 = vld [vmem:[#allocation4 + $0x110] sm:$0xff]
  %v1563 = vld [vmem:[#allocation4 + $0x118] sm:$0xff]
  %v1564 = vld [vmem:[#allocation4 + $0x120] sm:$0xff]
  %v1565 = vld [vmem:[#allocation4 + $0x128] sm:$0xff]
  %v1566 = vld [vmem:[#allocation4 + $0x130] sm:$0xff]
  %v1567 = vld [vmem:[#allocation4 + $0x138] sm:$0xff]
  %v1568 = vld [vmem:[#allocation4 + $0x140] sm:$0xff]
  %v1569 = vld [vmem:[#allocation4 + $0x148] sm:$0xff]
  %v1570 = vld [vmem:[#allocation4 + $0x150] sm:$0xff]
  %v1571 = vld [vmem:[#allocation4 + $0x158] sm:$0xff]
  %v1572 = vld [vmem:[#allocation4 + $0x160] sm:$0xff]
  %v1573 = vld [vmem:[#allocation4 + $0x168] sm:$0xff]
  %v1574 = vld [vmem:[#allocation4 + $0x170] sm:$0xff]
  %v1575 = vld [vmem:[#allocation4 + $0x178] sm:$0xff]
  %v1576 = vld [vmem:[#allocation4 + $0x180] sm:$0xff]
  %v1577 = vld [vmem:[#allocation4 + $0x188] sm:$0xff]
  %v1578 = vld [vmem:[#allocation4 + $0x190] sm:$0xff]
  %v1579 = vld [vmem:[#allocation4 + $0x198] sm:$0xff]
  %v1580 = vld [vmem:[#allocation4 + $0x1a0] sm:$0xff]
  %v1581 = vld [vmem:[#allocation4 + $0x1a8] sm:$0xff]
  %v1582 = vld [vmem:[#allocation4 + $0x1b0] sm:$0xff]
  %v1583 = vld [vmem:[#allocation4 + $0x1b8] sm:$0xff]
  %v1584 = vld [vmem:[#allocation4 + $0x1c0] sm:$0xff]
  %v1585 = vld [vmem:[#allocation4 + $0x1c8] sm:$0xff]
  %v1586 = vld [vmem:[#allocation4 + $0x1d0] sm:$0xff]
  %v1587 = vld [vmem:[#allocation4 + $0x1d8] sm:$0xff]
  %v1588 = vld [vmem:[#allocation4 + $0x1e0] sm:$0xff]
  %v1589 = vld [vmem:[#allocation4 + $0x1e8] sm:$0xff]
  %v1590 = vld [vmem:[#allocation4 + $0x1f0] sm:$0xff]
  %v1591 = vld [vmem:[#allocation4 + $0x1f8] sm:$0xff]
  %v1592 = vld [vmem:[#allocation4 + $0x200] sm:$0xff]
  %v1593 = vld [vmem:[#allocation4 + $0x208] sm:$0xff]
  %v1594 = vld [vmem:[#allocation4 + $0x210] sm:$0xff]
  %v1595 = vld [vmem:[#allocation4 + $0x218] sm:$0xff]
  %v1596 = vld [vmem:[#allocation4 + $0x220] sm:$0xff]
  %v1597 = vld [vmem:[#allocation4 + $0x228] sm:$0xff]
  %v1598 = vld [vmem:[#allocation4 + $0x230] sm:$0xff]
  %v1599 = vld [vmem:[#allocation4 + $0x238] sm:$0xff]
  %v1600 = vld [vmem:[#allocation4 + $0x240] sm:$0xff]
  %v1601 = vld [vmem:[#allocation4 + $0x248] sm:$0xff]
  %v1602 = vld [vmem:[#allocation4 + $0x250] sm:$0xff]
  %v1603 = vld [vmem:[#allocation4 + $0x258] sm:$0xff]
  %v1604 = vld [vmem:[#allocation4 + $0x260] sm:$0xff]
  %v1605 = vld [vmem:[#allocation4 + $0x268] sm:$0xff]
  %v1606 = vld [vmem:[#allocation4 + $0x270] sm:$0xff]
  %v1607 = vld [vmem:[#allocation4 + $0x278] sm:$0xff]
  %v1608 = vld [vmem:[#allocation4 + $0x280] sm:$0xff]
  %v1609 = vld [vmem:[#allocation4 + $0x288] sm:$0xff]
  %v1610 = vld [vmem:[#allocation4 + $0x290] sm:$0xff]
  %v1611 = vld [vmem:[#allocation4 + $0x298] sm:$0xff]
  %v1612 = vld [vmem:[#allocation4 + $0x2a0] sm:$0xff]
  %v1613 = vld [vmem:[#allocation4 + $0x2a8] sm:$0xff]
  %v1614 = vld [vmem:[#allocation4 + $0x2b0] sm:$0xff]
  %v1615 = vld [vmem:[#allocation4 + $0x2b8] sm:$0xff]
  %v1616 = vld [vmem:[#allocation4 + $0x2c0] sm:$0xff]
  %v1617 = vld [vmem:[#allocation4 + $0x2c8] sm:$0xff]
  %v1618 = vld [vmem:[#allocation4 + $0x2d0] sm:$0xff]
  %v1619 = vld [vmem:[#allocation4 + $0x2d8] sm:$0xff]
  %v1620 = vld [vmem:[#allocation4 + $0x2e0] sm:$0xff]
  %v1621 = vld [vmem:[#allocation4 + $0x2e8] sm:$0xff]
  %v1622 = vld [vmem:[#allocation4 + $0x2f0] sm:$0xff]
  %v1623 = vld [vmem:[#allocation4 + $0x2f8] sm:$0xff]
  %v1624 = vld [vmem:[#allocation4 + $0x300] sm:$0xff]
  %v1625 = vld [vmem:[#allocation4 + $0x308] sm:$0xff]
  %v1626 = vld [vmem:[#allocation4 + $0x310] sm:$0xff]
  %v1627 = vld [vmem:[#allocation4 + $0x318] sm:$0xff]
  %v1628 = vld [vmem:[#allocation4 + $0x320] sm:$0xff]
  %v1629 = vld [vmem:[#allocation4 + $0x328] sm:$0xff]
  %v1630 = vld [vmem:[#allocation4 + $0x330] sm:$0xff]
  %v1631 = vld [vmem:[#allocation4 + $0x338] sm:$0xff]
  %v1632 = vld [vmem:[#allocation4 + $0x340] sm:$0xff]
  %v1633 = vld [vmem:[#allocation4 + $0x348] sm:$0xff]
  %v1634 = vld [vmem:[#allocation4 + $0x350] sm:$0xff]
  %v1635 = vld [vmem:[#allocation4 + $0x358] sm:$0xff]
  %v1636 = vld [vmem:[#allocation4 + $0x360] sm:$0xff]
  %v1637 = vld [vmem:[#allocation4 + $0x368] sm:$0xff]
  %v1638 = vld [vmem:[#allocation4 + $0x370] sm:$0xff]
  %v1639 = vld [vmem:[#allocation4 + $0x378] sm:$0xff]
  %v1640 = vld [vmem:[#allocation4 + $0x380] sm:$0xff]
  %v1641 = vld [vmem:[#allocation4 + $0x388] sm:$0xff]
  %v1642 = vld [vmem:[#allocation4 + $0x390] sm:$0xff]
  %v1643 = vld [vmem:[#allocation4 + $0x398] sm:$0xff]
  %v1644 = vld [vmem:[#allocation4 + $0x3a0] sm:$0xff]
  %v1645 = vld [vmem:[#allocation4 + $0x3a8] sm:$0xff]
  %v1646 = vld [vmem:[#allocation4 + $0x3b0] sm:$0xff]
  %v1647 = vld [vmem:[#allocation4 + $0x3b8] sm:$0xff]
  %v1648 = vld [vmem:[#allocation4 + $0x3c0] sm:$0xff]
  %v1649 = vld [vmem:[#allocation4 + $0x3c8] sm:$0xff]
  %v1650 = vld [vmem:[#allocation4 + $0x3d0] sm:$0xff]
  %v1651 = vld [vmem:[#allocation4 + $0x3d8] sm:$0xff]
  %v1652 = vld [vmem:[#allocation4 + $0x3e0] sm:$0xff]
  %v1653 = vld [vmem:[#allocation4 + $0x3e8] sm:$0xff]
  %v1654 = vld [vmem:[#allocation4 + $0x3f0] sm:$0xff]
  %v1655 = vld [vmem:[#allocation4 + $0x3f8] sm:$0xff]
  %1656 = vmatprep.subr.mxu0 %v1529
  %1657 = vmatpush1.msra.mxu0 %v1528
  %1658 = vmatprep.subr.mxu0 %v1533
  %1659 = vmatpush1.msra.mxu0 %v1532
  %1660 = vmatprep.subr.mxu0 %v1537
  %1661 = vmatpush1.msra.mxu0 %v1536
  %1662 = vmatprep.subr.mxu0 %v1541
  %1663 = vmatpush1.msra.mxu0 %v1540
  %1664 = vmatprep.subr.mxu0 %v1545
  %1665 = vmatpush1.msra.mxu0 %v1544
  %1666 = vmatprep.subr.mxu0 %v1549
  %1667 = vmatpush1.msra.mxu0 %v1548
  %1668 = vmatprep.subr.mxu0 %v1553
  %1669 = vmatpush1.msra.mxu0 %v1552
  %1670 = vmatprep.subr.mxu0 %v1557
  %1671 = vmatpush1.msra.mxu0 %v1556
  %1672 = vmatprep.subr.mxu0 %v1561
  %1673 = vmatpush1.msra.mxu0 %v1560
  %1674 = vmatprep.subr.mxu0 %v1565
  %1675 = vmatpush1.msra.mxu0 %v1564
  %1676 = vmatprep.subr.mxu0 %v1569
  %1677 = vmatpush1.msra.mxu0 %v1568
  %1678 = vmatprep.subr.mxu0 %v1573
  %1679 = vmatpush1.msra.mxu0 %v1572
  %1680 = vmatprep.subr.mxu0 %v1577
  %1681 = vmatpush1.msra.mxu0 %v1576
  %1682 = vmatprep.subr.mxu0 %v1581
  %1683 = vmatpush1.msra.mxu0 %v1580
  %1684 = vmatprep.subr.mxu0 %v1585
  %1685 = vmatpush1.msra.mxu0 %v1584
  %1686 = vmatprep.subr.mxu0 %v1589
  %1687 = vmatpush1.msra.mxu0 %v1588
  %1688 = vmatprep.subr.mxu0 %v1593
  %1689 = vmatpush1.msra.mxu0 %v1592
  %1690 = vmatprep.subr.mxu0 %v1597
  %1691 = vmatpush1.msra.mxu0 %v1596
  %1692 = vmatprep.subr.mxu0 %v1601
  %1693 = vmatpush1.msra.mxu0 %v1600
  %1694 = vmatprep.subr.mxu0 %v1605
  %1695 = vmatpush1.msra.mxu0 %v1604
  %1696 = vmatprep.subr.mxu0 %v1609
  %1697 = vmatpush1.msra.mxu0 %v1608
  %1698 = vmatprep.subr.mxu0 %v1613
  %1699 = vmatpush1.msra.mxu0 %v1612
  %1700 = vmatprep.subr.mxu0 %v1617
  %1701 = vmatpush1.msra.mxu0 %v1616
  %1702 = vmatprep.subr.mxu0 %v1621
  %1703 = vmatpush1.msra.mxu0 %v1620
  %1704 = vmatprep.subr.mxu0 %v1625
  %1705 = vmatpush1.msra.mxu0 %v1624
  %1706 = vmatprep.subr.mxu0 %v1629
  %1707 = vmatpush1.msra.mxu0 %v1628
  %1708 = vmatprep.subr.mxu0 %v1633
  %1709 = vmatpush1.msra.mxu0 %v1632
  %1710 = vmatprep.subr.mxu0 %v1637
  %1711 = vmatpush1.msra.mxu0 %v1636
  %1712 = vmatprep.subr.mxu0 %v1641
  %1713 = vmatpush1.msra.mxu0 %v1640
  %1714 = vmatprep.subr.mxu0 %v1645
  %1715 = vmatpush1.msra.mxu0 %v1644
  %1716 = vmatprep.subr.mxu0 %v1649
  %1717 = vmatpush1.msra.mxu0 %v1648
  %1718 = vmatprep.subr.mxu0 %v1653
  %1719 = vmatpush1.msra.mxu0 %v1652
  %1720 = vmatprep.mubr.f32.mxu0 %v1525
  %1721 = vmatmul.mubr.f32.gmra.mrb[0].mxu0 %v1524
  %v1722 = vpop.f32.mrb[0].mxu0
  %v1723 = vadd.f32 0.0, %v1722
  %v1724 = vpop.f32.mrb[0].mxu0
  %v1725 = vadd.f32 0.0, %v1724
  %1726 = vmatprep.mubr.f32.mxu0 %v1527
  %1727 = vmatmul.mubr.f32.gmra.mrb[0].mxu0 %v1526
  %v1728 = vpop.f32.mrb[0].mxu0
  %v1729 = vadd.f32 0.0, %v1728
  %v1730 = vpop.f32.mrb[0].mxu0
  %v1731 = vadd.f32 0.0, %v1730
  %1732 = vdwg.mxu0
  %1733 = vmatprep.subr.mxu0 %v1531
  %1734 = vmatpush1.msra.mxu0 %v1530
  %1735 = vmatprep.subr.mxu0 %v1535
  %1736 = vmatpush1.msra.mxu0 %v1534
  %1737 = vmatprep.subr.mxu0 %v1539
  %1738 = vmatpush1.msra.mxu0 %v1538
  %1739 = vmatprep.subr.mxu0 %v1543
  %1740 = vmatpush1.msra.mxu0 %v1542
  %1741 = vmatprep.subr.mxu0 %v1547
  %1742 = vmatpush1.msra.mxu0 %v1546
  %1743 = vmatprep.subr.mxu0 %v1551
  %1744 = vmatpush1.msra.mxu0 %v1550
  %1745 = vmatprep.subr.mxu0 %v1555
  %1746 = vmatpush1.msra.mxu0 %v1554
  %1747 = vmatprep.subr.mxu0 %v1559
  %1748 = vmatpush1.msra.mxu0 %v1558
  %1749 = vmatprep.subr.mxu0 %v1563
  %1750 = vmatpush1.msra.mxu0 %v1562
  %1751 = vmatprep.subr.mxu0 %v1567
  %1752 = vmatpush1.msra.mxu0 %v1566
  %1753 = vmatprep.subr.mxu0 %v1571
  %1754 = vmatpush1.msra.mxu0 %v1570
  %1755 = vmatprep.subr.mxu0 %v1575
  %1756 = vmatpush1.msra.mxu0 %v1574
  %1757 = vmatprep.subr.mxu0 %v1579
  %1758 = vmatpush1.msra.mxu0 %v1578
  %1759 = vmatprep.subr.mxu0 %v1583
  %1760 = vmatpush1.msra.mxu0 %v1582
  %1761 = vmatprep.subr.mxu0 %v1587
  %1762 = vmatpush1.msra.mxu0 %v1586
  %1763 = vmatprep.subr.mxu0 %v1591
  %1764 = vmatpush1.msra.mxu0 %v1590
  %1765 = vmatprep.subr.mxu0 %v1595
  %1766 = vmatpush1.msra.mxu0 %v1594
  %1767 = vmatprep.subr.mxu0 %v1599
  %1768 = vmatpush1.msra.mxu0 %v1598
  %1769 = vmatprep.subr.mxu0 %v1603
  %1770 = vmatpush1.msra.mxu0 %v1602
  %1771 = vmatprep.subr.mxu0 %v1607
  %1772 = vmatpush1.msra.mxu0 %v1606
  %1773 = vmatprep.subr.mxu0 %v1611
  %1774 = vmatpush1.msra.mxu0 %v1610
  %1775 = vmatprep.subr.mxu0 %v1615
  %1776 = vmatpush1.msra.mxu0 %v1614
  %1777 = vmatprep.subr.mxu0 %v1619
  %1778 = vmatpush1.msra.mxu0 %v1618
  %1779 = vmatprep.subr.mxu0 %v1623
  %1780 = vmatpush1.msra.mxu0 %v1622
  %1781 = vmatprep.subr.mxu0 %v1627
  %1782 = vmatpush1.msra.mxu0 %v1626
  %1783 = vmatprep.subr.mxu0 %v1631
  %1784 = vmatpush1.msra.mxu0 %v1630
  %1785 = vmatprep.subr.mxu0 %v1635
  %1786 = vmatpush1.msra.mxu0 %v1634
  %1787 = vmatprep.subr.mxu0 %v1639
  %1788 = vmatpush1.msra.mxu0 %v1638
  %1789 = vmatprep.subr.mxu0 %v1643
  %1790 = vmatpush1.msra.mxu0 %v1642
  %1791 = vmatprep.subr.mxu0 %v1647
  %1792 = vmatpush1.msra.mxu0 %v1646
  %1793 = vmatprep.subr.mxu0 %v1651
  %1794 = vmatpush1.msra.mxu0 %v1650
  %1795 = vmatprep.subr.mxu0 %v1655
  %1796 = vmatpush1.msra.mxu0 %v1654
  %1797 = vmatprep.mubr.f32.mxu0 %v1525
  %1798 = vmatmul.mubr.f32.gmra.mrb[0].mxu0 %v1524
  %v1799 = vpop.f32.mrb[0].mxu0
  %v1800 = vadd.f32 0.0, %v1799
  %v1801 = vpop.f32.mrb[0].mxu0
  %v1802 = vadd.f32 0.0, %v1801
  %1803 = vmatprep.mubr.f32.mxu0 %v1527
  %1804 = vmatmul.mubr.f32.gmra.mrb[0].mxu0 %v1526
  %v1805 = vpop.f32.mrb[0].mxu0
  %v1806 = vadd.f32 0.0, %v1805
  %v1807 = vpop.f32.mrb[0].mxu0
  %v1808 = vadd.f32 0.0, %v1807
  %1809 = vdwg.mxu0
  %s1810 = scalar_lea.vmem %s0, 128
  %v1811 = vld [vmem:[%s1810] sm:$0xff]
  %v1812 = vld [vmem:[%s1810 + $0x8] sm:$0xff]
  %v1813 = vld [vmem:[%s1810 + $0x10] sm:$0xff]
  %v1814 = vld [vmem:[%s1810 + $0x18] sm:$0xff]
  %s1815 = scalar_lea.vmem %s42, 96
  %v1816 = vld [vmem:[%s1815] sm:$0xff]
  %v1817 = vld [vmem:[%s1815 + $0x8] sm:$0xff]
  %v1818 = vld [vmem:[%s1815 + $0x10] sm:$0xff]
  %v1819 = vld [vmem:[%s1815 + $0x18] sm:$0xff]
  %v1820 = vadd.f32 %v1811, %v1723
  %v1821 = vadd.f32 %v1812, %v1725
  %v1822 = vadd.f32 %v1813, %v1800
  %v1823 = vadd.f32 %v1814, %v1802
  %v1824 = vadd.f32 %v1816, %v1729
  %v1825 = vadd.f32 %v1817, %v1731
  %v1826 = vadd.f32 %v1818, %v1806
  %v1827 = vadd.f32 %v1819, %v1808
  %v1828 = vxor.u32 %v1820, 2147483648
  %v1829 = vxor.u32 %v1821, 2147483648
  %v1830 = vxor.u32 %v1822, 2147483648
  %v1831 = vxor.u32 %v1824, 2147483648
  %v1832 = vxor.u32 %v1825, 2147483648
  %v1833 = vxor.u32 %v1826, 2147483648
  %v1834 = vmul.f32 %v1828, 1.442695
  %v1835 = vpow.pop %v1834
  %v1836 = vmul.f32 %v1829, 1.442695
  %v1837 = vpow.pop %v1836
  %v1838 = vmul.f32 %v1830, 1.442695
  %v1839 = vpow.pop %v1838
  %v1840 = vmul.f32 %v1831, 1.442695
  %v1841 = vpow.pop %v1840
  %v1842 = vmul.f32 %v1832, 1.442695
  %v1843 = vpow.pop %v1842
  %v1844 = vmul.f32 %v1833, 1.442695
  %v1845 = vpow.pop %v1844
  %v1846 = vadd.f32 %v1835, 1.0
  %v1847 = vadd.f32 %v1837, 1.0
  %v1848 = vadd.f32 %v1839, 1.0
  %v1849 = vadd.f32 %v1841, 1.0
  %v1850 = vadd.f32 %v1843, 1.0
  %v1851 = vadd.f32 %v1845, 1.0
  %v1852 = vrcp.pop %v1846
  %v1853 = vmul.f32 1.0, %v1852
  %v1854 = vrcp.pop %v1847
  %v1855 = vmul.f32 1.0, %v1854
  %v1856 = vrcp.pop %v1848
  %v1857 = vmul.f32 1.0, %v1856
  %v1858 = vrcp.pop %v1849
  %v1859 = vmul.f32 1.0, %v1858
  %v1860 = vrcp.pop %v1850
  %v1861 = vmul.f32 1.0, %v1860
  %v1862 = vrcp.pop %v1851
  %v1863 = vmul.f32 1.0, %v1862
  %v1864 = vtanh.pop %v1823
  %v1865 = vtanh.pop %v1827
  %v1866 = vld [vmem:[#allocation3] sm:$0xff]
  %v1867 = vld [vmem:[#allocation3 + $0x8] sm:$0xff]
  %v1868 = vmul.f32 %v1855, %v1866
  %v1869 = vmul.f32 %v1861, %v1867
  %v1870 = vmul.f32 %v1853, %v1864
  %v1871 = vmul.f32 %v1859, %v1865
  %v1872 = vadd.f32 %v1868, %v1870
  %v1873 = vadd.f32 %v1869, %v1871
  %v1874 = vtanh.pop %v1872
  %v1875 = vtanh.pop %v1873
  %v1876 = vmul.f32 %v1857, %v1874
  %v1877 = vmul.f32 %v1863, %v1875
  %1878 = vst [vmem:[#allocation3] sm:$0xff] %v1872
  %1879 = vst [vmem:[#allocation3 + $0x8] sm:$0xff] %v1873
  %1880 = vst [vmem:[#allocation2] sm:$0xff] %v1876
  %1881 = vst [vmem:[#allocation2 + $0x18] sm:$0xff] %v1877
  %s1882 = scalar_lea.vmem %s3, 32
  %1883 = vst [vmem:[%s1882] sm:$0xff] %v1876
  %s1884 = scalar_lea.vmem %s50, 24
  %1885 = vst [vmem:[%s1884] sm:$0xff] %v1877
  %v1886 = vld [vmem:[#allocation2] sm:$0xff]
  %v1887 = vld [vmem:[#allocation2 + $0x8] sm:$0xff]
  %v1888 = vld [vmem:[#allocation2 + $0x10] sm:$0xff]
  %v1889 = vld [vmem:[#allocation2 + $0x18] sm:$0xff]
  %v1890 = vld [vmem:[#allocation4] sm:$0xff]
  %v1891 = vld [vmem:[#allocation4 + $0x8] sm:$0xff]
  %v1892 = vld [vmem:[#allocation4 + $0x10] sm:$0xff]
  %v1893 = vld [vmem:[#allocation4 + $0x18] sm:$0xff]
  %v1894 = vld [vmem:[#allocation4 + $0x20] sm:$0xff]
  %v1895 = vld [vmem:[#allocation4 + $0x28] sm:$0xff]
  %v1896 = vld [vmem:[#allocation4 + $0x30] sm:$0xff]
  %v1897 = vld [vmem:[#allocation4 + $0x38] sm:$0xff]
  %v1898 = vld [vmem:[#allocation4 + $0x40] sm:$0xff]
  %v1899 = vld [vmem:[#allocation4 + $0x48] sm:$0xff]
  %v1900 = vld [vmem:[#allocation4 + $0x50] sm:$0xff]
  %v1901 = vld [vmem:[#allocation4 + $0x58] sm:$0xff]
  %v1902 = vld [vmem:[#allocation4 + $0x60] sm:$0xff]
  %v1903 = vld [vmem:[#allocation4 + $0x68] sm:$0xff]
  %v1904 = vld [vmem:[#allocation4 + $0x70] sm:$0xff]
  %v1905 = vld [vmem:[#allocation4 + $0x78] sm:$0xff]
  %v1906 = vld [vmem:[#allocation4 + $0x80] sm:$0xff]
  %v1907 = vld [vmem:[#allocation4 + $0x88] sm:$0xff]
  %v1908 = vld [vmem:[#allocation4 + $0x90] sm:$0xff]
  %v1909 = vld [vmem:[#allocation4 + $0x98] sm:$0xff]
  %v1910 = vld [vmem:[#allocation4 + $0xa0] sm:$0xff]
  %v1911 = vld [vmem:[#allocation4 + $0xa8] sm:$0xff]
  %v1912 = vld [vmem:[#allocation4 + $0xb0] sm:$0xff]
  %v1913 = vld [vmem:[#allocation4 + $0xb8] sm:$0xff]
  %v1914 = vld [vmem:[#allocation4 + $0xc0] sm:$0xff]
  %v1915 = vld [vmem:[#allocation4 + $0xc8] sm:$0xff]
  %v1916 = vld [vmem:[#allocation4 + $0xd0] sm:$0xff]
  %v1917 = vld [vmem:[#allocation4 + $0xd8] sm:$0xff]
  %v1918 = vld [vmem:[#allocation4 + $0xe0] sm:$0xff]
  %v1919 = vld [vmem:[#allocation4 + $0xe8] sm:$0xff]
  %v1920 = vld [vmem:[#allocation4 + $0xf0] sm:$0xff]
  %v1921 = vld [vmem:[#allocation4 + $0xf8] sm:$0xff]
  %v1922 = vld [vmem:[#allocation4 + $0x100] sm:$0xff]
  %v1923 = vld [vmem:[#allocation4 + $0x108] sm:$0xff]
  %v1924 = vld [vmem:[#allocation4 + $0x110] sm:$0xff]
  %v1925 = vld [vmem:[#allocation4 + $0x118] sm:$0xff]
  %v1926 = vld [vmem:[#allocation4 + $0x120] sm:$0xff]
  %v1927 = vld [vmem:[#allocation4 + $0x128] sm:$0xff]
  %v1928 = vld [vmem:[#allocation4 + $0x130] sm:$0xff]
  %v1929 = vld [vmem:[#allocation4 + $0x138] sm:$0xff]
  %v1930 = vld [vmem:[#allocation4 + $0x140] sm:$0xff]
  %v1931 = vld [vmem:[#allocation4 + $0x148] sm:$0xff]
  %v1932 = vld [vmem:[#allocation4 + $0x150] sm:$0xff]
  %v1933 = vld [vmem:[#allocation4 + $0x158] sm:$0xff]
  %v1934 = vld [vmem:[#allocation4 + $0x160] sm:$0xff]
  %v1935 = vld [vmem:[#allocation4 + $0x168] sm:$0xff]
  %v1936 = vld [vmem:[#allocation4 + $0x170] sm:$0xff]
  %v1937 = vld [vmem:[#allocation4 + $0x178] sm:$0xff]
  %v1938 = vld [vmem:[#allocation4 + $0x180] sm:$0xff]
  %v1939 = vld [vmem:[#allocation4 + $0x188] sm:$0xff]
  %v1940 = vld [vmem:[#allocation4 + $0x190] sm:$0xff]
  %v1941 = vld [vmem:[#allocation4 + $0x198] sm:$0xff]
  %v1942 = vld [vmem:[#allocation4 + $0x1a0] sm:$0xff]
  %v1943 = vld [vmem:[#allocation4 + $0x1a8] sm:$0xff]
  %v1944 = vld [vmem:[#allocation4 + $0x1b0] sm:$0xff]
  %v1945 = vld [vmem:[#allocation4 + $0x1b8] sm:$0xff]
  %v1946 = vld [vmem:[#allocation4 + $0x1c0] sm:$0xff]
  %v1947 = vld [vmem:[#allocation4 + $0x1c8] sm:$0xff]
  %v1948 = vld [vmem:[#allocation4 + $0x1d0] sm:$0xff]
  %v1949 = vld [vmem:[#allocation4 + $0x1d8] sm:$0xff]
  %v1950 = vld [vmem:[#allocation4 + $0x1e0] sm:$0xff]
  %v1951 = vld [vmem:[#allocation4 + $0x1e8] sm:$0xff]
  %v1952 = vld [vmem:[#allocation4 + $0x1f0] sm:$0xff]
  %v1953 = vld [vmem:[#allocation4 + $0x1f8] sm:$0xff]
  %v1954 = vld [vmem:[#allocation4 + $0x200] sm:$0xff]
  %v1955 = vld [vmem:[#allocation4 + $0x208] sm:$0xff]
  %v1956 = vld [vmem:[#allocation4 + $0x210] sm:$0xff]
  %v1957 = vld [vmem:[#allocation4 + $0x218] sm:$0xff]
  %v1958 = vld [vmem:[#allocation4 + $0x220] sm:$0xff]
  %v1959 = vld [vmem:[#allocation4 + $0x228] sm:$0xff]
  %v1960 = vld [vmem:[#allocation4 + $0x230] sm:$0xff]
  %v1961 = vld [vmem:[#allocation4 + $0x238] sm:$0xff]
  %v1962 = vld [vmem:[#allocation4 + $0x240] sm:$0xff]
  %v1963 = vld [vmem:[#allocation4 + $0x248] sm:$0xff]
  %v1964 = vld [vmem:[#allocation4 + $0x250] sm:$0xff]
  %v1965 = vld [vmem:[#allocation4 + $0x258] sm:$0xff]
  %v1966 = vld [vmem:[#allocation4 + $0x260] sm:$0xff]
  %v1967 = vld [vmem:[#allocation4 + $0x268] sm:$0xff]
  %v1968 = vld [vmem:[#allocation4 + $0x270] sm:$0xff]
  %v1969 = vld [vmem:[#allocation4 + $0x278] sm:$0xff]
  %v1970 = vld [vmem:[#allocation4 + $0x280] sm:$0xff]
  %v1971 = vld [vmem:[#allocation4 + $0x288] sm:$0xff]
  %v1972 = vld [vmem:[#allocation4 + $0x290] sm:$0xff]
  %v1973 = vld [vmem:[#allocation4 + $0x298] sm:$0xff]
  %v1974 = vld [vmem:[#allocation4 + $0x2a0] sm:$0xff]
  %v1975 = vld [vmem:[#allocation4 + $0x2a8] sm:$0xff]
  %v1976 = vld [vmem:[#allocation4 + $0x2b0] sm:$0xff]
  %v1977 = vld [vmem:[#allocation4 + $0x2b8] sm:$0xff]
  %v1978 = vld [vmem:[#allocation4 + $0x2c0] sm:$0xff]
  %v1979 = vld [vmem:[#allocation4 + $0x2c8] sm:$0xff]
  %v1980 = vld [vmem:[#allocation4 + $0x2d0] sm:$0xff]
  %v1981 = vld [vmem:[#allocation4 + $0x2d8] sm:$0xff]
  %v1982 = vld [vmem:[#allocation4 + $0x2e0] sm:$0xff]
  %v1983 = vld [vmem:[#allocation4 + $0x2e8] sm:$0xff]
  %v1984 = vld [vmem:[#allocation4 + $0x2f0] sm:$0xff]
  %v1985 = vld [vmem:[#allocation4 + $0x2f8] sm:$0xff]
  %v1986 = vld [vmem:[#allocation4 + $0x300] sm:$0xff]
  %v1987 = vld [vmem:[#allocation4 + $0x308] sm:$0xff]
  %v1988 = vld [vmem:[#allocation4 + $0x310] sm:$0xff]
  %v1989 = vld [vmem:[#allocation4 + $0x318] sm:$0xff]
  %v1990 = vld [vmem:[#allocation4 + $0x320] sm:$0xff]
  %v1991 = vld [vmem:[#allocation4 + $0x328] sm:$0xff]
  %v1992 = vld [vmem:[#allocation4 + $0x330] sm:$0xff]
  %v1993 = vld [vmem:[#allocation4 + $0x338] sm:$0xff]
  %v1994 = vld [vmem:[#allocation4 + $0x340] sm:$0xff]
  %v1995 = vld [vmem:[#allocation4 + $0x348] sm:$0xff]
  %v1996 = vld [vmem:[#allocation4 + $0x350] sm:$0xff]
  %v1997 = vld [vmem:[#allocation4 + $0x358] sm:$0xff]
  %v1998 = vld [vmem:[#allocation4 + $0x360] sm:$0xff]
  %v1999 = vld [vmem:[#allocation4 + $0x368] sm:$0xff]
  %v2000 = vld [vmem:[#allocation4 + $0x370] sm:$0xff]
  %v2001 = vld [vmem:[#allocation4 + $0x378] sm:$0xff]
  %v2002 = vld [vmem:[#allocation4 + $0x380] sm:$0xff]
  %v2003 = vld [vmem:[#allocation4 + $0x388] sm:$0xff]
  %v2004 = vld [vmem:[#allocation4 + $0x390] sm:$0xff]
  %v2005 = vld [vmem:[#allocation4 + $0x398] sm:$0xff]
  %v2006 = vld [vmem:[#allocation4 + $0x3a0] sm:$0xff]
  %v2007 = vld [vmem:[#allocation4 + $0x3a8] sm:$0xff]
  %v2008 = vld [vmem:[#allocation4 + $0x3b0] sm:$0xff]
  %v2009 = vld [vmem:[#allocation4 + $0x3b8] sm:$0xff]
  %v2010 = vld [vmem:[#allocation4 + $0x3c0] sm:$0xff]
  %v2011 = vld [vmem:[#allocation4 + $0x3c8] sm:$0xff]
  %v2012 = vld [vmem:[#allocation4 + $0x3d0] sm:$0xff]
  %v2013 = vld [vmem:[#allocation4 + $0x3d8] sm:$0xff]
  %v2014 = vld [vmem:[#allocation4 + $0x3e0] sm:$0xff]
  %v2015 = vld [vmem:[#allocation4 + $0x3e8] sm:$0xff]
  %v2016 = vld [vmem:[#allocation4 + $0x3f0] sm:$0xff]
  %v2017 = vld [vmem:[#allocation4 + $0x3f8] sm:$0xff]
  %2018 = vmatprep.subr.mxu0 %v1891
  %2019 = vmatpush1.msra.mxu0 %v1890
  %2020 = vmatprep.subr.mxu0 %v1895
  %2021 = vmatpush1.msra.mxu0 %v1894
  %2022 = vmatprep.subr.mxu0 %v1899
  %2023 = vmatpush1.msra.mxu0 %v1898
  %2024 = vmatprep.subr.mxu0 %v1903
  %2025 = vmatpush1.msra.mxu0 %v1902
  %2026 = vmatprep.subr.mxu0 %v1907
  %2027 = vmatpush1.msra.mxu0 %v1906
  %2028 = vmatprep.subr.mxu0 %v1911
  %2029 = vmatpush1.msra.mxu0 %v1910
  %2030 = vmatprep.subr.mxu0 %v1915
  %2031 = vmatpush1.msra.mxu0 %v1914
  %2032 = vmatprep.subr.mxu0 %v1919
  %2033 = vmatpush1.msra.mxu0 %v1918
  %2034 = vmatprep.subr.mxu0 %v1923
  %2035 = vmatpush1.msra.mxu0 %v1922
  %2036 = vmatprep.subr.mxu0 %v1927
  %2037 = vmatpush1.msra.mxu0 %v1926
  %2038 = vmatprep.subr.mxu0 %v1931
  %2039 = vmatpush1.msra.mxu0 %v1930
  %2040 = vmatprep.subr.mxu0 %v1935
  %2041 = vmatpush1.msra.mxu0 %v1934
  %2042 = vmatprep.subr.mxu0 %v1939
  %2043 = vmatpush1.msra.mxu0 %v1938
  %2044 = vmatprep.subr.mxu0 %v1943
  %2045 = vmatpush1.msra.mxu0 %v1942
  %2046 = vmatprep.subr.mxu0 %v1947
  %2047 = vmatpush1.msra.mxu0 %v1946
  %2048 = vmatprep.subr.mxu0 %v1951
  %2049 = vmatpush1.msra.mxu0 %v1950
  %2050 = vmatprep.subr.mxu0 %v1955
  %2051 = vmatpush1.msra.mxu0 %v1954
  %2052 = vmatprep.subr.mxu0 %v1959
  %2053 = vmatpush1.msra.mxu0 %v1958
  %2054 = vmatprep.subr.mxu0 %v1963
  %2055 = vmatpush1.msra.mxu0 %v1962
  %2056 = vmatprep.subr.mxu0 %v1967
  %2057 = vmatpush1.msra.mxu0 %v1966
  %2058 = vmatprep.subr.mxu0 %v1971
  %2059 = vmatpush1.msra.mxu0 %v1970
  %2060 = vmatprep.subr.mxu0 %v1975
  %2061 = vmatpush1.msra.mxu0 %v1974
  %2062 = vmatprep.subr.mxu0 %v1979
  %2063 = vmatpush1.msra.mxu0 %v1978
  %2064 = vmatprep.subr.mxu0 %v1983
  %2065 = vmatpush1.msra.mxu0 %v1982
  %2066 = vmatprep.subr.mxu0 %v1987
  %2067 = vmatpush1.msra.mxu0 %v1986
  %2068 = vmatprep.subr.mxu0 %v1991
  %2069 = vmatpush1.msra.mxu0 %v1990
  %2070 = vmatprep.subr.mxu0 %v1995
  %2071 = vmatpush1.msra.mxu0 %v1994
  %2072 = vmatprep.subr.mxu0 %v1999
  %2073 = vmatpush1.msra.mxu0 %v1998
  %2074 = vmatprep.subr.mxu0 %v2003
  %2075 = vmatpush1.msra.mxu0 %v2002
  %2076 = vmatprep.subr.mxu0 %v2007
  %2077 = vmatpush1.msra.mxu0 %v2006
  %2078 = vmatprep.subr.mxu0 %v2011
  %2079 = vmatpush1.msra.mxu0 %v2010
  %2080 = vmatprep.subr.mxu0 %v2015
  %2081 = vmatpush1.msra.mxu0 %v2014
  %2082 = vmatprep.mubr.f32.mxu0 %v1887
  %2083 = vmatmul.mubr.f32.gmra.mrb[0].mxu0 %v1886
  %v2084 = vpop.f32.mrb[0].mxu0
  %v2085 = vadd.f32 0.0, %v2084
  %v2086 = vpop.f32.mrb[0].mxu0
  %v2087 = vadd.f32 0.0, %v2086
  %2088 = vmatprep.mubr.f32.mxu0 %v1889
  %2089 = vmatmul.mubr.f32.gmra.mrb[0].mxu0 %v1888
  %v2090 = vpop.f32.mrb[0].mxu0
  %v2091 = vadd.f32 0.0, %v2090
  %v2092 = vpop.f32.mrb[0].mxu0
  %v2093 = vadd.f32 0.0, %v2092
  %2094 = vdwg.mxu0
  %2095 = vmatprep.subr.mxu0 %v1893
  %2096 = vmatpush1.msra.mxu0 %v1892
  %2097 = vmatprep.subr.mxu0 %v1897
  %2098 = vmatpush1.msra.mxu0 %v1896
  %2099 = vmatprep.subr.mxu0 %v1901
  %2100 = vmatpush1.msra.mxu0 %v1900
  %2101 = vmatprep.subr.mxu0 %v1905
  %2102 = vmatpush1.msra.mxu0 %v1904
  %2103 = vmatprep.subr.mxu0 %v1909
  %2104 = vmatpush1.msra.mxu0 %v1908
  %2105 = vmatprep.subr.mxu0 %v1913
  %2106 = vmatpush1.msra.mxu0 %v1912
  %2107 = vmatprep.subr.mxu0 %v1917
  %2108 = vmatpush1.msra.mxu0 %v1916
  %2109 = vmatprep.subr.mxu0 %v1921
  %2110 = vmatpush1.msra.mxu0 %v1920
  %2111 = vmatprep.subr.mxu0 %v1925
  %2112 = vmatpush1.msra.mxu0 %v1924
  %2113 = vmatprep.subr.mxu0 %v1929
  %2114 = vmatpush1.msra.mxu0 %v1928
  %2115 = vmatprep.subr.mxu0 %v1933
  %2116 = vmatpush1.msra.mxu0 %v1932
  %2117 = vmatprep.subr.mxu0 %v1937
  %2118 = vmatpush1.msra.mxu0 %v1936
  %2119 = vmatprep.subr.mxu0 %v1941
  %2120 = vmatpush1.msra.mxu0 %v1940
  %2121 = vmatprep.subr.mxu0 %v1945
  %2122 = vmatpush1.msra.mxu0 %v1944
  %2123 = vmatprep.subr.mxu0 %v1949
  %2124 = vmatpush1.msra.mxu0 %v1948
  %2125 = vmatprep.subr.mxu0 %v1953
  %2126 = vmatpush1.msra.mxu0 %v1952
  %2127 = vmatprep.subr.mxu0 %v1957
  %2128 = vmatpush1.msra.mxu0 %v1956
  %2129 = vmatprep.subr.mxu0 %v1961
  %2130 = vmatpush1.msra.mxu0 %v1960
  %2131 = vmatprep.subr.mxu0 %v1965
  %2132 = vmatpush1.msra.mxu0 %v1964
  %2133 = vmatprep.subr.mxu0 %v1969
  %2134 = vmatpush1.msra.mxu0 %v1968
  %2135 = vmatprep.subr.mxu0 %v1973
  %2136 = vmatpush1.msra.mxu0 %v1972
  %2137 = vmatprep.subr.mxu0 %v1977
  %2138 = vmatpush1.msra.mxu0 %v1976
  %2139 = vmatprep.subr.mxu0 %v1981
  %2140 = vmatpush1.msra.mxu0 %v1980
  %2141 = vmatprep.subr.mxu0 %v1985
  %2142 = vmatpush1.msra.mxu0 %v1984
  %2143 = vmatprep.subr.mxu0 %v1989
  %2144 = vmatpush1.msra.mxu0 %v1988
  %2145 = vmatprep.subr.mxu0 %v1993
  %2146 = vmatpush1.msra.mxu0 %v1992
  %2147 = vmatprep.subr.mxu0 %v1997
  %2148 = vmatpush1.msra.mxu0 %v1996
  %2149 = vmatprep.subr.mxu0 %v2001
  %2150 = vmatpush1.msra.mxu0 %v2000
  %2151 = vmatprep.subr.mxu0 %v2005
  %2152 = vmatpush1.msra.mxu0 %v2004
  %2153 = vmatprep.subr.mxu0 %v2009
  %2154 = vmatpush1.msra.mxu0 %v2008
  %2155 = vmatprep.subr.mxu0 %v2013
  %2156 = vmatpush1.msra.mxu0 %v2012
  %2157 = vmatprep.subr.mxu0 %v2017
  %2158 = vmatpush1.msra.mxu0 %v2016
  %2159 = vmatprep.mubr.f32.mxu0 %v1887
  %2160 = vmatmul.mubr.f32.gmra.mrb[0].mxu0 %v1886
  %v2161 = vpop.f32.mrb[0].mxu0
  %v2162 = vadd.f32 0.0, %v2161
  %v2163 = vpop.f32.mrb[0].mxu0
  %v2164 = vadd.f32 0.0, %v2163
  %2165 = vmatprep.mubr.f32.mxu0 %v1889
  %2166 = vmatmul.mubr.f32.gmra.mrb[0].mxu0 %v1888
  %v2167 = vpop.f32.mrb[0].mxu0
  %v2168 = vadd.f32 0.0, %v2167
  %v2169 = vpop.f32.mrb[0].mxu0
  %v2170 = vadd.f32 0.0, %v2169
  %2171 = vdwg.mxu0
  %s2172 = scalar_lea.vmem %s0, 160
  %v2173 = vld [vmem:[%s2172] sm:$0xff]
  %v2174 = vld [vmem:[%s2172 + $0x8] sm:$0xff]
  %v2175 = vld [vmem:[%s2172 + $0x10] sm:$0xff]
  %v2176 = vld [vmem:[%s2172 + $0x18] sm:$0xff]
  %s2177 = scalar_lea.vmem %s42, 64
  %v2178 = vld [vmem:[%s2177] sm:$0xff]
  %v2179 = vld [vmem:[%s2177 + $0x8] sm:$0xff]
  %v2180 = vld [vmem:[%s2177 + $0x10] sm:$0xff]
  %v2181 = vld [vmem:[%s2177 + $0x18] sm:$0xff]
  %v2182 = vadd.f32 %v2173, %v2085
  %v2183 = vadd.f32 %v2174, %v2087
  %v2184 = vadd.f32 %v2175, %v2162
  %v2185 = vadd.f32 %v2176, %v2164
  %v2186 = vadd.f32 %v2178, %v2091
  %v2187 = vadd.f32 %v2179, %v2093
  %v2188 = vadd.f32 %v2180, %v2168
  %v2189 = vadd.f32 %v2181, %v2170
  %v2190 = vxor.u32 %v2182, 2147483648
  %v2191 = vxor.u32 %v2183, 2147483648
  %v2192 = vxor.u32 %v2184, 2147483648
  %v2193 = vxor.u32 %v2186, 2147483648
  %v2194 = vxor.u32 %v2187, 2147483648
  %v2195 = vxor.u32 %v2188, 2147483648
  %v2196 = vmul.f32 %v2190, 1.442695
  %v2197 = vpow.pop %v2196
  %v2198 = vmul.f32 %v2191, 1.442695
  %v2199 = vpow.pop %v2198
  %v2200 = vmul.f32 %v2192, 1.442695
  %v2201 = vpow.pop %v2200
  %v2202 = vmul.f32 %v2193, 1.442695
  %v2203 = vpow.pop %v2202
  %v2204 = vmul.f32 %v2194, 1.442695
  %v2205 = vpow.pop %v2204
  %v2206 = vmul.f32 %v2195, 1.442695
  %v2207 = vpow.pop %v2206
  %v2208 = vadd.f32 %v2197, 1.0
  %v2209 = vadd.f32 %v2199, 1.0
  %v2210 = vadd.f32 %v2201, 1.0
  %v2211 = vadd.f32 %v2203, 1.0
  %v2212 = vadd.f32 %v2205, 1.0
  %v2213 = vadd.f32 %v2207, 1.0
  %v2214 = vrcp.pop %v2208
  %v2215 = vmul.f32 1.0, %v2214
  %v2216 = vrcp.pop %v2209
  %v2217 = vmul.f32 1.0, %v2216
  %v2218 = vrcp.pop %v2210
  %v2219 = vmul.f32 1.0, %v2218
  %v2220 = vrcp.pop %v2211
  %v2221 = vmul.f32 1.0, %v2220
  %v2222 = vrcp.pop %v2212
  %v2223 = vmul.f32 1.0, %v2222
  %v2224 = vrcp.pop %v2213
  %v2225 = vmul.f32 1.0, %v2224
  %v2226 = vtanh.pop %v2185
  %v2227 = vtanh.pop %v2189
  %v2228 = vld [vmem:[#allocation3] sm:$0xff]
  %v2229 = vld [vmem:[#allocation3 + $0x8] sm:$0xff]
  %v2230 = vmul.f32 %v2217, %v2228
  %v2231 = vmul.f32 %v2223, %v2229
  %v2232 = vmul.f32 %v2215, %v2226
  %v2233 = vmul.f32 %v2221, %v2227
  %v2234 = vadd.f32 %v2230, %v2232
  %v2235 = vadd.f32 %v2231, %v2233
  %v2236 = vtanh.pop %v2234
  %v2237 = vtanh.pop %v2235
  %v2238 = vmul.f32 %v2219, %v2236
  %v2239 = vmul.f32 %v2225, %v2237
  %2240 = vst [vmem:[#allocation3] sm:$0xff] %v2234
  %2241 = vst [vmem:[#allocation3 + $0x8] sm:$0xff] %v2235
  %2242 = vst [vmem:[#allocation2] sm:$0xff] %v2238
  %2243 = vst [vmem:[#allocation2 + $0x18] sm:$0xff] %v2239
  %s2244 = scalar_lea.vmem %s3, 40
  %2245 = vst [vmem:[%s2244] sm:$0xff] %v2238
  %s2246 = scalar_lea.vmem %s50, 16
  %2247 = vst [vmem:[%s2246] sm:$0xff] %v2239
  %v2248 = vld [vmem:[#allocation2] sm:$0xff]
  %v2249 = vld [vmem:[#allocation2 + $0x8] sm:$0xff]
  %v2250 = vld [vmem:[#allocation2 + $0x10] sm:$0xff]
  %v2251 = vld [vmem:[#allocation2 + $0x18] sm:$0xff]
  %v2252 = vld [vmem:[#allocation4] sm:$0xff]
  %v2253 = vld [vmem:[#allocation4 + $0x8] sm:$0xff]
  %v2254 = vld [vmem:[#allocation4 + $0x10] sm:$0xff]
  %v2255 = vld [vmem:[#allocation4 + $0x18] sm:$0xff]
  %v2256 = vld [vmem:[#allocation4 + $0x20] sm:$0xff]
  %v2257 = vld [vmem:[#allocation4 + $0x28] sm:$0xff]
  %v2258 = vld [vmem:[#allocation4 + $0x30] sm:$0xff]
  %v2259 = vld [vmem:[#allocation4 + $0x38] sm:$0xff]
  %v2260 = vld [vmem:[#allocation4 + $0x40] sm:$0xff]
  %v2261 = vld [vmem:[#allocation4 + $0x48] sm:$0xff]
  %v2262 = vld [vmem:[#allocation4 + $0x50] sm:$0xff]
  %v2263 = vld [vmem:[#allocation4 + $0x58] sm:$0xff]
  %v2264 = vld [vmem:[#allocation4 + $0x60] sm:$0xff]
  %v2265 = vld [vmem:[#allocation4 + $0x68] sm:$0xff]
  %v2266 = vld [vmem:[#allocation4 + $0x70] sm:$0xff]
  %v2267 = vld [vmem:[#allocation4 + $0x78] sm:$0xff]
  %v2268 = vld [vmem:[#allocation4 + $0x80] sm:$0xff]
  %v2269 = vld [vmem:[#allocation4 + $0x88] sm:$0xff]
  %v2270 = vld [vmem:[#allocation4 + $0x90] sm:$0xff]
  %v2271 = vld [vmem:[#allocation4 + $0x98] sm:$0xff]
  %v2272 = vld [vmem:[#allocation4 + $0xa0] sm:$0xff]
  %v2273 = vld [vmem:[#allocation4 + $0xa8] sm:$0xff]
  %v2274 = vld [vmem:[#allocation4 + $0xb0] sm:$0xff]
  %v2275 = vld [vmem:[#allocation4 + $0xb8] sm:$0xff]
  %v2276 = vld [vmem:[#allocation4 + $0xc0] sm:$0xff]
  %v2277 = vld [vmem:[#allocation4 + $0xc8] sm:$0xff]
  %v2278 = vld [vmem:[#allocation4 + $0xd0] sm:$0xff]
  %v2279 = vld [vmem:[#allocation4 + $0xd8] sm:$0xff]
  %v2280 = vld [vmem:[#allocation4 + $0xe0] sm:$0xff]
  %v2281 = vld [vmem:[#allocation4 + $0xe8] sm:$0xff]
  %v2282 = vld [vmem:[#allocation4 + $0xf0] sm:$0xff]
  %v2283 = vld [vmem:[#allocation4 + $0xf8] sm:$0xff]
  %v2284 = vld [vmem:[#allocation4 + $0x100] sm:$0xff]
  %v2285 = vld [vmem:[#allocation4 + $0x108] sm:$0xff]
  %v2286 = vld [vmem:[#allocation4 + $0x110] sm:$0xff]
  %v2287 = vld [vmem:[#allocation4 + $0x118] sm:$0xff]
  %v2288 = vld [vmem:[#allocation4 + $0x120] sm:$0xff]
  %v2289 = vld [vmem:[#allocation4 + $0x128] sm:$0xff]
  %v2290 = vld [vmem:[#allocation4 + $0x130] sm:$0xff]
  %v2291 = vld [vmem:[#allocation4 + $0x138] sm:$0xff]
  %v2292 = vld [vmem:[#allocation4 + $0x140] sm:$0xff]
  %v2293 = vld [vmem:[#allocation4 + $0x148] sm:$0xff]
  %v2294 = vld [vmem:[#allocation4 + $0x150] sm:$0xff]
  %v2295 = vld [vmem:[#allocation4 + $0x158] sm:$0xff]
  %v2296 = vld [vmem:[#allocation4 + $0x160] sm:$0xff]
  %v2297 = vld [vmem:[#allocation4 + $0x168] sm:$0xff]
  %v2298 = vld [vmem:[#allocation4 + $0x170] sm:$0xff]
  %v2299 = vld [vmem:[#allocation4 + $0x178] sm:$0xff]
  %v2300 = vld [vmem:[#allocation4 + $0x180] sm:$0xff]
  %v2301 = vld [vmem:[#allocation4 + $0x188] sm:$0xff]
  %v2302 = vld [vmem:[#allocation4 + $0x190] sm:$0xff]
  %v2303 = vld [vmem:[#allocation4 + $0x198] sm:$0xff]
  %v2304 = vld [vmem:[#allocation4 + $0x1a0] sm:$0xff]
  %v2305 = vld [vmem:[#allocation4 + $0x1a8] sm:$0xff]
  %v2306 = vld [vmem:[#allocation4 + $0x1b0] sm:$0xff]
  %v2307 = vld [vmem:[#allocation4 + $0x1b8] sm:$0xff]
  %v2308 = vld [vmem:[#allocation4 + $0x1c0] sm:$0xff]
  %v2309 = vld [vmem:[#allocation4 + $0x1c8] sm:$0xff]
  %v2310 = vld [vmem:[#allocation4 + $0x1d0] sm:$0xff]
  %v2311 = vld [vmem:[#allocation4 + $0x1d8] sm:$0xff]
  %v2312 = vld [vmem:[#allocation4 + $0x1e0] sm:$0xff]
  %v2313 = vld [vmem:[#allocation4 + $0x1e8] sm:$0xff]
  %v2314 = vld [vmem:[#allocation4 + $0x1f0] sm:$0xff]
  %v2315 = vld [vmem:[#allocation4 + $0x1f8] sm:$0xff]
  %v2316 = vld [vmem:[#allocation4 + $0x200] sm:$0xff]
  %v2317 = vld [vmem:[#allocation4 + $0x208] sm:$0xff]
  %v2318 = vld [vmem:[#allocation4 + $0x210] sm:$0xff]
  %v2319 = vld [vmem:[#allocation4 + $0x218] sm:$0xff]
  %v2320 = vld [vmem:[#allocation4 + $0x220] sm:$0xff]
  %v2321 = vld [vmem:[#allocation4 + $0x228] sm:$0xff]
  %v2322 = vld [vmem:[#allocation4 + $0x230] sm:$0xff]
  %v2323 = vld [vmem:[#allocation4 + $0x238] sm:$0xff]
  %v2324 = vld [vmem:[#allocation4 + $0x240] sm:$0xff]
  %v2325 = vld [vmem:[#allocation4 + $0x248] sm:$0xff]
  %v2326 = vld [vmem:[#allocation4 + $0x250] sm:$0xff]
  %v2327 = vld [vmem:[#allocation4 + $0x258] sm:$0xff]
  %v2328 = vld [vmem:[#allocation4 + $0x260] sm:$0xff]
  %v2329 = vld [vmem:[#allocation4 + $0x268] sm:$0xff]
  %v2330 = vld [vmem:[#allocation4 + $0x270] sm:$0xff]
  %v2331 = vld [vmem:[#allocation4 + $0x278] sm:$0xff]
  %v2332 = vld [vmem:[#allocation4 + $0x280] sm:$0xff]
  %v2333 = vld [vmem:[#allocation4 + $0x288] sm:$0xff]
  %v2334 = vld [vmem:[#allocation4 + $0x290] sm:$0xff]
  %v2335 = vld [vmem:[#allocation4 + $0x298] sm:$0xff]
  %v2336 = vld [vmem:[#allocation4 + $0x2a0] sm:$0xff]
  %v2337 = vld [vmem:[#allocation4 + $0x2a8] sm:$0xff]
  %v2338 = vld [vmem:[#allocation4 + $0x2b0] sm:$0xff]
  %v2339 = vld [vmem:[#allocation4 + $0x2b8] sm:$0xff]
  %v2340 = vld [vmem:[#allocation4 + $0x2c0] sm:$0xff]
  %v2341 = vld [vmem:[#allocation4 + $0x2c8] sm:$0xff]
  %v2342 = vld [vmem:[#allocation4 + $0x2d0] sm:$0xff]
  %v2343 = vld [vmem:[#allocation4 + $0x2d8] sm:$0xff]
  %v2344 = vld [vmem:[#allocation4 + $0x2e0] sm:$0xff]
  %v2345 = vld [vmem:[#allocation4 + $0x2e8] sm:$0xff]
  %v2346 = vld [vmem:[#allocation4 + $0x2f0] sm:$0xff]
  %v2347 = vld [vmem:[#allocation4 + $0x2f8] sm:$0xff]
  %v2348 = vld [vmem:[#allocation4 + $0x300] sm:$0xff]
  %v2349 = vld [vmem:[#allocation4 + $0x308] sm:$0xff]
  %v2350 = vld [vmem:[#allocation4 + $0x310] sm:$0xff]
  %v2351 = vld [vmem:[#allocation4 + $0x318] sm:$0xff]
  %v2352 = vld [vmem:[#allocation4 + $0x320] sm:$0xff]
  %v2353 = vld [vmem:[#allocation4 + $0x328] sm:$0xff]
  %v2354 = vld [vmem:[#allocation4 + $0x330] sm:$0xff]
  %v2355 = vld [vmem:[#allocation4 + $0x338] sm:$0xff]
  %v2356 = vld [vmem:[#allocation4 + $0x340] sm:$0xff]
  %v2357 = vld [vmem:[#allocation4 + $0x348] sm:$0xff]
  %v2358 = vld [vmem:[#allocation4 + $0x350] sm:$0xff]
  %v2359 = vld [vmem:[#allocation4 + $0x358] sm:$0xff]
  %v2360 = vld [vmem:[#allocation4 + $0x360] sm:$0xff]
  %v2361 = vld [vmem:[#allocation4 + $0x368] sm:$0xff]
  %v2362 = vld [vmem:[#allocation4 + $0x370] sm:$0xff]
  %v2363 = vld [vmem:[#allocation4 + $0x378] sm:$0xff]
  %v2364 = vld [vmem:[#allocation4 + $0x380] sm:$0xff]
  %v2365 = vld [vmem:[#allocation4 + $0x388] sm:$0xff]
  %v2366 = vld [vmem:[#allocation4 + $0x390] sm:$0xff]
  %v2367 = vld [vmem:[#allocation4 + $0x398] sm:$0xff]
  %v2368 = vld [vmem:[#allocation4 + $0x3a0] sm:$0xff]
  %v2369 = vld [vmem:[#allocation4 + $0x3a8] sm:$0xff]
  %v2370 = vld [vmem:[#allocation4 + $0x3b0] sm:$0xff]
  %v2371 = vld [vmem:[#allocation4 + $0x3b8] sm:$0xff]
  %v2372 = vld [vmem:[#allocation4 + $0x3c0] sm:$0xff]
  %v2373 = vld [vmem:[#allocation4 + $0x3c8] sm:$0xff]
  %v2374 = vld [vmem:[#allocation4 + $0x3d0] sm:$0xff]
  %v2375 = vld [vmem:[#allocation4 + $0x3d8] sm:$0xff]
  %v2376 = vld [vmem:[#allocation4 + $0x3e0] sm:$0xff]
  %v2377 = vld [vmem:[#allocation4 + $0x3e8] sm:$0xff]
  %v2378 = vld [vmem:[#allocation4 + $0x3f0] sm:$0xff]
  %v2379 = vld [vmem:[#allocation4 + $0x3f8] sm:$0xff]
  %2380 = vmatprep.subr.mxu0 %v2253
  %2381 = vmatpush1.msra.mxu0 %v2252
  %2382 = vmatprep.subr.mxu0 %v2257
  %2383 = vmatpush1.msra.mxu0 %v2256
  %2384 = vmatprep.subr.mxu0 %v2261
  %2385 = vmatpush1.msra.mxu0 %v2260
  %2386 = vmatprep.subr.mxu0 %v2265
  %2387 = vmatpush1.msra.mxu0 %v2264
  %2388 = vmatprep.subr.mxu0 %v2269
  %2389 = vmatpush1.msra.mxu0 %v2268
  %2390 = vmatprep.subr.mxu0 %v2273
  %2391 = vmatpush1.msra.mxu0 %v2272
  %2392 = vmatprep.subr.mxu0 %v2277
  %2393 = vmatpush1.msra.mxu0 %v2276
  %2394 = vmatprep.subr.mxu0 %v2281
  %2395 = vmatpush1.msra.mxu0 %v2280
  %2396 = vmatprep.subr.mxu0 %v2285
  %2397 = vmatpush1.msra.mxu0 %v2284
  %2398 = vmatprep.subr.mxu0 %v2289
  %2399 = vmatpush1.msra.mxu0 %v2288
  %2400 = vmatprep.subr.mxu0 %v2293
  %2401 = vmatpush1.msra.mxu0 %v2292
  %2402 = vmatprep.subr.mxu0 %v2297
  %2403 = vmatpush1.msra.mxu0 %v2296
  %2404 = vmatprep.subr.mxu0 %v2301
  %2405 = vmatpush1.msra.mxu0 %v2300
  %2406 = vmatprep.subr.mxu0 %v2305
  %2407 = vmatpush1.msra.mxu0 %v2304
  %2408 = vmatprep.subr.mxu0 %v2309
  %2409 = vmatpush1.msra.mxu0 %v2308
  %2410 = vmatprep.subr.mxu0 %v2313
  %2411 = vmatpush1.msra.mxu0 %v2312
  %2412 = vmatprep.subr.mxu0 %v2317
  %2413 = vmatpush1.msra.mxu0 %v2316
  %2414 = vmatprep.subr.mxu0 %v2321
  %2415 = vmatpush1.msra.mxu0 %v2320
  %2416 = vmatprep.subr.mxu0 %v2325
  %2417 = vmatpush1.msra.mxu0 %v2324
  %2418 = vmatprep.subr.mxu0 %v2329
  %2419 = vmatpush1.msra.mxu0 %v2328
  %2420 = vmatprep.subr.mxu0 %v2333
  %2421 = vmatpush1.msra.mxu0 %v2332
  %2422 = vmatprep.subr.mxu0 %v2337
  %2423 = vmatpush1.msra.mxu0 %v2336
  %2424 = vmatprep.subr.mxu0 %v2341
  %2425 = vmatpush1.msra.mxu0 %v2340
  %2426 = vmatprep.subr.mxu0 %v2345
  %2427 = vmatpush1.msra.mxu0 %v2344
  %2428 = vmatprep.subr.mxu0 %v2349
  %2429 = vmatpush1.msra.mxu0 %v2348
  %2430 = vmatprep.subr.mxu0 %v2353
  %2431 = vmatpush1.msra.mxu0 %v2352
  %2432 = vmatprep.subr.mxu0 %v2357
  %2433 = vmatpush1.msra.mxu0 %v2356
  %2434 = vmatprep.subr.mxu0 %v2361
  %2435 = vmatpush1.msra.mxu0 %v2360
  %2436 = vmatprep.subr.mxu0 %v2365
  %2437 = vmatpush1.msra.mxu0 %v2364
  %2438 = vmatprep.subr.mxu0 %v2369
  %2439 = vmatpush1.msra.mxu0 %v2368
  %2440 = vmatprep.subr.mxu0 %v2373
  %2441 = vmatpush1.msra.mxu0 %v2372
  %2442 = vmatprep.subr.mxu0 %v2377
  %2443 = vmatpush1.msra.mxu0 %v2376
  %2444 = vmatprep.mubr.f32.mxu0 %v2249
  %2445 = vmatmul.mubr.f32.gmra.mrb[0].mxu0 %v2248
  %v2446 = vpop.f32.mrb[0].mxu0
  %v2447 = vadd.f32 0.0, %v2446
  %v2448 = vpop.f32.mrb[0].mxu0
  %v2449 = vadd.f32 0.0, %v2448
  %2450 = vmatprep.mubr.f32.mxu0 %v2251
  %2451 = vmatmul.mubr.f32.gmra.mrb[0].mxu0 %v2250
  %v2452 = vpop.f32.mrb[0].mxu0
  %v2453 = vadd.f32 0.0, %v2452
  %v2454 = vpop.f32.mrb[0].mxu0
  %v2455 = vadd.f32 0.0, %v2454
  %2456 = vdwg.mxu0
  %2457 = vmatprep.subr.mxu0 %v2255
  %2458 = vmatpush1.msra.mxu0 %v2254
  %2459 = vmatprep.subr.mxu0 %v2259
  %2460 = vmatpush1.msra.mxu0 %v2258
  %2461 = vmatprep.subr.mxu0 %v2263
  %2462 = vmatpush1.msra.mxu0 %v2262
  %2463 = vmatprep.subr.mxu0 %v2267
  %2464 = vmatpush1.msra.mxu0 %v2266
  %2465 = vmatprep.subr.mxu0 %v2271
  %2466 = vmatpush1.msra.mxu0 %v2270
  %2467 = vmatprep.subr.mxu0 %v2275
  %2468 = vmatpush1.msra.mxu0 %v2274
  %2469 = vmatprep.subr.mxu0 %v2279
  %2470 = vmatpush1.msra.mxu0 %v2278
  %2471 = vmatprep.subr.mxu0 %v2283
  %2472 = vmatpush1.msra.mxu0 %v2282
  %2473 = vmatprep.subr.mxu0 %v2287
  %2474 = vmatpush1.msra.mxu0 %v2286
  %2475 = vmatprep.subr.mxu0 %v2291
  %2476 = vmatpush1.msra.mxu0 %v2290
  %2477 = vmatprep.subr.mxu0 %v2295
  %2478 = vmatpush1.msra.mxu0 %v2294
  %2479 = vmatprep.subr.mxu0 %v2299
  %2480 = vmatpush1.msra.mxu0 %v2298
  %2481 = vmatprep.subr.mxu0 %v2303
  %2482 = vmatpush1.msra.mxu0 %v2302
  %2483 = vmatprep.subr.mxu0 %v2307
  %2484 = vmatpush1.msra.mxu0 %v2306
  %2485 = vmatprep.subr.mxu0 %v2311
  %2486 = vmatpush1.msra.mxu0 %v2310
  %2487 = vmatprep.subr.mxu0 %v2315
  %2488 = vmatpush1.msra.mxu0 %v2314
  %2489 = vmatprep.subr.mxu0 %v2319
  %2490 = vmatpush1.msra.mxu0 %v2318
  %2491 = vmatprep.subr.mxu0 %v2323
  %2492 = vmatpush1.msra.mxu0 %v2322
  %2493 = vmatprep.subr.mxu0 %v2327
  %2494 = vmatpush1.msra.mxu0 %v2326
  %2495 = vmatprep.subr.mxu0 %v2331
  %2496 = vmatpush1.msra.mxu0 %v2330
  %2497 = vmatprep.subr.mxu0 %v2335
  %2498 = vmatpush1.msra.mxu0 %v2334
  %2499 = vmatprep.subr.mxu0 %v2339
  %2500 = vmatpush1.msra.mxu0 %v2338
  %2501 = vmatprep.subr.mxu0 %v2343
  %2502 = vmatpush1.msra.mxu0 %v2342
  %2503 = vmatprep.subr.mxu0 %v2347
  %2504 = vmatpush1.msra.mxu0 %v2346
  %2505 = vmatprep.subr.mxu0 %v2351
  %2506 = vmatpush1.msra.mxu0 %v2350
  %2507 = vmatprep.subr.mxu0 %v2355
  %2508 = vmatpush1.msra.mxu0 %v2354
  %2509 = vmatprep.subr.mxu0 %v2359
  %2510 = vmatpush1.msra.mxu0 %v2358
  %2511 = vmatprep.subr.mxu0 %v2363
  %2512 = vmatpush1.msra.mxu0 %v2362
  %2513 = vmatprep.subr.mxu0 %v2367
  %2514 = vmatpush1.msra.mxu0 %v2366
  %2515 = vmatprep.subr.mxu0 %v2371
  %2516 = vmatpush1.msra.mxu0 %v2370
  %2517 = vmatprep.subr.mxu0 %v2375
  %2518 = vmatpush1.msra.mxu0 %v2374
  %2519 = vmatprep.subr.mxu0 %v2379
  %2520 = vmatpush1.msra.mxu0 %v2378
  %2521 = vmatprep.mubr.f32.mxu0 %v2249
  %2522 = vmatmul.mubr.f32.gmra.mrb[0].mxu0 %v2248
  %v2523 = vpop.f32.mrb[0].mxu0
  %v2524 = vadd.f32 0.0, %v2523
  %v2525 = vpop.f32.mrb[0].mxu0
  %v2526 = vadd.f32 0.0, %v2525
  %2527 = vmatprep.mubr.f32.mxu0 %v2251
  %2528 = vmatmul.mubr.f32.gmra.mrb[0].mxu0 %v2250
  %v2529 = vpop.f32.mrb[0].mxu0
  %v2530 = vadd.f32 0.0, %v2529
  %v2531 = vpop.f32.mrb[0].mxu0
  %v2532 = vadd.f32 0.0, %v2531
  %2533 = vdwg.mxu0
  %s2534 = scalar_lea.vmem %s0, 192
  %v2535 = vld [vmem:[%s2534] sm:$0xff]
  %v2536 = vld [vmem:[%s2534 + $0x8] sm:$0xff]
  %v2537 = vld [vmem:[%s2534 + $0x10] sm:$0xff]
  %v2538 = vld [vmem:[%s2534 + $0x18] sm:$0xff]
  %s2539 = scalar_lea.vmem %s42, 32
  %v2540 = vld [vmem:[%s2539] sm:$0xff]
  %v2541 = vld [vmem:[%s2539 + $0x8] sm:$0xff]
  %v2542 = vld [vmem:[%s2539 + $0x10] sm:$0xff]
  %v2543 = vld [vmem:[%s2539 + $0x18] sm:$0xff]
  %v2544 = vadd.f32 %v2535, %v2447
  %v2545 = vadd.f32 %v2536, %v2449
  %v2546 = vadd.f32 %v2537, %v2524
  %v2547 = vadd.f32 %v2538, %v2526
  %v2548 = vadd.f32 %v2540, %v2453
  %v2549 = vadd.f32 %v2541, %v2455
  %v2550 = vadd.f32 %v2542, %v2530
  %v2551 = vadd.f32 %v2543, %v2532
  %v2552 = vxor.u32 %v2544, 2147483648
  %v2553 = vxor.u32 %v2545, 2147483648
  %v2554 = vxor.u32 %v2546, 2147483648
  %v2555 = vxor.u32 %v2548, 2147483648
  %v2556 = vxor.u32 %v2549, 2147483648
  %v2557 = vxor.u32 %v2550, 2147483648
  %v2558 = vmul.f32 %v2552, 1.442695
  %v2559 = vpow.pop %v2558
  %v2560 = vmul.f32 %v2553, 1.442695
  %v2561 = vpow.pop %v2560
  %v2562 = vmul.f32 %v2554, 1.442695
  %v2563 = vpow.pop %v2562
  %v2564 = vmul.f32 %v2555, 1.442695
  %v2565 = vpow.pop %v2564
  %v2566 = vmul.f32 %v2556, 1.442695
  %v2567 = vpow.pop %v2566
  %v2568 = vmul.f32 %v2557, 1.442695
  %v2569 = vpow.pop %v2568
  %v2570 = vadd.f32 %v2559, 1.0
  %v2571 = vadd.f32 %v2561, 1.0
  %v2572 = vadd.f32 %v2563, 1.0
  %v2573 = vadd.f32 %v2565, 1.0
  %v2574 = vadd.f32 %v2567, 1.0
  %v2575 = vadd.f32 %v2569, 1.0
  %v2576 = vrcp.pop %v2570
  %v2577 = vmul.f32 1.0, %v2576
  %v2578 = vrcp.pop %v2571
  %v2579 = vmul.f32 1.0, %v2578
  %v2580 = vrcp.pop %v2572
  %v2581 = vmul.f32 1.0, %v2580
  %v2582 = vrcp.pop %v2573
  %v2583 = vmul.f32 1.0, %v2582
  %v2584 = vrcp.pop %v2574
  %v2585 = vmul.f32 1.0, %v2584
  %v2586 = vrcp.pop %v2575
  %v2587 = vmul.f32 1.0, %v2586
  %v2588 = vtanh.pop %v2547
  %v2589 = vtanh.pop %v2551
  %v2590 = vld [vmem:[#allocation3] sm:$0xff]
  %v2591 = vld [vmem:[#allocation3 + $0x8] sm:$0xff]
  %v2592 = vmul.f32 %v2579, %v2590
  %v2593 = vmul.f32 %v2585, %v2591
  %v2594 = vmul.f32 %v2577, %v2588
  %v2595 = vmul.f32 %v2583, %v2589
  %v2596 = vadd.f32 %v2592, %v2594
  %v2597 = vadd.f32 %v2593, %v2595
  %v2598 = vtanh.pop %v2596
  %v2599 = vtanh.pop %v2597
  %v2600 = vmul.f32 %v2581, %v2598
  %v2601 = vmul.f32 %v2587, %v2599
  %2602 = vst [vmem:[#allocation3] sm:$0xff] %v2596
  %2603 = vst [vmem:[#allocation3 + $0x8] sm:$0xff] %v2597
  %2604 = vst [vmem:[#allocation2] sm:$0xff] %v2600
  %2605 = vst [vmem:[#allocation2 + $0x18] sm:$0xff] %v2601
  %s2606 = scalar_lea.vmem %s3, 48
  %2607 = vst [vmem:[%s2606] sm:$0xff] %v2600
  %s2608 = scalar_lea.vmem %s50, 8
  %2609 = vst [vmem:[%s2608] sm:$0xff] %v2601
  %v2610 = vld [vmem:[#allocation2] sm:$0xff]
  %v2611 = vld [vmem:[#allocation2 + $0x8] sm:$0xff]
  %v2612 = vld [vmem:[#allocation2 + $0x10] sm:$0xff]
  %v2613 = vld [vmem:[#allocation2 + $0x18] sm:$0xff]
  %v2614 = vld [vmem:[#allocation4] sm:$0xff]
  %v2615 = vld [vmem:[#allocation4 + $0x8] sm:$0xff]
  %v2616 = vld [vmem:[#allocation4 + $0x10] sm:$0xff]
  %v2617 = vld [vmem:[#allocation4 + $0x18] sm:$0xff]
  %v2618 = vld [vmem:[#allocation4 + $0x20] sm:$0xff]
  %v2619 = vld [vmem:[#allocation4 + $0x28] sm:$0xff]
  %v2620 = vld [vmem:[#allocation4 + $0x30] sm:$0xff]
  %v2621 = vld [vmem:[#allocation4 + $0x38] sm:$0xff]
  %v2622 = vld [vmem:[#allocation4 + $0x40] sm:$0xff]
  %v2623 = vld [vmem:[#allocation4 + $0x48] sm:$0xff]
  %v2624 = vld [vmem:[#allocation4 + $0x50] sm:$0xff]
  %v2625 = vld [vmem:[#allocation4 + $0x58] sm:$0xff]
  %v2626 = vld [vmem:[#allocation4 + $0x60] sm:$0xff]
  %v2627 = vld [vmem:[#allocation4 + $0x68] sm:$0xff]
  %v2628 = vld [vmem:[#allocation4 + $0x70] sm:$0xff]
  %v2629 = vld [vmem:[#allocation4 + $0x78] sm:$0xff]
  %v2630 = vld [vmem:[#allocation4 + $0x80] sm:$0xff]
  %v2631 = vld [vmem:[#allocation4 + $0x88] sm:$0xff]
  %v2632 = vld [vmem:[#allocation4 + $0x90] sm:$0xff]
  %v2633 = vld [vmem:[#allocation4 + $0x98] sm:$0xff]
  %v2634 = vld [vmem:[#allocation4 + $0xa0] sm:$0xff]
  %v2635 = vld [vmem:[#allocation4 + $0xa8] sm:$0xff]
  %v2636 = vld [vmem:[#allocation4 + $0xb0] sm:$0xff]
  %v2637 = vld [vmem:[#allocation4 + $0xb8] sm:$0xff]
  %v2638 = vld [vmem:[#allocation4 + $0xc0] sm:$0xff]
  %v2639 = vld [vmem:[#allocation4 + $0xc8] sm:$0xff]
  %v2640 = vld [vmem:[#allocation4 + $0xd0] sm:$0xff]
  %v2641 = vld [vmem:[#allocation4 + $0xd8] sm:$0xff]
  %v2642 = vld [vmem:[#allocation4 + $0xe0] sm:$0xff]
  %v2643 = vld [vmem:[#allocation4 + $0xe8] sm:$0xff]
  %v2644 = vld [vmem:[#allocation4 + $0xf0] sm:$0xff]
  %v2645 = vld [vmem:[#allocation4 + $0xf8] sm:$0xff]
  %v2646 = vld [vmem:[#allocation4 + $0x100] sm:$0xff]
  %v2647 = vld [vmem:[#allocation4 + $0x108] sm:$0xff]
  %v2648 = vld [vmem:[#allocation4 + $0x110] sm:$0xff]
  %v2649 = vld [vmem:[#allocation4 + $0x118] sm:$0xff]
  %v2650 = vld [vmem:[#allocation4 + $0x120] sm:$0xff]
  %v2651 = vld [vmem:[#allocation4 + $0x128] sm:$0xff]
  %v2652 = vld [vmem:[#allocation4 + $0x130] sm:$0xff]
  %v2653 = vld [vmem:[#allocation4 + $0x138] sm:$0xff]
  %v2654 = vld [vmem:[#allocation4 + $0x140] sm:$0xff]
  %v2655 = vld [vmem:[#allocation4 + $0x148] sm:$0xff]
  %v2656 = vld [vmem:[#allocation4 + $0x150] sm:$0xff]
  %v2657 = vld [vmem:[#allocation4 + $0x158] sm:$0xff]
  %v2658 = vld [vmem:[#allocation4 + $0x160] sm:$0xff]
  %v2659 = vld [vmem:[#allocation4 + $0x168] sm:$0xff]
  %v2660 = vld [vmem:[#allocation4 + $0x170] sm:$0xff]
  %v2661 = vld [vmem:[#allocation4 + $0x178] sm:$0xff]
  %v2662 = vld [vmem:[#allocation4 + $0x180] sm:$0xff]
  %v2663 = vld [vmem:[#allocation4 + $0x188] sm:$0xff]
  %v2664 = vld [vmem:[#allocation4 + $0x190] sm:$0xff]
  %v2665 = vld [vmem:[#allocation4 + $0x198] sm:$0xff]
  %v2666 = vld [vmem:[#allocation4 + $0x1a0] sm:$0xff]
  %v2667 = vld [vmem:[#allocation4 + $0x1a8] sm:$0xff]
  %v2668 = vld [vmem:[#allocation4 + $0x1b0] sm:$0xff]
  %v2669 = vld [vmem:[#allocation4 + $0x1b8] sm:$0xff]
  %v2670 = vld [vmem:[#allocation4 + $0x1c0] sm:$0xff]
  %v2671 = vld [vmem:[#allocation4 + $0x1c8] sm:$0xff]
  %v2672 = vld [vmem:[#allocation4 + $0x1d0] sm:$0xff]
  %v2673 = vld [vmem:[#allocation4 + $0x1d8] sm:$0xff]
  %v2674 = vld [vmem:[#allocation4 + $0x1e0] sm:$0xff]
  %v2675 = vld [vmem:[#allocation4 + $0x1e8] sm:$0xff]
  %v2676 = vld [vmem:[#allocation4 + $0x1f0] sm:$0xff]
  %v2677 = vld [vmem:[#allocation4 + $0x1f8] sm:$0xff]
  %v2678 = vld [vmem:[#allocation4 + $0x200] sm:$0xff]
  %v2679 = vld [vmem:[#allocation4 + $0x208] sm:$0xff]
  %v2680 = vld [vmem:[#allocation4 + $0x210] sm:$0xff]
  %v2681 = vld [vmem:[#allocation4 + $0x218] sm:$0xff]
  %v2682 = vld [vmem:[#allocation4 + $0x220] sm:$0xff]
  %v2683 = vld [vmem:[#allocation4 + $0x228] sm:$0xff]
  %v2684 = vld [vmem:[#allocation4 + $0x230] sm:$0xff]
  %v2685 = vld [vmem:[#allocation4 + $0x238] sm:$0xff]
  %v2686 = vld [vmem:[#allocation4 + $0x240] sm:$0xff]
  %v2687 = vld [vmem:[#allocation4 + $0x248] sm:$0xff]
  %v2688 = vld [vmem:[#allocation4 + $0x250] sm:$0xff]
  %v2689 = vld [vmem:[#allocation4 + $0x258] sm:$0xff]
  %v2690 = vld [vmem:[#allocation4 + $0x260] sm:$0xff]
  %v2691 = vld [vmem:[#allocation4 + $0x268] sm:$0xff]
  %v2692 = vld [vmem:[#allocation4 + $0x270] sm:$0xff]
  %v2693 = vld [vmem:[#allocation4 + $0x278] sm:$0xff]
  %v2694 = vld [vmem:[#allocation4 + $0x280] sm:$0xff]
  %v2695 = vld [vmem:[#allocation4 + $0x288] sm:$0xff]
  %v2696 = vld [vmem:[#allocation4 + $0x290] sm:$0xff]
  %v2697 = vld [vmem:[#allocation4 + $0x298] sm:$0xff]
  %v2698 = vld [vmem:[#allocation4 + $0x2a0] sm:$0xff]
  %v2699 = vld [vmem:[#allocation4 + $0x2a8] sm:$0xff]
  %v2700 = vld [vmem:[#allocation4 + $0x2b0] sm:$0xff]
  %v2701 = vld [vmem:[#allocation4 + $0x2b8] sm:$0xff]
  %v2702 = vld [vmem:[#allocation4 + $0x2c0] sm:$0xff]
  %v2703 = vld [vmem:[#allocation4 + $0x2c8] sm:$0xff]
  %v2704 = vld [vmem:[#allocation4 + $0x2d0] sm:$0xff]
  %v2705 = vld [vmem:[#allocation4 + $0x2d8] sm:$0xff]
  %v2706 = vld [vmem:[#allocation4 + $0x2e0] sm:$0xff]
  %v2707 = vld [vmem:[#allocation4 + $0x2e8] sm:$0xff]
  %v2708 = vld [vmem:[#allocation4 + $0x2f0] sm:$0xff]
  %v2709 = vld [vmem:[#allocation4 + $0x2f8] sm:$0xff]
  %v2710 = vld [vmem:[#allocation4 + $0x300] sm:$0xff]
  %v2711 = vld [vmem:[#allocation4 + $0x308] sm:$0xff]
  %v2712 = vld [vmem:[#allocation4 + $0x310] sm:$0xff]
  %v2713 = vld [vmem:[#allocation4 + $0x318] sm:$0xff]
  %v2714 = vld [vmem:[#allocation4 + $0x320] sm:$0xff]
  %v2715 = vld [vmem:[#allocation4 + $0x328] sm:$0xff]
  %v2716 = vld [vmem:[#allocation4 + $0x330] sm:$0xff]
  %v2717 = vld [vmem:[#allocation4 + $0x338] sm:$0xff]
  %v2718 = vld [vmem:[#allocation4 + $0x340] sm:$0xff]
  %v2719 = vld [vmem:[#allocation4 + $0x348] sm:$0xff]
  %v2720 = vld [vmem:[#allocation4 + $0x350] sm:$0xff]
  %v2721 = vld [vmem:[#allocation4 + $0x358] sm:$0xff]
  %v2722 = vld [vmem:[#allocation4 + $0x360] sm:$0xff]
  %v2723 = vld [vmem:[#allocation4 + $0x368] sm:$0xff]
  %v2724 = vld [vmem:[#allocation4 + $0x370] sm:$0xff]
  %v2725 = vld [vmem:[#allocation4 + $0x378] sm:$0xff]
  %v2726 = vld [vmem:[#allocation4 + $0x380] sm:$0xff]
  %v2727 = vld [vmem:[#allocation4 + $0x388] sm:$0xff]
  %v2728 = vld [vmem:[#allocation4 + $0x390] sm:$0xff]
  %v2729 = vld [vmem:[#allocation4 + $0x398] sm:$0xff]
  %v2730 = vld [vmem:[#allocation4 + $0x3a0] sm:$0xff]
  %v2731 = vld [vmem:[#allocation4 + $0x3a8] sm:$0xff]
  %v2732 = vld [vmem:[#allocation4 + $0x3b0] sm:$0xff]
  %v2733 = vld [vmem:[#allocation4 + $0x3b8] sm:$0xff]
  %v2734 = vld [vmem:[#allocation4 + $0x3c0] sm:$0xff]
  %v2735 = vld [vmem:[#allocation4 + $0x3c8] sm:$0xff]
  %v2736 = vld [vmem:[#allocation4 + $0x3d0] sm:$0xff]
  %v2737 = vld [vmem:[#allocation4 + $0x3d8] sm:$0xff]
  %v2738 = vld [vmem:[#allocation4 + $0x3e0] sm:$0xff]
  %v2739 = vld [vmem:[#allocation4 + $0x3e8] sm:$0xff]
  %v2740 = vld [vmem:[#allocation4 + $0x3f0] sm:$0xff]
  %v2741 = vld [vmem:[#allocation4 + $0x3f8] sm:$0xff]
  %2742 = vmatprep.subr.mxu0 %v2615
  %2743 = vmatpush1.msra.mxu0 %v2614
  %2744 = vmatprep.subr.mxu0 %v2619
  %2745 = vmatpush1.msra.mxu0 %v2618
  %2746 = vmatprep.subr.mxu0 %v2623
  %2747 = vmatpush1.msra.mxu0 %v2622
  %2748 = vmatprep.subr.mxu0 %v2627
  %2749 = vmatpush1.msra.mxu0 %v2626
  %2750 = vmatprep.subr.mxu0 %v2631
  %2751 = vmatpush1.msra.mxu0 %v2630
  %2752 = vmatprep.subr.mxu0 %v2635
  %2753 = vmatpush1.msra.mxu0 %v2634
  %2754 = vmatprep.subr.mxu0 %v2639
  %2755 = vmatpush1.msra.mxu0 %v2638
  %2756 = vmatprep.subr.mxu0 %v2643
  %2757 = vmatpush1.msra.mxu0 %v2642
  %2758 = vmatprep.subr.mxu0 %v2647
  %2759 = vmatpush1.msra.mxu0 %v2646
  %2760 = vmatprep.subr.mxu0 %v2651
  %2761 = vmatpush1.msra.mxu0 %v2650
  %2762 = vmatprep.subr.mxu0 %v2655
  %2763 = vmatpush1.msra.mxu0 %v2654
  %2764 = vmatprep.subr.mxu0 %v2659
  %2765 = vmatpush1.msra.mxu0 %v2658
  %2766 = vmatprep.subr.mxu0 %v2663
  %2767 = vmatpush1.msra.mxu0 %v2662
  %2768 = vmatprep.subr.mxu0 %v2667
  %2769 = vmatpush1.msra.mxu0 %v2666
  %2770 = vmatprep.subr.mxu0 %v2671
  %2771 = vmatpush1.msra.mxu0 %v2670
  %2772 = vmatprep.subr.mxu0 %v2675
  %2773 = vmatpush1.msra.mxu0 %v2674
  %2774 = vmatprep.subr.mxu0 %v2679
  %2775 = vmatpush1.msra.mxu0 %v2678
  %2776 = vmatprep.subr.mxu0 %v2683
  %2777 = vmatpush1.msra.mxu0 %v2682
  %2778 = vmatprep.subr.mxu0 %v2687
  %2779 = vmatpush1.msra.mxu0 %v2686
  %2780 = vmatprep.subr.mxu0 %v2691
  %2781 = vmatpush1.msra.mxu0 %v2690
  %2782 = vmatprep.subr.mxu0 %v2695
  %2783 = vmatpush1.msra.mxu0 %v2694
  %2784 = vmatprep.subr.mxu0 %v2699
  %2785 = vmatpush1.msra.mxu0 %v2698
  %2786 = vmatprep.subr.mxu0 %v2703
  %2787 = vmatpush1.msra.mxu0 %v2702
  %2788 = vmatprep.subr.mxu0 %v2707
  %2789 = vmatpush1.msra.mxu0 %v2706
  %2790 = vmatprep.subr.mxu0 %v2711
  %2791 = vmatpush1.msra.mxu0 %v2710
  %2792 = vmatprep.subr.mxu0 %v2715
  %2793 = vmatpush1.msra.mxu0 %v2714
  %2794 = vmatprep.subr.mxu0 %v2719
  %2795 = vmatpush1.msra.mxu0 %v2718
  %2796 = vmatprep.subr.mxu0 %v2723
  %2797 = vmatpush1.msra.mxu0 %v2722
  %2798 = vmatprep.subr.mxu0 %v2727
  %2799 = vmatpush1.msra.mxu0 %v2726
  %2800 = vmatprep.subr.mxu0 %v2731
  %2801 = vmatpush1.msra.mxu0 %v2730
  %2802 = vmatprep.subr.mxu0 %v2735
  %2803 = vmatpush1.msra.mxu0 %v2734
  %2804 = vmatprep.subr.mxu0 %v2739
  %2805 = vmatpush1.msra.mxu0 %v2738
  %2806 = vmatprep.mubr.f32.mxu0 %v2611
  %2807 = vmatmul.mubr.f32.gmra.mrb[0].mxu0 %v2610
  %v2808 = vpop.f32.mrb[0].mxu0
  %v2809 = vadd.f32 0.0, %v2808
  %v2810 = vpop.f32.mrb[0].mxu0
  %v2811 = vadd.f32 0.0, %v2810
  %2812 = vmatprep.mubr.f32.mxu0 %v2613
  %2813 = vmatmul.mubr.f32.gmra.mrb[0].mxu0 %v2612
  %v2814 = vpop.f32.mrb[0].mxu0
  %v2815 = vadd.f32 0.0, %v2814
  %v2816 = vpop.f32.mrb[0].mxu0
  %v2817 = vadd.f32 0.0, %v2816
  %2818 = vdwg.mxu0
  %2819 = vmatprep.subr.mxu0 %v2617
  %2820 = vmatpush1.msra.mxu0 %v2616
  %2821 = vmatprep.subr.mxu0 %v2621
  %2822 = vmatpush1.msra.mxu0 %v2620
  %2823 = vmatprep.subr.mxu0 %v2625
  %2824 = vmatpush1.msra.mxu0 %v2624
  %2825 = vmatprep.subr.mxu0 %v2629
  %2826 = vmatpush1.msra.mxu0 %v2628
  %2827 = vmatprep.subr.mxu0 %v2633
  %2828 = vmatpush1.msra.mxu0 %v2632
  %2829 = vmatprep.subr.mxu0 %v2637
  %2830 = vmatpush1.msra.mxu0 %v2636
  %2831 = vmatprep.subr.mxu0 %v2641
  %2832 = vmatpush1.msra.mxu0 %v2640
  %2833 = vmatprep.subr.mxu0 %v2645
  %2834 = vmatpush1.msra.mxu0 %v2644
  %2835 = vmatprep.subr.mxu0 %v2649
  %2836 = vmatpush1.msra.mxu0 %v2648
  %2837 = vmatprep.subr.mxu0 %v2653
  %2838 = vmatpush1.msra.mxu0 %v2652
  %2839 = vmatprep.subr.mxu0 %v2657
  %2840 = vmatpush1.msra.mxu0 %v2656
  %2841 = vmatprep.subr.mxu0 %v2661
  %2842 = vmatpush1.msra.mxu0 %v2660
  %2843 = vmatprep.subr.mxu0 %v2665
  %2844 = vmatpush1.msra.mxu0 %v2664
  %2845 = vmatprep.subr.mxu0 %v2669
  %2846 = vmatpush1.msra.mxu0 %v2668
  %2847 = vmatprep.subr.mxu0 %v2673
  %2848 = vmatpush1.msra.mxu0 %v2672
  %2849 = vmatprep.subr.mxu0 %v2677
  %2850 = vmatpush1.msra.mxu0 %v2676
  %2851 = vmatprep.subr.mxu0 %v2681
  %2852 = vmatpush1.msra.mxu0 %v2680
  %2853 = vmatprep.subr.mxu0 %v2685
  %2854 = vmatpush1.msra.mxu0 %v2684
  %2855 = vmatprep.subr.mxu0 %v2689
  %2856 = vmatpush1.msra.mxu0 %v2688
  %2857 = vmatprep.subr.mxu0 %v2693
  %2858 = vmatpush1.msra.mxu0 %v2692
  %2859 = vmatprep.subr.mxu0 %v2697
  %2860 = vmatpush1.msra.mxu0 %v2696
  %2861 = vmatprep.subr.mxu0 %v2701
  %2862 = vmatpush1.msra.mxu0 %v2700
  %2863 = vmatprep.subr.mxu0 %v2705
  %2864 = vmatpush1.msra.mxu0 %v2704
  %2865 = vmatprep.subr.mxu0 %v2709
  %2866 = vmatpush1.msra.mxu0 %v2708
  %2867 = vmatprep.subr.mxu0 %v2713
  %2868 = vmatpush1.msra.mxu0 %v2712
  %2869 = vmatprep.subr.mxu0 %v2717
  %2870 = vmatpush1.msra.mxu0 %v2716
  %2871 = vmatprep.subr.mxu0 %v2721
  %2872 = vmatpush1.msra.mxu0 %v2720
  %2873 = vmatprep.subr.mxu0 %v2725
  %2874 = vmatpush1.msra.mxu0 %v2724
  %2875 = vmatprep.subr.mxu0 %v2729
  %2876 = vmatpush1.msra.mxu0 %v2728
  %2877 = vmatprep.subr.mxu0 %v2733
  %2878 = vmatpush1.msra.mxu0 %v2732
  %2879 = vmatprep.subr.mxu0 %v2737
  %2880 = vmatpush1.msra.mxu0 %v2736
  %2881 = vmatprep.subr.mxu0 %v2741
  %2882 = vmatpush1.msra.mxu0 %v2740
  %2883 = vmatprep.mubr.f32.mxu0 %v2611
  %2884 = vmatmul.mubr.f32.gmra.mrb[0].mxu0 %v2610
  %v2885 = vpop.f32.mrb[0].mxu0
  %v2886 = vadd.f32 0.0, %v2885
  %v2887 = vpop.f32.mrb[0].mxu0
  %v2888 = vadd.f32 0.0, %v2887
  %2889 = vmatprep.mubr.f32.mxu0 %v2613
  %2890 = vmatmul.mubr.f32.gmra.mrb[0].mxu0 %v2612
  %v2891 = vpop.f32.mrb[0].mxu0
  %v2892 = vadd.f32 0.0, %v2891
  %v2893 = vpop.f32.mrb[0].mxu0
  %v2894 = vadd.f32 0.0, %v2893
  %2895 = vdwg.mxu0
  %s2896 = scalar_lea.vmem %s0, 224
  %v2897 = vld [vmem:[%s2896] sm:$0xff]
  %v2898 = vld [vmem:[%s2896 + $0x8] sm:$0xff]
  %v2899 = vld [vmem:[%s2896 + $0x10] sm:$0xff]
  %v2900 = vld [vmem:[%s2896 + $0x18] sm:$0xff]
  %v2901 = vld [vmem:[%s42] sm:$0xff]
  %v2902 = vld [vmem:[%s42 + $0x8] sm:$0xff]
  %v2903 = vld [vmem:[%s42 + $0x10] sm:$0xff]
  %v2904 = vld [vmem:[%s42 + $0x18] sm:$0xff]
  %v2905 = vadd.f32 %v2897, %v2809
  %v2906 = vadd.f32 %v2898, %v2811
  %v2907 = vadd.f32 %v2899, %v2886
  %v2908 = vadd.f32 %v2900, %v2888
  %v2909 = vadd.f32 %v2901, %v2815
  %v2910 = vadd.f32 %v2902, %v2817
  %v2911 = vadd.f32 %v2903, %v2892
  %v2912 = vadd.f32 %v2904, %v2894
  %v2913 = vxor.u32 %v2905, 2147483648
  %v2914 = vxor.u32 %v2906, 2147483648
  %v2915 = vxor.u32 %v2907, 2147483648
  %v2916 = vxor.u32 %v2909, 2147483648
  %v2917 = vxor.u32 %v2910, 2147483648
  %v2918 = vxor.u32 %v2911, 2147483648
  %v2919 = vmul.f32 %v2913, 1.442695
  %v2920 = vpow.pop %v2919
  %v2921 = vmul.f32 %v2914, 1.442695
  %v2922 = vpow.pop %v2921
  %v2923 = vmul.f32 %v2915, 1.442695
  %v2924 = vpow.pop %v2923
  %v2925 = vmul.f32 %v2916, 1.442695
  %v2926 = vpow.pop %v2925
  %v2927 = vmul.f32 %v2917, 1.442695
  %v2928 = vpow.pop %v2927
  %v2929 = vmul.f32 %v2918, 1.442695
  %v2930 = vpow.pop %v2929
  %v2931 = vadd.f32 %v2920, 1.0
  %v2932 = vadd.f32 %v2922, 1.0
  %v2933 = vadd.f32 %v2924, 1.0
  %v2934 = vadd.f32 %v2926, 1.0
  %v2935 = vadd.f32 %v2928, 1.0
  %v2936 = vadd.f32 %v2930, 1.0
  %v2937 = vrcp.pop %v2931
  %v2938 = vmul.f32 1.0, %v2937
  %v2939 = vrcp.pop %v2932
  %v2940 = vmul.f32 1.0, %v2939
  %v2941 = vrcp.pop %v2933
  %v2942 = vmul.f32 1.0, %v2941
  %v2943 = vrcp.pop %v2934
  %v2944 = vmul.f32 1.0, %v2943
  %v2945 = vrcp.pop %v2935
  %v2946 = vmul.f32 1.0, %v2945
  %v2947 = vrcp.pop %v2936
  %v2948 = vmul.f32 1.0, %v2947
  %v2949 = vtanh.pop %v2908
  %v2950 = vtanh.pop %v2912
  %v2951 = vld [vmem:[#allocation3] sm:$0xff]
  %v2952 = vld [vmem:[#allocation3 + $0x8] sm:$0xff]
  %v2953 = vmul.f32 %v2940, %v2951
  %v2954 = vmul.f32 %v2946, %v2952
  %v2955 = vmul.f32 %v2938, %v2949
  %v2956 = vmul.f32 %v2944, %v2950
  %v2957 = vadd.f32 %v2953, %v2955
  %v2958 = vadd.f32 %v2954, %v2956
  %v2959 = vtanh.pop %v2957
  %v2960 = vtanh.pop %v2958
  %v2961 = vmul.f32 %v2942, %v2959
  %v2962 = vmul.f32 %v2948, %v2960
  %2963 = vst [vmem:[#allocation3] sm:$0xff] %v2957
  %2964 = vst [vmem:[#allocation3 + $0x8] sm:$0xff] %v2958
  %2965 = vst [vmem:[#allocation2] sm:$0xff] %v2961
  %2966 = vst [vmem:[#allocation2 + $0x18] sm:$0xff] %v2962
  %s2967 = scalar_lea.vmem %s3, 56
  %2968 = vst [vmem:[%s2967] sm:$0xff] %v2961
  %2969 = vst [vmem:[%s50] sm:$0xff] %v2962
  %s2970 = ssub.s32 0, 0
  %s2971 = smul.u32 8, %s2970
  %p2972 = scmp.lt.s32.totalorder %s2971, 7
  %s2973 = scalar_select %p2972, %s2971, 7
  %s2974 = smul.addr %s2973, 8
  %s2975 = scalar_lea.vmem %s4, %s2974
  // Predicated region
  $region18: #{bilstm_forward.2} parent=0 // pred_check
    _
  $region19: #{bilstm_forward.2} parent=0 // pred_check_branch
    %2977 = sbr.rel (0) target = $region21
  $region20: #{bilstm_forward.2} parent=0 // pred_region
    _
  $region21: #{bilstm_forward.2} parent=0 // pred_fallthru
    _
  // Predicated region
  $region22: #{bilstm_forward.2} parent=0 // pred_check
    _
  $region23: #{bilstm_forward.2} parent=0 // pred_check_branch
    %2979 = sbr.rel (0) target = $region25
  $region24: #{bilstm_forward.2} parent=0 // pred_region
    %s2980 = ssub.s32 0, 0
    %s2981 = smul.u32 8, %s2980
  $region25: #{bilstm_forward.2} parent=0 // pred_fallthru
    _
  // Predicated region
  $region26: #{bilstm_forward.2} parent=0 // pred_check
    _
  $region27: #{bilstm_forward.2} parent=0 // pred_check_branch
    %2983 = sbr.rel (0) target = $region29
  $region28: #{bilstm_forward.2} parent=0 // pred_region
    _
  $region29: #{bilstm_forward.2} parent=0 // pred_fallthru
    _
  // Predicated region
  $region30: #{bilstm_forward.2} parent=0 // pred_check
    _
  $region31: #{bilstm_forward.2} parent=0 // pred_check_branch
    %2985 = sbr.rel (0) target = $region33
  $region32: #{bilstm_forward.2} parent=0 // pred_region
    %s2986 = ssub.s32 0, 0
    %s2987 = smul.u32 8, %s2986
    %p2988 = scmp.lt.s32.totalorder %s2987, 7
    %s2989 = scalar_select %p2988, %s2987, 7
    %s2990 = smul.addr %s2989, 8
    %s2991 = scalar_lea.vmem %s4, %s2990
  $region33: #{bilstm_forward.2} parent=0 // pred_fallthru
    _
  %2992 = vsyncmov [#allocation5]
  %s2993 = vpop.sfrf %2992
  %p2994 = scmp.eq.s32.totalorder %s2993, 0
  %p2995 = pneg %p2994
  %2997 = shalt.err (%p2995)

// kernel: bilstm_forward.3
$region0: #{bilstm_forward.3}
  #allocation0 [shape = 'u32[]', space=smem, size = 0x4, offset = 0x4, fixed_abs, tag = 'smem constant byte address 0x4 - core index']
  #allocation1 [shape = 'u32[144,128]{1,0:T(1,128)}', space=vmem, size = 0x12000, scoped, tag = 'internal scratch']
  #allocation2 [shape = 'f32[16,256]{1,0:T(8,128)}', space=vmem, size = 0x4000, scoped, tag = 'scratch operand']
  #allocation3 [shape = 'f32[16,128]{1,0:T(8,128)}', space=vmem, size = 0x2000, scoped, tag = 'scratch operand']
  #allocation4 [shape = 'f32[256,512]{1,0:T(8,128)}', space=vmem, size = 0x80000, scoped, tag = 'scratch operand']
  #allocation5 [shape = 's32[1]{0}', space=sflag, size = 0x4, scoped, tag = 'scratch operand']
  #allocation6 [shape = 's32[]', space=sflag, size = 0x4, offset = 0, fixed_abs, tag = 'sflag constant byte address 0x0 - dummy sync flag']
  %s0 = inlined_call_operand.vmem [shape: f32[8,8,512], index: 0, kind: input, shape index: {}]
  %s1 = inlined_call_operand.vmem [shape: f32[8,8,512], index: 1, kind: input, shape index: {}]
  %s2 = inlined_call_operand.vmem [shape: f32[256,512], index: 2, kind: input, shape index: {}]
  %s3 = inlined_call_operand.vmem [shape: f32[8,8,128], index: 3, kind: output, shape index: {0}]
  %s4 = inlined_call_operand.vmem [shape: f32[8,8,128], index: 4, kind: output, shape index: {1}]
  %5 = xla_tuple %s3, %s4
  %s6 = sld [smem:[#allocation0]]
  $region64: #{bilstm_forward.3} parent=0
    _
  %s8 = ssub.s32 1, %s6
  %s9 = scalar_select 0, %s8, %s6
  // Predicated region
  $region2: #{bilstm_forward.3} parent=0 // pred_check
    _
  $region3: #{bilstm_forward.3} parent=0 // pred_check_branch
    %11 = sbr.rel (0) target = $region5
  $region4: #{bilstm_forward.3} parent=0 // pred_region
    _
  $region5: #{bilstm_forward.3} parent=0 // pred_fallthru
    _
  // Predicated region
  $region6: #{bilstm_forward.3} parent=0 // pred_check
    _
  $region7: #{bilstm_forward.3} parent=0 // pred_check_branch
    %13 = sbr.rel (0) target = $region9
  $region8: #{bilstm_forward.3} parent=0 // pred_region
    %s14 = ssub.s32 0, 0
    %s15 = smul.u32 8, %s14
    %p16 = scmp.lt.s32.totalorder %s15, 7
    %s17 = scalar_select %p16, %s15, 7
    %s18 = smul.addr %s17, 4
    %s19 = smul.addr %s18, 8
    %s20 = scalar_lea.vmem %s1, %s19
    %s21 = ssub.s32 0, 0
    %s22 = smul.u32 8, %s21
  $region9: #{bilstm_forward.3} parent=0 // pred_fallthru
    _
  %s23 = ssub.s32 0, 0
  %s24 = smul.u32 8, %s23
  %p25 = scmp.lt.s32.totalorder %s24, 7
  %s26 = scalar_select %p25, %s24, 7
  %s27 = smul.addr %s26, 4
  %s28 = smul.addr %s27, 8
  %s29 = scalar_lea.vmem %s1, %s28
  %s30 = ssub.s32 0, 0
  %s31 = smul.u32 8, %s30
  %p32 = scmp.lt.s32.totalorder %s31, 7
  %s33 = scalar_select %p32, %s31, 7
  %s34 = smul.addr %s33, 8
  %s35 = scalar_lea.vmem %s4, %s34
  %s36 = ssub.s32 0, 0
  %s37 = smul.u32 8, %s36
  %p38 = scmp.lt.s32.totalorder %s37, 7
  %s39 = scalar_select %p38, %s37, 7
  %s40 = smul.addr %s39, 4
  %s41 = smul.addr %s40, 8
  %s42 = scalar_lea.vmem %s1, %s41
  %s43 = ssub.s32 0, 0
  %s44 = smul.u32 8, %s43
  %s45 = ssub.s32 0, 0
  %s46 = smul.u32 8, %s45
  %p47 = scmp.lt.s32.totalorder %s46, 7
  %s48 = scalar_select %p47, %s46, 7
  %s49 = smul.addr %s48, 8
  %s50 = scalar_lea.vmem %s4, %s49
  %s51 = ssub.s32 0, 0
  %s52 = smul.u32 8, %s51
  %p53 = scmp.eq.s32.totalorder 0, 0
  // Predicated region
  $region10: #{bilstm_forward.3} parent=0 // pred_check
    %p54 = pneg %p53
  $region11: #{bilstm_forward.3} parent=0 // pred_check_branch
    %56 = sbr.rel (%p54) target = $region13
  $region12: #{bilstm_forward.3} parent=0 // pred_region
    %p58 = scmp.lt.u32.totalorder 1024, 8
    %p59 = pneg %p58
    // Predicated region
    $region14: #{bilstm_forward.3} parent=12 // pred_check
      _
    $region15: #{bilstm_forward.3} parent=12 // pred_check_branch
      %61 = sbr.rel (%p58) target = $region17
    $region16: #{bilstm_forward.3} parent=12 // pred_region
      %s76 = sand.u32 1024, 7
      %p77 = scmp.eq.s32.totalorder %s76, 0
      // Predicated region
      $region29: #{bilstm_forward.3} parent=16 // pred_check
        %p78 = pneg %p77
      $region30: #{bilstm_forward.3} parent=16 // pred_check_branch
        %80 = sbr.rel (%p78) target = $region32
      $region31: #{bilstm_forward.3} parent=16 // pred_region
        loop: start=0, step=1, limit=1
        $region33: #{bilstm_forward.3} parent=31 // loop_pre_header
          _
        $region34: #{bilstm_forward.3} parent=31 // loop_header
          %s82 = sphi 0, %s86
          %p83 = scmp.ge.s32.totalorder %s82, 1
          %s87 = sphi %s2, %s2
          %s88 = sphi [#allocation4], [#allocation4]
        $region35: #{bilstm_forward.3} parent=31 // loop_header_branch
          %85 = sbr.rel (%p83) target = $region39
        $region36: #{bilstm_forward.3} parent=31 // loop_body
          %v89 = vld [vmem:[%s87] sm:$0xff]
          %90 = vst [vmem:[%s88] sm:$0xff] %v89
          %v91 = vld [vmem:[%s87 + $0x8] sm:$0xff]
          %92 = vst [vmem:[%s88 + $0x8] sm:$0xff] %v91
          %v93 = vld [vmem:[%s87 + $0x10] sm:$0xff]
          %94 = vst [vmem:[%s88 + $0x10] sm:$0xff] %v93
          %v95 = vld [vmem:[%s87 + $0x18] sm:$0xff]
          %96 = vst [vmem:[%s88 + $0x18] sm:$0xff] %v95
          %v97 = vld [vmem:[%s87 + $0x20] sm:$0xff]
          %98 = vst [vmem:[%s88 + $0x20] sm:$0xff] %v97
          %v99 = vld [vmem:[%s87 + $0x28] sm:$0xff]
          %100 = vst [vmem:[%s88 + $0x28] sm:$0xff] %v99
          %v101 = vld [vmem:[%s87 + $0x30] sm:$0xff]
          %102 = vst [vmem:[%s88 + $0x30] sm:$0xff] %v101
          %v103 = vld [vmem:[%s87 + $0x38] sm:$0xff]
          %104 = vst [vmem:[%s88 + $0x38] sm:$0xff] %v103
          %v105 = vld [vmem:[%s87 + $0x40] sm:$0xff]
          %106 = vst [vmem:[%s88 + $0x40] sm:$0xff] %v105
          %v107 = vld [vmem:[%s87 + $0x48] sm:$0xff]
          %108 = vst [vmem:[%s88 + $0x48] sm:$0xff] %v107
          %v109 = vld [vmem:[%s87 + $0x50] sm:$0xff]
          %110 = vst [vmem:[%s88 + $0x50] sm:$0xff] %v109
          %v111 = vld [vmem:[%s87 + $0x58] sm:$0xff]
          %112 = vst [vmem:[%s88 + $0x58] sm:$0xff] %v111
          %v113 = vld [vmem:[%s87 + $0x60] sm:$0xff]
          %114 = vst [vmem:[%s88 + $0x60] sm:$0xff] %v113
          %v115 = vld [vmem:[%s87 + $0x68] sm:$0xff]
          %116 = vst [vmem:[%s88 + $0x68] sm:$0xff] %v115
          %v117 = vld [vmem:[%s87 + $0x70] sm:$0xff]
          %118 = vst [vmem:[%s88 + $0x70] sm:$0xff] %v117
          %v119 = vld [vmem:[%s87 + $0x78] sm:$0xff]
          %120 = vst [vmem:[%s88 + $0x78] sm:$0xff] %v119
          %v121 = vld [vmem:[%s87 + $0x80] sm:$0xff]
          %122 = vst [vmem:[%s88 + $0x80] sm:$0xff] %v121
          %v123 = vld [vmem:[%s87 + $0x88] sm:$0xff]
          %124 = vst [vmem:[%s88 + $0x88] sm:$0xff] %v123
          %v125 = vld [vmem:[%s87 + $0x90] sm:$0xff]
          %126 = vst [vmem:[%s88 + $0x90] sm:$0xff] %v125
          %v127 = vld [vmem:[%s87 + $0x98] sm:$0xff]
          %128 = vst [vmem:[%s88 + $0x98] sm:$0xff] %v127
          %v129 = vld [vmem:[%s87 + $0xa0] sm:$0xff]
          %130 = vst [vmem:[%s88 + $0xa0] sm:$0xff] %v129
          %v131 = vld [vmem:[%s87 + $0xa8] sm:$0xff]
          %132 = vst [vmem:[%s88 + $0xa8] sm:$0xff] %v131
          %v133 = vld [vmem:[%s87 + $0xb0] sm:$0xff]
          %134 = vst [vmem:[%s88 + $0xb0] sm:$0xff] %v133
          %v135 = vld [vmem:[%s87 + $0xb8] sm:$0xff]
          %136 = vst [vmem:[%s88 + $0xb8] sm:$0xff] %v135
          %v137 = vld [vmem:[%s87 + $0xc0] sm:$0xff]
          %138 = vst [vmem:[%s88 + $0xc0] sm:$0xff] %v137
          %v139 = vld [vmem:[%s87 + $0xc8] sm:$0xff]
          %140 = vst [vmem:[%s88 + $0xc8] sm:$0xff] %v139
          %v141 = vld [vmem:[%s87 + $0xd0] sm:$0xff]
          %142 = vst [vmem:[%s88 + $0xd0] sm:$0xff] %v141
          %v143 = vld [vmem:[%s87 + $0xd8] sm:$0xff]
          %144 = vst [vmem:[%s88 + $0xd8] sm:$0xff] %v143
          %v145 = vld [vmem:[%s87 + $0xe0] sm:$0xff]
          %146 = vst [vmem:[%s88 + $0xe0] sm:$0xff] %v145
          %v147 = vld [vmem:[%s87 + $0xe8] sm:$0xff]
          %148 = vst [vmem:[%s88 + $0xe8] sm:$0xff] %v147
          %v149 = vld [vmem:[%s87 + $0xf0] sm:$0xff]
          %150 = vst [vmem:[%s88 + $0xf0] sm:$0xff] %v149
          %v151 = vld [vmem:[%s87 + $0xf8] sm:$0xff]
          %152 = vst [vmem:[%s88 + $0xf8] sm:$0xff] %v151
          %v153 = vld [vmem:[%s87 + $0x100] sm:$0xff]
          %154 = vst [vmem:[%s88 + $0x100] sm:$0xff] %v153
          %v155 = vld [vmem:[%s87 + $0x108] sm:$0xff]
          %156 = vst [vmem:[%s88 + $0x108] sm:$0xff] %v155
          %v157 = vld [vmem:[%s87 + $0x110] sm:$0xff]
          %158 = vst [vmem:[%s88 + $0x110] sm:$0xff] %v157
          %v159 = vld [vmem:[%s87 + $0x118] sm:$0xff]
          %160 = vst [vmem:[%s88 + $0x118] sm:$0xff] %v159
          %v161 = vld [vmem:[%s87 + $0x120] sm:$0xff]
          %162 = vst [vmem:[%s88 + $0x120] sm:$0xff] %v161
          %v163 = vld [vmem:[%s87 + $0x128] sm:$0xff]
          %164 = vst [vmem:[%s88 + $0x128] sm:$0xff] %v163
          %v165 = vld [vmem:[%s87 + $0x130] sm:$0xff]
          %166 = vst [vmem:[%s88 + $0x130] sm:$0xff] %v165
          %v167 = vld [vmem:[%s87 + $0x138] sm:$0xff]
          %168 = vst [vmem:[%s88 + $0x138] sm:$0xff] %v167
          %v169 = vld [vmem:[%s87 + $0x140] sm:$0xff]
          %170 = vst [vmem:[%s88 + $0x140] sm:$0xff] %v169
          %v171 = vld [vmem:[%s87 + $0x148] sm:$0xff]
          %172 = vst [vmem:[%s88 + $0x148] sm:$0xff] %v171
          %v173 = vld [vmem:[%s87 + $0x150] sm:$0xff]
          %174 = vst [vmem:[%s88 + $0x150] sm:$0xff] %v173
          %v175 = vld [vmem:[%s87 + $0x158] sm:$0xff]
          %176 = vst [vmem:[%s88 + $0x158] sm:$0xff] %v175
          %v177 = vld [vmem:[%s87 + $0x160] sm:$0xff]
          %178 = vst [vmem:[%s88 + $0x160] sm:$0xff] %v177
          %v179 = vld [vmem:[%s87 + $0x168] sm:$0xff]
          %180 = vst [vmem:[%s88 + $0x168] sm:$0xff] %v179
          %v181 = vld [vmem:[%s87 + $0x170] sm:$0xff]
          %182 = vst [vmem:[%s88 + $0x170] sm:$0xff] %v181
          %v183 = vld [vmem:[%s87 + $0x178] sm:$0xff]
          %184 = vst [vmem:[%s88 + $0x178] sm:$0xff] %v183
          %v185 = vld [vmem:[%s87 + $0x180] sm:$0xff]
          %186 = vst [vmem:[%s88 + $0x180] sm:$0xff] %v185
          %v187 = vld [vmem:[%s87 + $0x188] sm:$0xff]
          %188 = vst [vmem:[%s88 + $0x188] sm:$0xff] %v187
          %v189 = vld [vmem:[%s87 + $0x190] sm:$0xff]
          %190 = vst [vmem:[%s88 + $0x190] sm:$0xff] %v189
          %v191 = vld [vmem:[%s87 + $0x198] sm:$0xff]
          %192 = vst [vmem:[%s88 + $0x198] sm:$0xff] %v191
          %v193 = vld [vmem:[%s87 + $0x1a0] sm:$0xff]
          %194 = vst [vmem:[%s88 + $0x1a0] sm:$0xff] %v193
          %v195 = vld [vmem:[%s87 + $0x1a8] sm:$0xff]
          %196 = vst [vmem:[%s88 + $0x1a8] sm:$0xff] %v195
          %v197 = vld [vmem:[%s87 + $0x1b0] sm:$0xff]
          %198 = vst [vmem:[%s88 + $0x1b0] sm:$0xff] %v197
          %v199 = vld [vmem:[%s87 + $0x1b8] sm:$0xff]
          %200 = vst [vmem:[%s88 + $0x1b8] sm:$0xff] %v199
          %v201 = vld [vmem:[%s87 + $0x1c0] sm:$0xff]
          %202 = vst [vmem:[%s88 + $0x1c0] sm:$0xff] %v201
          %v203 = vld [vmem:[%s87 + $0x1c8] sm:$0xff]
          %204 = vst [vmem:[%s88 + $0x1c8] sm:$0xff] %v203
          %v205 = vld [vmem:[%s87 + $0x1d0] sm:$0xff]
          %206 = vst [vmem:[%s88 + $0x1d0] sm:$0xff] %v205
          %v207 = vld [vmem:[%s87 + $0x1d8] sm:$0xff]
          %208 = vst [vmem:[%s88 + $0x1d8] sm:$0xff] %v207
          %v209 = vld [vmem:[%s87 + $0x1e0] sm:$0xff]
          %210 = vst [vmem:[%s88 + $0x1e0] sm:$0xff] %v209
          %v211 = vld [vmem:[%s87 + $0x1e8] sm:$0xff]
          %212 = vst [vmem:[%s88 + $0x1e8] sm:$0xff] %v211
          %v213 = vld [vmem:[%s87 + $0x1f0] sm:$0xff]
          %214 = vst [vmem:[%s88 + $0x1f0] sm:$0xff] %v213
          %v215 = vld [vmem:[%s87 + $0x1f8] sm:$0xff]
          %216 = vst [vmem:[%s88 + $0x1f8] sm:$0xff] %v215
          %v217 = vld [vmem:[%s87 + $0x200] sm:$0xff]
          %218 = vst [vmem:[%s88 + $0x200] sm:$0xff] %v217
          %v219 = vld [vmem:[%s87 + $0x208] sm:$0xff]
          %220 = vst [vmem:[%s88 + $0x208] sm:$0xff] %v219
          %v221 = vld [vmem:[%s87 + $0x210] sm:$0xff]
          %222 = vst [vmem:[%s88 + $0x210] sm:$0xff] %v221
          %v223 = vld [vmem:[%s87 + $0x218] sm:$0xff]
          %224 = vst [vmem:[%s88 + $0x218] sm:$0xff] %v223
          %v225 = vld [vmem:[%s87 + $0x220] sm:$0xff]
          %226 = vst [vmem:[%s88 + $0x220] sm:$0xff] %v225
          %v227 = vld [vmem:[%s87 + $0x228] sm:$0xff]
          %228 = vst [vmem:[%s88 + $0x228] sm:$0xff] %v227
          %v229 = vld [vmem:[%s87 + $0x230] sm:$0xff]
          %230 = vst [vmem:[%s88 + $0x230] sm:$0xff] %v229
          %v231 = vld [vmem:[%s87 + $0x238] sm:$0xff]
          %232 = vst [vmem:[%s88 + $0x238] sm:$0xff] %v231
          %v233 = vld [vmem:[%s87 + $0x240] sm:$0xff]
          %234 = vst [vmem:[%s88 + $0x240] sm:$0xff] %v233
          %v235 = vld [vmem:[%s87 + $0x248] sm:$0xff]
          %236 = vst [vmem:[%s88 + $0x248] sm:$0xff] %v235
          %v237 = vld [vmem:[%s87 + $0x250] sm:$0xff]
          %238 = vst [vmem:[%s88 + $0x250] sm:$0xff] %v237
          %v239 = vld [vmem:[%s87 + $0x258] sm:$0xff]
          %240 = vst [vmem:[%s88 + $0x258] sm:$0xff] %v239
          %v241 = vld [vmem:[%s87 + $0x260] sm:$0xff]
          %242 = vst [vmem:[%s88 + $0x260] sm:$0xff] %v241
          %v243 = vld [vmem:[%s87 + $0x268] sm:$0xff]
          %244 = vst [vmem:[%s88 + $0x268] sm:$0xff] %v243
          %v245 = vld [vmem:[%s87 + $0x270] sm:$0xff]
          %246 = vst [vmem:[%s88 + $0x270] sm:$0xff] %v245
          %v247 = vld [vmem:[%s87 + $0x278] sm:$0xff]
          %248 = vst [vmem:[%s88 + $0x278] sm:$0xff] %v247
          %v249 = vld [vmem:[%s87 + $0x280] sm:$0xff]
          %250 = vst [vmem:[%s88 + $0x280] sm:$0xff] %v249
          %v251 = vld [vmem:[%s87 + $0x288] sm:$0xff]
          %252 = vst [vmem:[%s88 + $0x288] sm:$0xff] %v251
          %v253 = vld [vmem:[%s87 + $0x290] sm:$0xff]
          %254 = vst [vmem:[%s88 + $0x290] sm:$0xff] %v253
          %v255 = vld [vmem:[%s87 + $0x298] sm:$0xff]
          %256 = vst [vmem:[%s88 + $0x298] sm:$0xff] %v255
          %v257 = vld [vmem:[%s87 + $0x2a0] sm:$0xff]
          %258 = vst [vmem:[%s88 + $0x2a0] sm:$0xff] %v257
          %v259 = vld [vmem:[%s87 + $0x2a8] sm:$0xff]
          %260 = vst [vmem:[%s88 + $0x2a8] sm:$0xff] %v259
          %v261 = vld [vmem:[%s87 + $0x2b0] sm:$0xff]
          %262 = vst [vmem:[%s88 + $0x2b0] sm:$0xff] %v261
          %v263 = vld [vmem:[%s87 + $0x2b8] sm:$0xff]
          %264 = vst [vmem:[%s88 + $0x2b8] sm:$0xff] %v263
          %v265 = vld [vmem:[%s87 + $0x2c0] sm:$0xff]
          %266 = vst [vmem:[%s88 + $0x2c0] sm:$0xff] %v265
          %v267 = vld [vmem:[%s87 + $0x2c8] sm:$0xff]
          %268 = vst [vmem:[%s88 + $0x2c8] sm:$0xff] %v267
          %v269 = vld [vmem:[%s87 + $0x2d0] sm:$0xff]
          %270 = vst [vmem:[%s88 + $0x2d0] sm:$0xff] %v269
          %v271 = vld [vmem:[%s87 + $0x2d8] sm:$0xff]
          %272 = vst [vmem:[%s88 + $0x2d8] sm:$0xff] %v271
          %v273 = vld [vmem:[%s87 + $0x2e0] sm:$0xff]
          %274 = vst [vmem:[%s88 + $0x2e0] sm:$0xff] %v273
          %v275 = vld [vmem:[%s87 + $0x2e8] sm:$0xff]
          %276 = vst [vmem:[%s88 + $0x2e8] sm:$0xff] %v275
          %v277 = vld [vmem:[%s87 + $0x2f0] sm:$0xff]
          %278 = vst [vmem:[%s88 + $0x2f0] sm:$0xff] %v277
          %v279 = vld [vmem:[%s87 + $0x2f8] sm:$0xff]
          %280 = vst [vmem:[%s88 + $0x2f8] sm:$0xff] %v279
          %v281 = vld [vmem:[%s87 + $0x300] sm:$0xff]
          %282 = vst [vmem:[%s88 + $0x300] sm:$0xff] %v281
          %v283 = vld [vmem:[%s87 + $0x308] sm:$0xff]
          %284 = vst [vmem:[%s88 + $0x308] sm:$0xff] %v283
          %v285 = vld [vmem:[%s87 + $0x310] sm:$0xff]
          %286 = vst [vmem:[%s88 + $0x310] sm:$0xff] %v285
          %v287 = vld [vmem:[%s87 + $0x318] sm:$0xff]
          %288 = vst [vmem:[%s88 + $0x318] sm:$0xff] %v287
          %v289 = vld [vmem:[%s87 + $0x320] sm:$0xff]
          %290 = vst [vmem:[%s88 + $0x320] sm:$0xff] %v289
          %v291 = vld [vmem:[%s87 + $0x328] sm:$0xff]
          %292 = vst [vmem:[%s88 + $0x328] sm:$0xff] %v291
          %v293 = vld [vmem:[%s87 + $0x330] sm:$0xff]
          %294 = vst [vmem:[%s88 + $0x330] sm:$0xff] %v293
          %v295 = vld [vmem:[%s87 + $0x338] sm:$0xff]
          %296 = vst [vmem:[%s88 + $0x338] sm:$0xff] %v295
          %v297 = vld [vmem:[%s87 + $0x340] sm:$0xff]
          %298 = vst [vmem:[%s88 + $0x340] sm:$0xff] %v297
          %v299 = vld [vmem:[%s87 + $0x348] sm:$0xff]
          %300 = vst [vmem:[%s88 + $0x348] sm:$0xff] %v299
          %v301 = vld [vmem:[%s87 + $0x350] sm:$0xff]
          %302 = vst [vmem:[%s88 + $0x350] sm:$0xff] %v301
          %v303 = vld [vmem:[%s87 + $0x358] sm:$0xff]
          %304 = vst [vmem:[%s88 + $0x358] sm:$0xff] %v303
          %v305 = vld [vmem:[%s87 + $0x360] sm:$0xff]
          %306 = vst [vmem:[%s88 + $0x360] sm:$0xff] %v305
          %v307 = vld [vmem:[%s87 + $0x368] sm:$0xff]
          %308 = vst [vmem:[%s88 + $0x368] sm:$0xff] %v307
          %v309 = vld [vmem:[%s87 + $0x370] sm:$0xff]
          %310 = vst [vmem:[%s88 + $0x370] sm:$0xff] %v309
          %v311 = vld [vmem:[%s87 + $0x378] sm:$0xff]
          %312 = vst [vmem:[%s88 + $0x378] sm:$0xff] %v311
          %v313 = vld [vmem:[%s87 + $0x380] sm:$0xff]
          %314 = vst [vmem:[%s88 + $0x380] sm:$0xff] %v313
          %v315 = vld [vmem:[%s87 + $0x388] sm:$0xff]
          %316 = vst [vmem:[%s88 + $0x388] sm:$0xff] %v315
          %v317 = vld [vmem:[%s87 + $0x390] sm:$0xff]
          %318 = vst [vmem:[%s88 + $0x390] sm:$0xff] %v317
          %v319 = vld [vmem:[%s87 + $0x398] sm:$0xff]
          %320 = vst [vmem:[%s88 + $0x398] sm:$0xff] %v319
          %v321 = vld [vmem:[%s87 + $0x3a0] sm:$0xff]
          %322 = vst [vmem:[%s88 + $0x3a0] sm:$0xff] %v321
          %v323 = vld [vmem:[%s87 + $0x3a8] sm:$0xff]
          %324 = vst [vmem:[%s88 + $0x3a8] sm:$0xff] %v323
          %v325 = vld [vmem:[%s87 + $0x3b0] sm:$0xff]
          %326 = vst [vmem:[%s88 + $0x3b0] sm:$0xff] %v325
          %v327 = vld [vmem:[%s87 + $0x3b8] sm:$0xff]
          %328 = vst [vmem:[%s88 + $0x3b8] sm:$0xff] %v327
          %v329 = vld [vmem:[%s87 + $0x3c0] sm:$0xff]
          %330 = vst [vmem:[%s88 + $0x3c0] sm:$0xff] %v329
          %v331 = vld [vmem:[%s87 + $0x3c8] sm:$0xff]
          %332 = vst [vmem:[%s88 + $0x3c8] sm:$0xff] %v331
          %v333 = vld [vmem:[%s87 + $0x3d0] sm:$0xff]
          %334 = vst [vmem:[%s88 + $0x3d0] sm:$0xff] %v333
          %v335 = vld [vmem:[%s87 + $0x3d8] sm:$0xff]
          %336 = vst [vmem:[%s88 + $0x3d8] sm:$0xff] %v335
          %v337 = vld [vmem:[%s87 + $0x3e0] sm:$0xff]
          %338 = vst [vmem:[%s88 + $0x3e0] sm:$0xff] %v337
          %v339 = vld [vmem:[%s87 + $0x3e8] sm:$0xff]
          %340 = vst [vmem:[%s88 + $0x3e8] sm:$0xff] %v339
          %v341 = vld [vmem:[%s87 + $0x3f0] sm:$0xff]
          %342 = vst [vmem:[%s88 + $0x3f0] sm:$0xff] %v341
          %v343 = vld [vmem:[%s87 + $0x3f8] sm:$0xff]
          %344 = vst [vmem:[%s88 + $0x3f8] sm:$0xff] %v343
        $region37: #{bilstm_forward.3} parent=31 // loop_footer
          %s86 = sadd.s32 1, %s82
        $region38: #{bilstm_forward.3} parent=31 // loop_footer_branch
          %81 = sbr.rel target = $region34
        $region39: #{bilstm_forward.3} parent=31 // loop_exit
          _
      $region32: #{bilstm_forward.3} parent=16 // pred_fallthru
        _
      %p345 = pneg %p77
      // Predicated region
      $region40: #{bilstm_forward.3} parent=16 // pred_check
        _
      $region41: #{bilstm_forward.3} parent=16 // pred_check_branch
        %347 = sbr.rel (%p77) target = $region43
      $region42: #{bilstm_forward.3} parent=16 // pred_region
        %s348 = sand.u32 1024, 7
      $region43: #{bilstm_forward.3} parent=16 // pred_fallthru
        _
    $region17: #{bilstm_forward.3} parent=12 // pred_fallthru
      _
    // Predicated region
    $region18: #{bilstm_forward.3} parent=12 // pred_check
      %p62 = pneg %p58
    $region19: #{bilstm_forward.3} parent=12 // pred_check_branch
      %64 = sbr.rel (%p62) target = $region21
    $region20: #{bilstm_forward.3} parent=12 // pred_region
      %s65 = sshllo.u32 0, 1024
      loop: start=0, step=1, limit=1
      $region22: #{bilstm_forward.3} parent=20 // loop_pre_header
        _
      $region23: #{bilstm_forward.3} parent=20 // loop_header
        %s67 = sphi 0, %s71
        %p68 = scmp.ge.s32.totalorder %s67, 1
        %s72 = sphi %s2, %s2
        %s73 = sphi [#allocation4], [#allocation4]
      $region24: #{bilstm_forward.3} parent=20 // loop_header_branch
        %70 = sbr.rel (%p68) target = $region28
      $region25: #{bilstm_forward.3} parent=20 // loop_body
        %v74 = vld [vmem:[%s72] sm:%s65]
        %75 = vst [vmem:[%s73] sm:%s65] %v74
      $region26: #{bilstm_forward.3} parent=20 // loop_footer
        %s71 = sadd.s32 1, %s67
      $region27: #{bilstm_forward.3} parent=20 // loop_footer_branch
        %66 = sbr.rel target = $region23
      $region28: #{bilstm_forward.3} parent=20 // loop_exit
        _
    $region21: #{bilstm_forward.3} parent=12 // pred_fallthru
      _
    // Predicated region
    $region44: #{bilstm_forward.3} parent=12 // pred_check
      _
    $region45: #{bilstm_forward.3} parent=12 // pred_check_branch
      %351 = sbr.rel (0) target = $region47
    $region46: #{bilstm_forward.3} parent=12 // pred_region
      %352 = vsyncadd [#allocation5], 16384
    $region47: #{bilstm_forward.3} parent=12 // pred_fallthru
      _
    %353 = vst [vmem:[#allocation2] sm:$0xff] 0.0
    %354 = vst [vmem:[#allocation2 + $0x8] sm:$0xff] 0.0
    %355 = vst [vmem:[#allocation2 + $0x10] sm:$0xff] 0.0
    %356 = vst [vmem:[#allocation2 + $0x18] sm:$0xff] 0.0
    %357 = vst [vmem:[#allocation3] sm:$0xff] 0.0
    %358 = vst [vmem:[#allocation3 + $0x8] sm:$0xff] 0.0
    %s359 = smul.u32 8, 32
    %s360 = smul.u32 %s359, 4
    %s361 = sshll.u32 %s360, 4
    %362 = dma.done [#allocation5], %s361
  $region13: #{bilstm_forward.3} parent=0 // pred_fallthru
    _
  %v363 = vld [vmem:[#allocation2] sm:$0xff]
  %v364 = vld [vmem:[#allocation2 + $0x8] sm:$0xff]
  %v365 = vld [vmem:[#allocation2 + $0x10] sm:$0xff]
  %v366 = vld [vmem:[#allocation2 + $0x18] sm:$0xff]
  %v367 = vld [vmem:[#allocation4] sm:$0xff]
  %v368 = vld [vmem:[#allocation4 + $0x8] sm:$0xff]
  %v369 = vld [vmem:[#allocation4 + $0x10] sm:$0xff]
  %v370 = vld [vmem:[#allocation4 + $0x18] sm:$0xff]
  %v371 = vld [vmem:[#allocation4 + $0x20] sm:$0xff]
  %v372 = vld [vmem:[#allocation4 + $0x28] sm:$0xff]
  %v373 = vld [vmem:[#allocation4 + $0x30] sm:$0xff]
  %v374 = vld [vmem:[#allocation4 + $0x38] sm:$0xff]
  %v375 = vld [vmem:[#allocation4 + $0x40] sm:$0xff]
  %v376 = vld [vmem:[#allocation4 + $0x48] sm:$0xff]
  %v377 = vld [vmem:[#allocation4 + $0x50] sm:$0xff]
  %v378 = vld [vmem:[#allocation4 + $0x58] sm:$0xff]
  %v379 = vld [vmem:[#allocation4 + $0x60] sm:$0xff]
  %v380 = vld [vmem:[#allocation4 + $0x68] sm:$0xff]
  %v381 = vld [vmem:[#allocation4 + $0x70] sm:$0xff]
  %v382 = vld [vmem:[#allocation4 + $0x78] sm:$0xff]
  %v383 = vld [vmem:[#allocation4 + $0x80] sm:$0xff]
  %v384 = vld [vmem:[#allocation4 + $0x88] sm:$0xff]
  %v385 = vld [vmem:[#allocation4 + $0x90] sm:$0xff]
  %v386 = vld [vmem:[#allocation4 + $0x98] sm:$0xff]
  %v387 = vld [vmem:[#allocation4 + $0xa0] sm:$0xff]
  %v388 = vld [vmem:[#allocation4 + $0xa8] sm:$0xff]
  %v389 = vld [vmem:[#allocation4 + $0xb0] sm:$0xff]
  %v390 = vld [vmem:[#allocation4 + $0xb8] sm:$0xff]
  %v391 = vld [vmem:[#allocation4 + $0xc0] sm:$0xff]
  %v392 = vld [vmem:[#allocation4 + $0xc8] sm:$0xff]
  %v393 = vld [vmem:[#allocation4 + $0xd0] sm:$0xff]
  %v394 = vld [vmem:[#allocation4 + $0xd8] sm:$0xff]
  %v395 = vld [vmem:[#allocation4 + $0xe0] sm:$0xff]
  %v396 = vld [vmem:[#allocation4 + $0xe8] sm:$0xff]
  %v397 = vld [vmem:[#allocation4 + $0xf0] sm:$0xff]
  %v398 = vld [vmem:[#allocation4 + $0xf8] sm:$0xff]
  %v399 = vld [vmem:[#allocation4 + $0x100] sm:$0xff]
  %v400 = vld [vmem:[#allocation4 + $0x108] sm:$0xff]
  %v401 = vld [vmem:[#allocation4 + $0x110] sm:$0xff]
  %v402 = vld [vmem:[#allocation4 + $0x118] sm:$0xff]
  %v403 = vld [vmem:[#allocation4 + $0x120] sm:$0xff]
  %v404 = vld [vmem:[#allocation4 + $0x128] sm:$0xff]
  %v405 = vld [vmem:[#allocation4 + $0x130] sm:$0xff]
  %v406 = vld [vmem:[#allocation4 + $0x138] sm:$0xff]
  %v407 = vld [vmem:[#allocation4 + $0x140] sm:$0xff]
  %v408 = vld [vmem:[#allocation4 + $0x148] sm:$0xff]
  %v409 = vld [vmem:[#allocation4 + $0x150] sm:$0xff]
  %v410 = vld [vmem:[#allocation4 + $0x158] sm:$0xff]
  %v411 = vld [vmem:[#allocation4 + $0x160] sm:$0xff]
  %v412 = vld [vmem:[#allocation4 + $0x168] sm:$0xff]
  %v413 = vld [vmem:[#allocation4 + $0x170] sm:$0xff]
  %v414 = vld [vmem:[#allocation4 + $0x178] sm:$0xff]
  %v415 = vld [vmem:[#allocation4 + $0x180] sm:$0xff]
  %v416 = vld [vmem:[#allocation4 + $0x188] sm:$0xff]
  %v417 = vld [vmem:[#allocation4 + $0x190] sm:$0xff]
  %v418 = vld [vmem:[#allocation4 + $0x198] sm:$0xff]
  %v419 = vld [vmem:[#allocation4 + $0x1a0] sm:$0xff]
  %v420 = vld [vmem:[#allocation4 + $0x1a8] sm:$0xff]
  %v421 = vld [vmem:[#allocation4 + $0x1b0] sm:$0xff]
  %v422 = vld [vmem:[#allocation4 + $0x1b8] sm:$0xff]
  %v423 = vld [vmem:[#allocation4 + $0x1c0] sm:$0xff]
  %v424 = vld [vmem:[#allocation4 + $0x1c8] sm:$0xff]
  %v425 = vld [vmem:[#allocation4 + $0x1d0] sm:$0xff]
  %v426 = vld [vmem:[#allocation4 + $0x1d8] sm:$0xff]
  %v427 = vld [vmem:[#allocation4 + $0x1e0] sm:$0xff]
  %v428 = vld [vmem:[#allocation4 + $0x1e8] sm:$0xff]
  %v429 = vld [vmem:[#allocation4 + $0x1f0] sm:$0xff]
  %v430 = vld [vmem:[#allocation4 + $0x1f8] sm:$0xff]
  %v431 = vld [vmem:[#allocation4 + $0x200] sm:$0xff]
  %v432 = vld [vmem:[#allocation4 + $0x208] sm:$0xff]
  %v433 = vld [vmem:[#allocation4 + $0x210] sm:$0xff]
  %v434 = vld [vmem:[#allocation4 + $0x218] sm:$0xff]
  %v435 = vld [vmem:[#allocation4 + $0x220] sm:$0xff]
  %v436 = vld [vmem:[#allocation4 + $0x228] sm:$0xff]
  %v437 = vld [vmem:[#allocation4 + $0x230] sm:$0xff]
  %v438 = vld [vmem:[#allocation4 + $0x238] sm:$0xff]
  %v439 = vld [vmem:[#allocation4 + $0x240] sm:$0xff]
  %v440 = vld [vmem:[#allocation4 + $0x248] sm:$0xff]
  %v441 = vld [vmem:[#allocation4 + $0x250] sm:$0xff]
  %v442 = vld [vmem:[#allocation4 + $0x258] sm:$0xff]
  %v443 = vld [vmem:[#allocation4 + $0x260] sm:$0xff]
  %v444 = vld [vmem:[#allocation4 + $0x268] sm:$0xff]
  %v445 = vld [vmem:[#allocation4 + $0x270] sm:$0xff]
  %v446 = vld [vmem:[#allocation4 + $0x278] sm:$0xff]
  %v447 = vld [vmem:[#allocation4 + $0x280] sm:$0xff]
  %v448 = vld [vmem:[#allocation4 + $0x288] sm:$0xff]
  %v449 = vld [vmem:[#allocation4 + $0x290] sm:$0xff]
  %v450 = vld [vmem:[#allocation4 + $0x298] sm:$0xff]
  %v451 = vld [vmem:[#allocation4 + $0x2a0] sm:$0xff]
  %v452 = vld [vmem:[#allocation4 + $0x2a8] sm:$0xff]
  %v453 = vld [vmem:[#allocation4 + $0x2b0] sm:$0xff]
  %v454 = vld [vmem:[#allocation4 + $0x2b8] sm:$0xff]
  %v455 = vld [vmem:[#allocation4 + $0x2c0] sm:$0xff]
  %v456 = vld [vmem:[#allocation4 + $0x2c8] sm:$0xff]
  %v457 = vld [vmem:[#allocation4 + $0x2d0] sm:$0xff]
  %v458 = vld [vmem:[#allocation4 + $0x2d8] sm:$0xff]
  %v459 = vld [vmem:[#allocation4 + $0x2e0] sm:$0xff]
  %v460 = vld [vmem:[#allocation4 + $0x2e8] sm:$0xff]
  %v461 = vld [vmem:[#allocation4 + $0x2f0] sm:$0xff]
  %v462 = vld [vmem:[#allocation4 + $0x2f8] sm:$0xff]
  %v463 = vld [vmem:[#allocation4 + $0x300] sm:$0xff]
  %v464 = vld [vmem:[#allocation4 + $0x308] sm:$0xff]
  %v465 = vld [vmem:[#allocation4 + $0x310] sm:$0xff]
  %v466 = vld [vmem:[#allocation4 + $0x318] sm:$0xff]
  %v467 = vld [vmem:[#allocation4 + $0x320] sm:$0xff]
  %v468 = vld [vmem:[#allocation4 + $0x328] sm:$0xff]
  %v469 = vld [vmem:[#allocation4 + $0x330] sm:$0xff]
  %v470 = vld [vmem:[#allocation4 + $0x338] sm:$0xff]
  %v471 = vld [vmem:[#allocation4 + $0x340] sm:$0xff]
  %v472 = vld [vmem:[#allocation4 + $0x348] sm:$0xff]
  %v473 = vld [vmem:[#allocation4 + $0x350] sm:$0xff]
  %v474 = vld [vmem:[#allocation4 + $0x358] sm:$0xff]
  %v475 = vld [vmem:[#allocation4 + $0x360] sm:$0xff]
  %v476 = vld [vmem:[#allocation4 + $0x368] sm:$0xff]
  %v477 = vld [vmem:[#allocation4 + $0x370] sm:$0xff]
  %v478 = vld [vmem:[#allocation4 + $0x378] sm:$0xff]
  %v479 = vld [vmem:[#allocation4 + $0x380] sm:$0xff]
  %v480 = vld [vmem:[#allocation4 + $0x388] sm:$0xff]
  %v481 = vld [vmem:[#allocation4 + $0x390] sm:$0xff]
  %v482 = vld [vmem:[#allocation4 + $0x398] sm:$0xff]
  %v483 = vld [vmem:[#allocation4 + $0x3a0] sm:$0xff]
  %v484 = vld [vmem:[#allocation4 + $0x3a8] sm:$0xff]
  %v485 = vld [vmem:[#allocation4 + $0x3b0] sm:$0xff]
  %v486 = vld [vmem:[#allocation4 + $0x3b8] sm:$0xff]
  %v487 = vld [vmem:[#allocation4 + $0x3c0] sm:$0xff]
  %v488 = vld [vmem:[#allocation4 + $0x3c8] sm:$0xff]
  %v489 = vld [vmem:[#allocation4 + $0x3d0] sm:$0xff]
  %v490 = vld [vmem:[#allocation4 + $0x3d8] sm:$0xff]
  %v491 = vld [vmem:[#allocation4 + $0x3e0] sm:$0xff]
  %v492 = vld [vmem:[#allocation4 + $0x3e8] sm:$0xff]
  %v493 = vld [vmem:[#allocation4 + $0x3f0] sm:$0xff]
  %v494 = vld [vmem:[#allocation4 + $0x3f8] sm:$0xff]
  %495 = vmatprep.subr.mxu0 %v368
  %496 = vmatpush1.msra.mxu0 %v367
  %497 = vmatprep.subr.mxu0 %v372
  %498 = vmatpush1.msra.mxu0 %v371
  %499 = vmatprep.subr.mxu0 %v376
  %500 = vmatpush1.msra.mxu0 %v375
  %501 = vmatprep.subr.mxu0 %v380
  %502 = vmatpush1.msra.mxu0 %v379
  %503 = vmatprep.subr.mxu0 %v384
  %504 = vmatpush1.msra.mxu0 %v383
  %505 = vmatprep.subr.mxu0 %v388
  %506 = vmatpush1.msra.mxu0 %v387
  %507 = vmatprep.subr.mxu0 %v392
  %508 = vmatpush1.msra.mxu0 %v391
  %509 = vmatprep.subr.mxu0 %v396
  %510 = vmatpush1.msra.mxu0 %v395
  %511 = vmatprep.subr.mxu0 %v400
  %512 = vmatpush1.msra.mxu0 %v399
  %513 = vmatprep.subr.mxu0 %v404
  %514 = vmatpush1.msra.mxu0 %v403
  %515 = vmatprep.subr.mxu0 %v408
  %516 = vmatpush1.msra.mxu0 %v407
  %517 = vmatprep.subr.mxu0 %v412
  %518 = vmatpush1.msra.mxu0 %v411
  %519 = vmatprep.subr.mxu0 %v416
  %520 = vmatpush1.msra.mxu0 %v415
  %521 = vmatprep.subr.mxu0 %v420
  %522 = vmatpush1.msra.mxu0 %v419
  %523 = vmatprep.subr.mxu0 %v424
  %524 = vmatpush1.msra.mxu0 %v423
  %525 = vmatprep.subr.mxu0 %v428
  %526 = vmatpush1.msra.mxu0 %v427
  %527 = vmatprep.subr.mxu0 %v432
  %528 = vmatpush1.msra.mxu0 %v431
  %529 = vmatprep.subr.mxu0 %v436
  %530 = vmatpush1.msra.mxu0 %v435
  %531 = vmatprep.subr.mxu0 %v440
  %532 = vmatpush1.msra.mxu0 %v439
  %533 = vmatprep.subr.mxu0 %v444
  %534 = vmatpush1.msra.mxu0 %v443
  %535 = vmatprep.subr.mxu0 %v448
  %536 = vmatpush1.msra.mxu0 %v447
  %537 = vmatprep.subr.mxu0 %v452
  %538 = vmatpush1.msra.mxu0 %v451
  %539 = vmatprep.subr.mxu0 %v456
  %540 = vmatpush1.msra.mxu0 %v455
  %541 = vmatprep.subr.mxu0 %v460
  %542 = vmatpush1.msra.mxu0 %v459
  %543 = vmatprep.subr.mxu0 %v464
  %544 = vmatpush1.msra.mxu0 %v463
  %545 = vmatprep.subr.mxu0 %v468
  %546 = vmatpush1.msra.mxu0 %v467
  %547 = vmatprep.subr.mxu0 %v472
  %548 = vmatpush1.msra.mxu0 %v471
  %549 = vmatprep.subr.mxu0 %v476
  %550 = vmatpush1.msra.mxu0 %v475
  %551 = vmatprep.subr.mxu0 %v480
  %552 = vmatpush1.msra.mxu0 %v479
  %553 = vmatprep.subr.mxu0 %v484
  %554 = vmatpush1.msra.mxu0 %v483
  %555 = vmatprep.subr.mxu0 %v488
  %556 = vmatpush1.msra.mxu0 %v487
  %557 = vmatprep.subr.mxu0 %v492
  %558 = vmatpush1.msra.mxu0 %v491
  %559 = vmatprep.mubr.f32.mxu0 %v364
  %560 = vmatmul.mubr.f32.gmra.mrb[0].mxu0 %v363
  %v561 = vpop.f32.mrb[0].mxu0
  %v562 = vadd.f32 0.0, %v561
  %v563 = vpop.f32.mrb[0].mxu0
  %v564 = vadd.f32 0.0, %v563
  %565 = vmatprep.mubr.f32.mxu0 %v366
  %566 = vmatmul.mubr.f32.gmra.mrb[0].mxu0 %v365
  %v567 = vpop.f32.mrb[0].mxu0
  %v568 = vadd.f32 0.0, %v567
  %v569 = vpop.f32.mrb[0].mxu0
  %v570 = vadd.f32 0.0, %v569
  %571 = vdwg.mxu0
  %572 = vmatprep.subr.mxu0 %v370
  %573 = vmatpush1.msra.mxu0 %v369
  %574 = vmatprep.subr.mxu0 %v374
  %575 = vmatpush1.msra.mxu0 %v373
  %576 = vmatprep.subr.mxu0 %v378
  %577 = vmatpush1.msra.mxu0 %v377
  %578 = vmatprep.subr.mxu0 %v382
  %579 = vmatpush1.msra.mxu0 %v381
  %580 = vmatprep.subr.mxu0 %v386
  %581 = vmatpush1.msra.mxu0 %v385
  %582 = vmatprep.subr.mxu0 %v390
  %583 = vmatpush1.msra.mxu0 %v389
  %584 = vmatprep.subr.mxu0 %v394
  %585 = vmatpush1.msra.mxu0 %v393
  %586 = vmatprep.subr.mxu0 %v398
  %587 = vmatpush1.msra.mxu0 %v397
  %588 = vmatprep.subr.mxu0 %v402
  %589 = vmatpush1.msra.mxu0 %v401
  %590 = vmatprep.subr.mxu0 %v406
  %591 = vmatpush1.msra.mxu0 %v405
  %592 = vmatprep.subr.mxu0 %v410
  %593 = vmatpush1.msra.mxu0 %v409
  %594 = vmatprep.subr.mxu0 %v414
  %595 = vmatpush1.msra.mxu0 %v413
  %596 = vmatprep.subr.mxu0 %v418
  %597 = vmatpush1.msra.mxu0 %v417
  %598 = vmatprep.subr.mxu0 %v422
  %599 = vmatpush1.msra.mxu0 %v421
  %600 = vmatprep.subr.mxu0 %v426
  %601 = vmatpush1.msra.mxu0 %v425
  %602 = vmatprep.subr.mxu0 %v430
  %603 = vmatpush1.msra.mxu0 %v429
  %604 = vmatprep.subr.mxu0 %v434
  %605 = vmatpush1.msra.mxu0 %v433
  %606 = vmatprep.subr.mxu0 %v438
  %607 = vmatpush1.msra.mxu0 %v437
  %608 = vmatprep.subr.mxu0 %v442
  %609 = vmatpush1.msra.mxu0 %v441
  %610 = vmatprep.subr.mxu0 %v446
  %611 = vmatpush1.msra.mxu0 %v445
  %612 = vmatprep.subr.mxu0 %v450
  %613 = vmatpush1.msra.mxu0 %v449
  %614 = vmatprep.subr.mxu0 %v454
  %615 = vmatpush1.msra.mxu0 %v453
  %616 = vmatprep.subr.mxu0 %v458
  %617 = vmatpush1.msra.mxu0 %v457
  %618 = vmatprep.subr.mxu0 %v462
  %619 = vmatpush1.msra.mxu0 %v461
  %620 = vmatprep.subr.mxu0 %v466
  %621 = vmatpush1.msra.mxu0 %v465
  %622 = vmatprep.subr.mxu0 %v470
  %623 = vmatpush1.msra.mxu0 %v469
  %624 = vmatprep.subr.mxu0 %v474
  %625 = vmatpush1.msra.mxu0 %v473
  %626 = vmatprep.subr.mxu0 %v478
  %627 = vmatpush1.msra.mxu0 %v477
  %628 = vmatprep.subr.mxu0 %v482
  %629 = vmatpush1.msra.mxu0 %v481
  %630 = vmatprep.subr.mxu0 %v486
  %631 = vmatpush1.msra.mxu0 %v485
  %632 = vmatprep.subr.mxu0 %v490
  %633 = vmatpush1.msra.mxu0 %v489
  %634 = vmatprep.subr.mxu0 %v494
  %635 = vmatpush1.msra.mxu0 %v493
  %636 = vmatprep.mubr.f32.mxu0 %v364
  %637 = vmatmul.mubr.f32.gmra.mrb[0].mxu0 %v363
  %v638 = vpop.f32.mrb[0].mxu0
  %v639 = vadd.f32 0.0, %v638
  %v640 = vpop.f32.mrb[0].mxu0
  %v641 = vadd.f32 0.0, %v640
  %642 = vmatprep.mubr.f32.mxu0 %v366
  %643 = vmatmul.mubr.f32.gmra.mrb[0].mxu0 %v365
  %v644 = vpop.f32.mrb[0].mxu0
  %v645 = vadd.f32 0.0, %v644
  %v646 = vpop.f32.mrb[0].mxu0
  %v647 = vadd.f32 0.0, %v646
  %648 = vdwg.mxu0
  %v649 = vld [vmem:[%s0] sm:$0xff]
  %v650 = vld [vmem:[%s0 + $0x8] sm:$0xff]
  %v651 = vld [vmem:[%s0 + $0x10] sm:$0xff]
  %v652 = vld [vmem:[%s0 + $0x18] sm:$0xff]
  %s653 = scalar_lea.vmem %s42, 224
  %v654 = vld [vmem:[%s653] sm:$0xff]
  %v655 = vld [vmem:[%s653 + $0x8] sm:$0xff]
  %v656 = vld [vmem:[%s653 + $0x10] sm:$0xff]
  %v657 = vld [vmem:[%s653 + $0x18] sm:$0xff]
  %v658 = vadd.f32 %v649, %v562
  %v659 = vadd.f32 %v650, %v564
  %v660 = vadd.f32 %v651, %v639
  %v661 = vadd.f32 %v652, %v641
  %v662 = vadd.f32 %v654, %v568
  %v663 = vadd.f32 %v655, %v570
  %v664 = vadd.f32 %v656, %v645
  %v665 = vadd.f32 %v657, %v647
  %v666 = vxor.u32 %v658, 2147483648
  %v667 = vxor.u32 %v659, 2147483648
  %v668 = vxor.u32 %v660, 2147483648
  %v669 = vxor.u32 %v662, 2147483648
  %v670 = vxor.u32 %v663, 2147483648
  %v671 = vxor.u32 %v664, 2147483648
  %v672 = vmul.f32 %v666, 1.442695
  %v673 = vpow.pop %v672
  %v674 = vmul.f32 %v667, 1.442695
  %v675 = vpow.pop %v674
  %v676 = vmul.f32 %v668, 1.442695
  %v677 = vpow.pop %v676
  %v678 = vmul.f32 %v669, 1.442695
  %v679 = vpow.pop %v678
  %v680 = vmul.f32 %v670, 1.442695
  %v681 = vpow.pop %v680
  %v682 = vmul.f32 %v671, 1.442695
  %v683 = vpow.pop %v682
  %v684 = vadd.f32 %v673, 1.0
  %v685 = vadd.f32 %v675, 1.0
  %v686 = vadd.f32 %v677, 1.0
  %v687 = vadd.f32 %v679, 1.0
  %v688 = vadd.f32 %v681, 1.0
  %v689 = vadd.f32 %v683, 1.0
  %v690 = vrcp.pop %v684
  %v691 = vmul.f32 1.0, %v690
  %v692 = vrcp.pop %v685
  %v693 = vmul.f32 1.0, %v692
  %v694 = vrcp.pop %v686
  %v695 = vmul.f32 1.0, %v694
  %v696 = vrcp.pop %v687
  %v697 = vmul.f32 1.0, %v696
  %v698 = vrcp.pop %v688
  %v699 = vmul.f32 1.0, %v698
  %v700 = vrcp.pop %v689
  %v701 = vmul.f32 1.0, %v700
  %v702 = vtanh.pop %v661
  %v703 = vtanh.pop %v665
  %v704 = vld [vmem:[#allocation3] sm:$0xff]
  %v705 = vld [vmem:[#allocation3 + $0x8] sm:$0xff]
  %v706 = vmul.f32 %v693, %v704
  %v707 = vmul.f32 %v699, %v705
  %v708 = vmul.f32 %v691, %v702
  %v709 = vmul.f32 %v697, %v703
  %v710 = vadd.f32 %v706, %v708
  %v711 = vadd.f32 %v707, %v709
  %v712 = vtanh.pop %v710
  %v713 = vtanh.pop %v711
  %v714 = vmul.f32 %v695, %v712
  %v715 = vmul.f32 %v701, %v713
  %716 = vst [vmem:[#allocation3] sm:$0xff] %v710
  %717 = vst [vmem:[#allocation3 + $0x8] sm:$0xff] %v711
  %718 = vst [vmem:[#allocation2] sm:$0xff] %v714
  %719 = vst [vmem:[#allocation2 + $0x18] sm:$0xff] %v715
  %720 = vst [vmem:[%s3] sm:$0xff] %v714
  %s721 = scalar_lea.vmem %s50, 56
  %722 = vst [vmem:[%s721] sm:$0xff] %v715
  %v723 = vld [vmem:[#allocation2] sm:$0xff]
  %v724 = vld [vmem:[#allocation2 + $0x8] sm:$0xff]
  %v725 = vld [vmem:[#allocation2 + $0x10] sm:$0xff]
  %v726 = vld [vmem:[#allocation2 + $0x18] sm:$0xff]
  %v727 = vld [vmem:[#allocation4] sm:$0xff]
  %v728 = vld [vmem:[#allocation4 + $0x8] sm:$0xff]
  %v729 = vld [vmem:[#allocation4 + $0x10] sm:$0xff]
  %v730 = vld [vmem:[#allocation4 + $0x18] sm:$0xff]
  %v731 = vld [vmem:[#allocation4 + $0x20] sm:$0xff]
  %v732 = vld [vmem:[#allocation4 + $0x28] sm:$0xff]
  %v733 = vld [vmem:[#allocation4 + $0x30] sm:$0xff]
  %v734 = vld [vmem:[#allocation4 + $0x38] sm:$0xff]
  %v735 = vld [vmem:[#allocation4 + $0x40] sm:$0xff]
  %v736 = vld [vmem:[#allocation4 + $0x48] sm:$0xff]
  %v737 = vld [vmem:[#allocation4 + $0x50] sm:$0xff]
  %v738 = vld [vmem:[#allocation4 + $0x58] sm:$0xff]
  %v739 = vld [vmem:[#allocation4 + $0x60] sm:$0xff]
  %v740 = vld [vmem:[#allocation4 + $0x68] sm:$0xff]
  %v741 = vld [vmem:[#allocation4 + $0x70] sm:$0xff]
  %v742 = vld [vmem:[#allocation4 + $0x78] sm:$0xff]
  %v743 = vld [vmem:[#allocation4 + $0x80] sm:$0xff]
  %v744 = vld [vmem:[#allocation4 + $0x88] sm:$0xff]
  %v745 = vld [vmem:[#allocation4 + $0x90] sm:$0xff]
  %v746 = vld [vmem:[#allocation4 + $0x98] sm:$0xff]
  %v747 = vld [vmem:[#allocation4 + $0xa0] sm:$0xff]
  %v748 = vld [vmem:[#allocation4 + $0xa8] sm:$0xff]
  %v749 = vld [vmem:[#allocation4 + $0xb0] sm:$0xff]
  %v750 = vld [vmem:[#allocation4 + $0xb8] sm:$0xff]
  %v751 = vld [vmem:[#allocation4 + $0xc0] sm:$0xff]
  %v752 = vld [vmem:[#allocation4 + $0xc8] sm:$0xff]
  %v753 = vld [vmem:[#allocation4 + $0xd0] sm:$0xff]
  %v754 = vld [vmem:[#allocation4 + $0xd8] sm:$0xff]
  %v755 = vld [vmem:[#allocation4 + $0xe0] sm:$0xff]
  %v756 = vld [vmem:[#allocation4 + $0xe8] sm:$0xff]
  %v757 = vld [vmem:[#allocation4 + $0xf0] sm:$0xff]
  %v758 = vld [vmem:[#allocation4 + $0xf8] sm:$0xff]
  %v759 = vld [vmem:[#allocation4 + $0x100] sm:$0xff]
  %v760 = vld [vmem:[#allocation4 + $0x108] sm:$0xff]
  %v761 = vld [vmem:[#allocation4 + $0x110] sm:$0xff]
  %v762 = vld [vmem:[#allocation4 + $0x118] sm:$0xff]
  %v763 = vld [vmem:[#allocation4 + $0x120] sm:$0xff]
  %v764 = vld [vmem:[#allocation4 + $0x128] sm:$0xff]
  %v765 = vld [vmem:[#allocation4 + $0x130] sm:$0xff]
  %v766 = vld [vmem:[#allocation4 + $0x138] sm:$0xff]
  %v767 = vld [vmem:[#allocation4 + $0x140] sm:$0xff]
  %v768 = vld [vmem:[#allocation4 + $0x148] sm:$0xff]
  %v769 = vld [vmem:[#allocation4 + $0x150] sm:$0xff]
  %v770 = vld [vmem:[#allocation4 + $0x158] sm:$0xff]
  %v771 = vld [vmem:[#allocation4 + $0x160] sm:$0xff]
  %v772 = vld [vmem:[#allocation4 + $0x168] sm:$0xff]
  %v773 = vld [vmem:[#allocation4 + $0x170] sm:$0xff]
  %v774 = vld [vmem:[#allocation4 + $0x178] sm:$0xff]
  %v775 = vld [vmem:[#allocation4 + $0x180] sm:$0xff]
  %v776 = vld [vmem:[#allocation4 + $0x188] sm:$0xff]
  %v777 = vld [vmem:[#allocation4 + $0x190] sm:$0xff]
  %v778 = vld [vmem:[#allocation4 + $0x198] sm:$0xff]
  %v779 = vld [vmem:[#allocation4 + $0x1a0] sm:$0xff]
  %v780 = vld [vmem:[#allocation4 + $0x1a8] sm:$0xff]
  %v781 = vld [vmem:[#allocation4 + $0x1b0] sm:$0xff]
  %v782 = vld [vmem:[#allocation4 + $0x1b8] sm:$0xff]
  %v783 = vld [vmem:[#allocation4 + $0x1c0] sm:$0xff]
  %v784 = vld [vmem:[#allocation4 + $0x1c8] sm:$0xff]
  %v785 = vld [vmem:[#allocation4 + $0x1d0] sm:$0xff]
  %v786 = vld [vmem:[#allocation4 + $0x1d8] sm:$0xff]
  %v787 = vld [vmem:[#allocation4 + $0x1e0] sm:$0xff]
  %v788 = vld [vmem:[#allocation4 + $0x1e8] sm:$0xff]
  %v789 = vld [vmem:[#allocation4 + $0x1f0] sm:$0xff]
  %v790 = vld [vmem:[#allocation4 + $0x1f8] sm:$0xff]
  %v791 = vld [vmem:[#allocation4 + $0x200] sm:$0xff]
  %v792 = vld [vmem:[#allocation4 + $0x208] sm:$0xff]
  %v793 = vld [vmem:[#allocation4 + $0x210] sm:$0xff]
  %v794 = vld [vmem:[#allocation4 + $0x218] sm:$0xff]
  %v795 = vld [vmem:[#allocation4 + $0x220] sm:$0xff]
  %v796 = vld [vmem:[#allocation4 + $0x228] sm:$0xff]
  %v797 = vld [vmem:[#allocation4 + $0x230] sm:$0xff]
  %v798 = vld [vmem:[#allocation4 + $0x238] sm:$0xff]
  %v799 = vld [vmem:[#allocation4 + $0x240] sm:$0xff]
  %v800 = vld [vmem:[#allocation4 + $0x248] sm:$0xff]
  %v801 = vld [vmem:[#allocation4 + $0x250] sm:$0xff]
  %v802 = vld [vmem:[#allocation4 + $0x258] sm:$0xff]
  %v803 = vld [vmem:[#allocation4 + $0x260] sm:$0xff]
  %v804 = vld [vmem:[#allocation4 + $0x268] sm:$0xff]
  %v805 = vld [vmem:[#allocation4 + $0x270] sm:$0xff]
  %v806 = vld [vmem:[#allocation4 + $0x278] sm:$0xff]
  %v807 = vld [vmem:[#allocation4 + $0x280] sm:$0xff]
  %v808 = vld [vmem:[#allocation4 + $0x288] sm:$0xff]
  %v809 = vld [vmem:[#allocation4 + $0x290] sm:$0xff]
  %v810 = vld [vmem:[#allocation4 + $0x298] sm:$0xff]
  %v811 = vld [vmem:[#allocation4 + $0x2a0] sm:$0xff]
  %v812 = vld [vmem:[#allocation4 + $0x2a8] sm:$0xff]
  %v813 = vld [vmem:[#allocation4 + $0x2b0] sm:$0xff]
  %v814 = vld [vmem:[#allocation4 + $0x2b8] sm:$0xff]
  %v815 = vld [vmem:[#allocation4 + $0x2c0] sm:$0xff]
  %v816 = vld [vmem:[#allocation4 + $0x2c8] sm:$0xff]
  %v817 = vld [vmem:[#allocation4 + $0x2d0] sm:$0xff]
  %v818 = vld [vmem:[#allocation4 + $0x2d8] sm:$0xff]
  %v819 = vld [vmem:[#allocation4 + $0x2e0] sm:$0xff]
  %v820 = vld [vmem:[#allocation4 + $0x2e8] sm:$0xff]
  %v821 = vld [vmem:[#allocation4 + $0x2f0] sm:$0xff]
  %v822 = vld [vmem:[#allocation4 + $0x2f8] sm:$0xff]
  %v823 = vld [vmem:[#allocation4 + $0x300] sm:$0xff]
  %v824 = vld [vmem:[#allocation4 + $0x308] sm:$0xff]
  %v825 = vld [vmem:[#allocation4 + $0x310] sm:$0xff]
  %v826 = vld [vmem:[#allocation4 + $0x318] sm:$0xff]
  %v827 = vld [vmem:[#allocation4 + $0x320] sm:$0xff]
  %v828 = vld [vmem:[#allocation4 + $0x328] sm:$0xff]
  %v829 = vld [vmem:[#allocation4 + $0x330] sm:$0xff]
  %v830 = vld [vmem:[#allocation4 + $0x338] sm:$0xff]
  %v831 = vld [vmem:[#allocation4 + $0x340] sm:$0xff]
  %v832 = vld [vmem:[#allocation4 + $0x348] sm:$0xff]
  %v833 = vld [vmem:[#allocation4 + $0x350] sm:$0xff]
  %v834 = vld [vmem:[#allocation4 + $0x358] sm:$0xff]
  %v835 = vld [vmem:[#allocation4 + $0x360] sm:$0xff]
  %v836 = vld [vmem:[#allocation4 + $0x368] sm:$0xff]
  %v837 = vld [vmem:[#allocation4 + $0x370] sm:$0xff]
  %v838 = vld [vmem:[#allocation4 + $0x378] sm:$0xff]
  %v839 = vld [vmem:[#allocation4 + $0x380] sm:$0xff]
  %v840 = vld [vmem:[#allocation4 + $0x388] sm:$0xff]
  %v841 = vld [vmem:[#allocation4 + $0x390] sm:$0xff]
  %v842 = vld [vmem:[#allocation4 + $0x398] sm:$0xff]
  %v843 = vld [vmem:[#allocation4 + $0x3a0] sm:$0xff]
  %v844 = vld [vmem:[#allocation4 + $0x3a8] sm:$0xff]
  %v845 = vld [vmem:[#allocation4 + $0x3b0] sm:$0xff]
  %v846 = vld [vmem:[#allocation4 + $0x3b8] sm:$0xff]
  %v847 = vld [vmem:[#allocation4 + $0x3c0] sm:$0xff]
  %v848 = vld [vmem:[#allocation4 + $0x3c8] sm:$0xff]
  %v849 = vld [vmem:[#allocation4 + $0x3d0] sm:$0xff]
  %v850 = vld [vmem:[#allocation4 + $0x3d8] sm:$0xff]
  %v851 = vld [vmem:[#allocation4 + $0x3e0] sm:$0xff]
  %v852 = vld [vmem:[#allocation4 + $0x3e8] sm:$0xff]
  %v853 = vld [vmem:[#allocation4 + $0x3f0] sm:$0xff]
  %v854 = vld [vmem:[#allocation4 + $0x3f8] sm:$0xff]
  %855 = vmatprep.subr.mxu0 %v728
  %856 = vmatpush1.msra.mxu0 %v727
  %857 = vmatprep.subr.mxu0 %v732
  %858 = vmatpush1.msra.mxu0 %v731
  %859 = vmatprep.subr.mxu0 %v736
  %860 = vmatpush1.msra.mxu0 %v735
  %861 = vmatprep.subr.mxu0 %v740
  %862 = vmatpush1.msra.mxu0 %v739
  %863 = vmatprep.subr.mxu0 %v744
  %864 = vmatpush1.msra.mxu0 %v743
  %865 = vmatprep.subr.mxu0 %v748
  %866 = vmatpush1.msra.mxu0 %v747
  %867 = vmatprep.subr.mxu0 %v752
  %868 = vmatpush1.msra.mxu0 %v751
  %869 = vmatprep.subr.mxu0 %v756
  %870 = vmatpush1.msra.mxu0 %v755
  %871 = vmatprep.subr.mxu0 %v760
  %872 = vmatpush1.msra.mxu0 %v759
  %873 = vmatprep.subr.mxu0 %v764
  %874 = vmatpush1.msra.mxu0 %v763
  %875 = vmatprep.subr.mxu0 %v768
  %876 = vmatpush1.msra.mxu0 %v767
  %877 = vmatprep.subr.mxu0 %v772
  %878 = vmatpush1.msra.mxu0 %v771
  %879 = vmatprep.subr.mxu0 %v776
  %880 = vmatpush1.msra.mxu0 %v775
  %881 = vmatprep.subr.mxu0 %v780
  %882 = vmatpush1.msra.mxu0 %v779
  %883 = vmatprep.subr.mxu0 %v784
  %884 = vmatpush1.msra.mxu0 %v783
  %885 = vmatprep.subr.mxu0 %v788
  %886 = vmatpush1.msra.mxu0 %v787
  %887 = vmatprep.subr.mxu0 %v792
  %888 = vmatpush1.msra.mxu0 %v791
  %889 = vmatprep.subr.mxu0 %v796
  %890 = vmatpush1.msra.mxu0 %v795
  %891 = vmatprep.subr.mxu0 %v800
  %892 = vmatpush1.msra.mxu0 %v799
  %893 = vmatprep.subr.mxu0 %v804
  %894 = vmatpush1.msra.mxu0 %v803
  %895 = vmatprep.subr.mxu0 %v808
  %896 = vmatpush1.msra.mxu0 %v807
  %897 = vmatprep.subr.mxu0 %v812
  %898 = vmatpush1.msra.mxu0 %v811
  %899 = vmatprep.subr.mxu0 %v816
  %900 = vmatpush1.msra.mxu0 %v815
  %901 = vmatprep.subr.mxu0 %v820
  %902 = vmatpush1.msra.mxu0 %v819
  %903 = vmatprep.subr.mxu0 %v824
  %904 = vmatpush1.msra.mxu0 %v823
  %905 = vmatprep.subr.mxu0 %v828
  %906 = vmatpush1.msra.mxu0 %v827
  %907 = vmatprep.subr.mxu0 %v832
  %908 = vmatpush1.msra.mxu0 %v831
  %909 = vmatprep.subr.mxu0 %v836
  %910 = vmatpush1.msra.mxu0 %v835
  %911 = vmatprep.subr.mxu0 %v840
  %912 = vmatpush1.msra.mxu0 %v839
  %913 = vmatprep.subr.mxu0 %v844
  %914 = vmatpush1.msra.mxu0 %v843
  %915 = vmatprep.subr.mxu0 %v848
  %916 = vmatpush1.msra.mxu0 %v847
  %917 = vmatprep.subr.mxu0 %v852
  %918 = vmatpush1.msra.mxu0 %v851
  %919 = vmatprep.mubr.f32.mxu0 %v724
  %920 = vmatmul.mubr.f32.gmra.mrb[0].mxu0 %v723
  %v921 = vpop.f32.mrb[0].mxu0
  %v922 = vadd.f32 0.0, %v921
  %v923 = vpop.f32.mrb[0].mxu0
  %v924 = vadd.f32 0.0, %v923
  %925 = vmatprep.mubr.f32.mxu0 %v726
  %926 = vmatmul.mubr.f32.gmra.mrb[0].mxu0 %v725
  %v927 = vpop.f32.mrb[0].mxu0
  %v928 = vadd.f32 0.0, %v927
  %v929 = vpop.f32.mrb[0].mxu0
  %v930 = vadd.f32 0.0, %v929
  %931 = vdwg.mxu0
  %932 = vmatprep.subr.mxu0 %v730
  %933 = vmatpush1.msra.mxu0 %v729
  %934 = vmatprep.subr.mxu0 %v734
  %935 = vmatpush1.msra.mxu0 %v733
  %936 = vmatprep.subr.mxu0 %v738
  %937 = vmatpush1.msra.mxu0 %v737
  %938 = vmatprep.subr.mxu0 %v742
  %939 = vmatpush1.msra.mxu0 %v741
  %940 = vmatprep.subr.mxu0 %v746
  %941 = vmatpush1.msra.mxu0 %v745
  %942 = vmatprep.subr.mxu0 %v750
  %943 = vmatpush1.msra.mxu0 %v749
  %944 = vmatprep.subr.mxu0 %v754
  %945 = vmatpush1.msra.mxu0 %v753
  %946 = vmatprep.subr.mxu0 %v758
  %947 = vmatpush1.msra.mxu0 %v757
  %948 = vmatprep.subr.mxu0 %v762
  %949 = vmatpush1.msra.mxu0 %v761
  %950 = vmatprep.subr.mxu0 %v766
  %951 = vmatpush1.msra.mxu0 %v765
  %952 = vmatprep.subr.mxu0 %v770
  %953 = vmatpush1.msra.mxu0 %v769
  %954 = vmatprep.subr.mxu0 %v774
  %955 = vmatpush1.msra.mxu0 %v773
  %956 = vmatprep.subr.mxu0 %v778
  %957 = vmatpush1.msra.mxu0 %v777
  %958 = vmatprep.subr.mxu0 %v782
  %959 = vmatpush1.msra.mxu0 %v781
  %960 = vmatprep.subr.mxu0 %v786
  %961 = vmatpush1.msra.mxu0 %v785
  %962 = vmatprep.subr.mxu0 %v790
  %963 = vmatpush1.msra.mxu0 %v789
  %964 = vmatprep.subr.mxu0 %v794
  %965 = vmatpush1.msra.mxu0 %v793
  %966 = vmatprep.subr.mxu0 %v798
  %967 = vmatpush1.msra.mxu0 %v797
  %968 = vmatprep.subr.mxu0 %v802
  %969 = vmatpush1.msra.mxu0 %v801
  %970 = vmatprep.subr.mxu0 %v806
  %971 = vmatpush1.msra.mxu0 %v805
  %972 = vmatprep.subr.mxu0 %v810
  %973 = vmatpush1.msra.mxu0 %v809
  %974 = vmatprep.subr.mxu0 %v814
  %975 = vmatpush1.msra.mxu0 %v813
  %976 = vmatprep.subr.mxu0 %v818
  %977 = vmatpush1.msra.mxu0 %v817
  %978 = vmatprep.subr.mxu0 %v822
  %979 = vmatpush1.msra.mxu0 %v821
  %980 = vmatprep.subr.mxu0 %v826
  %981 = vmatpush1.msra.mxu0 %v825
  %982 = vmatprep.subr.mxu0 %v830
  %983 = vmatpush1.msra.mxu0 %v829
  %984 = vmatprep.subr.mxu0 %v834
  %985 = vmatpush1.msra.mxu0 %v833
  %986 = vmatprep.subr.mxu0 %v838
  %987 = vmatpush1.msra.mxu0 %v837
  %988 = vmatprep.subr.mxu0 %v842
  %989 = vmatpush1.msra.mxu0 %v841
  %990 = vmatprep.subr.mxu0 %v846
  %991 = vmatpush1.msra.mxu0 %v845
  %992 = vmatprep.subr.mxu0 %v850
  %993 = vmatpush1.msra.mxu0 %v849
  %994 = vmatprep.subr.mxu0 %v854
  %995 = vmatpush1.msra.mxu0 %v853
  %996 = vmatprep.mubr.f32.mxu0 %v724
  %997 = vmatmul.mubr.f32.gmra.mrb[0].mxu0 %v723
  %v998 = vpop.f32.mrb[0].mxu0
  %v999 = vadd.f32 0.0, %v998
  %v1000 = vpop.f32.mrb[0].mxu0
  %v1001 = vadd.f32 0.0, %v1000
  %1002 = vmatprep.mubr.f32.mxu0 %v726
  %1003 = vmatmul.mubr.f32.gmra.mrb[0].mxu0 %v725
  %v1004 = vpop.f32.mrb[0].mxu0
  %v1005 = vadd.f32 0.0, %v1004
  %v1006 = vpop.f32.mrb[0].mxu0
  %v1007 = vadd.f32 0.0, %v1006
  %1008 = vdwg.mxu0
  %s1009 = scalar_lea.vmem %s0, 32
  %v1010 = vld [vmem:[%s1009] sm:$0xff]
  %v1011 = vld [vmem:[%s1009 + $0x8] sm:$0xff]
  %v1012 = vld [vmem:[%s1009 + $0x10] sm:$0xff]
  %v1013 = vld [vmem:[%s1009 + $0x18] sm:$0xff]
  %s1014 = scalar_lea.vmem %s42, 192
  %v1015 = vld [vmem:[%s1014] sm:$0xff]
  %v1016 = vld [vmem:[%s1014 + $0x8] sm:$0xff]
  %v1017 = vld [vmem:[%s1014 + $0x10] sm:$0xff]
  %v1018 = vld [vmem:[%s1014 + $0x18] sm:$0xff]
  %v1019 = vadd.f32 %v1010, %v922
  %v1020 = vadd.f32 %v1011, %v924
  %v1021 = vadd.f32 %v1012, %v999
  %v1022 = vadd.f32 %v1013, %v1001
  %v1023 = vadd.f32 %v1015, %v928
  %v1024 = vadd.f32 %v1016, %v930
  %v1025 = vadd.f32 %v1017, %v1005
  %v1026 = vadd.f32 %v1018, %v1007
  %v1027 = vxor.u32 %v1019, 2147483648
  %v1028 = vxor.u32 %v1020, 2147483648
  %v1029 = vxor.u32 %v1021, 2147483648
  %v1030 = vxor.u32 %v1023, 2147483648
  %v1031 = vxor.u32 %v1024, 2147483648
  %v1032 = vxor.u32 %v1025, 2147483648
  %v1033 = vmul.f32 %v1027, 1.442695
  %v1034 = vpow.pop %v1033
  %v1035 = vmul.f32 %v1028, 1.442695
  %v1036 = vpow.pop %v1035
  %v1037 = vmul.f32 %v1029, 1.442695
  %v1038 = vpow.pop %v1037
  %v1039 = vmul.f32 %v1030, 1.442695
  %v1040 = vpow.pop %v1039
  %v1041 = vmul.f32 %v1031, 1.442695
  %v1042 = vpow.pop %v1041
  %v1043 = vmul.f32 %v1032, 1.442695
  %v1044 = vpow.pop %v1043
  %v1045 = vadd.f32 %v1034, 1.0
  %v1046 = vadd.f32 %v1036, 1.0
  %v1047 = vadd.f32 %v1038, 1.0
  %v1048 = vadd.f32 %v1040, 1.0
  %v1049 = vadd.f32 %v1042, 1.0
  %v1050 = vadd.f32 %v1044, 1.0
  %v1051 = vrcp.pop %v1045
  %v1052 = vmul.f32 1.0, %v1051
  %v1053 = vrcp.pop %v1046
  %v1054 = vmul.f32 1.0, %v1053
  %v1055 = vrcp.pop %v1047
  %v1056 = vmul.f32 1.0, %v1055
  %v1057 = vrcp.pop %v1048
  %v1058 = vmul.f32 1.0, %v1057
  %v1059 = vrcp.pop %v1049
  %v1060 = vmul.f32 1.0, %v1059
  %v1061 = vrcp.pop %v1050
  %v1062 = vmul.f32 1.0, %v1061
  %v1063 = vtanh.pop %v1022
  %v1064 = vtanh.pop %v1026
  %v1065 = vld [vmem:[#allocation3] sm:$0xff]
  %v1066 = vld [vmem:[#allocation3 + $0x8] sm:$0xff]
  %v1067 = vmul.f32 %v1054, %v1065
  %v1068 = vmul.f32 %v1060, %v1066
  %v1069 = vmul.f32 %v1052, %v1063
  %v1070 = vmul.f32 %v1058, %v1064
  %v1071 = vadd.f32 %v1067, %v1069
  %v1072 = vadd.f32 %v1068, %v1070
  %v1073 = vtanh.pop %v1071
  %v1074 = vtanh.pop %v1072
  %v1075 = vmul.f32 %v1056, %v1073
  %v1076 = vmul.f32 %v1062, %v1074
  %1077 = vst [vmem:[#allocation3] sm:$0xff] %v1071
  %1078 = vst [vmem:[#allocation3 + $0x8] sm:$0xff] %v1072
  %1079 = vst [vmem:[#allocation2] sm:$0xff] %v1075
  %1080 = vst [vmem:[#allocation2 + $0x18] sm:$0xff] %v1076
  %s1081 = scalar_lea.vmem %s3, 8
  %1082 = vst [vmem:[%s1081] sm:$0xff] %v1075
  %s1083 = scalar_lea.vmem %s50, 48
  %1084 = vst [vmem:[%s1083] sm:$0xff] %v1076
  %v1085 = vld [vmem:[#allocation2] sm:$0xff]
  %v1086 = vld [vmem:[#allocation2 + $0x8] sm:$0xff]
  %v1087 = vld [vmem:[#allocation2 + $0x10] sm:$0xff]
  %v1088 = vld [vmem:[#allocation2 + $0x18] sm:$0xff]
  %v1089 = vld [vmem:[#allocation4] sm:$0xff]
  %v1090 = vld [vmem:[#allocation4 + $0x8] sm:$0xff]
  %v1091 = vld [vmem:[#allocation4 + $0x10] sm:$0xff]
  %v1092 = vld [vmem:[#allocation4 + $0x18] sm:$0xff]
  %v1093 = vld [vmem:[#allocation4 + $0x20] sm:$0xff]
  %v1094 = vld [vmem:[#allocation4 + $0x28] sm:$0xff]
  %v1095 = vld [vmem:[#allocation4 + $0x30] sm:$0xff]
  %v1096 = vld [vmem:[#allocation4 + $0x38] sm:$0xff]
  %v1097 = vld [vmem:[#allocation4 + $0x40] sm:$0xff]
  %v1098 = vld [vmem:[#allocation4 + $0x48] sm:$0xff]
  %v1099 = vld [vmem:[#allocation4 + $0x50] sm:$0xff]
  %v1100 = vld [vmem:[#allocation4 + $0x58] sm:$0xff]
  %v1101 = vld [vmem:[#allocation4 + $0x60] sm:$0xff]
  %v1102 = vld [vmem:[#allocation4 + $0x68] sm:$0xff]
  %v1103 = vld [vmem:[#allocation4 + $0x70] sm:$0xff]
  %v1104 = vld [vmem:[#allocation4 + $0x78] sm:$0xff]
  %v1105 = vld [vmem:[#allocation4 + $0x80] sm:$0xff]
  %v1106 = vld [vmem:[#allocation4 + $0x88] sm:$0xff]
  %v1107 = vld [vmem:[#allocation4 + $0x90] sm:$0xff]
  %v1108 = vld [vmem:[#allocation4 + $0x98] sm:$0xff]
  %v1109 = vld [vmem:[#allocation4 + $0xa0] sm:$0xff]
  %v1110 = vld [vmem:[#allocation4 + $0xa8] sm:$0xff]
  %v1111 = vld [vmem:[#allocation4 + $0xb0] sm:$0xff]
  %v1112 = vld [vmem:[#allocation4 + $0xb8] sm:$0xff]
  %v1113 = vld [vmem:[#allocation4 + $0xc0] sm:$0xff]
  %v1114 = vld [vmem:[#allocation4 + $0xc8] sm:$0xff]
  %v1115 = vld [vmem:[#allocation4 + $0xd0] sm:$0xff]
  %v1116 = vld [vmem:[#allocation4 + $0xd8] sm:$0xff]
  %v1117 = vld [vmem:[#allocation4 + $0xe0] sm:$0xff]
  %v1118 = vld [vmem:[#allocation4 + $0xe8] sm:$0xff]
  %v1119 = vld [vmem:[#allocation4 + $0xf0] sm:$0xff]
  %v1120 = vld [vmem:[#allocation4 + $0xf8] sm:$0xff]
  %v1121 = vld [vmem:[#allocation4 + $0x100] sm:$0xff]
  %v1122 = vld [vmem:[#allocation4 + $0x108] sm:$0xff]
  %v1123 = vld [vmem:[#allocation4 + $0x110] sm:$0xff]
  %v1124 = vld [vmem:[#allocation4 + $0x118] sm:$0xff]
  %v1125 = vld [vmem:[#allocation4 + $0x120] sm:$0xff]
  %v1126 = vld [vmem:[#allocation4 + $0x128] sm:$0xff]
  %v1127 = vld [vmem:[#allocation4 + $0x130] sm:$0xff]
  %v1128 = vld [vmem:[#allocation4 + $0x138] sm:$0xff]
  %v1129 = vld [vmem:[#allocation4 + $0x140] sm:$0xff]
  %v1130 = vld [vmem:[#allocation4 + $0x148] sm:$0xff]
  %v1131 = vld [vmem:[#allocation4 + $0x150] sm:$0xff]
  %v1132 = vld [vmem:[#allocation4 + $0x158] sm:$0xff]
  %v1133 = vld [vmem:[#allocation4 + $0x160] sm:$0xff]
  %v1134 = vld [vmem:[#allocation4 + $0x168] sm:$0xff]
  %v1135 = vld [vmem:[#allocation4 + $0x170] sm:$0xff]
  %v1136 = vld [vmem:[#allocation4 + $0x178] sm:$0xff]
  %v1137 = vld [vmem:[#allocation4 + $0x180] sm:$0xff]
  %v1138 = vld [vmem:[#allocation4 + $0x188] sm:$0xff]
  %v1139 = vld [vmem:[#allocation4 + $0x190] sm:$0xff]
  %v1140 = vld [vmem:[#allocation4 + $0x198] sm:$0xff]
  %v1141 = vld [vmem:[#allocation4 + $0x1a0] sm:$0xff]
  %v1142 = vld [vmem:[#allocation4 + $0x1a8] sm:$0xff]
  %v1143 = vld [vmem:[#allocation4 + $0x1b0] sm:$0xff]
  %v1144 = vld [vmem:[#allocation4 + $0x1b8] sm:$0xff]
  %v1145 = vld [vmem:[#allocation4 + $0x1c0] sm:$0xff]
  %v1146 = vld [vmem:[#allocation4 + $0x1c8] sm:$0xff]
  %v1147 = vld [vmem:[#allocation4 + $0x1d0] sm:$0xff]
  %v1148 = vld [vmem:[#allocation4 + $0x1d8] sm:$0xff]
  %v1149 = vld [vmem:[#allocation4 + $0x1e0] sm:$0xff]
  %v1150 = vld [vmem:[#allocation4 + $0x1e8] sm:$0xff]
  %v1151 = vld [vmem:[#allocation4 + $0x1f0] sm:$0xff]
  %v1152 = vld [vmem:[#allocation4 + $0x1f8] sm:$0xff]
  %v1153 = vld [vmem:[#allocation4 + $0x200] sm:$0xff]
  %v1154 = vld [vmem:[#allocation4 + $0x208] sm:$0xff]
  %v1155 = vld [vmem:[#allocation4 + $0x210] sm:$0xff]
  %v1156 = vld [vmem:[#allocation4 + $0x218] sm:$0xff]
  %v1157 = vld [vmem:[#allocation4 + $0x220] sm:$0xff]
  %v1158 = vld [vmem:[#allocation4 + $0x228] sm:$0xff]
  %v1159 = vld [vmem:[#allocation4 + $0x230] sm:$0xff]
  %v1160 = vld [vmem:[#allocation4 + $0x238] sm:$0xff]
  %v1161 = vld [vmem:[#allocation4 + $0x240] sm:$0xff]
  %v1162 = vld [vmem:[#allocation4 + $0x248] sm:$0xff]
  %v1163 = vld [vmem:[#allocation4 + $0x250] sm:$0xff]
  %v1164 = vld [vmem:[#allocation4 + $0x258] sm:$0xff]
  %v1165 = vld [vmem:[#allocation4 + $0x260] sm:$0xff]
  %v1166 = vld [vmem:[#allocation4 + $0x268] sm:$0xff]
  %v1167 = vld [vmem:[#allocation4 + $0x270] sm:$0xff]
  %v1168 = vld [vmem:[#allocation4 + $0x278] sm:$0xff]
  %v1169 = vld [vmem:[#allocation4 + $0x280] sm:$0xff]
  %v1170 = vld [vmem:[#allocation4 + $0x288] sm:$0xff]
  %v1171 = vld [vmem:[#allocation4 + $0x290] sm:$0xff]
  %v1172 = vld [vmem:[#allocation4 + $0x298] sm:$0xff]
  %v1173 = vld [vmem:[#allocation4 + $0x2a0] sm:$0xff]
  %v1174 = vld [vmem:[#allocation4 + $0x2a8] sm:$0xff]
  %v1175 = vld [vmem:[#allocation4 + $0x2b0] sm:$0xff]
  %v1176 = vld [vmem:[#allocation4 + $0x2b8] sm:$0xff]
  %v1177 = vld [vmem:[#allocation4 + $0x2c0] sm:$0xff]
  %v1178 = vld [vmem:[#allocation4 + $0x2c8] sm:$0xff]
  %v1179 = vld [vmem:[#allocation4 + $0x2d0] sm:$0xff]
  %v1180 = vld [vmem:[#allocation4 + $0x2d8] sm:$0xff]
  %v1181 = vld [vmem:[#allocation4 + $0x2e0] sm:$0xff]
  %v1182 = vld [vmem:[#allocation4 + $0x2e8] sm:$0xff]
  %v1183 = vld [vmem:[#allocation4 + $0x2f0] sm:$0xff]
  %v1184 = vld [vmem:[#allocation4 + $0x2f8] sm:$0xff]
  %v1185 = vld [vmem:[#allocation4 + $0x300] sm:$0xff]
  %v1186 = vld [vmem:[#allocation4 + $0x308] sm:$0xff]
  %v1187 = vld [vmem:[#allocation4 + $0x310] sm:$0xff]
  %v1188 = vld [vmem:[#allocation4 + $0x318] sm:$0xff]
  %v1189 = vld [vmem:[#allocation4 + $0x320] sm:$0xff]
  %v1190 = vld [vmem:[#allocation4 + $0x328] sm:$0xff]
  %v1191 = vld [vmem:[#allocation4 + $0x330] sm:$0xff]
  %v1192 = vld [vmem:[#allocation4 + $0x338] sm:$0xff]
  %v1193 = vld [vmem:[#allocation4 + $0x340] sm:$0xff]
  %v1194 = vld [vmem:[#allocation4 + $0x348] sm:$0xff]
  %v1195 = vld [vmem:[#allocation4 + $0x350] sm:$0xff]
  %v1196 = vld [vmem:[#allocation4 + $0x358] sm:$0xff]
  %v1197 = vld [vmem:[#allocation4 + $0x360] sm:$0xff]
  %v1198 = vld [vmem:[#allocation4 + $0x368] sm:$0xff]
  %v1199 = vld [vmem:[#allocation4 + $0x370] sm:$0xff]
  %v1200 = vld [vmem:[#allocation4 + $0x378] sm:$0xff]
  %v1201 = vld [vmem:[#allocation4 + $0x380] sm:$0xff]
  %v1202 = vld [vmem:[#allocation4 + $0x388] sm:$0xff]
  %v1203 = vld [vmem:[#allocation4 + $0x390] sm:$0xff]
  %v1204 = vld [vmem:[#allocation4 + $0x398] sm:$0xff]
  %v1205 = vld [vmem:[#allocation4 + $0x3a0] sm:$0xff]
  %v1206 = vld [vmem:[#allocation4 + $0x3a8] sm:$0xff]
  %v1207 = vld [vmem:[#allocation4 + $0x3b0] sm:$0xff]
  %v1208 = vld [vmem:[#allocation4 + $0x3b8] sm:$0xff]
  %v1209 = vld [vmem:[#allocation4 + $0x3c0] sm:$0xff]
  %v1210 = vld [vmem:[#allocation4 + $0x3c8] sm:$0xff]
  %v1211 = vld [vmem:[#allocation4 + $0x3d0] sm:$0xff]
  %v1212 = vld [vmem:[#allocation4 + $0x3d8] sm:$0xff]
  %v1213 = vld [vmem:[#allocation4 + $0x3e0] sm:$0xff]
  %v1214 = vld [vmem:[#allocation4 + $0x3e8] sm:$0xff]
  %v1215 = vld [vmem:[#allocation4 + $0x3f0] sm:$0xff]
  %v1216 = vld [vmem:[#allocation4 + $0x3f8] sm:$0xff]
  %1217 = vmatprep.subr.mxu0 %v1090
  %1218 = vmatpush1.msra.mxu0 %v1089
  %1219 = vmatprep.subr.mxu0 %v1094
  %1220 = vmatpush1.msra.mxu0 %v1093
  %1221 = vmatprep.subr.mxu0 %v1098
  %1222 = vmatpush1.msra.mxu0 %v1097
  %1223 = vmatprep.subr.mxu0 %v1102
  %1224 = vmatpush1.msra.mxu0 %v1101
  %1225 = vmatprep.subr.mxu0 %v1106
  %1226 = vmatpush1.msra.mxu0 %v1105
  %1227 = vmatprep.subr.mxu0 %v1110
  %1228 = vmatpush1.msra.mxu0 %v1109
  %1229 = vmatprep.subr.mxu0 %v1114
  %1230 = vmatpush1.msra.mxu0 %v1113
  %1231 = vmatprep.subr.mxu0 %v1118
  %1232 = vmatpush1.msra.mxu0 %v1117
  %1233 = vmatprep.subr.mxu0 %v1122
  %1234 = vmatpush1.msra.mxu0 %v1121
  %1235 = vmatprep.subr.mxu0 %v1126
  %1236 = vmatpush1.msra.mxu0 %v1125
  %1237 = vmatprep.subr.mxu0 %v1130
  %1238 = vmatpush1.msra.mxu0 %v1129
  %1239 = vmatprep.subr.mxu0 %v1134
  %1240 = vmatpush1.msra.mxu0 %v1133
  %1241 = vmatprep.subr.mxu0 %v1138
  %1242 = vmatpush1.msra.mxu0 %v1137
  %1243 = vmatprep.subr.mxu0 %v1142
  %1244 = vmatpush1.msra.mxu0 %v1141
  %1245 = vmatprep.subr.mxu0 %v1146
  %1246 = vmatpush1.msra.mxu0 %v1145
  %1247 = vmatprep.subr.mxu0 %v1150
  %1248 = vmatpush1.msra.mxu0 %v1149
  %1249 = vmatprep.subr.mxu0 %v1154
  %1250 = vmatpush1.msra.mxu0 %v1153
  %1251 = vmatprep.subr.mxu0 %v1158
  %1252 = vmatpush1.msra.mxu0 %v1157
  %1253 = vmatprep.subr.mxu0 %v1162
  %1254 = vmatpush1.msra.mxu0 %v1161
  %1255 = vmatprep.subr.mxu0 %v1166
  %1256 = vmatpush1.msra.mxu0 %v1165
  %1257 = vmatprep.subr.mxu0 %v1170
  %1258 = vmatpush1.msra.mxu0 %v1169
  %1259 = vmatprep.subr.mxu0 %v1174
  %1260 = vmatpush1.msra.mxu0 %v1173
  %1261 = vmatprep.subr.mxu0 %v1178
  %1262 = vmatpush1.msra.mxu0 %v1177
  %1263 = vmatprep.subr.mxu0 %v1182
  %1264 = vmatpush1.msra.mxu0 %v1181
  %1265 = vmatprep.subr.mxu0 %v1186
  %1266 = vmatpush1.msra.mxu0 %v1185
  %1267 = vmatprep.subr.mxu0 %v1190
  %1268 = vmatpush1.msra.mxu0 %v1189
  %1269 = vmatprep.subr.mxu0 %v1194
  %1270 = vmatpush1.msra.mxu0 %v1193
  %1271 = vmatprep.subr.mxu0 %v1198
  %1272 = vmatpush1.msra.mxu0 %v1197
  %1273 = vmatprep.subr.mxu0 %v1202
  %1274 = vmatpush1.msra.mxu0 %v1201
  %1275 = vmatprep.subr.mxu0 %v1206
  %1276 = vmatpush1.msra.mxu0 %v1205
  %1277 = vmatprep.subr.mxu0 %v1210
  %1278 = vmatpush1.msra.mxu0 %v1209
  %1279 = vmatprep.subr.mxu0 %v1214
  %1280 = vmatpush1.msra.mxu0 %v1213
  %1281 = vmatprep.mubr.f32.mxu0 %v1086
  %1282 = vmatmul.mubr.f32.gmra.mrb[0].mxu0 %v1085
  %v1283 = vpop.f32.mrb[0].mxu0
  %v1284 = vadd.f32 0.0, %v1283
  %v1285 = vpop.f32.mrb[0].mxu0
  %v1286 = vadd.f32 0.0, %v1285
  %1287 = vmatprep.mubr.f32.mxu0 %v1088
  %1288 = vmatmul.mubr.f32.gmra.mrb[0].mxu0 %v1087
  %v1289 = vpop.f32.mrb[0].mxu0
  %v1290 = vadd.f32 0.0, %v1289
  %v1291 = vpop.f32.mrb[0].mxu0
  %v1292 = vadd.f32 0.0, %v1291
  %1293 = vdwg.mxu0
  %1294 = vmatprep.subr.mxu0 %v1092
  %1295 = vmatpush1.msra.mxu0 %v1091
  %1296 = vmatprep.subr.mxu0 %v1096
  %1297 = vmatpush1.msra.mxu0 %v1095
  %1298 = vmatprep.subr.mxu0 %v1100
  %1299 = vmatpush1.msra.mxu0 %v1099
  %1300 = vmatprep.subr.mxu0 %v1104
  %1301 = vmatpush1.msra.mxu0 %v1103
  %1302 = vmatprep.subr.mxu0 %v1108
  %1303 = vmatpush1.msra.mxu0 %v1107
  %1304 = vmatprep.subr.mxu0 %v1112
  %1305 = vmatpush1.msra.mxu0 %v1111
  %1306 = vmatprep.subr.mxu0 %v1116
  %1307 = vmatpush1.msra.mxu0 %v1115
  %1308 = vmatprep.subr.mxu0 %v1120
  %1309 = vmatpush1.msra.mxu0 %v1119
  %1310 = vmatprep.subr.mxu0 %v1124
  %1311 = vmatpush1.msra.mxu0 %v1123
  %1312 = vmatprep.subr.mxu0 %v1128
  %1313 = vmatpush1.msra.mxu0 %v1127
  %1314 = vmatprep.subr.mxu0 %v1132
  %1315 = vmatpush1.msra.mxu0 %v1131
  %1316 = vmatprep.subr.mxu0 %v1136
  %1317 = vmatpush1.msra.mxu0 %v1135
  %1318 = vmatprep.subr.mxu0 %v1140
  %1319 = vmatpush1.msra.mxu0 %v1139
  %1320 = vmatprep.subr.mxu0 %v1144
  %1321 = vmatpush1.msra.mxu0 %v1143
  %1322 = vmatprep.subr.mxu0 %v1148
  %1323 = vmatpush1.msra.mxu0 %v1147
  %1324 = vmatprep.subr.mxu0 %v1152
  %1325 = vmatpush1.msra.mxu0 %v1151
  %1326 = vmatprep.subr.mxu0 %v1156
  %1327 = vmatpush1.msra.mxu0 %v1155
  %1328 = vmatprep.subr.mxu0 %v1160
  %1329 = vmatpush1.msra.mxu0 %v1159
  %1330 = vmatprep.subr.mxu0 %v1164
  %1331 = vmatpush1.msra.mxu0 %v1163
  %1332 = vmatprep.subr.mxu0 %v1168
  %1333 = vmatpush1.msra.mxu0 %v1167
  %1334 = vmatprep.subr.mxu0 %v1172
  %1335 = vmatpush1.msra.mxu0 %v1171
  %1336 = vmatprep.subr.mxu0 %v1176
  %1337 = vmatpush1.msra.mxu0 %v1175
  %1338 = vmatprep.subr.mxu0 %v1180
  %1339 = vmatpush1.msra.mxu0 %v1179
  %1340 = vmatprep.subr.mxu0 %v1184
  %1341 = vmatpush1.msra.mxu0 %v1183
  %1342 = vmatprep.subr.mxu0 %v1188
  %1343 = vmatpush1.msra.mxu0 %v1187
  %1344 = vmatprep.subr.mxu0 %v1192
  %1345 = vmatpush1.msra.mxu0 %v1191
  %1346 = vmatprep.subr.mxu0 %v1196
  %1347 = vmatpush1.msra.mxu0 %v1195
  %1348 = vmatprep.subr.mxu0 %v1200
  %1349 = vmatpush1.msra.mxu0 %v1199
  %1350 = vmatprep.subr.mxu0 %v1204
  %1351 = vmatpush1.msra.mxu0 %v1203
  %1352 = vmatprep.subr.mxu0 %v1208
  %1353 = vmatpush1.msra.mxu0 %v1207
  %1354 = vmatprep.subr.mxu0 %v1212
  %1355 = vmatpush1.msra.mxu0 %v1211
  %1356 = vmatprep.subr.mxu0 %v1216
  %1357 = vmatpush1.msra.mxu0 %v1215
  %1358 = vmatprep.mubr.f32.mxu0 %v1086
  %1359 = vmatmul.mubr.f32.gmra.mrb[0].mxu0 %v1085
  %v1360 = vpop.f32.mrb[0].mxu0
  %v1361 = vadd.f32 0.0, %v1360
  %v1362 = vpop.f32.mrb[0].mxu0
  %v1363 = vadd.f32 0.0, %v1362
  %1364 = vmatprep.mubr.f32.mxu0 %v1088
  %1365 = vmatmul.mubr.f32.gmra.mrb[0].mxu0 %v1087
  %v1366 = vpop.f32.mrb[0].mxu0
  %v1367 = vadd.f32 0.0, %v1366
  %v1368 = vpop.f32.mrb[0].mxu0
  %v1369 = vadd.f32 0.0, %v1368
  %1370 = vdwg.mxu0
  %s1371 = scalar_lea.vmem %s0, 64
  %v1372 = vld [vmem:[%s1371] sm:$0xff]
  %v1373 = vld [vmem:[%s1371 + $0x8] sm:$0xff]
  %v1374 = vld [vmem:[%s1371 + $0x10] sm:$0xff]
  %v1375 = vld [vmem:[%s1371 + $0x18] sm:$0xff]
  %s1376 = scalar_lea.vmem %s42, 160
  %v1377 = vld [vmem:[%s1376] sm:$0xff]
  %v1378 = vld [vmem:[%s1376 + $0x8] sm:$0xff]
  %v1379 = vld [vmem:[%s1376 + $0x10] sm:$0xff]
  %v1380 = vld [vmem:[%s1376 + $0x18] sm:$0xff]
  %v1381 = vadd.f32 %v1372, %v1284
  %v1382 = vadd.f32 %v1373, %v1286
  %v1383 = vadd.f32 %v1374, %v1361
  %v1384 = vadd.f32 %v1375, %v1363
  %v1385 = vadd.f32 %v1377, %v1290
  %v1386 = vadd.f32 %v1378, %v1292
  %v1387 = vadd.f32 %v1379, %v1367
  %v1388 = vadd.f32 %v1380, %v1369
  %v1389 = vxor.u32 %v1381, 2147483648
  %v1390 = vxor.u32 %v1382, 2147483648
  %v1391 = vxor.u32 %v1383, 2147483648
  %v1392 = vxor.u32 %v1385, 2147483648
  %v1393 = vxor.u32 %v1386, 2147483648
  %v1394 = vxor.u32 %v1387, 2147483648
  %v1395 = vmul.f32 %v1389, 1.442695
  %v1396 = vpow.pop %v1395
  %v1397 = vmul.f32 %v1390, 1.442695
  %v1398 = vpow.pop %v1397
  %v1399 = vmul.f32 %v1391, 1.442695
  %v1400 = vpow.pop %v1399
  %v1401 = vmul.f32 %v1392, 1.442695
  %v1402 = vpow.pop %v1401
  %v1403 = vmul.f32 %v1393, 1.442695
  %v1404 = vpow.pop %v1403
  %v1405 = vmul.f32 %v1394, 1.442695
  %v1406 = vpow.pop %v1405
  %v1407 = vadd.f32 %v1396, 1.0
  %v1408 = vadd.f32 %v1398, 1.0
  %v1409 = vadd.f32 %v1400, 1.0
  %v1410 = vadd.f32 %v1402, 1.0
  %v1411 = vadd.f32 %v1404, 1.0
  %v1412 = vadd.f32 %v1406, 1.0
  %v1413 = vrcp.pop %v1407
  %v1414 = vmul.f32 1.0, %v1413
  %v1415 = vrcp.pop %v1408
  %v1416 = vmul.f32 1.0, %v1415
  %v1417 = vrcp.pop %v1409
  %v1418 = vmul.f32 1.0, %v1417
  %v1419 = vrcp.pop %v1410
  %v1420 = vmul.f32 1.0, %v1419
  %v1421 = vrcp.pop %v1411
  %v1422 = vmul.f32 1.0, %v1421
  %v1423 = vrcp.pop %v1412
  %v1424 = vmul.f32 1.0, %v1423
  %v1425 = vtanh.pop %v1384
  %v1426 = vtanh.pop %v1388
  %v1427 = vld [vmem:[#allocation3] sm:$0xff]
  %v1428 = vld [vmem:[#allocation3 + $0x8] sm:$0xff]
  %v1429 = vmul.f32 %v1416, %v1427
  %v1430 = vmul.f32 %v1422, %v1428
  %v1431 = vmul.f32 %v1414, %v1425
  %v1432 = vmul.f32 %v1420, %v1426
  %v1433 = vadd.f32 %v1429, %v1431
  %v1434 = vadd.f32 %v1430, %v1432
  %v1435 = vtanh.pop %v1433
  %v1436 = vtanh.pop %v1434
  %v1437 = vmul.f32 %v1418, %v1435
  %v1438 = vmul.f32 %v1424, %v1436
  %1439 = vst [vmem:[#allocation3] sm:$0xff] %v1433
  %1440 = vst [vmem:[#allocation3 + $0x8] sm:$0xff] %v1434
  %1441 = vst [vmem:[#allocation2] sm:$0xff] %v1437
  %1442 = vst [vmem:[#allocation2 + $0x18] sm:$0xff] %v1438
  %s1443 = scalar_lea.vmem %s3, 16
  %1444 = vst [vmem:[%s1443] sm:$0xff] %v1437
  %s1445 = scalar_lea.vmem %s50, 40
  %1446 = vst [vmem:[%s1445] sm:$0xff] %v1438
  %v1447 = vld [vmem:[#allocation2] sm:$0xff]
  %v1448 = vld [vmem:[#allocation2 + $0x8] sm:$0xff]
  %v1449 = vld [vmem:[#allocation2 + $0x10] sm:$0xff]
  %v1450 = vld [vmem:[#allocation2 + $0x18] sm:$0xff]
  %v1451 = vld [vmem:[#allocation4] sm:$0xff]
  %v1452 = vld [vmem:[#allocation4 + $0x8] sm:$0xff]
  %v1453 = vld [vmem:[#allocation4 + $0x10] sm:$0xff]
  %v1454 = vld [vmem:[#allocation4 + $0x18] sm:$0xff]
  %v1455 = vld [vmem:[#allocation4 + $0x20] sm:$0xff]
  %v1456 = vld [vmem:[#allocation4 + $0x28] sm:$0xff]
  %v1457 = vld [vmem:[#allocation4 + $0x30] sm:$0xff]
  %v1458 = vld [vmem:[#allocation4 + $0x38] sm:$0xff]
  %v1459 = vld [vmem:[#allocation4 + $0x40] sm:$0xff]
  %v1460 = vld [vmem:[#allocation4 + $0x48] sm:$0xff]
  %v1461 = vld [vmem:[#allocation4 + $0x50] sm:$0xff]
  %v1462 = vld [vmem:[#allocation4 + $0x58] sm:$0xff]
  %v1463 = vld [vmem:[#allocation4 + $0x60] sm:$0xff]
  %v1464 = vld [vmem:[#allocation4 + $0x68] sm:$0xff]
  %v1465 = vld [vmem:[#allocation4 + $0x70] sm:$0xff]
  %v1466 = vld [vmem:[#allocation4 + $0x78] sm:$0xff]
  %v1467 = vld [vmem:[#allocation4 + $0x80] sm:$0xff]
  %v1468 = vld [vmem:[#allocation4 + $0x88] sm:$0xff]
  %v1469 = vld [vmem:[#allocation4 + $0x90] sm:$0xff]
  %v1470 = vld [vmem:[#allocation4 + $0x98] sm:$0xff]
  %v1471 = vld [vmem:[#allocation4 + $0xa0] sm:$0xff]
  %v1472 = vld [vmem:[#allocation4 + $0xa8] sm:$0xff]
  %v1473 = vld [vmem:[#allocation4 + $0xb0] sm:$0xff]
  %v1474 = vld [vmem:[#allocation4 + $0xb8] sm:$0xff]
  %v1475 = vld [vmem:[#allocation4 + $0xc0] sm:$0xff]
  %v1476 = vld [vmem:[#allocation4 + $0xc8] sm:$0xff]
  %v1477 = vld [vmem:[#allocation4 + $0xd0] sm:$0xff]
  %v1478 = vld [vmem:[#allocation4 + $0xd8] sm:$0xff]
  %v1479 = vld [vmem:[#allocation4 + $0xe0] sm:$0xff]
  %v1480 = vld [vmem:[#allocation4 + $0xe8] sm:$0xff]
  %v1481 = vld [vmem:[#allocation4 + $0xf0] sm:$0xff]
  %v1482 = vld [vmem:[#allocation4 + $0xf8] sm:$0xff]
  %v1483 = vld [vmem:[#allocation4 + $0x100] sm:$0xff]
  %v1484 = vld [vmem:[#allocation4 + $0x108] sm:$0xff]
  %v1485 = vld [vmem:[#allocation4 + $0x110] sm:$0xff]
  %v1486 = vld [vmem:[#allocation4 + $0x118] sm:$0xff]
  %v1487 = vld [vmem:[#allocation4 + $0x120] sm:$0xff]
  %v1488 = vld [vmem:[#allocation4 + $0x128] sm:$0xff]
  %v1489 = vld [vmem:[#allocation4 + $0x130] sm:$0xff]
  %v1490 = vld [vmem:[#allocation4 + $0x138] sm:$0xff]
  %v1491 = vld [vmem:[#allocation4 + $0x140] sm:$0xff]
  %v1492 = vld [vmem:[#allocation4 + $0x148] sm:$0xff]
  %v1493 = vld [vmem:[#allocation4 + $0x150] sm:$0xff]
  %v1494 = vld [vmem:[#allocation4 + $0x158] sm:$0xff]
  %v1495 = vld [vmem:[#allocation4 + $0x160] sm:$0xff]
  %v1496 = vld [vmem:[#allocation4 + $0x168] sm:$0xff]
  %v1497 = vld [vmem:[#allocation4 + $0x170] sm:$0xff]
  %v1498 = vld [vmem:[#allocation4 + $0x178] sm:$0xff]
  %v1499 = vld [vmem:[#allocation4 + $0x180] sm:$0xff]
  %v1500 = vld [vmem:[#allocation4 + $0x188] sm:$0xff]
  %v1501 = vld [vmem:[#allocation4 + $0x190] sm:$0xff]
  %v1502 = vld [vmem:[#allocation4 + $0x198] sm:$0xff]
  %v1503 = vld [vmem:[#allocation4 + $0x1a0] sm:$0xff]
  %v1504 = vld [vmem:[#allocation4 + $0x1a8] sm:$0xff]
  %v1505 = vld [vmem:[#allocation4 + $0x1b0] sm:$0xff]
  %v1506 = vld [vmem:[#allocation4 + $0x1b8] sm:$0xff]
  %v1507 = vld [vmem:[#allocation4 + $0x1c0] sm:$0xff]
  %v1508 = vld [vmem:[#allocation4 + $0x1c8] sm:$0xff]
  %v1509 = vld [vmem:[#allocation4 + $0x1d0] sm:$0xff]
  %v1510 = vld [vmem:[#allocation4 + $0x1d8] sm:$0xff]
  %v1511 = vld [vmem:[#allocation4 + $0x1e0] sm:$0xff]
  %v1512 = vld [vmem:[#allocation4 + $0x1e8] sm:$0xff]
  %v1513 = vld [vmem:[#allocation4 + $0x1f0] sm:$0xff]
  %v1514 = vld [vmem:[#allocation4 + $0x1f8] sm:$0xff]
  %v1515 = vld [vmem:[#allocation4 + $0x200] sm:$0xff]
  %v1516 = vld [vmem:[#allocation4 + $0x208] sm:$0xff]
  %v1517 = vld [vmem:[#allocation4 + $0x210] sm:$0xff]
  %v1518 = vld [vmem:[#allocation4 + $0x218] sm:$0xff]
  %v1519 = vld [vmem:[#allocation4 + $0x220] sm:$0xff]
  %v1520 = vld [vmem:[#allocation4 + $0x228] sm:$0xff]
  %v1521 = vld [vmem:[#allocation4 + $0x230] sm:$0xff]
  %v1522 = vld [vmem:[#allocation4 + $0x238] sm:$0xff]
  %v1523 = vld [vmem:[#allocation4 + $0x240] sm:$0xff]
  %v1524 = vld [vmem:[#allocation4 + $0x248] sm:$0xff]
  %v1525 = vld [vmem:[#allocation4 + $0x250] sm:$0xff]
  %v1526 = vld [vmem:[#allocation4 + $0x258] sm:$0xff]
  %v1527 = vld [vmem:[#allocation4 + $0x260] sm:$0xff]
  %v1528 = vld [vmem:[#allocation4 + $0x268] sm:$0xff]
  %v1529 = vld [vmem:[#allocation4 + $0x270] sm:$0xff]
  %v1530 = vld [vmem:[#allocation4 + $0x278] sm:$0xff]
  %v1531 = vld [vmem:[#allocation4 + $0x280] sm:$0xff]
  %v1532 = vld [vmem:[#allocation4 + $0x288] sm:$0xff]
  %v1533 = vld [vmem:[#allocation4 + $0x290] sm:$0xff]
  %v1534 = vld [vmem:[#allocation4 + $0x298] sm:$0xff]
  %v1535 = vld [vmem:[#allocation4 + $0x2a0] sm:$0xff]
  %v1536 = vld [vmem:[#allocation4 + $0x2a8] sm:$0xff]
  %v1537 = vld [vmem:[#allocation4 + $0x2b0] sm:$0xff]
  %v1538 = vld [vmem:[#allocation4 + $0x2b8] sm:$0xff]
  %v1539 = vld [vmem:[#allocation4 + $0x2c0] sm:$0xff]
  %v1540 = vld [vmem:[#allocation4 + $0x2c8] sm:$0xff]
  %v1541 = vld [vmem:[#allocation4 + $0x2d0] sm:$0xff]
  %v1542 = vld [vmem:[#allocation4 + $0x2d8] sm:$0xff]
  %v1543 = vld [vmem:[#allocation4 + $0x2e0] sm:$0xff]
  %v1544 = vld [vmem:[#allocation4 + $0x2e8] sm:$0xff]
  %v1545 = vld [vmem:[#allocation4 + $0x2f0] sm:$0xff]
  %v1546 = vld [vmem:[#allocation4 + $0x2f8] sm:$0xff]
  %v1547 = vld [vmem:[#allocation4 + $0x300] sm:$0xff]
  %v1548 = vld [vmem:[#allocation4 + $0x308] sm:$0xff]
  %v1549 = vld [vmem:[#allocation4 + $0x310] sm:$0xff]
  %v1550 = vld [vmem:[#allocation4 + $0x318] sm:$0xff]
  %v1551 = vld [vmem:[#allocation4 + $0x320] sm:$0xff]
  %v1552 = vld [vmem:[#allocation4 + $0x328] sm:$0xff]
  %v1553 = vld [vmem:[#allocation4 + $0x330] sm:$0xff]
  %v1554 = vld [vmem:[#allocation4 + $0x338] sm:$0xff]
  %v1555 = vld [vmem:[#allocation4 + $0x340] sm:$0xff]
  %v1556 = vld [vmem:[#allocation4 + $0x348] sm:$0xff]
  %v1557 = vld [vmem:[#allocation4 + $0x350] sm:$0xff]
  %v1558 = vld [vmem:[#allocation4 + $0x358] sm:$0xff]
  %v1559 = vld [vmem:[#allocation4 + $0x360] sm:$0xff]
  %v1560 = vld [vmem:[#allocation4 + $0x368] sm:$0xff]
  %v1561 = vld [vmem:[#allocation4 + $0x370] sm:$0xff]
  %v1562 = vld [vmem:[#allocation4 + $0x378] sm:$0xff]
  %v1563 = vld [vmem:[#allocation4 + $0x380] sm:$0xff]
  %v1564 = vld [vmem:[#allocation4 + $0x388] sm:$0xff]
  %v1565 = vld [vmem:[#allocation4 + $0x390] sm:$0xff]
  %v1566 = vld [vmem:[#allocation4 + $0x398] sm:$0xff]
  %v1567 = vld [vmem:[#allocation4 + $0x3a0] sm:$0xff]
  %v1568 = vld [vmem:[#allocation4 + $0x3a8] sm:$0xff]
  %v1569 = vld [vmem:[#allocation4 + $0x3b0] sm:$0xff]
  %v1570 = vld [vmem:[#allocation4 + $0x3b8] sm:$0xff]
  %v1571 = vld [vmem:[#allocation4 + $0x3c0] sm:$0xff]
  %v1572 = vld [vmem:[#allocation4 + $0x3c8] sm:$0xff]
  %v1573 = vld [vmem:[#allocation4 + $0x3d0] sm:$0xff]
  %v1574 = vld [vmem:[#allocation4 + $0x3d8] sm:$0xff]
  %v1575 = vld [vmem:[#allocation4 + $0x3e0] sm:$0xff]
  %v1576 = vld [vmem:[#allocation4 + $0x3e8] sm:$0xff]
  %v1577 = vld [vmem:[#allocation4 + $0x3f0] sm:$0xff]
  %v1578 = vld [vmem:[#allocation4 + $0x3f8] sm:$0xff]
  %1579 = vmatprep.subr.mxu0 %v1452
  %1580 = vmatpush1.msra.mxu0 %v1451
  %1581 = vmatprep.subr.mxu0 %v1456
  %1582 = vmatpush1.msra.mxu0 %v1455
  %1583 = vmatprep.subr.mxu0 %v1460
  %1584 = vmatpush1.msra.mxu0 %v1459
  %1585 = vmatprep.subr.mxu0 %v1464
  %1586 = vmatpush1.msra.mxu0 %v1463
  %1587 = vmatprep.subr.mxu0 %v1468
  %1588 = vmatpush1.msra.mxu0 %v1467
  %1589 = vmatprep.subr.mxu0 %v1472
  %1590 = vmatpush1.msra.mxu0 %v1471
  %1591 = vmatprep.subr.mxu0 %v1476
  %1592 = vmatpush1.msra.mxu0 %v1475
  %1593 = vmatprep.subr.mxu0 %v1480
  %1594 = vmatpush1.msra.mxu0 %v1479
  %1595 = vmatprep.subr.mxu0 %v1484
  %1596 = vmatpush1.msra.mxu0 %v1483
  %1597 = vmatprep.subr.mxu0 %v1488
  %1598 = vmatpush1.msra.mxu0 %v1487
  %1599 = vmatprep.subr.mxu0 %v1492
  %1600 = vmatpush1.msra.mxu0 %v1491
  %1601 = vmatprep.subr.mxu0 %v1496
  %1602 = vmatpush1.msra.mxu0 %v1495
  %1603 = vmatprep.subr.mxu0 %v1500
  %1604 = vmatpush1.msra.mxu0 %v1499
  %1605 = vmatprep.subr.mxu0 %v1504
  %1606 = vmatpush1.msra.mxu0 %v1503
  %1607 = vmatprep.subr.mxu0 %v1508
  %1608 = vmatpush1.msra.mxu0 %v1507
  %1609 = vmatprep.subr.mxu0 %v1512
  %1610 = vmatpush1.msra.mxu0 %v1511
  %1611 = vmatprep.subr.mxu0 %v1516
  %1612 = vmatpush1.msra.mxu0 %v1515
  %1613 = vmatprep.subr.mxu0 %v1520
  %1614 = vmatpush1.msra.mxu0 %v1519
  %1615 = vmatprep.subr.mxu0 %v1524
  %1616 = vmatpush1.msra.mxu0 %v1523
  %1617 = vmatprep.subr.mxu0 %v1528
  %1618 = vmatpush1.msra.mxu0 %v1527
  %1619 = vmatprep.subr.mxu0 %v1532
  %1620 = vmatpush1.msra.mxu0 %v1531
  %1621 = vmatprep.subr.mxu0 %v1536
  %1622 = vmatpush1.msra.mxu0 %v1535
  %1623 = vmatprep.subr.mxu0 %v1540
  %1624 = vmatpush1.msra.mxu0 %v1539
  %1625 = vmatprep.subr.mxu0 %v1544
  %1626 = vmatpush1.msra.mxu0 %v1543
  %1627 = vmatprep.subr.mxu0 %v1548
  %1628 = vmatpush1.msra.mxu0 %v1547
  %1629 = vmatprep.subr.mxu0 %v1552
  %1630 = vmatpush1.msra.mxu0 %v1551
  %1631 = vmatprep.subr.mxu0 %v1556
  %1632 = vmatpush1.msra.mxu0 %v1555
  %1633 = vmatprep.subr.mxu0 %v1560
  %1634 = vmatpush1.msra.mxu0 %v1559
  %1635 = vmatprep.subr.mxu0 %v1564
  %1636 = vmatpush1.msra.mxu0 %v1563
  %1637 = vmatprep.subr.mxu0 %v1568
  %1638 = vmatpush1.msra.mxu0 %v1567
  %1639 = vmatprep.subr.mxu0 %v1572
  %1640 = vmatpush1.msra.mxu0 %v1571
  %1641 = vmatprep.subr.mxu0 %v1576
  %1642 = vmatpush1.msra.mxu0 %v1575
  %1643 = vmatprep.mubr.f32.mxu0 %v1448
  %1644 = vmatmul.mubr.f32.gmra.mrb[0].mxu0 %v1447
  %v1645 = vpop.f32.mrb[0].mxu0
  %v1646 = vadd.f32 0.0, %v1645
  %v1647 = vpop.f32.mrb[0].mxu0
  %v1648 = vadd.f32 0.0, %v1647
  %1649 = vmatprep.mubr.f32.mxu0 %v1450
  %1650 = vmatmul.mubr.f32.gmra.mrb[0].mxu0 %v1449
  %v1651 = vpop.f32.mrb[0].mxu0
  %v1652 = vadd.f32 0.0, %v1651
  %v1653 = vpop.f32.mrb[0].mxu0
  %v1654 = vadd.f32 0.0, %v1653
  %1655 = vdwg.mxu0
  %1656 = vmatprep.subr.mxu0 %v1454
  %1657 = vmatpush1.msra.mxu0 %v1453
  %1658 = vmatprep.subr.mxu0 %v1458
  %1659 = vmatpush1.msra.mxu0 %v1457
  %1660 = vmatprep.subr.mxu0 %v1462
  %1661 = vmatpush1.msra.mxu0 %v1461
  %1662 = vmatprep.subr.mxu0 %v1466
  %1663 = vmatpush1.msra.mxu0 %v1465
  %1664 = vmatprep.subr.mxu0 %v1470
  %1665 = vmatpush1.msra.mxu0 %v1469
  %1666 = vmatprep.subr.mxu0 %v1474
  %1667 = vmatpush1.msra.mxu0 %v1473
  %1668 = vmatprep.subr.mxu0 %v1478
  %1669 = vmatpush1.msra.mxu0 %v1477
  %1670 = vmatprep.subr.mxu0 %v1482
  %1671 = vmatpush1.msra.mxu0 %v1481
  %1672 = vmatprep.subr.mxu0 %v1486
  %1673 = vmatpush1.msra.mxu0 %v1485
  %1674 = vmatprep.subr.mxu0 %v1490
  %1675 = vmatpush1.msra.mxu0 %v1489
  %1676 = vmatprep.subr.mxu0 %v1494
  %1677 = vmatpush1.msra.mxu0 %v1493
  %1678 = vmatprep.subr.mxu0 %v1498
  %1679 = vmatpush1.msra.mxu0 %v1497
  %1680 = vmatprep.subr.mxu0 %v1502
  %1681 = vmatpush1.msra.mxu0 %v1501
  %1682 = vmatprep.subr.mxu0 %v1506
  %1683 = vmatpush1.msra.mxu0 %v1505
  %1684 = vmatprep.subr.mxu0 %v1510
  %1685 = vmatpush1.msra.mxu0 %v1509
  %1686 = vmatprep.subr.mxu0 %v1514
  %1687 = vmatpush1.msra.mxu0 %v1513
  %1688 = vmatprep.subr.mxu0 %v1518
  %1689 = vmatpush1.msra.mxu0 %v1517
  %1690 = vmatprep.subr.mxu0 %v1522
  %1691 = vmatpush1.msra.mxu0 %v1521
  %1692 = vmatprep.subr.mxu0 %v1526
  %1693 = vmatpush1.msra.mxu0 %v1525
  %1694 = vmatprep.subr.mxu0 %v1530
  %1695 = vmatpush1.msra.mxu0 %v1529
  %1696 = vmatprep.subr.mxu0 %v1534
  %1697 = vmatpush1.msra.mxu0 %v1533
  %1698 = vmatprep.subr.mxu0 %v1538
  %1699 = vmatpush1.msra.mxu0 %v1537
  %1700 = vmatprep.subr.mxu0 %v1542
  %1701 = vmatpush1.msra.mxu0 %v1541
  %1702 = vmatprep.subr.mxu0 %v1546
  %1703 = vmatpush1.msra.mxu0 %v1545
  %1704 = vmatprep.subr.mxu0 %v1550
  %1705 = vmatpush1.msra.mxu0 %v1549
  %1706 = vmatprep.subr.mxu0 %v1554
  %1707 = vmatpush1.msra.mxu0 %v1553
  %1708 = vmatprep.subr.mxu0 %v1558
  %1709 = vmatpush1.msra.mxu0 %v1557
  %1710 = vmatprep.subr.mxu0 %v1562
  %1711 = vmatpush1.msra.mxu0 %v1561
  %1712 = vmatprep.subr.mxu0 %v1566
  %1713 = vmatpush1.msra.mxu0 %v1565
  %1714 = vmatprep.subr.mxu0 %v1570
  %1715 = vmatpush1.msra.mxu0 %v1569
  %1716 = vmatprep.subr.mxu0 %v1574
  %1717 = vmatpush1.msra.mxu0 %v1573
  %1718 = vmatprep.subr.mxu0 %v1578
  %1719 = vmatpush1.msra.mxu0 %v1577
  %1720 = vmatprep.mubr.f32.mxu0 %v1448
  %1721 = vmatmul.mubr.f32.gmra.mrb[0].mxu0 %v1447
  %v1722 = vpop.f32.mrb[0].mxu0
  %v1723 = vadd.f32 0.0, %v1722
  %v1724 = vpop.f32.mrb[0].mxu0
  %v1725 = vadd.f32 0.0, %v1724
  %1726 = vmatprep.mubr.f32.mxu0 %v1450
  %1727 = vmatmul.mubr.f32.gmra.mrb[0].mxu0 %v1449
  %v1728 = vpop.f32.mrb[0].mxu0
  %v1729 = vadd.f32 0.0, %v1728
  %v1730 = vpop.f32.mrb[0].mxu0
  %v1731 = vadd.f32 0.0, %v1730
  %1732 = vdwg.mxu0
  %s1733 = scalar_lea.vmem %s0, 96
  %v1734 = vld [vmem:[%s1733] sm:$0xff]
  %v1735 = vld [vmem:[%s1733 + $0x8] sm:$0xff]
  %v1736 = vld [vmem:[%s1733 + $0x10] sm:$0xff]
  %v1737 = vld [vmem:[%s1733 + $0x18] sm:$0xff]
  %s1738 = scalar_lea.vmem %s42, 128
  %v1739 = vld [vmem:[%s1738] sm:$0xff]
  %v1740 = vld [vmem:[%s1738 + $0x8] sm:$0xff]
  %v1741 = vld [vmem:[%s1738 + $0x10] sm:$0xff]
  %v1742 = vld [vmem:[%s1738 + $0x18] sm:$0xff]
  %v1743 = vadd.f32 %v1734, %v1646
  %v1744 = vadd.f32 %v1735, %v1648
  %v1745 = vadd.f32 %v1736, %v1723
  %v1746 = vadd.f32 %v1737, %v1725
  %v1747 = vadd.f32 %v1739, %v1652
  %v1748 = vadd.f32 %v1740, %v1654
  %v1749 = vadd.f32 %v1741, %v1729
  %v1750 = vadd.f32 %v1742, %v1731
  %v1751 = vxor.u32 %v1743, 2147483648
  %v1752 = vxor.u32 %v1744, 2147483648
  %v1753 = vxor.u32 %v1745, 2147483648
  %v1754 = vxor.u32 %v1747, 2147483648
  %v1755 = vxor.u32 %v1748, 2147483648
  %v1756 = vxor.u32 %v1749, 2147483648
  %v1757 = vmul.f32 %v1751, 1.442695
  %v1758 = vpow.pop %v1757
  %v1759 = vmul.f32 %v1752, 1.442695
  %v1760 = vpow.pop %v1759
  %v1761 = vmul.f32 %v1753, 1.442695
  %v1762 = vpow.pop %v1761
  %v1763 = vmul.f32 %v1754, 1.442695
  %v1764 = vpow.pop %v1763
  %v1765 = vmul.f32 %v1755, 1.442695
  %v1766 = vpow.pop %v1765
  %v1767 = vmul.f32 %v1756, 1.442695
  %v1768 = vpow.pop %v1767
  %v1769 = vadd.f32 %v1758, 1.0
  %v1770 = vadd.f32 %v1760, 1.0
  %v1771 = vadd.f32 %v1762, 1.0
  %v1772 = vadd.f32 %v1764, 1.0
  %v1773 = vadd.f32 %v1766, 1.0
  %v1774 = vadd.f32 %v1768, 1.0
  %v1775 = vrcp.pop %v1769
  %v1776 = vmul.f32 1.0, %v1775
  %v1777 = vrcp.pop %v1770
  %v1778 = vmul.f32 1.0, %v1777
  %v1779 = vrcp.pop %v1771
  %v1780 = vmul.f32 1.0, %v1779
  %v1781 = vrcp.pop %v1772
  %v1782 = vmul.f32 1.0, %v1781
  %v1783 = vrcp.pop %v1773
  %v1784 = vmul.f32 1.0, %v1783
  %v1785 = vrcp.pop %v1774
  %v1786 = vmul.f32 1.0, %v1785
  %v1787 = vtanh.pop %v1746
  %v1788 = vtanh.pop %v1750
  %v1789 = vld [vmem:[#allocation3] sm:$0xff]
  %v1790 = vld [vmem:[#allocation3 + $0x8] sm:$0xff]
  %v1791 = vmul.f32 %v1778, %v1789
  %v1792 = vmul.f32 %v1784, %v1790
  %v1793 = vmul.f32 %v1776, %v1787
  %v1794 = vmul.f32 %v1782, %v1788
  %v1795 = vadd.f32 %v1791, %v1793
  %v1796 = vadd.f32 %v1792, %v1794
  %v1797 = vtanh.pop %v1795
  %v1798 = vtanh.pop %v1796
  %v1799 = vmul.f32 %v1780, %v1797
  %v1800 = vmul.f32 %v1786, %v1798
  %1801 = vst [vmem:[#allocation3] sm:$0xff] %v1795
  %1802 = vst [vmem:[#allocation3 + $0x8] sm:$0xff] %v1796
  %1803 = vst [vmem:[#allocation2] sm:$0xff] %v1799
  %1804 = vst [vmem:[#allocation2 + $0x18] sm:$0xff] %v1800
  %s1805 = scalar_lea.vmem %s3, 24
  %1806 = vst [vmem:[%s1805] sm:$0xff] %v1799
  %s1807 = scalar_lea.vmem %s50, 32
  %1808 = vst [vmem:[%s1807] sm:$0xff] %v1800
  %v1809 = vld [vmem:[#allocation2] sm:$0xff]
  %v1810 = vld [vmem:[#allocation2 + $0x8] sm:$0xff]
  %v1811 = vld [vmem:[#allocation2 + $0x10] sm:$0xff]
  %v1812 = vld [vmem:[#allocation2 + $0x18] sm:$0xff]
  %v1813 = vld [vmem:[#allocation4] sm:$0xff]
  %v1814 = vld [vmem:[#allocation4 + $0x8] sm:$0xff]
  %v1815 = vld [vmem:[#allocation4 + $0x10] sm:$0xff]
  %v1816 = vld [vmem:[#allocation4 + $0x18] sm:$0xff]
  %v1817 = vld [vmem:[#allocation4 + $0x20] sm:$0xff]
  %v1818 = vld [vmem:[#allocation4 + $0x28] sm:$0xff]
  %v1819 = vld [vmem:[#allocation4 + $0x30] sm:$0xff]
  %v1820 = vld [vmem:[#allocation4 + $0x38] sm:$0xff]
  %v1821 = vld [vmem:[#allocation4 + $0x40] sm:$0xff]
  %v1822 = vld [vmem:[#allocation4 + $0x48] sm:$0xff]
  %v1823 = vld [vmem:[#allocation4 + $0x50] sm:$0xff]
  %v1824 = vld [vmem:[#allocation4 + $0x58] sm:$0xff]
  %v1825 = vld [vmem:[#allocation4 + $0x60] sm:$0xff]
  %v1826 = vld [vmem:[#allocation4 + $0x68] sm:$0xff]
  %v1827 = vld [vmem:[#allocation4 + $0x70] sm:$0xff]
  %v1828 = vld [vmem:[#allocation4 + $0x78] sm:$0xff]
  %v1829 = vld [vmem:[#allocation4 + $0x80] sm:$0xff]
  %v1830 = vld [vmem:[#allocation4 + $0x88] sm:$0xff]
  %v1831 = vld [vmem:[#allocation4 + $0x90] sm:$0xff]
  %v1832 = vld [vmem:[#allocation4 + $0x98] sm:$0xff]
  %v1833 = vld [vmem:[#allocation4 + $0xa0] sm:$0xff]
  %v1834 = vld [vmem:[#allocation4 + $0xa8] sm:$0xff]
  %v1835 = vld [vmem:[#allocation4 + $0xb0] sm:$0xff]
  %v1836 = vld [vmem:[#allocation4 + $0xb8] sm:$0xff]
  %v1837 = vld [vmem:[#allocation4 + $0xc0] sm:$0xff]
  %v1838 = vld [vmem:[#allocation4 + $0xc8] sm:$0xff]
  %v1839 = vld [vmem:[#allocation4 + $0xd0] sm:$0xff]
  %v1840 = vld [vmem:[#allocation4 + $0xd8] sm:$0xff]
  %v1841 = vld [vmem:[#allocation4 + $0xe0] sm:$0xff]
  %v1842 = vld [vmem:[#allocation4 + $0xe8] sm:$0xff]
  %v1843 = vld [vmem:[#allocation4 + $0xf0] sm:$0xff]
  %v1844 = vld [vmem:[#allocation4 + $0xf8] sm:$0xff]
  %v1845 = vld [vmem:[#allocation4 + $0x100] sm:$0xff]
  %v1846 = vld [vmem:[#allocation4 + $0x108] sm:$0xff]
  %v1847 = vld [vmem:[#allocation4 + $0x110] sm:$0xff]
  %v1848 = vld [vmem:[#allocation4 + $0x118] sm:$0xff]
  %v1849 = vld [vmem:[#allocation4 + $0x120] sm:$0xff]
  %v1850 = vld [vmem:[#allocation4 + $0x128] sm:$0xff]
  %v1851 = vld [vmem:[#allocation4 + $0x130] sm:$0xff]
  %v1852 = vld [vmem:[#allocation4 + $0x138] sm:$0xff]
  %v1853 = vld [vmem:[#allocation4 + $0x140] sm:$0xff]
  %v1854 = vld [vmem:[#allocation4 + $0x148] sm:$0xff]
  %v1855 = vld [vmem:[#allocation4 + $0x150] sm:$0xff]
  %v1856 = vld [vmem:[#allocation4 + $0x158] sm:$0xff]
  %v1857 = vld [vmem:[#allocation4 + $0x160] sm:$0xff]
  %v1858 = vld [vmem:[#allocation4 + $0x168] sm:$0xff]
  %v1859 = vld [vmem:[#allocation4 + $0x170] sm:$0xff]
  %v1860 = vld [vmem:[#allocation4 + $0x178] sm:$0xff]
  %v1861 = vld [vmem:[#allocation4 + $0x180] sm:$0xff]
  %v1862 = vld [vmem:[#allocation4 + $0x188] sm:$0xff]
  %v1863 = vld [vmem:[#allocation4 + $0x190] sm:$0xff]
  %v1864 = vld [vmem:[#allocation4 + $0x198] sm:$0xff]
  %v1865 = vld [vmem:[#allocation4 + $0x1a0] sm:$0xff]
  %v1866 = vld [vmem:[#allocation4 + $0x1a8] sm:$0xff]
  %v1867 = vld [vmem:[#allocation4 + $0x1b0] sm:$0xff]
  %v1868 = vld [vmem:[#allocation4 + $0x1b8] sm:$0xff]
  %v1869 = vld [vmem:[#allocation4 + $0x1c0] sm:$0xff]
  %v1870 = vld [vmem:[#allocation4 + $0x1c8] sm:$0xff]
  %v1871 = vld [vmem:[#allocation4 + $0x1d0] sm:$0xff]
  %v1872 = vld [vmem:[#allocation4 + $0x1d8] sm:$0xff]
  %v1873 = vld [vmem:[#allocation4 + $0x1e0] sm:$0xff]
  %v1874 = vld [vmem:[#allocation4 + $0x1e8] sm:$0xff]
  %v1875 = vld [vmem:[#allocation4 + $0x1f0] sm:$0xff]
  %v1876 = vld [vmem:[#allocation4 + $0x1f8] sm:$0xff]
  %v1877 = vld [vmem:[#allocation4 + $0x200] sm:$0xff]
  %v1878 = vld [vmem:[#allocation4 + $0x208] sm:$0xff]
  %v1879 = vld [vmem:[#allocation4 + $0x210] sm:$0xff]
  %v1880 = vld [vmem:[#allocation4 + $0x218] sm:$0xff]
  %v1881 = vld [vmem:[#allocation4 + $0x220] sm:$0xff]
  %v1882 = vld [vmem:[#allocation4 + $0x228] sm:$0xff]
  %v1883 = vld [vmem:[#allocation4 + $0x230] sm:$0xff]
  %v1884 = vld [vmem:[#allocation4 + $0x238] sm:$0xff]
  %v1885 = vld [vmem:[#allocation4 + $0x240] sm:$0xff]
  %v1886 = vld [vmem:[#allocation4 + $0x248] sm:$0xff]
  %v1887 = vld [vmem:[#allocation4 + $0x250] sm:$0xff]
  %v1888 = vld [vmem:[#allocation4 + $0x258] sm:$0xff]
  %v1889 = vld [vmem:[#allocation4 + $0x260] sm:$0xff]
  %v1890 = vld [vmem:[#allocation4 + $0x268] sm:$0xff]
  %v1891 = vld [vmem:[#allocation4 + $0x270] sm:$0xff]
  %v1892 = vld [vmem:[#allocation4 + $0x278] sm:$0xff]
  %v1893 = vld [vmem:[#allocation4 + $0x280] sm:$0xff]
  %v1894 = vld [vmem:[#allocation4 + $0x288] sm:$0xff]
  %v1895 = vld [vmem:[#allocation4 + $0x290] sm:$0xff]
  %v1896 = vld [vmem:[#allocation4 + $0x298] sm:$0xff]
  %v1897 = vld [vmem:[#allocation4 + $0x2a0] sm:$0xff]
  %v1898 = vld [vmem:[#allocation4 + $0x2a8] sm:$0xff]
  %v1899 = vld [vmem:[#allocation4 + $0x2b0] sm:$0xff]
  %v1900 = vld [vmem:[#allocation4 + $0x2b8] sm:$0xff]
  %v1901 = vld [vmem:[#allocation4 + $0x2c0] sm:$0xff]
  %v1902 = vld [vmem:[#allocation4 + $0x2c8] sm:$0xff]
  %v1903 = vld [vmem:[#allocation4 + $0x2d0] sm:$0xff]
  %v1904 = vld [vmem:[#allocation4 + $0x2d8] sm:$0xff]
  %v1905 = vld [vmem:[#allocation4 + $0x2e0] sm:$0xff]
  %v1906 = vld [vmem:[#allocation4 + $0x2e8] sm:$0xff]
  %v1907 = vld [vmem:[#allocation4 + $0x2f0] sm:$0xff]
  %v1908 = vld [vmem:[#allocation4 + $0x2f8] sm:$0xff]
  %v1909 = vld [vmem:[#allocation4 + $0x300] sm:$0xff]
  %v1910 = vld [vmem:[#allocation4 + $0x308] sm:$0xff]
  %v1911 = vld [vmem:[#allocation4 + $0x310] sm:$0xff]
  %v1912 = vld [vmem:[#allocation4 + $0x318] sm:$0xff]
  %v1913 = vld [vmem:[#allocation4 + $0x320] sm:$0xff]
  %v1914 = vld [vmem:[#allocation4 + $0x328] sm:$0xff]
  %v1915 = vld [vmem:[#allocation4 + $0x330] sm:$0xff]
  %v1916 = vld [vmem:[#allocation4 + $0x338] sm:$0xff]
  %v1917 = vld [vmem:[#allocation4 + $0x340] sm:$0xff]
  %v1918 = vld [vmem:[#allocation4 + $0x348] sm:$0xff]
  %v1919 = vld [vmem:[#allocation4 + $0x350] sm:$0xff]
  %v1920 = vld [vmem:[#allocation4 + $0x358] sm:$0xff]
  %v1921 = vld [vmem:[#allocation4 + $0x360] sm:$0xff]
  %v1922 = vld [vmem:[#allocation4 + $0x368] sm:$0xff]
  %v1923 = vld [vmem:[#allocation4 + $0x370] sm:$0xff]
  %v1924 = vld [vmem:[#allocation4 + $0x378] sm:$0xff]
  %v1925 = vld [vmem:[#allocation4 + $0x380] sm:$0xff]
  %v1926 = vld [vmem:[#allocation4 + $0x388] sm:$0xff]
  %v1927 = vld [vmem:[#allocation4 + $0x390] sm:$0xff]
  %v1928 = vld [vmem:[#allocation4 + $0x398] sm:$0xff]
  %v1929 = vld [vmem:[#allocation4 + $0x3a0] sm:$0xff]
  %v1930 = vld [vmem:[#allocation4 + $0x3a8] sm:$0xff]
  %v1931 = vld [vmem:[#allocation4 + $0x3b0] sm:$0xff]
  %v1932 = vld [vmem:[#allocation4 + $0x3b8] sm:$0xff]
  %v1933 = vld [vmem:[#allocation4 + $0x3c0] sm:$0xff]
  %v1934 = vld [vmem:[#allocation4 + $0x3c8] sm:$0xff]
  %v1935 = vld [vmem:[#allocation4 + $0x3d0] sm:$0xff]
  %v1936 = vld [vmem:[#allocation4 + $0x3d8] sm:$0xff]
  %v1937 = vld [vmem:[#allocation4 + $0x3e0] sm:$0xff]
  %v1938 = vld [vmem:[#allocation4 + $0x3e8] sm:$0xff]
  %v1939 = vld [vmem:[#allocation4 + $0x3f0] sm:$0xff]
  %v1940 = vld [vmem:[#allocation4 + $0x3f8] sm:$0xff]
  %1941 = vmatprep.subr.mxu0 %v1814
  %1942 = vmatpush1.msra.mxu0 %v1813
  %1943 = vmatprep.subr.mxu0 %v1818
  %1944 = vmatpush1.msra.mxu0 %v1817
  %1945 = vmatprep.subr.mxu0 %v1822
  %1946 = vmatpush1.msra.mxu0 %v1821
  %1947 = vmatprep.subr.mxu0 %v1826
  %1948 = vmatpush1.msra.mxu0 %v1825
  %1949 = vmatprep.subr.mxu0 %v1830
  %1950 = vmatpush1.msra.mxu0 %v1829
  %1951 = vmatprep.subr.mxu0 %v1834
  %1952 = vmatpush1.msra.mxu0 %v1833
  %1953 = vmatprep.subr.mxu0 %v1838
  %1954 = vmatpush1.msra.mxu0 %v1837
  %1955 = vmatprep.subr.mxu0 %v1842
  %1956 = vmatpush1.msra.mxu0 %v1841
  %1957 = vmatprep.subr.mxu0 %v1846
  %1958 = vmatpush1.msra.mxu0 %v1845
  %1959 = vmatprep.subr.mxu0 %v1850
  %1960 = vmatpush1.msra.mxu0 %v1849
  %1961 = vmatprep.subr.mxu0 %v1854
  %1962 = vmatpush1.msra.mxu0 %v1853
  %1963 = vmatprep.subr.mxu0 %v1858
  %1964 = vmatpush1.msra.mxu0 %v1857
  %1965 = vmatprep.subr.mxu0 %v1862
  %1966 = vmatpush1.msra.mxu0 %v1861
  %1967 = vmatprep.subr.mxu0 %v1866
  %1968 = vmatpush1.msra.mxu0 %v1865
  %1969 = vmatprep.subr.mxu0 %v1870
  %1970 = vmatpush1.msra.mxu0 %v1869
  %1971 = vmatprep.subr.mxu0 %v1874
  %1972 = vmatpush1.msra.mxu0 %v1873
  %1973 = vmatprep.subr.mxu0 %v1878
  %1974 = vmatpush1.msra.mxu0 %v1877
  %1975 = vmatprep.subr.mxu0 %v1882
  %1976 = vmatpush1.msra.mxu0 %v1881
  %1977 = vmatprep.subr.mxu0 %v1886
  %1978 = vmatpush1.msra.mxu0 %v1885
  %1979 = vmatprep.subr.mxu0 %v1890
  %1980 = vmatpush1.msra.mxu0 %v1889
  %1981 = vmatprep.subr.mxu0 %v1894
  %1982 = vmatpush1.msra.mxu0 %v1893
  %1983 = vmatprep.subr.mxu0 %v1898
  %1984 = vmatpush1.msra.mxu0 %v1897
  %1985 = vmatprep.subr.mxu0 %v1902
  %1986 = vmatpush1.msra.mxu0 %v1901
  %1987 = vmatprep.subr.mxu0 %v1906
  %1988 = vmatpush1.msra.mxu0 %v1905
  %1989 = vmatprep.subr.mxu0 %v1910
  %1990 = vmatpush1.msra.mxu0 %v1909
  %1991 = vmatprep.subr.mxu0 %v1914
  %1992 = vmatpush1.msra.mxu0 %v1913
  %1993 = vmatprep.subr.mxu0 %v1918
  %1994 = vmatpush1.msra.mxu0 %v1917
  %1995 = vmatprep.subr.mxu0 %v1922
  %1996 = vmatpush1.msra.mxu0 %v1921
  %1997 = vmatprep.subr.mxu0 %v1926
  %1998 = vmatpush1.msra.mxu0 %v1925
  %1999 = vmatprep.subr.mxu0 %v1930
  %2000 = vmatpush1.msra.mxu0 %v1929
  %2001 = vmatprep.subr.mxu0 %v1934
  %2002 = vmatpush1.msra.mxu0 %v1933
  %2003 = vmatprep.subr.mxu0 %v1938
  %2004 = vmatpush1.msra.mxu0 %v1937
  %2005 = vmatprep.mubr.f32.mxu0 %v1810
  %2006 = vmatmul.mubr.f32.gmra.mrb[0].mxu0 %v1809
  %v2007 = vpop.f32.mrb[0].mxu0
  %v2008 = vadd.f32 0.0, %v2007
  %v2009 = vpop.f32.mrb[0].mxu0
  %v2010 = vadd.f32 0.0, %v2009
  %2011 = vmatprep.mubr.f32.mxu0 %v1812
  %2012 = vmatmul.mubr.f32.gmra.mrb[0].mxu0 %v1811
  %v2013 = vpop.f32.mrb[0].mxu0
  %v2014 = vadd.f32 0.0, %v2013
  %v2015 = vpop.f32.mrb[0].mxu0
  %v2016 = vadd.f32 0.0, %v2015
  %2017 = vdwg.mxu0
  %2018 = vmatprep.subr.mxu0 %v1816
  %2019 = vmatpush1.msra.mxu0 %v1815
  %2020 = vmatprep.subr.mxu0 %v1820
  %2021 = vmatpush1.msra.mxu0 %v1819
  %2022 = vmatprep.subr.mxu0 %v1824
  %2023 = vmatpush1.msra.mxu0 %v1823
  %2024 = vmatprep.subr.mxu0 %v1828
  %2025 = vmatpush1.msra.mxu0 %v1827
  %2026 = vmatprep.subr.mxu0 %v1832
  %2027 = vmatpush1.msra.mxu0 %v1831
  %2028 = vmatprep.subr.mxu0 %v1836
  %2029 = vmatpush1.msra.mxu0 %v1835
  %2030 = vmatprep.subr.mxu0 %v1840
  %2031 = vmatpush1.msra.mxu0 %v1839
  %2032 = vmatprep.subr.mxu0 %v1844
  %2033 = vmatpush1.msra.mxu0 %v1843
  %2034 = vmatprep.subr.mxu0 %v1848
  %2035 = vmatpush1.msra.mxu0 %v1847
  %2036 = vmatprep.subr.mxu0 %v1852
  %2037 = vmatpush1.msra.mxu0 %v1851
  %2038 = vmatprep.subr.mxu0 %v1856
  %2039 = vmatpush1.msra.mxu0 %v1855
  %2040 = vmatprep.subr.mxu0 %v1860
  %2041 = vmatpush1.msra.mxu0 %v1859
  %2042 = vmatprep.subr.mxu0 %v1864
  %2043 = vmatpush1.msra.mxu0 %v1863
  %2044 = vmatprep.subr.mxu0 %v1868
  %2045 = vmatpush1.msra.mxu0 %v1867
  %2046 = vmatprep.subr.mxu0 %v1872
  %2047 = vmatpush1.msra.mxu0 %v1871
  %2048 = vmatprep.subr.mxu0 %v1876
  %2049 = vmatpush1.msra.mxu0 %v1875
  %2050 = vmatprep.subr.mxu0 %v1880
  %2051 = vmatpush1.msra.mxu0 %v1879
  %2052 = vmatprep.subr.mxu0 %v1884
  %2053 = vmatpush1.msra.mxu0 %v1883
  %2054 = vmatprep.subr.mxu0 %v1888
  %2055 = vmatpush1.msra.mxu0 %v1887
  %2056 = vmatprep.subr.mxu0 %v1892
  %2057 = vmatpush1.msra.mxu0 %v1891
  %2058 = vmatprep.subr.mxu0 %v1896
  %2059 = vmatpush1.msra.mxu0 %v1895
  %2060 = vmatprep.subr.mxu0 %v1900
  %2061 = vmatpush1.msra.mxu0 %v1899
  %2062 = vmatprep.subr.mxu0 %v1904
  %2063 = vmatpush1.msra.mxu0 %v1903
  %2064 = vmatprep.subr.mxu0 %v1908
  %2065 = vmatpush1.msra.mxu0 %v1907
  %2066 = vmatprep.subr.mxu0 %v1912
  %2067 = vmatpush1.msra.mxu0 %v1911
  %2068 = vmatprep.subr.mxu0 %v1916
  %2069 = vmatpush1.msra.mxu0 %v1915
  %2070 = vmatprep.subr.mxu0 %v1920
  %2071 = vmatpush1.msra.mxu0 %v1919
  %2072 = vmatprep.subr.mxu0 %v1924
  %2073 = vmatpush1.msra.mxu0 %v1923
  %2074 = vmatprep.subr.mxu0 %v1928
  %2075 = vmatpush1.msra.mxu0 %v1927
  %2076 = vmatprep.subr.mxu0 %v1932
  %2077 = vmatpush1.msra.mxu0 %v1931
  %2078 = vmatprep.subr.mxu0 %v1936
  %2079 = vmatpush1.msra.mxu0 %v1935
  %2080 = vmatprep.subr.mxu0 %v1940
  %2081 = vmatpush1.msra.mxu0 %v1939
  %2082 = vmatprep.mubr.f32.mxu0 %v1810
  %2083 = vmatmul.mubr.f32.gmra.mrb[0].mxu0 %v1809
  %v2084 = vpop.f32.mrb[0].mxu0
  %v2085 = vadd.f32 0.0, %v2084
  %v2086 = vpop.f32.mrb[0].mxu0
  %v2087 = vadd.f32 0.0, %v2086
  %2088 = vmatprep.mubr.f32.mxu0 %v1812
  %2089 = vmatmul.mubr.f32.gmra.mrb[0].mxu0 %v1811
  %v2090 = vpop.f32.mrb[0].mxu0
  %v2091 = vadd.f32 0.0, %v2090
  %v2092 = vpop.f32.mrb[0].mxu0
  %v2093 = vadd.f32 0.0, %v2092
  %2094 = vdwg.mxu0
  %s2095 = scalar_lea.vmem %s0, 128
  %v2096 = vld [vmem:[%s2095] sm:$0xff]
  %v2097 = vld [vmem:[%s2095 + $0x8] sm:$0xff]
  %v2098 = vld [vmem:[%s2095 + $0x10] sm:$0xff]
  %v2099 = vld [vmem:[%s2095 + $0x18] sm:$0xff]
  %s2100 = scalar_lea.vmem %s42, 96
  %v2101 = vld [vmem:[%s2100] sm:$0xff]
  %v2102 = vld [vmem:[%s2100 + $0x8] sm:$0xff]
  %v2103 = vld [vmem:[%s2100 + $0x10] sm:$0xff]
  %v2104 = vld [vmem:[%s2100 + $0x18] sm:$0xff]
  %v2105 = vadd.f32 %v2096, %v2008
  %v2106 = vadd.f32 %v2097, %v2010
  %v2107 = vadd.f32 %v2098, %v2085
  %v2108 = vadd.f32 %v2099, %v2087
  %v2109 = vadd.f32 %v2101, %v2014
  %v2110 = vadd.f32 %v2102, %v2016
  %v2111 = vadd.f32 %v2103, %v2091
  %v2112 = vadd.f32 %v2104, %v2093
  %v2113 = vxor.u32 %v2105, 2147483648
  %v2114 = vxor.u32 %v2106, 2147483648
  %v2115 = vxor.u32 %v2107, 2147483648
  %v2116 = vxor.u32 %v2109, 2147483648
  %v2117 = vxor.u32 %v2110, 2147483648
  %v2118 = vxor.u32 %v2111, 2147483648
  %v2119 = vmul.f32 %v2113, 1.442695
  %v2120 = vpow.pop %v2119
  %v2121 = vmul.f32 %v2114, 1.442695
  %v2122 = vpow.pop %v2121
  %v2123 = vmul.f32 %v2115, 1.442695
  %v2124 = vpow.pop %v2123
  %v2125 = vmul.f32 %v2116, 1.442695
  %v2126 = vpow.pop %v2125
  %v2127 = vmul.f32 %v2117, 1.442695
  %v2128 = vpow.pop %v2127
  %v2129 = vmul.f32 %v2118, 1.442695
  %v2130 = vpow.pop %v2129
  %v2131 = vadd.f32 %v2120, 1.0
  %v2132 = vadd.f32 %v2122, 1.0
  %v2133 = vadd.f32 %v2124, 1.0
  %v2134 = vadd.f32 %v2126, 1.0
  %v2135 = vadd.f32 %v2128, 1.0
  %v2136 = vadd.f32 %v2130, 1.0
  %v2137 = vrcp.pop %v2131
  %v2138 = vmul.f32 1.0, %v2137
  %v2139 = vrcp.pop %v2132
  %v2140 = vmul.f32 1.0, %v2139
  %v2141 = vrcp.pop %v2133
  %v2142 = vmul.f32 1.0, %v2141
  %v2143 = vrcp.pop %v2134
  %v2144 = vmul.f32 1.0, %v2143
  %v2145 = vrcp.pop %v2135
  %v2146 = vmul.f32 1.0, %v2145
  %v2147 = vrcp.pop %v2136
  %v2148 = vmul.f32 1.0, %v2147
  %v2149 = vtanh.pop %v2108
  %v2150 = vtanh.pop %v2112
  %v2151 = vld [vmem:[#allocation3] sm:$0xff]
  %v2152 = vld [vmem:[#allocation3 + $0x8] sm:$0xff]
  %v2153 = vmul.f32 %v2140, %v2151
  %v2154 = vmul.f32 %v2146, %v2152
  %v2155 = vmul.f32 %v2138, %v2149
  %v2156 = vmul.f32 %v2144, %v2150
  %v2157 = vadd.f32 %v2153, %v2155
  %v2158 = vadd.f32 %v2154, %v2156
  %v2159 = vtanh.pop %v2157
  %v2160 = vtanh.pop %v2158
  %v2161 = vmul.f32 %v2142, %v2159
  %v2162 = vmul.f32 %v2148, %v2160
  %2163 = vst [vmem:[#allocation3] sm:$0xff] %v2157
  %2164 = vst [vmem:[#allocation3 + $0x8] sm:$0xff] %v2158
  %2165 = vst [vmem:[#allocation2] sm:$0xff] %v2161
  %2166 = vst [vmem:[#allocation2 + $0x18] sm:$0xff] %v2162
  %s2167 = scalar_lea.vmem %s3, 32
  %2168 = vst [vmem:[%s2167] sm:$0xff] %v2161
  %s2169 = scalar_lea.vmem %s50, 24
  %2170 = vst [vmem:[%s2169] sm:$0xff] %v2162
  %v2171 = vld [vmem:[#allocation2] sm:$0xff]
  %v2172 = vld [vmem:[#allocation2 + $0x8] sm:$0xff]
  %v2173 = vld [vmem:[#allocation2 + $0x10] sm:$0xff]
  %v2174 = vld [vmem:[#allocation2 + $0x18] sm:$0xff]
  %v2175 = vld [vmem:[#allocation4] sm:$0xff]
  %v2176 = vld [vmem:[#allocation4 + $0x8] sm:$0xff]
  %v2177 = vld [vmem:[#allocation4 + $0x10] sm:$0xff]
  %v2178 = vld [vmem:[#allocation4 + $0x18] sm:$0xff]
  %v2179 = vld [vmem:[#allocation4 + $0x20] sm:$0xff]
  %v2180 = vld [vmem:[#allocation4 + $0x28] sm:$0xff]
  %v2181 = vld [vmem:[#allocation4 + $0x30] sm:$0xff]
  %v2182 = vld [vmem:[#allocation4 + $0x38] sm:$0xff]
  %v2183 = vld [vmem:[#allocation4 + $0x40] sm:$0xff]
  %v2184 = vld [vmem:[#allocation4 + $0x48] sm:$0xff]
  %v2185 = vld [vmem:[#allocation4 + $0x50] sm:$0xff]
  %v2186 = vld [vmem:[#allocation4 + $0x58] sm:$0xff]
  %v2187 = vld [vmem:[#allocation4 + $0x60] sm:$0xff]
  %v2188 = vld [vmem:[#allocation4 + $0x68] sm:$0xff]
  %v2189 = vld [vmem:[#allocation4 + $0x70] sm:$0xff]
  %v2190 = vld [vmem:[#allocation4 + $0x78] sm:$0xff]
  %v2191 = vld [vmem:[#allocation4 + $0x80] sm:$0xff]
  %v2192 = vld [vmem:[#allocation4 + $0x88] sm:$0xff]
  %v2193 = vld [vmem:[#allocation4 + $0x90] sm:$0xff]
  %v2194 = vld [vmem:[#allocation4 + $0x98] sm:$0xff]
  %v2195 = vld [vmem:[#allocation4 + $0xa0] sm:$0xff]
  %v2196 = vld [vmem:[#allocation4 + $0xa8] sm:$0xff]
  %v2197 = vld [vmem:[#allocation4 + $0xb0] sm:$0xff]
  %v2198 = vld [vmem:[#allocation4 + $0xb8] sm:$0xff]
  %v2199 = vld [vmem:[#allocation4 + $0xc0] sm:$0xff]
  %v2200 = vld [vmem:[#allocation4 + $0xc8] sm:$0xff]
  %v2201 = vld [vmem:[#allocation4 + $0xd0] sm:$0xff]
  %v2202 = vld [vmem:[#allocation4 + $0xd8] sm:$0xff]
  %v2203 = vld [vmem:[#allocation4 + $0xe0] sm:$0xff]
  %v2204 = vld [vmem:[#allocation4 + $0xe8] sm:$0xff]
  %v2205 = vld [vmem:[#allocation4 + $0xf0] sm:$0xff]
  %v2206 = vld [vmem:[#allocation4 + $0xf8] sm:$0xff]
  %v2207 = vld [vmem:[#allocation4 + $0x100] sm:$0xff]
  %v2208 = vld [vmem:[#allocation4 + $0x108] sm:$0xff]
  %v2209 = vld [vmem:[#allocation4 + $0x110] sm:$0xff]
  %v2210 = vld [vmem:[#allocation4 + $0x118] sm:$0xff]
  %v2211 = vld [vmem:[#allocation4 + $0x120] sm:$0xff]
  %v2212 = vld [vmem:[#allocation4 + $0x128] sm:$0xff]
  %v2213 = vld [vmem:[#allocation4 + $0x130] sm:$0xff]
  %v2214 = vld [vmem:[#allocation4 + $0x138] sm:$0xff]
  %v2215 = vld [vmem:[#allocation4 + $0x140] sm:$0xff]
  %v2216 = vld [vmem:[#allocation4 + $0x148] sm:$0xff]
  %v2217 = vld [vmem:[#allocation4 + $0x150] sm:$0xff]
  %v2218 = vld [vmem:[#allocation4 + $0x158] sm:$0xff]
  %v2219 = vld [vmem:[#allocation4 + $0x160] sm:$0xff]
  %v2220 = vld [vmem:[#allocation4 + $0x168] sm:$0xff]
  %v2221 = vld [vmem:[#allocation4 + $0x170] sm:$0xff]
  %v2222 = vld [vmem:[#allocation4 + $0x178] sm:$0xff]
  %v2223 = vld [vmem:[#allocation4 + $0x180] sm:$0xff]
  %v2224 = vld [vmem:[#allocation4 + $0x188] sm:$0xff]
  %v2225 = vld [vmem:[#allocation4 + $0x190] sm:$0xff]
  %v2226 = vld [vmem:[#allocation4 + $0x198] sm:$0xff]
  %v2227 = vld [vmem:[#allocation4 + $0x1a0] sm:$0xff]
  %v2228 = vld [vmem:[#allocation4 + $0x1a8] sm:$0xff]
  %v2229 = vld [vmem:[#allocation4 + $0x1b0] sm:$0xff]
  %v2230 = vld [vmem:[#allocation4 + $0x1b8] sm:$0xff]
  %v2231 = vld [vmem:[#allocation4 + $0x1c0] sm:$0xff]
  %v2232 = vld [vmem:[#allocation4 + $0x1c8] sm:$0xff]
  %v2233 = vld [vmem:[#allocation4 + $0x1d0] sm:$0xff]
  %v2234 = vld [vmem:[#allocation4 + $0x1d8] sm:$0xff]
  %v2235 = vld [vmem:[#allocation4 + $0x1e0] sm:$0xff]
  %v2236 = vld [vmem:[#allocation4 + $0x1e8] sm:$0xff]
  %v2237 = vld [vmem:[#allocation4 + $0x1f0] sm:$0xff]
  %v2238 = vld [vmem:[#allocation4 + $0x1f8] sm:$0xff]
  %v2239 = vld [vmem:[#allocation4 + $0x200] sm:$0xff]
  %v2240 = vld [vmem:[#allocation4 + $0x208] sm:$0xff]
  %v2241 = vld [vmem:[#allocation4 + $0x210] sm:$0xff]
  %v2242 = vld [vmem:[#allocation4 + $0x218] sm:$0xff]
  %v2243 = vld [vmem:[#allocation4 + $0x220] sm:$0xff]
  %v2244 = vld [vmem:[#allocation4 + $0x228] sm:$0xff]
  %v2245 = vld [vmem:[#allocation4 + $0x230] sm:$0xff]
  %v2246 = vld [vmem:[#allocation4 + $0x238] sm:$0xff]
  %v2247 = vld [vmem:[#allocation4 + $0x240] sm:$0xff]
  %v2248 = vld [vmem:[#allocation4 + $0x248] sm:$0xff]
  %v2249 = vld [vmem:[#allocation4 + $0x250] sm:$0xff]
  %v2250 = vld [vmem:[#allocation4 + $0x258] sm:$0xff]
  %v2251 = vld [vmem:[#allocation4 + $0x260] sm:$0xff]
  %v2252 = vld [vmem:[#allocation4 + $0x268] sm:$0xff]
  %v2253 = vld [vmem:[#allocation4 + $0x270] sm:$0xff]
  %v2254 = vld [vmem:[#allocation4 + $0x278] sm:$0xff]
  %v2255 = vld [vmem:[#allocation4 + $0x280] sm:$0xff]
  %v2256 = vld [vmem:[#allocation4 + $0x288] sm:$0xff]
  %v2257 = vld [vmem:[#allocation4 + $0x290] sm:$0xff]
  %v2258 = vld [vmem:[#allocation4 + $0x298] sm:$0xff]
  %v2259 = vld [vmem:[#allocation4 + $0x2a0] sm:$0xff]
  %v2260 = vld [vmem:[#allocation4 + $0x2a8] sm:$0xff]
  %v2261 = vld [vmem:[#allocation4 + $0x2b0] sm:$0xff]
  %v2262 = vld [vmem:[#allocation4 + $0x2b8] sm:$0xff]
  %v2263 = vld [vmem:[#allocation4 + $0x2c0] sm:$0xff]
  %v2264 = vld [vmem:[#allocation4 + $0x2c8] sm:$0xff]
  %v2265 = vld [vmem:[#allocation4 + $0x2d0] sm:$0xff]
  %v2266 = vld [vmem:[#allocation4 + $0x2d8] sm:$0xff]
  %v2267 = vld [vmem:[#allocation4 + $0x2e0] sm:$0xff]
  %v2268 = vld [vmem:[#allocation4 + $0x2e8] sm:$0xff]
  %v2269 = vld [vmem:[#allocation4 + $0x2f0] sm:$0xff]
  %v2270 = vld [vmem:[#allocation4 + $0x2f8] sm:$0xff]
  %v2271 = vld [vmem:[#allocation4 + $0x300] sm:$0xff]
  %v2272 = vld [vmem:[#allocation4 + $0x308] sm:$0xff]
  %v2273 = vld [vmem:[#allocation4 + $0x310] sm:$0xff]
  %v2274 = vld [vmem:[#allocation4 + $0x318] sm:$0xff]
  %v2275 = vld [vmem:[#allocation4 + $0x320] sm:$0xff]
  %v2276 = vld [vmem:[#allocation4 + $0x328] sm:$0xff]
  %v2277 = vld [vmem:[#allocation4 + $0x330] sm:$0xff]
  %v2278 = vld [vmem:[#allocation4 + $0x338] sm:$0xff]
  %v2279 = vld [vmem:[#allocation4 + $0x340] sm:$0xff]
  %v2280 = vld [vmem:[#allocation4 + $0x348] sm:$0xff]
  %v2281 = vld [vmem:[#allocation4 + $0x350] sm:$0xff]
  %v2282 = vld [vmem:[#allocation4 + $0x358] sm:$0xff]
  %v2283 = vld [vmem:[#allocation4 + $0x360] sm:$0xff]
  %v2284 = vld [vmem:[#allocation4 + $0x368] sm:$0xff]
  %v2285 = vld [vmem:[#allocation4 + $0x370] sm:$0xff]
  %v2286 = vld [vmem:[#allocation4 + $0x378] sm:$0xff]
  %v2287 = vld [vmem:[#allocation4 + $0x380] sm:$0xff]
  %v2288 = vld [vmem:[#allocation4 + $0x388] sm:$0xff]
  %v2289 = vld [vmem:[#allocation4 + $0x390] sm:$0xff]
  %v2290 = vld [vmem:[#allocation4 + $0x398] sm:$0xff]
  %v2291 = vld [vmem:[#allocation4 + $0x3a0] sm:$0xff]
  %v2292 = vld [vmem:[#allocation4 + $0x3a8] sm:$0xff]
  %v2293 = vld [vmem:[#allocation4 + $0x3b0] sm:$0xff]
  %v2294 = vld [vmem:[#allocation4 + $0x3b8] sm:$0xff]
  %v2295 = vld [vmem:[#allocation4 + $0x3c0] sm:$0xff]
  %v2296 = vld [vmem:[#allocation4 + $0x3c8] sm:$0xff]
  %v2297 = vld [vmem:[#allocation4 + $0x3d0] sm:$0xff]
  %v2298 = vld [vmem:[#allocation4 + $0x3d8] sm:$0xff]
  %v2299 = vld [vmem:[#allocation4 + $0x3e0] sm:$0xff]
  %v2300 = vld [vmem:[#allocation4 + $0x3e8] sm:$0xff]
  %v2301 = vld [vmem:[#allocation4 + $0x3f0] sm:$0xff]
  %v2302 = vld [vmem:[#allocation4 + $0x3f8] sm:$0xff]
  %2303 = vmatprep.subr.mxu0 %v2176
  %2304 = vmatpush1.msra.mxu0 %v2175
  %2305 = vmatprep.subr.mxu0 %v2180
  %2306 = vmatpush1.msra.mxu0 %v2179
  %2307 = vmatprep.subr.mxu0 %v2184
  %2308 = vmatpush1.msra.mxu0 %v2183
  %2309 = vmatprep.subr.mxu0 %v2188
  %2310 = vmatpush1.msra.mxu0 %v2187
  %2311 = vmatprep.subr.mxu0 %v2192
  %2312 = vmatpush1.msra.mxu0 %v2191
  %2313 = vmatprep.subr.mxu0 %v2196
  %2314 = vmatpush1.msra.mxu0 %v2195
  %2315 = vmatprep.subr.mxu0 %v2200
  %2316 = vmatpush1.msra.mxu0 %v2199
  %2317 = vmatprep.subr.mxu0 %v2204
  %2318 = vmatpush1.msra.mxu0 %v2203
  %2319 = vmatprep.subr.mxu0 %v2208
  %2320 = vmatpush1.msra.mxu0 %v2207
  %2321 = vmatprep.subr.mxu0 %v2212
  %2322 = vmatpush1.msra.mxu0 %v2211
  %2323 = vmatprep.subr.mxu0 %v2216
  %2324 = vmatpush1.msra.mxu0 %v2215
  %2325 = vmatprep.subr.mxu0 %v2220
  %2326 = vmatpush1.msra.mxu0 %v2219
  %2327 = vmatprep.subr.mxu0 %v2224
  %2328 = vmatpush1.msra.mxu0 %v2223
  %2329 = vmatprep.subr.mxu0 %v2228
  %2330 = vmatpush1.msra.mxu0 %v2227
  %2331 = vmatprep.subr.mxu0 %v2232
  %2332 = vmatpush1.msra.mxu0 %v2231
  %2333 = vmatprep.subr.mxu0 %v2236
  %2334 = vmatpush1.msra.mxu0 %v2235
  %2335 = vmatprep.subr.mxu0 %v2240
  %2336 = vmatpush1.msra.mxu0 %v2239
  %2337 = vmatprep.subr.mxu0 %v2244
  %2338 = vmatpush1.msra.mxu0 %v2243
  %2339 = vmatprep.subr.mxu0 %v2248
  %2340 = vmatpush1.msra.mxu0 %v2247
  %2341 = vmatprep.subr.mxu0 %v2252
  %2342 = vmatpush1.msra.mxu0 %v2251
  %2343 = vmatprep.subr.mxu0 %v2256
  %2344 = vmatpush1.msra.mxu0 %v2255
  %2345 = vmatprep.subr.mxu0 %v2260
  %2346 = vmatpush1.msra.mxu0 %v2259
  %2347 = vmatprep.subr.mxu0 %v2264
  %2348 = vmatpush1.msra.mxu0 %v2263
  %2349 = vmatprep.subr.mxu0 %v2268
  %2350 = vmatpush1.msra.mxu0 %v2267
  %2351 = vmatprep.subr.mxu0 %v2272
  %2352 = vmatpush1.msra.mxu0 %v2271
  %2353 = vmatprep.subr.mxu0 %v2276
  %2354 = vmatpush1.msra.mxu0 %v2275
  %2355 = vmatprep.subr.mxu0 %v2280
  %2356 = vmatpush1.msra.mxu0 %v2279
  %2357 = vmatprep.subr.mxu0 %v2284
  %2358 = vmatpush1.msra.mxu0 %v2283
  %2359 = vmatprep.subr.mxu0 %v2288
  %2360 = vmatpush1.msra.mxu0 %v2287
  %2361 = vmatprep.subr.mxu0 %v2292
  %2362 = vmatpush1.msra.mxu0 %v2291
  %2363 = vmatprep.subr.mxu0 %v2296
  %2364 = vmatpush1.msra.mxu0 %v2295
  %2365 = vmatprep.subr.mxu0 %v2300
  %2366 = vmatpush1.msra.mxu0 %v2299
  %2367 = vmatprep.mubr.f32.mxu0 %v2172
  %2368 = vmatmul.mubr.f32.gmra.mrb[0].mxu0 %v2171
  %v2369 = vpop.f32.mrb[0].mxu0
  %v2370 = vadd.f32 0.0, %v2369
  %v2371 = vpop.f32.mrb[0].mxu0
  %v2372 = vadd.f32 0.0, %v2371
  %2373 = vmatprep.mubr.f32.mxu0 %v2174
  %2374 = vmatmul.mubr.f32.gmra.mrb[0].mxu0 %v2173
  %v2375 = vpop.f32.mrb[0].mxu0
  %v2376 = vadd.f32 0.0, %v2375
  %v2377 = vpop.f32.mrb[0].mxu0
  %v2378 = vadd.f32 0.0, %v2377
  %2379 = vdwg.mxu0
  %2380 = vmatprep.subr.mxu0 %v2178
  %2381 = vmatpush1.msra.mxu0 %v2177
  %2382 = vmatprep.subr.mxu0 %v2182
  %2383 = vmatpush1.msra.mxu0 %v2181
  %2384 = vmatprep.subr.mxu0 %v2186
  %2385 = vmatpush1.msra.mxu0 %v2185
  %2386 = vmatprep.subr.mxu0 %v2190
  %2387 = vmatpush1.msra.mxu0 %v2189
  %2388 = vmatprep.subr.mxu0 %v2194
  %2389 = vmatpush1.msra.mxu0 %v2193
  %2390 = vmatprep.subr.mxu0 %v2198
  %2391 = vmatpush1.msra.mxu0 %v2197
  %2392 = vmatprep.subr.mxu0 %v2202
  %2393 = vmatpush1.msra.mxu0 %v2201
  %2394 = vmatprep.subr.mxu0 %v2206
  %2395 = vmatpush1.msra.mxu0 %v2205
  %2396 = vmatprep.subr.mxu0 %v2210
  %2397 = vmatpush1.msra.mxu0 %v2209
  %2398 = vmatprep.subr.mxu0 %v2214
  %2399 = vmatpush1.msra.mxu0 %v2213
  %2400 = vmatprep.subr.mxu0 %v2218
  %2401 = vmatpush1.msra.mxu0 %v2217
  %2402 = vmatprep.subr.mxu0 %v2222
  %2403 = vmatpush1.msra.mxu0 %v2221
  %2404 = vmatprep.subr.mxu0 %v2226
  %2405 = vmatpush1.msra.mxu0 %v2225
  %2406 = vmatprep.subr.mxu0 %v2230
  %2407 = vmatpush1.msra.mxu0 %v2229
  %2408 = vmatprep.subr.mxu0 %v2234
  %2409 = vmatpush1.msra.mxu0 %v2233
  %2410 = vmatprep.subr.mxu0 %v2238
  %2411 = vmatpush1.msra.mxu0 %v2237
  %2412 = vmatprep.subr.mxu0 %v2242
  %2413 = vmatpush1.msra.mxu0 %v2241
  %2414 = vmatprep.subr.mxu0 %v2246
  %2415 = vmatpush1.msra.mxu0 %v2245
  %2416 = vmatprep.subr.mxu0 %v2250
  %2417 = vmatpush1.msra.mxu0 %v2249
  %2418 = vmatprep.subr.mxu0 %v2254
  %2419 = vmatpush1.msra.mxu0 %v2253
  %2420 = vmatprep.subr.mxu0 %v2258
  %2421 = vmatpush1.msra.mxu0 %v2257
  %2422 = vmatprep.subr.mxu0 %v2262
  %2423 = vmatpush1.msra.mxu0 %v2261
  %2424 = vmatprep.subr.mxu0 %v2266
  %2425 = vmatpush1.msra.mxu0 %v2265
  %2426 = vmatprep.subr.mxu0 %v2270
  %2427 = vmatpush1.msra.mxu0 %v2269
  %2428 = vmatprep.subr.mxu0 %v2274
  %2429 = vmatpush1.msra.mxu0 %v2273
  %2430 = vmatprep.subr.mxu0 %v2278
  %2431 = vmatpush1.msra.mxu0 %v2277
  %2432 = vmatprep.subr.mxu0 %v2282
  %2433 = vmatpush1.msra.mxu0 %v2281
  %2434 = vmatprep.subr.mxu0 %v2286
  %2435 = vmatpush1.msra.mxu0 %v2285
  %2436 = vmatprep.subr.mxu0 %v2290
  %2437 = vmatpush1.msra.mxu0 %v2289
  %2438 = vmatprep.subr.mxu0 %v2294
  %2439 = vmatpush1.msra.mxu0 %v2293
  %2440 = vmatprep.subr.mxu0 %v2298
  %2441 = vmatpush1.msra.mxu0 %v2297
  %2442 = vmatprep.subr.mxu0 %v2302
  %2443 = vmatpush1.msra.mxu0 %v2301
  %2444 = vmatprep.mubr.f32.mxu0 %v2172
  %2445 = vmatmul.mubr.f32.gmra.mrb[0].mxu0 %v2171
  %v2446 = vpop.f32.mrb[0].mxu0
  %v2447 = vadd.f32 0.0, %v2446
  %v2448 = vpop.f32.mrb[0].mxu0
  %v2449 = vadd.f32 0.0, %v2448
  %2450 = vmatprep.mubr.f32.mxu0 %v2174
  %2451 = vmatmul.mubr.f32.gmra.mrb[0].mxu0 %v2173
  %v2452 = vpop.f32.mrb[0].mxu0
  %v2453 = vadd.f32 0.0, %v2452
  %v2454 = vpop.f32.mrb[0].mxu0
  %v2455 = vadd.f32 0.0, %v2454
  %2456 = vdwg.mxu0
  %s2457 = scalar_lea.vmem %s0, 160
  %v2458 = vld [vmem:[%s2457] sm:$0xff]
  %v2459 = vld [vmem:[%s2457 + $0x8] sm:$0xff]
  %v2460 = vld [vmem:[%s2457 + $0x10] sm:$0xff]
  %v2461 = vld [vmem:[%s2457 + $0x18] sm:$0xff]
  %s2462 = scalar_lea.vmem %s42, 64
  %v2463 = vld [vmem:[%s2462] sm:$0xff]
  %v2464 = vld [vmem:[%s2462 + $0x8] sm:$0xff]
  %v2465 = vld [vmem:[%s2462 + $0x10] sm:$0xff]
  %v2466 = vld [vmem:[%s2462 + $0x18] sm:$0xff]
  %v2467 = vadd.f32 %v2458, %v2370
  %v2468 = vadd.f32 %v2459, %v2372
  %v2469 = vadd.f32 %v2460, %v2447
  %v2470 = vadd.f32 %v2461, %v2449
  %v2471 = vadd.f32 %v2463, %v2376
  %v2472 = vadd.f32 %v2464, %v2378
  %v2473 = vadd.f32 %v2465, %v2453
  %v2474 = vadd.f32 %v2466, %v2455
  %v2475 = vxor.u32 %v2467, 2147483648
  %v2476 = vxor.u32 %v2468, 2147483648
  %v2477 = vxor.u32 %v2469, 2147483648
  %v2478 = vxor.u32 %v2471, 2147483648
  %v2479 = vxor.u32 %v2472, 2147483648
  %v2480 = vxor.u32 %v2473, 2147483648
  %v2481 = vmul.f32 %v2475, 1.442695
  %v2482 = vpow.pop %v2481
  %v2483 = vmul.f32 %v2476, 1.442695
  %v2484 = vpow.pop %v2483
  %v2485 = vmul.f32 %v2477, 1.442695
  %v2486 = vpow.pop %v2485
  %v2487 = vmul.f32 %v2478, 1.442695
  %v2488 = vpow.pop %v2487
  %v2489 = vmul.f32 %v2479, 1.442695
  %v2490 = vpow.pop %v2489
  %v2491 = vmul.f32 %v2480, 1.442695
  %v2492 = vpow.pop %v2491
  %v2493 = vadd.f32 %v2482, 1.0
  %v2494 = vadd.f32 %v2484, 1.0
  %v2495 = vadd.f32 %v2486, 1.0
  %v2496 = vadd.f32 %v2488, 1.0
  %v2497 = vadd.f32 %v2490, 1.0
  %v2498 = vadd.f32 %v2492, 1.0
  %v2499 = vrcp.pop %v2493
  %v2500 = vmul.f32 1.0, %v2499
  %v2501 = vrcp.pop %v2494
  %v2502 = vmul.f32 1.0, %v2501
  %v2503 = vrcp.pop %v2495
  %v2504 = vmul.f32 1.0, %v2503
  %v2505 = vrcp.pop %v2496
  %v2506 = vmul.f32 1.0, %v2505
  %v2507 = vrcp.pop %v2497
  %v2508 = vmul.f32 1.0, %v2507
  %v2509 = vrcp.pop %v2498
  %v2510 = vmul.f32 1.0, %v2509
  %v2511 = vtanh.pop %v2470
  %v2512 = vtanh.pop %v2474
  %v2513 = vld [vmem:[#allocation3] sm:$0xff]
  %v2514 = vld [vmem:[#allocation3 + $0x8] sm:$0xff]
  %v2515 = vmul.f32 %v2502, %v2513
  %v2516 = vmul.f32 %v2508, %v2514
  %v2517 = vmul.f32 %v2500, %v2511
  %v2518 = vmul.f32 %v2506, %v2512
  %v2519 = vadd.f32 %v2515, %v2517
  %v2520 = vadd.f32 %v2516, %v2518
  %v2521 = vtanh.pop %v2519
  %v2522 = vtanh.pop %v2520
  %v2523 = vmul.f32 %v2504, %v2521
  %v2524 = vmul.f32 %v2510, %v2522
  %2525 = vst [vmem:[#allocation3] sm:$0xff] %v2519
  %2526 = vst [vmem:[#allocation3 + $0x8] sm:$0xff] %v2520
  %2527 = vst [vmem:[#allocation2] sm:$0xff] %v2523
  %2528 = vst [vmem:[#allocation2 + $0x18] sm:$0xff] %v2524
  %s2529 = scalar_lea.vmem %s3, 40
  %2530 = vst [vmem:[%s2529] sm:$0xff] %v2523
  %s2531 = scalar_lea.vmem %s50, 16
  %2532 = vst [vmem:[%s2531] sm:$0xff] %v2524
  %v2533 = vld [vmem:[#allocation2] sm:$0xff]
  %v2534 = vld [vmem:[#allocation2 + $0x8] sm:$0xff]
  %v2535 = vld [vmem:[#allocation2 + $0x10] sm:$0xff]
  %v2536 = vld [vmem:[#allocation2 + $0x18] sm:$0xff]
  %v2537 = vld [vmem:[#allocation4] sm:$0xff]
  %v2538 = vld [vmem:[#allocation4 + $0x8] sm:$0xff]
  %v2539 = vld [vmem:[#allocation4 + $0x10] sm:$0xff]
  %v2540 = vld [vmem:[#allocation4 + $0x18] sm:$0xff]
  %v2541 = vld [vmem:[#allocation4 + $0x20] sm:$0xff]
  %v2542 = vld [vmem:[#allocation4 + $0x28] sm:$0xff]
  %v2543 = vld [vmem:[#allocation4 + $0x30] sm:$0xff]
  %v2544 = vld [vmem:[#allocation4 + $0x38] sm:$0xff]
  %v2545 = vld [vmem:[#allocation4 + $0x40] sm:$0xff]
  %v2546 = vld [vmem:[#allocation4 + $0x48] sm:$0xff]
  %v2547 = vld [vmem:[#allocation4 + $0x50] sm:$0xff]
  %v2548 = vld [vmem:[#allocation4 + $0x58] sm:$0xff]
  %v2549 = vld [vmem:[#allocation4 + $0x60] sm:$0xff]
  %v2550 = vld [vmem:[#allocation4 + $0x68] sm:$0xff]
  %v2551 = vld [vmem:[#allocation4 + $0x70] sm:$0xff]
  %v2552 = vld [vmem:[#allocation4 + $0x78] sm:$0xff]
  %v2553 = vld [vmem:[#allocation4 + $0x80] sm:$0xff]
  %v2554 = vld [vmem:[#allocation4 + $0x88] sm:$0xff]
  %v2555 = vld [vmem:[#allocation4 + $0x90] sm:$0xff]
  %v2556 = vld [vmem:[#allocation4 + $0x98] sm:$0xff]
  %v2557 = vld [vmem:[#allocation4 + $0xa0] sm:$0xff]
  %v2558 = vld [vmem:[#allocation4 + $0xa8] sm:$0xff]
  %v2559 = vld [vmem:[#allocation4 + $0xb0] sm:$0xff]
  %v2560 = vld [vmem:[#allocation4 + $0xb8] sm:$0xff]
  %v2561 = vld [vmem:[#allocation4 + $0xc0] sm:$0xff]
  %v2562 = vld [vmem:[#allocation4 + $0xc8] sm:$0xff]
  %v2563 = vld [vmem:[#allocation4 + $0xd0] sm:$0xff]
  %v2564 = vld [vmem:[#allocation4 + $0xd8] sm:$0xff]
  %v2565 = vld [vmem:[#allocation4 + $0xe0] sm:$0xff]
  %v2566 = vld [vmem:[#allocation4 + $0xe8] sm:$0xff]
  %v2567 = vld [vmem:[#allocation4 + $0xf0] sm:$0xff]
  %v2568 = vld [vmem:[#allocation4 + $0xf8] sm:$0xff]
  %v2569 = vld [vmem:[#allocation4 + $0x100] sm:$0xff]
  %v2570 = vld [vmem:[#allocation4 + $0x108] sm:$0xff]
  %v2571 = vld [vmem:[#allocation4 + $0x110] sm:$0xff]
  %v2572 = vld [vmem:[#allocation4 + $0x118] sm:$0xff]
  %v2573 = vld [vmem:[#allocation4 + $0x120] sm:$0xff]
  %v2574 = vld [vmem:[#allocation4 + $0x128] sm:$0xff]
  %v2575 = vld [vmem:[#allocation4 + $0x130] sm:$0xff]
  %v2576 = vld [vmem:[#allocation4 + $0x138] sm:$0xff]
  %v2577 = vld [vmem:[#allocation4 + $0x140] sm:$0xff]
  %v2578 = vld [vmem:[#allocation4 + $0x148] sm:$0xff]
  %v2579 = vld [vmem:[#allocation4 + $0x150] sm:$0xff]
  %v2580 = vld [vmem:[#allocation4 + $0x158] sm:$0xff]
  %v2581 = vld [vmem:[#allocation4 + $0x160] sm:$0xff]
  %v2582 = vld [vmem:[#allocation4 + $0x168] sm:$0xff]
  %v2583 = vld [vmem:[#allocation4 + $0x170] sm:$0xff]
  %v2584 = vld [vmem:[#allocation4 + $0x178] sm:$0xff]
  %v2585 = vld [vmem:[#allocation4 + $0x180] sm:$0xff]
  %v2586 = vld [vmem:[#allocation4 + $0x188] sm:$0xff]
  %v2587 = vld [vmem:[#allocation4 + $0x190] sm:$0xff]
  %v2588 = vld [vmem:[#allocation4 + $0x198] sm:$0xff]
  %v2589 = vld [vmem:[#allocation4 + $0x1a0] sm:$0xff]
  %v2590 = vld [vmem:[#allocation4 + $0x1a8] sm:$0xff]
  %v2591 = vld [vmem:[#allocation4 + $0x1b0] sm:$0xff]
  %v2592 = vld [vmem:[#allocation4 + $0x1b8] sm:$0xff]
  %v2593 = vld [vmem:[#allocation4 + $0x1c0] sm:$0xff]
  %v2594 = vld [vmem:[#allocation4 + $0x1c8] sm:$0xff]
  %v2595 = vld [vmem:[#allocation4 + $0x1d0] sm:$0xff]
  %v2596 = vld [vmem:[#allocation4 + $0x1d8] sm:$0xff]
  %v2597 = vld [vmem:[#allocation4 + $0x1e0] sm:$0xff]
  %v2598 = vld [vmem:[#allocation4 + $0x1e8] sm:$0xff]
  %v2599 = vld [vmem:[#allocation4 + $0x1f0] sm:$0xff]
  %v2600 = vld [vmem:[#allocation4 + $0x1f8] sm:$0xff]
  %v2601 = vld [vmem:[#allocation4 + $0x200] sm:$0xff]
  %v2602 = vld [vmem:[#allocation4 + $0x208] sm:$0xff]
  %v2603 = vld [vmem:[#allocation4 + $0x210] sm:$0xff]
  %v2604 = vld [vmem:[#allocation4 + $0x218] sm:$0xff]
  %v2605 = vld [vmem:[#allocation4 + $0x220] sm:$0xff]
  %v2606 = vld [vmem:[#allocation4 + $0x228] sm:$0xff]
  %v2607 = vld [vmem:[#allocation4 + $0x230] sm:$0xff]
  %v2608 = vld [vmem:[#allocation4 + $0x238] sm:$0xff]
  %v2609 = vld [vmem:[#allocation4 + $0x240] sm:$0xff]
  %v2610 = vld [vmem:[#allocation4 + $0x248] sm:$0xff]
  %v2611 = vld [vmem:[#allocation4 + $0x250] sm:$0xff]
  %v2612 = vld [vmem:[#allocation4 + $0x258] sm:$0xff]
  %v2613 = vld [vmem:[#allocation4 + $0x260] sm:$0xff]
  %v2614 = vld [vmem:[#allocation4 + $0x268] sm:$0xff]
  %v2615 = vld [vmem:[#allocation4 + $0x270] sm:$0xff]
  %v2616 = vld [vmem:[#allocation4 + $0x278] sm:$0xff]
  %v2617 = vld [vmem:[#allocation4 + $0x280] sm:$0xff]
  %v2618 = vld [vmem:[#allocation4 + $0x288] sm:$0xff]
  %v2619 = vld [vmem:[#allocation4 + $0x290] sm:$0xff]
  %v2620 = vld [vmem:[#allocation4 + $0x298] sm:$0xff]
  %v2621 = vld [vmem:[#allocation4 + $0x2a0] sm:$0xff]
  %v2622 = vld [vmem:[#allocation4 + $0x2a8] sm:$0xff]
  %v2623 = vld [vmem:[#allocation4 + $0x2b0] sm:$0xff]
  %v2624 = vld [vmem:[#allocation4 + $0x2b8] sm:$0xff]
  %v2625 = vld [vmem:[#allocation4 + $0x2c0] sm:$0xff]
  %v2626 = vld [vmem:[#allocation4 + $0x2c8] sm:$0xff]
  %v2627 = vld [vmem:[#allocation4 + $0x2d0] sm:$0xff]
  %v2628 = vld [vmem:[#allocation4 + $0x2d8] sm:$0xff]
  %v2629 = vld [vmem:[#allocation4 + $0x2e0] sm:$0xff]
  %v2630 = vld [vmem:[#allocation4 + $0x2e8] sm:$0xff]
  %v2631 = vld [vmem:[#allocation4 + $0x2f0] sm:$0xff]
  %v2632 = vld [vmem:[#allocation4 + $0x2f8] sm:$0xff]
  %v2633 = vld [vmem:[#allocation4 + $0x300] sm:$0xff]
  %v2634 = vld [vmem:[#allocation4 + $0x308] sm:$0xff]
  %v2635 = vld [vmem:[#allocation4 + $0x310] sm:$0xff]
  %v2636 = vld [vmem:[#allocation4 + $0x318] sm:$0xff]
  %v2637 = vld [vmem:[#allocation4 + $0x320] sm:$0xff]
  %v2638 = vld [vmem:[#allocation4 + $0x328] sm:$0xff]
  %v2639 = vld [vmem:[#allocation4 + $0x330] sm:$0xff]
  %v2640 = vld [vmem:[#allocation4 + $0x338] sm:$0xff]
  %v2641 = vld [vmem:[#allocation4 + $0x340] sm:$0xff]
  %v2642 = vld [vmem:[#allocation4 + $0x348] sm:$0xff]
  %v2643 = vld [vmem:[#allocation4 + $0x350] sm:$0xff]
  %v2644 = vld [vmem:[#allocation4 + $0x358] sm:$0xff]
  %v2645 = vld [vmem:[#allocation4 + $0x360] sm:$0xff]
  %v2646 = vld [vmem:[#allocation4 + $0x368] sm:$0xff]
  %v2647 = vld [vmem:[#allocation4 + $0x370] sm:$0xff]
  %v2648 = vld [vmem:[#allocation4 + $0x378] sm:$0xff]
  %v2649 = vld [vmem:[#allocation4 + $0x380] sm:$0xff]
  %v2650 = vld [vmem:[#allocation4 + $0x388] sm:$0xff]
  %v2651 = vld [vmem:[#allocation4 + $0x390] sm:$0xff]
  %v2652 = vld [vmem:[#allocation4 + $0x398] sm:$0xff]
  %v2653 = vld [vmem:[#allocation4 + $0x3a0] sm:$0xff]
  %v2654 = vld [vmem:[#allocation4 + $0x3a8] sm:$0xff]
  %v2655 = vld [vmem:[#allocation4 + $0x3b0] sm:$0xff]
  %v2656 = vld [vmem:[#allocation4 + $0x3b8] sm:$0xff]
  %v2657 = vld [vmem:[#allocation4 + $0x3c0] sm:$0xff]
  %v2658 = vld [vmem:[#allocation4 + $0x3c8] sm:$0xff]
  %v2659 = vld [vmem:[#allocation4 + $0x3d0] sm:$0xff]
  %v2660 = vld [vmem:[#allocation4 + $0x3d8] sm:$0xff]
  %v2661 = vld [vmem:[#allocation4 + $0x3e0] sm:$0xff]
  %v2662 = vld [vmem:[#allocation4 + $0x3e8] sm:$0xff]
  %v2663 = vld [vmem:[#allocation4 + $0x3f0] sm:$0xff]
  %v2664 = vld [vmem:[#allocation4 + $0x3f8] sm:$0xff]
  %2665 = vmatprep.subr.mxu0 %v2538
  %2666 = vmatpush1.msra.mxu0 %v2537
  %2667 = vmatprep.subr.mxu0 %v2542
  %2668 = vmatpush1.msra.mxu0 %v2541
  %2669 = vmatprep.subr.mxu0 %v2546
  %2670 = vmatpush1.msra.mxu0 %v2545
  %2671 = vmatprep.subr.mxu0 %v2550
  %2672 = vmatpush1.msra.mxu0 %v2549
  %2673 = vmatprep.subr.mxu0 %v2554
  %2674 = vmatpush1.msra.mxu0 %v2553
  %2675 = vmatprep.subr.mxu0 %v2558
  %2676 = vmatpush1.msra.mxu0 %v2557
  %2677 = vmatprep.subr.mxu0 %v2562
  %2678 = vmatpush1.msra.mxu0 %v2561
  %2679 = vmatprep.subr.mxu0 %v2566
  %2680 = vmatpush1.msra.mxu0 %v2565
  %2681 = vmatprep.subr.mxu0 %v2570
  %2682 = vmatpush1.msra.mxu0 %v2569
  %2683 = vmatprep.subr.mxu0 %v2574
  %2684 = vmatpush1.msra.mxu0 %v2573
  %2685 = vmatprep.subr.mxu0 %v2578
  %2686 = vmatpush1.msra.mxu0 %v2577
  %2687 = vmatprep.subr.mxu0 %v2582
  %2688 = vmatpush1.msra.mxu0 %v2581
  %2689 = vmatprep.subr.mxu0 %v2586
  %2690 = vmatpush1.msra.mxu0 %v2585
  %2691 = vmatprep.subr.mxu0 %v2590
  %2692 = vmatpush1.msra.mxu0 %v2589
  %2693 = vmatprep.subr.mxu0 %v2594
  %2694 = vmatpush1.msra.mxu0 %v2593
  %2695 = vmatprep.subr.mxu0 %v2598
  %2696 = vmatpush1.msra.mxu0 %v2597
  %2697 = vmatprep.subr.mxu0 %v2602
  %2698 = vmatpush1.msra.mxu0 %v2601
  %2699 = vmatprep.subr.mxu0 %v2606
  %2700 = vmatpush1.msra.mxu0 %v2605
  %2701 = vmatprep.subr.mxu0 %v2610
  %2702 = vmatpush1.msra.mxu0 %v2609
  %2703 = vmatprep.subr.mxu0 %v2614
  %2704 = vmatpush1.msra.mxu0 %v2613
  %2705 = vmatprep.subr.mxu0 %v2618
  %2706 = vmatpush1.msra.mxu0 %v2617
  %2707 = vmatprep.subr.mxu0 %v2622
  %2708 = vmatpush1.msra.mxu0 %v2621
  %2709 = vmatprep.subr.mxu0 %v2626
  %2710 = vmatpush1.msra.mxu0 %v2625
  %2711 = vmatprep.subr.mxu0 %v2630
  %2712 = vmatpush1.msra.mxu0 %v2629
  %2713 = vmatprep.subr.mxu0 %v2634
  %2714 = vmatpush1.msra.mxu0 %v2633
  %2715 = vmatprep.subr.mxu0 %v2638
  %2716 = vmatpush1.msra.mxu0 %v2637
  %2717 = vmatprep.subr.mxu0 %v2642
  %2718 = vmatpush1.msra.mxu0 %v2641
  %2719 = vmatprep.subr.mxu0 %v2646
  %2720 = vmatpush1.msra.mxu0 %v2645
  %2721 = vmatprep.subr.mxu0 %v2650
  %2722 = vmatpush1.msra.mxu0 %v2649
  %2723 = vmatprep.subr.mxu0 %v2654
  %2724 = vmatpush1.msra.mxu0 %v2653
  %2725 = vmatprep.subr.mxu0 %v2658
  %2726 = vmatpush1.msra.mxu0 %v2657
  %2727 = vmatprep.subr.mxu0 %v2662
  %2728 = vmatpush1.msra.mxu0 %v2661
  %2729 = vmatprep.mubr.f32.mxu0 %v2534
  %2730 = vmatmul.mubr.f32.gmra.mrb[0].mxu0 %v2533
  %v2731 = vpop.f32.mrb[0].mxu0
  %v2732 = vadd.f32 0.0, %v2731
  %v2733 = vpop.f32.mrb[0].mxu0
  %v2734 = vadd.f32 0.0, %v2733
  %2735 = vmatprep.mubr.f32.mxu0 %v2536
  %2736 = vmatmul.mubr.f32.gmra.mrb[0].mxu0 %v2535
  %v2737 = vpop.f32.mrb[0].mxu0
  %v2738 = vadd.f32 0.0, %v2737
  %v2739 = vpop.f32.mrb[0].mxu0
  %v2740 = vadd.f32 0.0, %v2739
  %2741 = vdwg.mxu0
  %2742 = vmatprep.subr.mxu0 %v2540
  %2743 = vmatpush1.msra.mxu0 %v2539
  %2744 = vmatprep.subr.mxu0 %v2544
  %2745 = vmatpush1.msra.mxu0 %v2543
  %2746 = vmatprep.subr.mxu0 %v2548
  %2747 = vmatpush1.msra.mxu0 %v2547
  %2748 = vmatprep.subr.mxu0 %v2552
  %2749 = vmatpush1.msra.mxu0 %v2551
  %2750 = vmatprep.subr.mxu0 %v2556
  %2751 = vmatpush1.msra.mxu0 %v2555
  %2752 = vmatprep.subr.mxu0 %v2560
  %2753 = vmatpush1.msra.mxu0 %v2559
  %2754 = vmatprep.subr.mxu0 %v2564
  %2755 = vmatpush1.msra.mxu0 %v2563
  %2756 = vmatprep.subr.mxu0 %v2568
  %2757 = vmatpush1.msra.mxu0 %v2567
  %2758 = vmatprep.subr.mxu0 %v2572
  %2759 = vmatpush1.msra.mxu0 %v2571
  %2760 = vmatprep.subr.mxu0 %v2576
  %2761 = vmatpush1.msra.mxu0 %v2575
  %2762 = vmatprep.subr.mxu0 %v2580
  %2763 = vmatpush1.msra.mxu0 %v2579
  %2764 = vmatprep.subr.mxu0 %v2584
  %2765 = vmatpush1.msra.mxu0 %v2583
  %2766 = vmatprep.subr.mxu0 %v2588
  %2767 = vmatpush1.msra.mxu0 %v2587
  %2768 = vmatprep.subr.mxu0 %v2592
  %2769 = vmatpush1.msra.mxu0 %v2591
  %2770 = vmatprep.subr.mxu0 %v2596
  %2771 = vmatpush1.msra.mxu0 %v2595
  %2772 = vmatprep.subr.mxu0 %v2600
  %2773 = vmatpush1.msra.mxu0 %v2599
  %2774 = vmatprep.subr.mxu0 %v2604
  %2775 = vmatpush1.msra.mxu0 %v2603
  %2776 = vmatprep.subr.mxu0 %v2608
  %2777 = vmatpush1.msra.mxu0 %v2607
  %2778 = vmatprep.subr.mxu0 %v2612
  %2779 = vmatpush1.msra.mxu0 %v2611
  %2780 = vmatprep.subr.mxu0 %v2616
  %2781 = vmatpush1.msra.mxu0 %v2615
  %2782 = vmatprep.subr.mxu0 %v2620
  %2783 = vmatpush1.msra.mxu0 %v2619
  %2784 = vmatprep.subr.mxu0 %v2624
  %2785 = vmatpush1.msra.mxu0 %v2623
  %2786 = vmatprep.subr.mxu0 %v2628
  %2787 = vmatpush1.msra.mxu0 %v2627
  %2788 = vmatprep.subr.mxu0 %v2632
  %2789 = vmatpush1.msra.mxu0 %v2631
  %2790 = vmatprep.subr.mxu0 %v2636
  %2791 = vmatpush1.msra.mxu0 %v2635
  %2792 = vmatprep.subr.mxu0 %v2640
  %2793 = vmatpush1.msra.mxu0 %v2639
  %2794 = vmatprep.subr.mxu0 %v2644
  %2795 = vmatpush1.msra.mxu0 %v2643
  %2796 = vmatprep.subr.mxu0 %v2648
  %2797 = vmatpush1.msra.mxu0 %v2647
  %2798 = vmatprep.subr.mxu0 %v2652
  %2799 = vmatpush1.msra.mxu0 %v2651
  %2800 = vmatprep.subr.mxu0 %v2656
  %2801 = vmatpush1.msra.mxu0 %v2655
  %2802 = vmatprep.subr.mxu0 %v2660
  %2803 = vmatpush1.msra.mxu0 %v2659
  %2804 = vmatprep.subr.mxu0 %v2664
  %2805 = vmatpush1.msra.mxu0 %v2663
  %2806 = vmatprep.mubr.f32.mxu0 %v2534
  %2807 = vmatmul.mubr.f32.gmra.mrb[0].mxu0 %v2533
  %v2808 = vpop.f32.mrb[0].mxu0
  %v2809 = vadd.f32 0.0, %v2808
  %v2810 = vpop.f32.mrb[0].mxu0
  %v2811 = vadd.f32 0.0, %v2810
  %2812 = vmatprep.mubr.f32.mxu0 %v2536
  %2813 = vmatmul.mubr.f32.gmra.mrb[0].mxu0 %v2535
  %v2814 = vpop.f32.mrb[0].mxu0
  %v2815 = vadd.f32 0.0, %v2814
  %v2816 = vpop.f32.mrb[0].mxu0
  %v2817 = vadd.f32 0.0, %v2816
  %2818 = vdwg.mxu0
  %s2819 = scalar_lea.vmem %s0, 192
  %v2820 = vld [vmem:[%s2819] sm:$0xff]
  %v2821 = vld [vmem:[%s2819 + $0x8] sm:$0xff]
  %v2822 = vld [vmem:[%s2819 + $0x10] sm:$0xff]
  %v2823 = vld [vmem:[%s2819 + $0x18] sm:$0xff]
  %s2824 = scalar_lea.vmem %s42, 32
  %v2825 = vld [vmem:[%s2824] sm:$0xff]
  %v2826 = vld [vmem:[%s2824 + $0x8] sm:$0xff]
  %v2827 = vld [vmem:[%s2824 + $0x10] sm:$0xff]
  %v2828 = vld [vmem:[%s2824 + $0x18] sm:$0xff]
  %v2829 = vadd.f32 %v2820, %v2732
  %v2830 = vadd.f32 %v2821, %v2734
  %v2831 = vadd.f32 %v2822, %v2809
  %v2832 = vadd.f32 %v2823, %v2811
  %v2833 = vadd.f32 %v2825, %v2738
  %v2834 = vadd.f32 %v2826, %v2740
  %v2835 = vadd.f32 %v2827, %v2815
  %v2836 = vadd.f32 %v2828, %v2817
  %v2837 = vxor.u32 %v2829, 2147483648
  %v2838 = vxor.u32 %v2830, 2147483648
  %v2839 = vxor.u32 %v2831, 2147483648
  %v2840 = vxor.u32 %v2833, 2147483648
  %v2841 = vxor.u32 %v2834, 2147483648
  %v2842 = vxor.u32 %v2835, 2147483648
  %v2843 = vmul.f32 %v2837, 1.442695
  %v2844 = vpow.pop %v2843
  %v2845 = vmul.f32 %v2838, 1.442695
  %v2846 = vpow.pop %v2845
  %v2847 = vmul.f32 %v2839, 1.442695
  %v2848 = vpow.pop %v2847
  %v2849 = vmul.f32 %v2840, 1.442695
  %v2850 = vpow.pop %v2849
  %v2851 = vmul.f32 %v2841, 1.442695
  %v2852 = vpow.pop %v2851
  %v2853 = vmul.f32 %v2842, 1.442695
  %v2854 = vpow.pop %v2853
  %v2855 = vadd.f32 %v2844, 1.0
  %v2856 = vadd.f32 %v2846, 1.0
  %v2857 = vadd.f32 %v2848, 1.0
  %v2858 = vadd.f32 %v2850, 1.0
  %v2859 = vadd.f32 %v2852, 1.0
  %v2860 = vadd.f32 %v2854, 1.0
  %v2861 = vrcp.pop %v2855
  %v2862 = vmul.f32 1.0, %v2861
  %v2863 = vrcp.pop %v2856
  %v2864 = vmul.f32 1.0, %v2863
  %v2865 = vrcp.pop %v2857
  %v2866 = vmul.f32 1.0, %v2865
  %v2867 = vrcp.pop %v2858
  %v2868 = vmul.f32 1.0, %v2867
  %v2869 = vrcp.pop %v2859
  %v2870 = vmul.f32 1.0, %v2869
  %v2871 = vrcp.pop %v2860
  %v2872 = vmul.f32 1.0, %v2871
  %v2873 = vtanh.pop %v2832
  %v2874 = vtanh.pop %v2836
  %v2875 = vld [vmem:[#allocation3] sm:$0xff]
  %v2876 = vld [vmem:[#allocation3 + $0x8] sm:$0xff]
  %v2877 = vmul.f32 %v2864, %v2875
  %v2878 = vmul.f32 %v2870, %v2876
  %v2879 = vmul.f32 %v2862, %v2873
  %v2880 = vmul.f32 %v2868, %v2874
  %v2881 = vadd.f32 %v2877, %v2879
  %v2882 = vadd.f32 %v2878, %v2880
  %v2883 = vtanh.pop %v2881
  %v2884 = vtanh.pop %v2882
  %v2885 = vmul.f32 %v2866, %v2883
  %v2886 = vmul.f32 %v2872, %v2884
  %2887 = vst [vmem:[#allocation3] sm:$0xff] %v2881
  %2888 = vst [vmem:[#allocation3 + $0x8] sm:$0xff] %v2882
  %2889 = vst [vmem:[#allocation2] sm:$0xff] %v2885
  %2890 = vst [vmem:[#allocation2 + $0x18] sm:$0xff] %v2886
  %s2891 = scalar_lea.vmem %s3, 48
  %2892 = vst [vmem:[%s2891] sm:$0xff] %v2885
  %s2893 = scalar_lea.vmem %s50, 8
  %2894 = vst [vmem:[%s2893] sm:$0xff] %v2886
  %v2895 = vld [vmem:[#allocation2] sm:$0xff]
  %v2896 = vld [vmem:[#allocation2 + $0x8] sm:$0xff]
  %v2897 = vld [vmem:[#allocation2 + $0x10] sm:$0xff]
  %v2898 = vld [vmem:[#allocation2 + $0x18] sm:$0xff]
  %v2899 = vld [vmem:[#allocation4] sm:$0xff]
  %v2900 = vld [vmem:[#allocation4 + $0x8] sm:$0xff]
  %v2901 = vld [vmem:[#allocation4 + $0x10] sm:$0xff]
  %v2902 = vld [vmem:[#allocation4 + $0x18] sm:$0xff]
  %v2903 = vld [vmem:[#allocation4 + $0x20] sm:$0xff]
  %v2904 = vld [vmem:[#allocation4 + $0x28] sm:$0xff]
  %v2905 = vld [vmem:[#allocation4 + $0x30] sm:$0xff]
  %v2906 = vld [vmem:[#allocation4 + $0x38] sm:$0xff]
  %v2907 = vld [vmem:[#allocation4 + $0x40] sm:$0xff]
  %v2908 = vld [vmem:[#allocation4 + $0x48] sm:$0xff]
  %v2909 = vld [vmem:[#allocation4 + $0x50] sm:$0xff]
  %v2910 = vld [vmem:[#allocation4 + $0x58] sm:$0xff]
  %v2911 = vld [vmem:[#allocation4 + $0x60] sm:$0xff]
  %v2912 = vld [vmem:[#allocation4 + $0x68] sm:$0xff]
  %v2913 = vld [vmem:[#allocation4 + $0x70] sm:$0xff]
  %v2914 = vld [vmem:[#allocation4 + $0x78] sm:$0xff]
  %v2915 = vld [vmem:[#allocation4 + $0x80] sm:$0xff]
  %v2916 = vld [vmem:[#allocation4 + $0x88] sm:$0xff]
  %v2917 = vld [vmem:[#allocation4 + $0x90] sm:$0xff]
  %v2918 = vld [vmem:[#allocation4 + $0x98] sm:$0xff]
  %v2919 = vld [vmem:[#allocation4 + $0xa0] sm:$0xff]
  %v2920 = vld [vmem:[#allocation4 + $0xa8] sm:$0xff]
  %v2921 = vld [vmem:[#allocation4 + $0xb0] sm:$0xff]
  %v2922 = vld [vmem:[#allocation4 + $0xb8] sm:$0xff]
  %v2923 = vld [vmem:[#allocation4 + $0xc0] sm:$0xff]
  %v2924 = vld [vmem:[#allocation4 + $0xc8] sm:$0xff]
  %v2925 = vld [vmem:[#allocation4 + $0xd0] sm:$0xff]
  %v2926 = vld [vmem:[#allocation4 + $0xd8] sm:$0xff]
  %v2927 = vld [vmem:[#allocation4 + $0xe0] sm:$0xff]
  %v2928 = vld [vmem:[#allocation4 + $0xe8] sm:$0xff]
  %v2929 = vld [vmem:[#allocation4 + $0xf0] sm:$0xff]
  %v2930 = vld [vmem:[#allocation4 + $0xf8] sm:$0xff]
  %v2931 = vld [vmem:[#allocation4 + $0x100] sm:$0xff]
  %v2932 = vld [vmem:[#allocation4 + $0x108] sm:$0xff]
  %v2933 = vld [vmem:[#allocation4 + $0x110] sm:$0xff]
  %v2934 = vld [vmem:[#allocation4 + $0x118] sm:$0xff]
  %v2935 = vld [vmem:[#allocation4 + $0x120] sm:$0xff]
  %v2936 = vld [vmem:[#allocation4 + $0x128] sm:$0xff]
  %v2937 = vld [vmem:[#allocation4 + $0x130] sm:$0xff]
  %v2938 = vld [vmem:[#allocation4 + $0x138] sm:$0xff]
  %v2939 = vld [vmem:[#allocation4 + $0x140] sm:$0xff]
  %v2940 = vld [vmem:[#allocation4 + $0x148] sm:$0xff]
  %v2941 = vld [vmem:[#allocation4 + $0x150] sm:$0xff]
  %v2942 = vld [vmem:[#allocation4 + $0x158] sm:$0xff]
  %v2943 = vld [vmem:[#allocation4 + $0x160] sm:$0xff]
  %v2944 = vld [vmem:[#allocation4 + $0x168] sm:$0xff]
  %v2945 = vld [vmem:[#allocation4 + $0x170] sm:$0xff]
  %v2946 = vld [vmem:[#allocation4 + $0x178] sm:$0xff]
  %v2947 = vld [vmem:[#allocation4 + $0x180] sm:$0xff]
  %v2948 = vld [vmem:[#allocation4 + $0x188] sm:$0xff]
  %v2949 = vld [vmem:[#allocation4 + $0x190] sm:$0xff]
  %v2950 = vld [vmem:[#allocation4 + $0x198] sm:$0xff]
  %v2951 = vld [vmem:[#allocation4 + $0x1a0] sm:$0xff]
  %v2952 = vld [vmem:[#allocation4 + $0x1a8] sm:$0xff]
  %v2953 = vld [vmem:[#allocation4 + $0x1b0] sm:$0xff]
  %v2954 = vld [vmem:[#allocation4 + $0x1b8] sm:$0xff]
  %v2955 = vld [vmem:[#allocation4 + $0x1c0] sm:$0xff]
  %v2956 = vld [vmem:[#allocation4 + $0x1c8] sm:$0xff]
  %v2957 = vld [vmem:[#allocation4 + $0x1d0] sm:$0xff]
  %v2958 = vld [vmem:[#allocation4 + $0x1d8] sm:$0xff]
  %v2959 = vld [vmem:[#allocation4 + $0x1e0] sm:$0xff]
  %v2960 = vld [vmem:[#allocation4 + $0x1e8] sm:$0xff]
  %v2961 = vld [vmem:[#allocation4 + $0x1f0] sm:$0xff]
  %v2962 = vld [vmem:[#allocation4 + $0x1f8] sm:$0xff]
  %v2963 = vld [vmem:[#allocation4 + $0x200] sm:$0xff]
  %v2964 = vld [vmem:[#allocation4 + $0x208] sm:$0xff]
  %v2965 = vld [vmem:[#allocation4 + $0x210] sm:$0xff]
  %v2966 = vld [vmem:[#allocation4 + $0x218] sm:$0xff]
  %v2967 = vld [vmem:[#allocation4 + $0x220] sm:$0xff]
  %v2968 = vld [vmem:[#allocation4 + $0x228] sm:$0xff]
  %v2969 = vld [vmem:[#allocation4 + $0x230] sm:$0xff]
  %v2970 = vld [vmem:[#allocation4 + $0x238] sm:$0xff]
  %v2971 = vld [vmem:[#allocation4 + $0x240] sm:$0xff]
  %v2972 = vld [vmem:[#allocation4 + $0x248] sm:$0xff]
  %v2973 = vld [vmem:[#allocation4 + $0x250] sm:$0xff]
  %v2974 = vld [vmem:[#allocation4 + $0x258] sm:$0xff]
  %v2975 = vld [vmem:[#allocation4 + $0x260] sm:$0xff]
  %v2976 = vld [vmem:[#allocation4 + $0x268] sm:$0xff]
  %v2977 = vld [vmem:[#allocation4 + $0x270] sm:$0xff]
  %v2978 = vld [vmem:[#allocation4 + $0x278] sm:$0xff]
  %v2979 = vld [vmem:[#allocation4 + $0x280] sm:$0xff]
  %v2980 = vld [vmem:[#allocation4 + $0x288] sm:$0xff]
  %v2981 = vld [vmem:[#allocation4 + $0x290] sm:$0xff]
  %v2982 = vld [vmem:[#allocation4 + $0x298] sm:$0xff]
  %v2983 = vld [vmem:[#allocation4 + $0x2a0] sm:$0xff]
  %v2984 = vld [vmem:[#allocation4 + $0x2a8] sm:$0xff]
  %v2985 = vld [vmem:[#allocation4 + $0x2b0] sm:$0xff]
  %v2986 = vld [vmem:[#allocation4 + $0x2b8] sm:$0xff]
  %v2987 = vld [vmem:[#allocation4 + $0x2c0] sm:$0xff]
  %v2988 = vld [vmem:[#allocation4 + $0x2c8] sm:$0xff]
  %v2989 = vld [vmem:[#allocation4 + $0x2d0] sm:$0xff]
  %v2990 = vld [vmem:[#allocation4 + $0x2d8] sm:$0xff]
  %v2991 = vld [vmem:[#allocation4 + $0x2e0] sm:$0xff]
  %v2992 = vld [vmem:[#allocation4 + $0x2e8] sm:$0xff]
  %v2993 = vld [vmem:[#allocation4 + $0x2f0] sm:$0xff]
  %v2994 = vld [vmem:[#allocation4 + $0x2f8] sm:$0xff]
  %v2995 = vld [vmem:[#allocation4 + $0x300] sm:$0xff]
  %v2996 = vld [vmem:[#allocation4 + $0x308] sm:$0xff]
  %v2997 = vld [vmem:[#allocation4 + $0x310] sm:$0xff]
  %v2998 = vld [vmem:[#allocation4 + $0x318] sm:$0xff]
  %v2999 = vld [vmem:[#allocation4 + $0x320] sm:$0xff]
  %v3000 = vld [vmem:[#allocation4 + $0x328] sm:$0xff]
  %v3001 = vld [vmem:[#allocation4 + $0x330] sm:$0xff]
  %v3002 = vld [vmem:[#allocation4 + $0x338] sm:$0xff]
  %v3003 = vld [vmem:[#allocation4 + $0x340] sm:$0xff]
  %v3004 = vld [vmem:[#allocation4 + $0x348] sm:$0xff]
  %v3005 = vld [vmem:[#allocation4 + $0x350] sm:$0xff]
  %v3006 = vld [vmem:[#allocation4 + $0x358] sm:$0xff]
  %v3007 = vld [vmem:[#allocation4 + $0x360] sm:$0xff]
  %v3008 = vld [vmem:[#allocation4 + $0x368] sm:$0xff]
  %v3009 = vld [vmem:[#allocation4 + $0x370] sm:$0xff]
  %v3010 = vld [vmem:[#allocation4 + $0x378] sm:$0xff]
  %v3011 = vld [vmem:[#allocation4 + $0x380] sm:$0xff]
  %v3012 = vld [vmem:[#allocation4 + $0x388] sm:$0xff]
  %v3013 = vld [vmem:[#allocation4 + $0x390] sm:$0xff]
  %v3014 = vld [vmem:[#allocation4 + $0x398] sm:$0xff]
  %v3015 = vld [vmem:[#allocation4 + $0x3a0] sm:$0xff]
  %v3016 = vld [vmem:[#allocation4 + $0x3a8] sm:$0xff]
  %v3017 = vld [vmem:[#allocation4 + $0x3b0] sm:$0xff]
  %v3018 = vld [vmem:[#allocation4 + $0x3b8] sm:$0xff]
  %v3019 = vld [vmem:[#allocation4 + $0x3c0] sm:$0xff]
  %v3020 = vld [vmem:[#allocation4 + $0x3c8] sm:$0xff]
  %v3021 = vld [vmem:[#allocation4 + $0x3d0] sm:$0xff]
  %v3022 = vld [vmem:[#allocation4 + $0x3d8] sm:$0xff]
  %v3023 = vld [vmem:[#allocation4 + $0x3e0] sm:$0xff]
  %v3024 = vld [vmem:[#allocation4 + $0x3e8] sm:$0xff]
  %v3025 = vld [vmem:[#allocation4 + $0x3f0] sm:$0xff]
  %v3026 = vld [vmem:[#allocation4 + $0x3f8] sm:$0xff]
  %3027 = vmatprep.subr.mxu0 %v2900
  %3028 = vmatpush1.msra.mxu0 %v2899
  %3029 = vmatprep.subr.mxu0 %v2904
  %3030 = vmatpush1.msra.mxu0 %v2903
  %3031 = vmatprep.subr.mxu0 %v2908
  %3032 = vmatpush1.msra.mxu0 %v2907
  %3033 = vmatprep.subr.mxu0 %v2912
  %3034 = vmatpush1.msra.mxu0 %v2911
  %3035 = vmatprep.subr.mxu0 %v2916
  %3036 = vmatpush1.msra.mxu0 %v2915
  %3037 = vmatprep.subr.mxu0 %v2920
  %3038 = vmatpush1.msra.mxu0 %v2919
  %3039 = vmatprep.subr.mxu0 %v2924
  %3040 = vmatpush1.msra.mxu0 %v2923
  %3041 = vmatprep.subr.mxu0 %v2928
  %3042 = vmatpush1.msra.mxu0 %v2927
  %3043 = vmatprep.subr.mxu0 %v2932
  %3044 = vmatpush1.msra.mxu0 %v2931
  %3045 = vmatprep.subr.mxu0 %v2936
  %3046 = vmatpush1.msra.mxu0 %v2935
  %3047 = vmatprep.subr.mxu0 %v2940
  %3048 = vmatpush1.msra.mxu0 %v2939
  %3049 = vmatprep.subr.mxu0 %v2944
  %3050 = vmatpush1.msra.mxu0 %v2943
  %3051 = vmatprep.subr.mxu0 %v2948
  %3052 = vmatpush1.msra.mxu0 %v2947
  %3053 = vmatprep.subr.mxu0 %v2952
  %3054 = vmatpush1.msra.mxu0 %v2951
  %3055 = vmatprep.subr.mxu0 %v2956
  %3056 = vmatpush1.msra.mxu0 %v2955
  %3057 = vmatprep.subr.mxu0 %v2960
  %3058 = vmatpush1.msra.mxu0 %v2959
  %3059 = vmatprep.subr.mxu0 %v2964
  %3060 = vmatpush1.msra.mxu0 %v2963
  %3061 = vmatprep.subr.mxu0 %v2968
  %3062 = vmatpush1.msra.mxu0 %v2967
  %3063 = vmatprep.subr.mxu0 %v2972
  %3064 = vmatpush1.msra.mxu0 %v2971
  %3065 = vmatprep.subr.mxu0 %v2976
  %3066 = vmatpush1.msra.mxu0 %v2975
  %3067 = vmatprep.subr.mxu0 %v2980
  %3068 = vmatpush1.msra.mxu0 %v2979
  %3069 = vmatprep.subr.mxu0 %v2984
  %3070 = vmatpush1.msra.mxu0 %v2983
  %3071 = vmatprep.subr.mxu0 %v2988
  %3072 = vmatpush1.msra.mxu0 %v2987
  %3073 = vmatprep.subr.mxu0 %v2992
  %3074 = vmatpush1.msra.mxu0 %v2991
  %3075 = vmatprep.subr.mxu0 %v2996
  %3076 = vmatpush1.msra.mxu0 %v2995
  %3077 = vmatprep.subr.mxu0 %v3000
  %3078 = vmatpush1.msra.mxu0 %v2999
  %3079 = vmatprep.subr.mxu0 %v3004
  %3080 = vmatpush1.msra.mxu0 %v3003
  %3081 = vmatprep.subr.mxu0 %v3008
  %3082 = vmatpush1.msra.mxu0 %v3007
  %3083 = vmatprep.subr.mxu0 %v3012
  %3084 = vmatpush1.msra.mxu0 %v3011
  %3085 = vmatprep.subr.mxu0 %v3016
  %3086 = vmatpush1.msra.mxu0 %v3015
  %3087 = vmatprep.subr.mxu0 %v3020
  %3088 = vmatpush1.msra.mxu0 %v3019
  %3089 = vmatprep.subr.mxu0 %v3024
  %3090 = vmatpush1.msra.mxu0 %v3023
  %3091 = vmatprep.mubr.f32.mxu0 %v2896
  %3092 = vmatmul.mubr.f32.gmra.mrb[0].mxu0 %v2895
  %v3093 = vpop.f32.mrb[0].mxu0
  %v3094 = vadd.f32 0.0, %v3093
  %v3095 = vpop.f32.mrb[0].mxu0
  %v3096 = vadd.f32 0.0, %v3095
  %3097 = vmatprep.mubr.f32.mxu0 %v2898
  %3098 = vmatmul.mubr.f32.gmra.mrb[0].mxu0 %v2897
  %v3099 = vpop.f32.mrb[0].mxu0
  %v3100 = vadd.f32 0.0, %v3099
  %v3101 = vpop.f32.mrb[0].mxu0
  %v3102 = vadd.f32 0.0, %v3101
  %3103 = vdwg.mxu0
  %3104 = vmatprep.subr.mxu0 %v2902
  %3105 = vmatpush1.msra.mxu0 %v2901
  %3106 = vmatprep.subr.mxu0 %v2906
  %3107 = vmatpush1.msra.mxu0 %v2905
  %3108 = vmatprep.subr.mxu0 %v2910
  %3109 = vmatpush1.msra.mxu0 %v2909
  %3110 = vmatprep.subr.mxu0 %v2914
  %3111 = vmatpush1.msra.mxu0 %v2913
  %3112 = vmatprep.subr.mxu0 %v2918
  %3113 = vmatpush1.msra.mxu0 %v2917
  %3114 = vmatprep.subr.mxu0 %v2922
  %3115 = vmatpush1.msra.mxu0 %v2921
  %3116 = vmatprep.subr.mxu0 %v2926
  %3117 = vmatpush1.msra.mxu0 %v2925
  %3118 = vmatprep.subr.mxu0 %v2930
  %3119 = vmatpush1.msra.mxu0 %v2929
  %3120 = vmatprep.subr.mxu0 %v2934
  %3121 = vmatpush1.msra.mxu0 %v2933
  %3122 = vmatprep.subr.mxu0 %v2938
  %3123 = vmatpush1.msra.mxu0 %v2937
  %3124 = vmatprep.subr.mxu0 %v2942
  %3125 = vmatpush1.msra.mxu0 %v2941
  %3126 = vmatprep.subr.mxu0 %v2946
  %3127 = vmatpush1.msra.mxu0 %v2945
  %3128 = vmatprep.subr.mxu0 %v2950
  %3129 = vmatpush1.msra.mxu0 %v2949
  %3130 = vmatprep.subr.mxu0 %v2954
  %3131 = vmatpush1.msra.mxu0 %v2953
  %3132 = vmatprep.subr.mxu0 %v2958
  %3133 = vmatpush1.msra.mxu0 %v2957
  %3134 = vmatprep.subr.mxu0 %v2962
  %3135 = vmatpush1.msra.mxu0 %v2961
  %3136 = vmatprep.subr.mxu0 %v2966
  %3137 = vmatpush1.msra.mxu0 %v2965
  %3138 = vmatprep.subr.mxu0 %v2970
  %3139 = vmatpush1.msra.mxu0 %v2969
  %3140 = vmatprep.subr.mxu0 %v2974
  %3141 = vmatpush1.msra.mxu0 %v2973
  %3142 = vmatprep.subr.mxu0 %v2978
  %3143 = vmatpush1.msra.mxu0 %v2977
  %3144 = vmatprep.subr.mxu0 %v2982
  %3145 = vmatpush1.msra.mxu0 %v2981
  %3146 = vmatprep.subr.mxu0 %v2986
  %3147 = vmatpush1.msra.mxu0 %v2985
  %3148 = vmatprep.subr.mxu0 %v2990
  %3149 = vmatpush1.msra.mxu0 %v2989
  %3150 = vmatprep.subr.mxu0 %v2994
  %3151 = vmatpush1.msra.mxu0 %v2993
  %3152 = vmatprep.subr.mxu0 %v2998
  %3153 = vmatpush1.msra.mxu0 %v2997
  %3154 = vmatprep.subr.mxu0 %v3002
  %3155 = vmatpush1.msra.mxu0 %v3001
  %3156 = vmatprep.subr.mxu0 %v3006
  %3157 = vmatpush1.msra.mxu0 %v3005
  %3158 = vmatprep.subr.mxu0 %v3010
  %3159 = vmatpush1.msra.mxu0 %v3009
  %3160 = vmatprep.subr.mxu0 %v3014
  %3161 = vmatpush1.msra.mxu0 %v3013
  %3162 = vmatprep.subr.mxu0 %v3018
  %3163 = vmatpush1.msra.mxu0 %v3017
  %3164 = vmatprep.subr.mxu0 %v3022
  %3165 = vmatpush1.msra.mxu0 %v3021
  %3166 = vmatprep.subr.mxu0 %v3026
  %3167 = vmatpush1.msra.mxu0 %v3025
  %3168 = vmatprep.mubr.f32.mxu0 %v2896
  %3169 = vmatmul.mubr.f32.gmra.mrb[0].mxu0 %v2895
  %v3170 = vpop.f32.mrb[0].mxu0
  %v3171 = vadd.f32 0.0, %v3170
  %v3172 = vpop.f32.mrb[0].mxu0
  %v3173 = vadd.f32 0.0, %v3172
  %3174 = vmatprep.mubr.f32.mxu0 %v2898
  %3175 = vmatmul.mubr.f32.gmra.mrb[0].mxu0 %v2897
  %v3176 = vpop.f32.mrb[0].mxu0
  %v3177 = vadd.f32 0.0, %v3176
  %v3178 = vpop.f32.mrb[0].mxu0
  %v3179 = vadd.f32 0.0, %v3178
  %3180 = vdwg.mxu0
  %s3181 = scalar_lea.vmem %s0, 224
  %v3182 = vld [vmem:[%s3181] sm:$0xff]
  %v3183 = vld [vmem:[%s3181 + $0x8] sm:$0xff]
  %v3184 = vld [vmem:[%s3181 + $0x10] sm:$0xff]
  %v3185 = vld [vmem:[%s3181 + $0x18] sm:$0xff]
  %v3186 = vld [vmem:[%s42] sm:$0xff]
  %v3187 = vld [vmem:[%s42 + $0x8] sm:$0xff]
  %v3188 = vld [vmem:[%s42 + $0x10] sm:$0xff]
  %v3189 = vld [vmem:[%s42 + $0x18] sm:$0xff]
  %v3190 = vadd.f32 %v3182, %v3094
  %v3191 = vadd.f32 %v3183, %v3096
  %v3192 = vadd.f32 %v3184, %v3171
  %v3193 = vadd.f32 %v3185, %v3173
  %v3194 = vadd.f32 %v3186, %v3100
  %v3195 = vadd.f32 %v3187, %v3102
  %v3196 = vadd.f32 %v3188, %v3177
  %v3197 = vadd.f32 %v3189, %v3179
  %v3198 = vxor.u32 %v3190, 2147483648
  %v3199 = vxor.u32 %v3191, 2147483648
  %v3200 = vxor.u32 %v3192, 2147483648
  %v3201 = vxor.u32 %v3194, 2147483648
  %v3202 = vxor.u32 %v3195, 2147483648
  %v3203 = vxor.u32 %v3196, 2147483648
  %v3204 = vmul.f32 %v3198, 1.442695
  %v3205 = vpow.pop %v3204
  %v3206 = vmul.f32 %v3199, 1.442695
  %v3207 = vpow.pop %v3206
  %v3208 = vmul.f32 %v3200, 1.442695
  %v3209 = vpow.pop %v3208
  %v3210 = vmul.f32 %v3201, 1.442695
  %v3211 = vpow.pop %v3210
  %v3212 = vmul.f32 %v3202, 1.442695
  %v3213 = vpow.pop %v3212
  %v3214 = vmul.f32 %v3203, 1.442695
  %v3215 = vpow.pop %v3214
  %v3216 = vadd.f32 %v3205, 1.0
  %v3217 = vadd.f32 %v3207, 1.0
  %v3218 = vadd.f32 %v3209, 1.0
  %v3219 = vadd.f32 %v3211, 1.0
  %v3220 = vadd.f32 %v3213, 1.0
  %v3221 = vadd.f32 %v3215, 1.0
  %v3222 = vrcp.pop %v3216
  %v3223 = vmul.f32 1.0, %v3222
  %v3224 = vrcp.pop %v3217
  %v3225 = vmul.f32 1.0, %v3224
  %v3226 = vrcp.pop %v3218
  %v3227 = vmul.f32 1.0, %v3226
  %v3228 = vrcp.pop %v3219
  %v3229 = vmul.f32 1.0, %v3228
  %v3230 = vrcp.pop %v3220
  %v3231 = vmul.f32 1.0, %v3230
  %v3232 = vrcp.pop %v3221
  %v3233 = vmul.f32 1.0, %v3232
  %v3234 = vtanh.pop %v3193
  %v3235 = vtanh.pop %v3197
  %v3236 = vld [vmem:[#allocation3] sm:$0xff]
  %v3237 = vld [vmem:[#allocation3 + $0x8] sm:$0xff]
  %v3238 = vmul.f32 %v3225, %v3236
  %v3239 = vmul.f32 %v3231, %v3237
  %v3240 = vmul.f32 %v3223, %v3234
  %v3241 = vmul.f32 %v3229, %v3235
  %v3242 = vadd.f32 %v3238, %v3240
  %v3243 = vadd.f32 %v3239, %v3241
  %v3244 = vtanh.pop %v3242
  %v3245 = vtanh.pop %v3243
  %v3246 = vmul.f32 %v3227, %v3244
  %v3247 = vmul.f32 %v3233, %v3245
  %3248 = vst [vmem:[#allocation3] sm:$0xff] %v3242
  %3249 = vst [vmem:[#allocation3 + $0x8] sm:$0xff] %v3243
  %3250 = vst [vmem:[#allocation2] sm:$0xff] %v3246
  %3251 = vst [vmem:[#allocation2 + $0x18] sm:$0xff] %v3247
  %s3252 = scalar_lea.vmem %s3, 56
  %3253 = vst [vmem:[%s3252] sm:$0xff] %v3246
  %3254 = vst [vmem:[%s50] sm:$0xff] %v3247
  %s3255 = ssub.s32 0, 0
  %s3256 = smul.u32 8, %s3255
  %p3257 = scmp.lt.s32.totalorder %s3256, 7
  %s3258 = scalar_select %p3257, %s3256, 7
  %s3259 = smul.addr %s3258, 8
  %s3260 = scalar_lea.vmem %s4, %s3259
  // Predicated region
  $region48: #{bilstm_forward.3} parent=0 // pred_check
    _
  $region49: #{bilstm_forward.3} parent=0 // pred_check_branch
    %3262 = sbr.rel (0) target = $region51
  $region50: #{bilstm_forward.3} parent=0 // pred_region
    _
  $region51: #{bilstm_forward.3} parent=0 // pred_fallthru
    _
  // Predicated region
  $region52: #{bilstm_forward.3} parent=0 // pred_check
    _
  $region53: #{bilstm_forward.3} parent=0 // pred_check_branch
    %3264 = sbr.rel (0) target = $region55
  $region54: #{bilstm_forward.3} parent=0 // pred_region
    %s3265 = ssub.s32 0, 0
    %s3266 = smul.u32 8, %s3265
  $region55: #{bilstm_forward.3} parent=0 // pred_fallthru
    _
  // Predicated region
  $region56: #{bilstm_forward.3} parent=0 // pred_check
    _
  $region57: #{bilstm_forward.3} parent=0 // pred_check_branch
    %3268 = sbr.rel (0) target = $region59
  $region58: #{bilstm_forward.3} parent=0 // pred_region
    _
  $region59: #{bilstm_forward.3} parent=0 // pred_fallthru
    _
  // Predicated region
  $region60: #{bilstm_forward.3} parent=0 // pred_check
    _
  $region61: #{bilstm_forward.3} parent=0 // pred_check_branch
    %3270 = sbr.rel (0) target = $region63
  $region62: #{bilstm_forward.3} parent=0 // pred_region
    %s3271 = ssub.s32 0, 0
    %s3272 = smul.u32 8, %s3271
    %p3273 = scmp.lt.s32.totalorder %s3272, 7
    %s3274 = scalar_select %p3273, %s3272, 7
    %s3275 = smul.addr %s3274, 8
    %s3276 = scalar_lea.vmem %s4, %s3275
  $region63: #{bilstm_forward.3} parent=0 // pred_fallthru
    _
  %3277 = vsyncmov [#allocation5]
  %s3278 = vpop.sfrf %3277
  %p3279 = scmp.eq.s32.totalorder %s3278, 0
  %p3280 = pneg %p3279
  %3282 = shalt.err (%p3280)

</llo_original>
